<compile_context>
chip_gen: v7x
topology: tpu7x:2x2x1
jax: 0.10.0
libtpu: 0.0.40
codegen_flags: <defaults>
</compile_context>

<pallas_src>
import functools

import jax
import jax.numpy as jnp
import numpy as np
from jax.experimental import pallas as pl
from jax.experimental.pallas import tpu as pltpu

EPS = 1e-5
LANE = 128


def _round_up(n, m):
    return (n + m - 1) // m * m


# ------------------------------ Pallas kernels ------------------------------


def _fused_conv_kernel(x_ref, w_ref, y_ref, psum_ref, pssq_ref,
                       *, kh, kw, stride, ho, wo, cin_p):
    """One padded image -> conv output + BN partial sums (fused).

    x_ref   : (1, Hp, Wp, cin_p)    f32  spatially padded NHWC input
    w_ref   : (kh*kw*cin_p, cout_p) bf16 packed weight (resident across grid)
    y_ref   : (1, ho*wo, cout_p)    f32  conv output (pixels x channels)
    psum_ref: (1, 1, cout_p)        f32  per-image sum(y)   over pixels
    pssq_ref: (1, 1, cout_p)        f32  per-image sum(y^2) over pixels
    """
    # Accumulate straight into the VMEM-resident output block: kh*kw shifted
    # accumulating MXU matmuls == im2col matmul, but patch extraction happens
    # on the VMEM block (no im2col HBM traffic, no extra scratch buffer).
    y_ref[...] = jnp.zeros_like(y_ref)
    for dy in range(kh):
        for dx in range(kw):
            if stride == 1:
                win = x_ref[0, pl.ds(dy, ho), pl.ds(dx, wo), :]
            else:
                win = x_ref[0, pl.ds(dy, ho, stride), pl.ds(dx, wo, stride), :]
            a = win.reshape(ho * wo, cin_p).astype(jnp.bfloat16)       # MXU operand
            wk = w_ref[pl.ds((dy * kw + dx) * cin_p, cin_p), :]
            y_ref[0] += jnp.dot(a, wk, preferred_element_type=jnp.float32)
    y = y_ref[0]
    psum_ref[0] = jnp.sum(y, axis=0, keepdims=True)
    pssq_ref[0] = jnp.sum(y * y, axis=0, keepdims=True)


def _fold(psum, pssq, gamma, beta, count):
    """Per-image BN partials -> per-channel (scale, bias).  All f32, tiny."""
    inv = 1.0 / count
    mean = jnp.sum(psum, axis=0) * inv                       # (1, cout_p)
    ex2 = jnp.sum(pssq, axis=0) * inv
    var = jnp.maximum(ex2 - mean * mean, 0.0)   # clamp cancellation -> no NaN
    scale = gamma * jax.lax.rsqrt(var + EPS)
    bias = beta - mean * scale
    return scale, bias


def _bn_relu_pad_kernel(y_ref, ps_ref, ss_ref, g_ref, b_ref, o_ref,
                        *, ho, wo, count):
    """relu(bn1(conv1)) with the BN fold fused in, reshaped to NHWC and written
    into a spatially zero-padded buffer that conv2 consumes directly."""
    scale, bias = _fold(ps_ref[...], ss_ref[...], g_ref[...], b_ref[...], count)
    o_ref[...] = jnp.zeros_like(o_ref)
    h = jnp.maximum(y_ref[0] * scale + bias, 0.0)
    cp = h.shape[-1]
    o_ref[0, pl.ds(1, ho), pl.ds(1, wo), :] = h.reshape(ho, wo, cp).astype(o_ref.dtype)


def _residual_proj_kernel(y_ref, ps2_ref, ss2_ref, g2_ref, b2_ref,
                          r_ref, pss_ref, sss_ref, gs_ref, bs_ref, o_ref,
                          *, count):
    """relu(bn2(conv2) + bn_s(conv_s(x))) with BOTH BN folds fused in."""
    s2, b2 = _fold(ps2_ref[...], ss2_ref[...], g2_ref[...], b2_ref[...], count)
    ss, bs = _fold(pss_ref[...], sss_ref[...], gs_ref[...], bs_ref[...], count)
    o_ref[0] = jnp.maximum(y_ref[0] * s2 + b2 + r_ref[0] * ss + bs, 0.0)


def _residual_id_kernel(y_ref, ps2_ref, ss2_ref, g2_ref, b2_ref, r_ref, o_ref,
                        *, count):
    """relu(bn2(conv2) + x) with the BN fold fused in (identity shortcut)."""
    s2, b2 = _fold(ps2_ref[...], ss2_ref[...], g2_ref[...], b2_ref[...], count)
    o_ref[0] = jnp.maximum(y_ref[0] * s2 + b2 + r_ref[0], 0.0)


# ------------------------------ pallas wrappers ------------------------------


def fused_conv_bnstats(x_pad, w2d, kh, kw, stride):
    """Conv (kh*kw accumulated bf16 MXU matmuls) + fused BN partial sums."""
    n, hp, wp, cin_p = x_pad.shape
    k, cout_p = w2d.shape
    assert k == kh * kw * cin_p
    ho = (hp - kh) // stride + 1
    wo = (wp - kw) // stride + 1
    kern = functools.partial(_fused_conv_kernel, kh=kh, kw=kw, stride=stride,
                             ho=ho, wo=wo, cin_p=cin_p)
    y, psum, pssq = pl.pallas_call(
        kern,
        out_shape=(jax.ShapeDtypeStruct((n, ho * wo, cout_p), jnp.float32),
                   jax.ShapeDtypeStruct((n, 1, cout_p), jnp.float32),
                   jax.ShapeDtypeStruct((n, 1, cout_p), jnp.float32)),
        grid=(n,),
        in_specs=[pl.BlockSpec((1, hp, wp, cin_p), lambda i: (i, 0, 0, 0)),
                  pl.BlockSpec((k, cout_p), lambda i: (0, 0))],
        out_specs=(pl.BlockSpec((1, ho * wo, cout_p), lambda i: (i, 0, 0)),
                   pl.BlockSpec((1, 1, cout_p), lambda i: (i, 0, 0)),
                   pl.BlockSpec((1, 1, cout_p), lambda i: (i, 0, 0))),
        compiler_params=pltpu.CompilerParams(dimension_semantics=("parallel",)),
    )(x_pad, w2d)
    return y, psum, pssq, ho, wo


def bn_relu_pad(y, psum, pssq, gamma, beta, ho, wo, count):
    n, m, cp = y.shape
    kern = functools.partial(_bn_relu_pad_kernel, ho=ho, wo=wo, count=float(count))
    act = pl.BlockSpec((1, m, cp), lambda i: (i, 0, 0))
    part = pl.BlockSpec((n, 1, cp), lambda i: (0, 0, 0))   # resident across grid
    vec = pl.BlockSpec((1, cp), lambda i: (0, 0))
    return pl.pallas_call(
        kern,
        out_shape=jax.ShapeDtypeStruct((n, ho + 2, wo + 2, cp), jnp.float32),
        grid=(n,),
        in_specs=[act, part, part, vec, vec],
        out_specs=pl.BlockSpec((1, ho + 2, wo + 2, cp), lambda i: (i, 0, 0, 0)),
        compiler_params=pltpu.CompilerParams(dimension_semantics=("parallel",)),
    )(y, psum, pssq, gamma, beta)


def residual_bn_relu(y2, ps2, ss2, g2, b2, r, proj_stats, count):
    n, m, cp = y2.shape
    act = pl.BlockSpec((1, m, cp), lambda i: (i, 0, 0))
    part = pl.BlockSpec((n, 1, cp), lambda i: (0, 0, 0))
    vec = pl.BlockSpec((1, cp), lambda i: (0, 0))
    if proj_stats is not None:
        pss, sss, gs, bs = proj_stats
        kern = functools.partial(_residual_proj_kernel, count=float(count))
        in_specs = [act, part, part, vec, vec, act, part, part, vec, vec]
        args = (y2, ps2, ss2, g2, b2, r, pss, sss, gs, bs)
    else:
        kern = functools.partial(_residual_id_kernel, count=float(count))
        in_specs = [act, part, part, vec, vec, act]
        args = (y2, ps2, ss2, g2, b2, r)
    return pl.pallas_call(
        kern,
        out_shape=jax.ShapeDtypeStruct((n, m, cp), jnp.float32),
        grid=(n,),
        in_specs=in_specs,
        out_specs=act,
        compiler_params=pltpu.CompilerParams(dimension_semantics=("parallel",)),
    )(*args)


# --------------------------------- glue (JAX) --------------------------------


def _pad_channels(x_nhwc, cp):
    c = x_nhwc.shape[-1]
    if c == cp:
        return x_nhwc
    return jnp.pad(x_nhwc, ((0, 0), (0, 0), (0, 0), (0, cp - c)))


def _pad_vec(v, cp):
    return jnp.pad(v.astype(jnp.float32), (0, cp - v.shape[0])).reshape(1, cp)


def _pack_weight(w_oihw, cin_p, cout_p):
    """(Cout,Cin,KH,KW) -> (KH*KW*cin_p, cout_p) bf16, zero-padded lanes."""
    cout, cin, kh, kw = w_oihw.shape
    w = jnp.transpose(w_oihw, (2, 3, 1, 0))                      # (kh,kw,cin,cout)
    w = jnp.pad(w, ((0, 0), (0, 0), (0, cin_p - cin), (0, cout_p - cout)))
    return w.reshape(kh * kw * cin_p, cout_p).astype(jnp.bfloat16)


def basic_block_forward(x_nchw, params, stride=1, flag=1):
    x = jnp.transpose(x_nchw, (0, 2, 3, 1)).astype(jnp.float32)  # NHWC
    n, h, w, in_planes = x.shape
    planes = params["w1"].shape[0]
    cin_p = _round_up(in_planes, LANE)
    cp = _round_up(planes, LANE)

    x_cp = _pad_channels(x, cin_p)                               # lane-dense channels

    # conv1 + bn1 partial stats (fused) ---------------------------------------
    w1 = _pack_weight(params["w1"], cin_p, cp)
    x_sp = jnp.pad(x_cp, ((0, 0), (1, 1), (1, 1), (0, 0)))       # spatial pad=1
    y1, ps1, ss1, ho, wo = fused_conv_bnstats(x_sp, w1, 3, 3, stride)

    # relu(bn1(.)) with the fold fused, writing conv2's padded input directly --
    h1_sp = bn_relu_pad(y1, ps1, ss1,
                        _pad_vec(params["g1"], cp), _pad_vec(params["b1"], cp),
                        ho, wo, count=n * ho * wo)               # (n, ho+2, wo+2, cp)

    # conv2 + bn2 partial stats (fused) ----------------------------------------
    w2 = _pack_weight(params["w2"], cp, cp)
    y2, ps2, ss2, ho2, wo2 = fused_conv_bnstats(h1_sp, w2, 3, 3, 1)

    # shortcut ------------------------------------------------------------------
    use_proj = (stride != 1) or (in_planes != planes) or (flag == 0)
    if use_proj:
        ws = _pack_weight(params["ws"], cin_p, cp)
        ysc, pss, sss, hs, wss = fused_conv_bnstats(x_cp, ws, 1, 1, stride)
        assert hs == ho2 and wss == wo2
        proj_stats = (pss, sss,
                      _pad_vec(params["gs"], cp), _pad_vec(params["bs"], cp))
        r = ysc
    else:
        r = x_cp.reshape(n, h * w, cin_p)                        # identity shortcut
        proj_stats = None

    # relu(bn2(conv2) + shortcut), all folds + affines fused --------------------
    out = residual_bn_relu(y2, ps2, ss2,
                           _pad_vec(params["g2"], cp), _pad_vec(params["b2"], cp),
                           r, proj_stats, count=n * ho2 * wo2)   # (n, ho2*wo2, cp)
    out = out.reshape(n, ho2, wo2, cp)[:, :, :, :planes]
    return jnp.transpose(out, (0, 3, 1, 2))                      # back to NCHW


# ----------------------------- pure-JAX reference ----------------------------


def _q(t):
    # The kernels round both MXU operands to bf16 (f32 accumulation); the
    # reference applies the identical rounding so it checks the same math.
    return t.astype(jnp.bfloat16).astype(jnp.float32)


def _ref_conv(x, w, stride, pad):
    return jax.lax.conv_general_dilated(
        _q(x), _q(w), (stride, stride), [(pad, pad), (pad, pad)],
        dimension_numbers=("NCHW", "OIHW", "NCHW"))


def _ref_bn(y, gamma, beta):
    mean = jnp.mean(y, axis=(0, 2, 3), keepdims=True)
    var = jnp.mean((y - mean) ** 2, axis=(0, 2, 3), keepdims=True)
    return (y - mean) * jax.lax.rsqrt(var + EPS) * gamma.reshape(1, -1, 1, 1) \
           + beta.reshape(1, -1, 1, 1)


def ref_forward(x, params, stride=1, flag=1):
    out = jax.nn.relu(_ref_bn(_ref_conv(x, params["w1"], stride, 1),
                              params["g1"], params["b1"]))
    out = _ref_bn(_ref_conv(out, params["w2"], 1, 1), params["g2"], params["b2"])
    in_planes, planes = x.shape[1], params["w1"].shape[0]
    if stride != 1 or in_planes != planes or flag == 0:
        sc = _ref_bn(_ref_conv(x, params["ws"], stride, 0), params["gs"], params["bs"])
    else:
        sc = x
    return jax.nn.relu(out + sc)


# ------------------------------------ main -----------------------------------

if __name__ == "__main__":
    in_planes, planes, stride, flag = 4, 8, 1, 1   # in != planes -> projection shortcut
    key = jax.random.PRNGKey(0)
    ks = jax.random.split(key, 10)

    params = {
        "w1": jax.random.normal(ks[0], (planes, in_planes, 3, 3), jnp.float32) * 0.1,
        "g1": jax.random.uniform(ks[1], (planes,), jnp.float32, 0.5, 1.5),
        "b1": jax.random.normal(ks[2], (planes,), jnp.float32) * 0.1,
        "w2": jax.random.normal(ks[3], (planes, planes, 3, 3), jnp.float32) * 0.1,
        "g2": jax.random.uniform(ks[4], (planes,), jnp.float32, 0.5, 1.5),
        "b2": jax.random.normal(ks[5], (planes,), jnp.float32) * 0.1,
        "ws": jax.random.normal(ks[6], (planes, in_planes, 1, 1), jnp.float32) * 0.1,
        "gs": jax.random.uniform(ks[7], (planes,), jnp.float32, 0.5, 1.5),
        "bs": jax.random.normal(ks[8], (planes,), jnp.float32) * 0.1,
    }
    x = jax.random.normal(ks[9], (2, in_planes, 16, 16), jnp.float32)

    fwd = jax.jit(functools.partial(basic_block_forward, stride=stride, flag=flag))
    out = jax.block_until_ready(fwd(x, params))

    ref = jax.block_until_ready(ref_forward(x, params, stride=stride, flag=flag))
    assert out.shape == ref.shape == (2, planes, 16, 16)
    # bf16 MXU operands (f32 accumulation); reference rounds operands the same
    # way, so the residual mismatch is only fp summation order / re-rounding.
    np.testing.assert_allclose(np.asarray(out), np.asarray(ref), atol=5e-3, rtol=5e-3)

    print("KERNEL_OK")
</pallas_src>

<mosaic_0001>
module attributes {stable_mosaic.version = 11 : i64} {
  func.func @_fused_conv_kernel(%arg0: i32, %arg1: memref<1x18x18x128xf32, #tpu.memory_space<vmem>>, %arg2: memref<1152x128xbf16, #tpu.memory_space<vmem>>, %arg3: memref<1x256x128xf32, #tpu.memory_space<vmem>>, %arg4: memref<1x1x128xf32, #tpu.memory_space<vmem>>, %arg5: memref<1x1x128xf32, #tpu.memory_space<vmem>>) attributes {dimension_semantics = [#tpu.dimension_semantics<parallel>], iteration_bounds = array<i64: 2>, scalar_prefetch = 0 : i64, scratch_operands = 0 : i64, tpu.core_type = #tpu.core_type<tc>, window_params = [{transform_indices = @transform_0, window_bounds = array<i64: 1, 18, 18, 128>}, {pipeline_mode = #tpu.pipeline_mode<synchronous>, transform_indices = @transform_1, window_bounds = array<i64: 1152, 128>}, {transform_indices = @transform_2, window_bounds = array<i64: 1, 256, 128>}, {transform_indices = @transform_3, window_bounds = array<i64: 1, 1, 128>}, {transform_indices = @transform_4, window_bounds = array<i64: 1, 1, 128>}]} {
    %cst = arith.constant 0.000000e+00 : f32
    %0 = vector.broadcast %cst : f32 to vector<1x256x128xf32>
    %c0 = arith.constant 0 : index
    %c0_0 = arith.constant 0 : index
    %c0_1 = arith.constant 0 : index
    %1 = vector.load %arg3[%c0, %c0_0, %c0_1] : memref<1x256x128xf32, #tpu.memory_space<vmem>>, vector<1x256x128xf32>
    tpu.vector_store %arg3[%c0, %c0_0, %c0_1], %0 {strides = array<i32>} : memref<1x256x128xf32, #tpu.memory_space<vmem>>, vector<1x256x128xf32>,
    %c0_2 = arith.constant 0 : index
    %c0_3 = arith.constant 0 : index
    %c0_4 = arith.constant 0 : index
    %c0_5 = arith.constant 0 : index
    %2 = vector.load %arg1[%c0_2, %c0_3, %c0_4, %c0_5] : memref<1x18x18x128xf32, #tpu.memory_space<vmem>>, vector<1x16x16x128xf32>
    %3 = vector.shape_cast %2 : vector<1x16x16x128xf32> to vector<16x16x128xf32>
    %4 = vector.shape_cast %3 : vector<16x16x128xf32> to vector<256x128xf32>
    %5 = arith.truncf %4 : vector<256x128xf32> to vector<256x128xbf16>
    %c0_6 = arith.constant 0 : index
    %c0_7 = arith.constant 0 : index
    %6 = vector.load %arg2[%c0_6, %c0_7] : memref<1152x128xbf16, #tpu.memory_space<vmem>>, vector<128x128xbf16>
    %c0_8 = arith.constant 0 : index
    %c0_9 = arith.constant 0 : index
    %c0_10 = arith.constant 0 : index
    %7 = vector.load %arg3[%c0_8, %c0_9, %c0_10] : memref<1x256x128xf32, #tpu.memory_space<vmem>>, vector<1x256x128xf32>
    %8 = vector.shape_cast %7 : vector<1x256x128xf32> to vector<256x128xf32>
    %cst_11 = arith.constant dense<0.000000e+00> : vector<256x128xf32>
    %9 = tpu.matmul %5, %6, %cst_11 {dimension_numbers = #tpu.dot_dimension_numbers<[1], [0], [0], [1], [0, 0, 1, 1], [], []>} : vector<256x128xbf16>, vector<128x128xbf16>, vector<256x128xf32> -> vector<256x128xf32>
    %10 = arith.addf %8, %9 : vector<256x128xf32>
    %c0_12 = arith.constant 0 : index
    %c0_13 = arith.constant 0 : index
    %c0_14 = arith.constant 0 : index
    %11 = vector.load %arg3[%c0_12, %c0_13, %c0_14] : memref<1x256x128xf32, #tpu.memory_space<vmem>>, vector<1x256x128xf32>
    %12 = vector.shape_cast %11 : vector<1x256x128xf32> to vector<256x128xf32>
    %13 = vector.shape_cast %10 : vector<256x128xf32> to vector<1x256x128xf32>
    tpu.vector_store %arg3[%c0_12, %c0_13, %c0_14], %13 {strides = array<i32>} : memref<1x256x128xf32, #tpu.memory_space<vmem>>, vector<1x256x128xf32>,
    %c0_15 = arith.constant 0 : index
    %c0_16 = arith.constant 0 : index
    %c1 = arith.constant 1 : index
    %c0_17 = arith.constant 0 : index
    %14 = vector.load %arg1[%c0_15, %c0_16, %c1, %c0_17] : memref<1x18x18x128xf32, #tpu.memory_space<vmem>>, vector<1x16x16x128xf32>
    %15 = vector.shape_cast %14 : vector<1x16x16x128xf32> to vector<16x16x128xf32>
    %16 = vector.shape_cast %15 : vector<16x16x128xf32> to vector<256x128xf32>
    %17 = arith.truncf %16 : vector<256x128xf32> to vector<256x128xbf16>
    %c128 = arith.constant 128 : index
    %c0_18 = arith.constant 0 : index
    %18 = vector.load %arg2[%c128, %c0_18] : memref<1152x128xbf16, #tpu.memory_space<vmem>>, vector<128x128xbf16>
    %c0_19 = arith.constant 0 : index
    %c0_20 = arith.constant 0 : index
    %c0_21 = arith.constant 0 : index
    %19 = vector.load %arg3[%c0_19, %c0_20, %c0_21] : memref<1x256x128xf32, #tpu.memory_space<vmem>>, vector<1x256x128xf32>
    %20 = vector.shape_cast %19 : vector<1x256x128xf32> to vector<256x128xf32>
    %cst_22 = arith.constant dense<0.000000e+00> : vector<256x128xf32>
    %21 = tpu.matmul %17, %18, %cst_22 {dimension_numbers = #tpu.dot_dimension_numbers<[1], [0], [0], [1], [0, 0, 1, 1], [], []>} : vector<256x128xbf16>, vector<128x128xbf16>, vector<256x128xf32> -> vector<256x128xf32>
    %22 = arith.addf %20, %21 : vector<256x128xf32>
    %c0_23 = arith.constant 0 : index
    %c0_24 = arith.constant 0 : index
    %c0_25 = arith.constant 0 : index
    %23 = vector.load %arg3[%c0_23, %c0_24, %c0_25] : memref<1x256x128xf32, #tpu.memory_space<vmem>>, vector<1x256x128xf32>
    %24 = vector.shape_cast %23 : vector<1x256x128xf32> to vector<256x128xf32>
    %25 = vector.shape_cast %22 : vector<256x128xf32> to vector<1x256x128xf32>
    tpu.vector_store %arg3[%c0_23, %c0_24, %c0_25], %25 {strides = array<i32>} : memref<1x256x128xf32, #tpu.memory_space<vmem>>, vector<1x256x128xf32>,
    %c0_26 = arith.constant 0 : index
    %c0_27 = arith.constant 0 : index
    %c2 = arith.constant 2 : index
    %c0_28 = arith.constant 0 : index
    %26 = vector.load %arg1[%c0_26, %c0_27, %c2, %c0_28] : memref<1x18x18x128xf32, #tpu.memory_space<vmem>>, vector<1x16x16x128xf32>
    %27 = vector.shape_cast %26 : vector<1x16x16x128xf32> to vector<16x16x128xf32>
    %28 = vector.shape_cast %27 : vector<16x16x128xf32> to vector<256x128xf32>
    %29 = arith.truncf %28 : vector<256x128xf32> to vector<256x128xbf16>
    %c256 = arith.constant 256 : index
    %c0_29 = arith.constant 0 : index
    %30 = vector.load %arg2[%c256, %c0_29] : memref<1152x128xbf16, #tpu.memory_space<vmem>>, vector<128x128xbf16>
    %c0_30 = arith.constant 0 : index
    %c0_31 = arith.constant 0 : index
    %c0_32 = arith.constant 0 : index
    %31 = vector.load %arg3[%c0_30, %c0_31, %c0_32] : memref<1x256x128xf32, #tpu.memory_space<vmem>>, vector<1x256x128xf32>
    %32 = vector.shape_cast %31 : vector<1x256x128xf32> to vector<256x128xf32>
    %cst_33 = arith.constant dense<0.000000e+00> : vector<256x128xf32>
    %33 = tpu.matmul %29, %30, %cst_33 {dimension_numbers = #tpu.dot_dimension_numbers<[1], [0], [0], [1], [0, 0, 1, 1], [], []>} : vector<256x128xbf16>, vector<128x128xbf16>, vector<256x128xf32> -> vector<256x128xf32>
    %34 = arith.addf %32, %33 : vector<256x128xf32>
    %c0_34 = arith.constant 0 : index
    %c0_35 = arith.constant 0 : index
    %c0_36 = arith.constant 0 : index
    %35 = vector.load %arg3[%c0_34, %c0_35, %c0_36] : memref<1x256x128xf32, #tpu.memory_space<vmem>>, vector<1x256x128xf32>
    %36 = vector.shape_cast %35 : vector<1x256x128xf32> to vector<256x128xf32>
    %37 = vector.shape_cast %34 : vector<256x128xf32> to vector<1x256x128xf32>
    tpu.vector_store %arg3[%c0_34, %c0_35, %c0_36], %37 {strides = array<i32>} : memref<1x256x128xf32, #tpu.memory_space<vmem>>, vector<1x256x128xf32>,
    %c0_37 = arith.constant 0 : index
    %c1_38 = arith.constant 1 : index
    %c0_39 = arith.constant 0 : index
    %c0_40 = arith.constant 0 : index
    %38 = vector.load %arg1[%c0_37, %c1_38, %c0_39, %c0_40] : memref<1x18x18x128xf32, #tpu.memory_space<vmem>>, vector<1x16x16x128xf32>
    %39 = vector.shape_cast %38 : vector<1x16x16x128xf32> to vector<16x16x128xf32>
    %40 = vector.shape_cast %39 : vector<16x16x128xf32> to vector<256x128xf32>
    %41 = arith.truncf %40 : vector<256x128xf32> to vector<256x128xbf16>
    %c384 = arith.constant 384 : index
    %c0_41 = arith.constant 0 : index
    %42 = vector.load %arg2[%c384, %c0_41] : memref<1152x128xbf16, #tpu.memory_space<vmem>>, vector<128x128xbf16>
    %c0_42 = arith.constant 0 : index
    %c0_43 = arith.constant 0 : index
    %c0_44 = arith.constant 0 : index
    %43 = vector.load %arg3[%c0_42, %c0_43, %c0_44] : memref<1x256x128xf32, #tpu.memory_space<vmem>>, vector<1x256x128xf32>
    %44 = vector.shape_cast %43 : vector<1x256x128xf32> to vector<256x128xf32>
    %cst_45 = arith.constant dense<0.000000e+00> : vector<256x128xf32>
    %45 = tpu.matmul %41, %42, %cst_45 {dimension_numbers = #tpu.dot_dimension_numbers<[1], [0], [0], [1], [0, 0, 1, 1], [], []>} : vector<256x128xbf16>, vector<128x128xbf16>, vector<256x128xf32> -> vector<256x128xf32>
    %46 = arith.addf %44, %45 : vector<256x128xf32>
    %c0_46 = arith.constant 0 : index
    %c0_47 = arith.constant 0 : index
    %c0_48 = arith.constant 0 : index
    %47 = vector.load %arg3[%c0_46, %c0_47, %c0_48] : memref<1x256x128xf32, #tpu.memory_space<vmem>>, vector<1x256x128xf32>
    %48 = vector.shape_cast %47 : vector<1x256x128xf32> to vector<256x128xf32>
    %49 = vector.shape_cast %46 : vector<256x128xf32> to vector<1x256x128xf32>
    tpu.vector_store %arg3[%c0_46, %c0_47, %c0_48], %49 {strides = array<i32>} : memref<1x256x128xf32, #tpu.memory_space<vmem>>, vector<1x256x128xf32>,
    %c0_49 = arith.constant 0 : index
    %c1_50 = arith.constant 1 : index
    %c1_51 = arith.constant 1 : index
    %c0_52 = arith.constant 0 : index
    %50 = vector.load %arg1[%c0_49, %c1_50, %c1_51, %c0_52] : memref<1x18x18x128xf32, #tpu.memory_space<vmem>>, vector<1x16x16x128xf32>
    %51 = vector.shape_cast %50 : vector<1x16x16x128xf32> to vector<16x16x128xf32>
    %52 = vector.shape_cast %51 : vector<16x16x128xf32> to vector<256x128xf32>
    %53 = arith.truncf %52 : vector<256x128xf32> to vector<256x128xbf16>
    %c512 = arith.constant 512 : index
    %c0_53 = arith.constant 0 : index
    %54 = vector.load %arg2[%c512, %c0_53] : memref<1152x128xbf16, #tpu.memory_space<vmem>>, vector<128x128xbf16>
    %c0_54 = arith.constant 0 : index
    %c0_55 = arith.constant 0 : index
    %c0_56 = arith.constant 0 : index
    %55 = vector.load %arg3[%c0_54, %c0_55, %c0_56] : memref<1x256x128xf32, #tpu.memory_space<vmem>>, vector<1x256x128xf32>
    %56 = vector.shape_cast %55 : vector<1x256x128xf32> to vector<256x128xf32>
    %cst_57 = arith.constant dense<0.000000e+00> : vector<256x128xf32>
    %57 = tpu.matmul %53, %54, %cst_57 {dimension_numbers = #tpu.dot_dimension_numbers<[1], [0], [0], [1], [0, 0, 1, 1], [], []>} : vector<256x128xbf16>, vector<128x128xbf16>, vector<256x128xf32> -> vector<256x128xf32>
    %58 = arith.addf %56, %57 : vector<256x128xf32>
    %c0_58 = arith.constant 0 : index
    %c0_59 = arith.constant 0 : index
    %c0_60 = arith.constant 0 : index
    %59 = vector.load %arg3[%c0_58, %c0_59, %c0_60] : memref<1x256x128xf32, #tpu.memory_space<vmem>>, vector<1x256x128xf32>
    %60 = vector.shape_cast %59 : vector<1x256x128xf32> to vector<256x128xf32>
    %61 = vector.shape_cast %58 : vector<256x128xf32> to vector<1x256x128xf32>
    tpu.vector_store %arg3[%c0_58, %c0_59, %c0_60], %61 {strides = array<i32>} : memref<1x256x128xf32, #tpu.memory_space<vmem>>, vector<1x256x128xf32>,
    %c0_61 = arith.constant 0 : index
    %c1_62 = arith.constant 1 : index
    %c2_63 = arith.constant 2 : index
    %c0_64 = arith.constant 0 : index
    %62 = vector.load %arg1[%c0_61, %c1_62, %c2_63, %c0_64] : memref<1x18x18x128xf32, #tpu.memory_space<vmem>>, vector<1x16x16x128xf32>
    %63 = vector.shape_cast %62 : vector<1x16x16x128xf32> to vector<16x16x128xf32>
    %64 = vector.shape_cast %63 : vector<16x16x128xf32> to vector<256x128xf32>
    %65 = arith.truncf %64 : vector<256x128xf32> to vector<256x128xbf16>
    %c640 = arith.constant 640 : index
    %c0_65 = arith.constant 0 : index
    %66 = vector.load %arg2[%c640, %c0_65] : memref<1152x128xbf16, #tpu.memory_space<vmem>>, vector<128x128xbf16>
    %c0_66 = arith.constant 0 : index
    %c0_67 = arith.constant 0 : index
    %c0_68 = arith.constant 0 : index
    %67 = vector.load %arg3[%c0_66, %c0_67, %c0_68] : memref<1x256x128xf32, #tpu.memory_space<vmem>>, vector<1x256x128xf32>
    %68 = vector.shape_cast %67 : vector<1x256x128xf32> to vector<256x128xf32>
    %cst_69 = arith.constant dense<0.000000e+00> : vector<256x128xf32>
    %69 = tpu.matmul %65, %66, %cst_69 {dimension_numbers = #tpu.dot_dimension_numbers<[1], [0], [0], [1], [0, 0, 1, 1], [], []>} : vector<256x128xbf16>, vector<128x128xbf16>, vector<256x128xf32> -> vector<256x128xf32>
    %70 = arith.addf %68, %69 : vector<256x128xf32>
    %c0_70 = arith.constant 0 : index
    %c0_71 = arith.constant 0 : index
    %c0_72 = arith.constant 0 : index
    %71 = vector.load %arg3[%c0_70, %c0_71, %c0_72] : memref<1x256x128xf32, #tpu.memory_space<vmem>>, vector<1x256x128xf32>
    %72 = vector.shape_cast %71 : vector<1x256x128xf32> to vector<256x128xf32>
    %73 = vector.shape_cast %70 : vector<256x128xf32> to vector<1x256x128xf32>
    tpu.vector_store %arg3[%c0_70, %c0_71, %c0_72], %73 {strides = array<i32>} : memref<1x256x128xf32, #tpu.memory_space<vmem>>, vector<1x256x128xf32>,
    %c0_73 = arith.constant 0 : index
    %c2_74 = arith.constant 2 : index
    %c0_75 = arith.constant 0 : index
    %c0_76 = arith.constant 0 : index
    %74 = vector.load %arg1[%c0_73, %c2_74, %c0_75, %c0_76] : memref<1x18x18x128xf32, #tpu.memory_space<vmem>>, vector<1x16x16x128xf32>
    %75 = vector.shape_cast %74 : vector<1x16x16x128xf32> to vector<16x16x128xf32>
    %76 = vector.shape_cast %75 : vector<16x16x128xf32> to vector<256x128xf32>
    %77 = arith.truncf %76 : vector<256x128xf32> to vector<256x128xbf16>
    %c768 = arith.constant 768 : index
    %c0_77 = arith.constant 0 : index
    %78 = vector.load %arg2[%c768, %c0_77] : memref<1152x128xbf16, #tpu.memory_space<vmem>>, vector<128x128xbf16>
    %c0_78 = arith.constant 0 : index
    %c0_79 = arith.constant 0 : index
    %c0_80 = arith.constant 0 : index
    %79 = vector.load %arg3[%c0_78, %c0_79, %c0_80] : memref<1x256x128xf32, #tpu.memory_space<vmem>>, vector<1x256x128xf32>
    %80 = vector.shape_cast %79 : vector<1x256x128xf32> to vector<256x128xf32>
    %cst_81 = arith.constant dense<0.000000e+00> : vector<256x128xf32>
    %81 = tpu.matmul %77, %78, %cst_81 {dimension_numbers = #tpu.dot_dimension_numbers<[1], [0], [0], [1], [0, 0, 1, 1], [], []>} : vector<256x128xbf16>, vector<128x128xbf16>, vector<256x128xf32> -> vector<256x128xf32>
    %82 = arith.addf %80, %81 : vector<256x128xf32>
    %c0_82 = arith.constant 0 : index
    %c0_83 = arith.constant 0 : index
    %c0_84 = arith.constant 0 : index
    %83 = vector.load %arg3[%c0_82, %c0_83, %c0_84] : memref<1x256x128xf32, #tpu.memory_space<vmem>>, vector<1x256x128xf32>
    %84 = vector.shape_cast %83 : vector<1x256x128xf32> to vector<256x128xf32>
    %85 = vector.shape_cast %82 : vector<256x128xf32> to vector<1x256x128xf32>
    tpu.vector_store %arg3[%c0_82, %c0_83, %c0_84], %85 {strides = array<i32>} : memref<1x256x128xf32, #tpu.memory_space<vmem>>, vector<1x256x128xf32>,
    %c0_85 = arith.constant 0 : index
    %c2_86 = arith.constant 2 : index
    %c1_87 = arith.constant 1 : index
    %c0_88 = arith.constant 0 : index
    %86 = vector.load %arg1[%c0_85, %c2_86, %c1_87, %c0_88] : memref<1x18x18x128xf32, #tpu.memory_space<vmem>>, vector<1x16x16x128xf32>
    %87 = vector.shape_cast %86 : vector<1x16x16x128xf32> to vector<16x16x128xf32>
    %88 = vector.shape_cast %87 : vector<16x16x128xf32> to vector<256x128xf32>
    %89 = arith.truncf %88 : vector<256x128xf32> to vector<256x128xbf16>
    %c896 = arith.constant 896 : index
    %c0_89 = arith.constant 0 : index
    %90 = vector.load %arg2[%c896, %c0_89] : memref<1152x128xbf16, #tpu.memory_space<vmem>>, vector<128x128xbf16>
    %c0_90 = arith.constant 0 : index
    %c0_91 = arith.constant 0 : index
    %c0_92 = arith.constant 0 : index
    %91 = vector.load %arg3[%c0_90, %c0_91, %c0_92] : memref<1x256x128xf32, #tpu.memory_space<vmem>>, vector<1x256x128xf32>
    %92 = vector.shape_cast %91 : vector<1x256x128xf32> to vector<256x128xf32>
    %cst_93 = arith.constant dense<0.000000e+00> : vector<256x128xf32>
    %93 = tpu.matmul %89, %90, %cst_93 {dimension_numbers = #tpu.dot_dimension_numbers<[1], [0], [0], [1], [0, 0, 1, 1], [], []>} : vector<256x128xbf16>, vector<128x128xbf16>, vector<256x128xf32> -> vector<256x128xf32>
    %94 = arith.addf %92, %93 : vector<256x128xf32>
    %c0_94 = arith.constant 0 : index
    %c0_95 = arith.constant 0 : index
    %c0_96 = arith.constant 0 : index
    %95 = vector.load %arg3[%c0_94, %c0_95, %c0_96] : memref<1x256x128xf32, #tpu.memory_space<vmem>>, vector<1x256x128xf32>
    %96 = vector.shape_cast %95 : vector<1x256x128xf32> to vector<256x128xf32>
    %97 = vector.shape_cast %94 : vector<256x128xf32> to vector<1x256x128xf32>
    tpu.vector_store %arg3[%c0_94, %c0_95, %c0_96], %97 {strides = array<i32>} : memref<1x256x128xf32, #tpu.memory_space<vmem>>, vector<1x256x128xf32>,
    %c0_97 = arith.constant 0 : index
    %c2_98 = arith.constant 2 : index
    %c2_99 = arith.constant 2 : index
    %c0_100 = arith.constant 0 : index
    %98 = vector.load %arg1[%c0_97, %c2_98, %c2_99, %c0_100] : memref<1x18x18x128xf32, #tpu.memory_space<vmem>>, vector<1x16x16x128xf32>
    %99 = vector.shape_cast %98 : vector<1x16x16x128xf32> to vector<16x16x128xf32>
    %100 = vector.shape_cast %99 : vector<16x16x128xf32> to vector<256x128xf32>
    %101 = arith.truncf %100 : vector<256x128xf32> to vector<256x128xbf16>
    %c1024 = arith.constant 1024 : index
    %c0_101 = arith.constant 0 : index
    %102 = vector.load %arg2[%c1024, %c0_101] : memref<1152x128xbf16, #tpu.memory_space<vmem>>, vector<128x128xbf16>
    %c0_102 = arith.constant 0 : index
    %c0_103 = arith.constant 0 : index
    %c0_104 = arith.constant 0 : index
    %103 = vector.load %arg3[%c0_102, %c0_103, %c0_104] : memref<1x256x128xf32, #tpu.memory_space<vmem>>, vector<1x256x128xf32>
    %104 = vector.shape_cast %103 : vector<1x256x128xf32> to vector<256x128xf32>
    %cst_105 = arith.constant dense<0.000000e+00> : vector<256x128xf32>
    %105 = tpu.matmul %101, %102, %cst_105 {dimension_numbers = #tpu.dot_dimension_numbers<[1], [0], [0], [1], [0, 0, 1, 1], [], []>} : vector<256x128xbf16>, vector<128x128xbf16>, vector<256x128xf32> -> vector<256x128xf32>
    %106 = arith.addf %104, %105 : vector<256x128xf32>
    %c0_106 = arith.constant 0 : index
    %c0_107 = arith.constant 0 : index
    %c0_108 = arith.constant 0 : index
    %107 = vector.load %arg3[%c0_106, %c0_107, %c0_108] : memref<1x256x128xf32, #tpu.memory_space<vmem>>, vector<1x256x128xf32>
    %108 = vector.shape_cast %107 : vector<1x256x128xf32> to vector<256x128xf32>
    %109 = vector.shape_cast %106 : vector<256x128xf32> to vector<1x256x128xf32>
    tpu.vector_store %arg3[%c0_106, %c0_107, %c0_108], %109 {strides = array<i32>} : memref<1x256x128xf32, #tpu.memory_space<vmem>>, vector<1x256x128xf32>,
    %c0_109 = arith.constant 0 : index
    %c0_110 = arith.constant 0 : index
    %c0_111 = arith.constant 0 : index
    %110 = vector.load %arg3[%c0_109, %c0_110, %c0_111] : memref<1x256x128xf32, #tpu.memory_space<vmem>>, vector<1x256x128xf32>
    %111 = vector.shape_cast %110 : vector<1x256x128xf32> to vector<256x128xf32>
    %cst_112 = arith.constant dense<0.000000e+00> : vector<128xf32>
    %112 = vector.multi_reduction <add>, %111, %cst_112 [0] : vector<256x128xf32> to vector<128xf32>
    %113 = vector.shape_cast %112 : vector<128xf32> to vector<1x128xf32>
    %c0_113 = arith.constant 0 : index
    %c0_114 = arith.constant 0 : index
    %c0_115 = arith.constant 0 : index
    %114 = vector.load %arg4[%c0_113, %c0_114, %c0_115] : memref<1x1x128xf32, #tpu.memory_space<vmem>>, vector<1x1x128xf32>
    %115 = vector.shape_cast %114 : vector<1x1x128xf32> to vector<1x128xf32>
    %116 = vector.shape_cast %113 : vector<1x128xf32> to vector<1x1x128xf32>
    tpu.vector_store %arg4[%c0_113, %c0_114, %c0_115], %116 {strides = array<i32>} : memref<1x1x128xf32, #tpu.memory_space<vmem>>, vector<1x1x128xf32>,
    %117 = arith.mulf %111, %111 : vector<256x128xf32>
    %cst_116 = arith.constant dense<0.000000e+00> : vector<128xf32>
    %118 = vector.multi_reduction <add>, %117, %cst_116 [0] : vector<256x128xf32> to vector<128xf32>
    %119 = vector.shape_cast %118 : vector<128xf32> to vector<1x128xf32>
    %c0_117 = arith.constant 0 : index
    %c0_118 = arith.constant 0 : index
    %c0_119 = arith.constant 0 : index
    %120 = vector.load %arg5[%c0_117, %c0_118, %c0_119] : memref<1x1x128xf32, #tpu.memory_space<vmem>>, vector<1x1x128xf32>
    %121 = vector.shape_cast %120 : vector<1x1x128xf32> to vector<1x128xf32>
    %122 = vector.shape_cast %119 : vector<1x128xf32> to vector<1x1x128xf32>
    tpu.vector_store %arg5[%c0_117, %c0_118, %c0_119], %122 {strides = array<i32>} : memref<1x1x128xf32, #tpu.memory_space<vmem>>, vector<1x1x128xf32>,
    return
  }
  func.func @transform_0(%arg0: i32) -> (i32, i32, i32, i32) {
    %c0_i32 = arith.constant 0 : i32
    %c0_i32_0 = arith.constant 0 : i32
    %c0_i32_1 = arith.constant 0 : i32
    %c0_i32_2 = arith.constant 0 : i32
    return %arg0, %c0_i32, %c0_i32_0, %c0_i32_1 : i32, i32, i32, i32
  }
  func.func @transform_1(%arg0: i32) -> (i32, i32) {
    %c0_i32 = arith.constant 0 : i32
    %c0_i32_0 = arith.constant 0 : i32
    %c0_i32_1 = arith.constant 0 : i32
    return %c0_i32, %c0_i32_0 : i32, i32
  }
  func.func @transform_2(%arg0: i32) -> (i32, i32, i32) {
    %c0_i32 = arith.constant 0 : i32
    %c0_i32_0 = arith.constant 0 : i32
    %c0_i32_1 = arith.constant 0 : i32
    return %arg0, %c0_i32, %c0_i32_0 : i32, i32, i32
  }
  func.func @transform_3(%arg0: i32) -> (i32, i32, i32) {
    %c0_i32 = arith.constant 0 : i32
    %c0_i32_0 = arith.constant 0 : i32
    %c0_i32_1 = arith.constant 0 : i32
    return %arg0, %c0_i32, %c0_i32_0 : i32, i32, i32
  }
  func.func @transform_4(%arg0: i32) -> (i32, i32, i32) {
    %c0_i32 = arith.constant 0 : i32
    %c0_i32_0 = arith.constant 0 : i32
    %c0_i32_1 = arith.constant 0 : i32
    return %arg0, %c0_i32, %c0_i32_0 : i32, i32, i32
  }
}

module attributes {stable_mosaic.version = 11 : i64} {
  func.func @_bn_relu_pad_kernel(%arg0: i32, %arg1: memref<1x256x128xf32, #tpu.memory_space<vmem>>, %arg2: memref<2x1x128xf32, #tpu.memory_space<vmem>>, %arg3: memref<2x1x128xf32, #tpu.memory_space<vmem>>, %arg4: memref<1x128xf32, #tpu.memory_space<vmem>>, %arg5: memref<1x128xf32, #tpu.memory_space<vmem>>, %arg6: memref<1x18x18x128xf32, #tpu.memory_space<vmem>>) attributes {dimension_semantics = [#tpu.dimension_semantics<parallel>], iteration_bounds = array<i64: 2>, scalar_prefetch = 0 : i64, scratch_operands = 0 : i64, tpu.core_type = #tpu.core_type<tc>, window_params = [{transform_indices = @transform_0, window_bounds = array<i64: 1, 256, 128>}, {pipeline_mode = #tpu.pipeline_mode<synchronous>, transform_indices = @transform_1, window_bounds = array<i64: 2, 1, 128>}, {pipeline_mode = #tpu.pipeline_mode<synchronous>, transform_indices = @transform_2, window_bounds = array<i64: 2, 1, 128>}, {pipeline_mode = #tpu.pipeline_mode<synchronous>, transform_indices = @transform_3, window_bounds = array<i64: 1, 128>}, {pipeline_mode = #tpu.pipeline_mode<synchronous>, transform_indices = @transform_4, window_bounds = array<i64: 1, 128>}, {transform_indices = @transform_5, window_bounds = array<i64: 1, 18, 18, 128>}]} {
    %c0 = arith.constant 0 : index
    %c0_0 = arith.constant 0 : index
    %c0_1 = arith.constant 0 : index
    %0 = vector.load %arg2[%c0, %c0_0, %c0_1] : memref<2x1x128xf32, #tpu.memory_space<vmem>>, vector<2x1x128xf32>
    %c0_2 = arith.constant 0 : index
    %c0_3 = arith.constant 0 : index
    %c0_4 = arith.constant 0 : index
    %1 = vector.load %arg3[%c0_2, %c0_3, %c0_4] : memref<2x1x128xf32, #tpu.memory_space<vmem>>, vector<2x1x128xf32>
    %c0_5 = arith.constant 0 : index
    %c0_6 = arith.constant 0 : index
    %2 = vector.load %arg4[%c0_5, %c0_6] : memref<1x128xf32, #tpu.memory_space<vmem>>, vector<1x128xf32>
    %c0_7 = arith.constant 0 : index
    %c0_8 = arith.constant 0 : index
    %3 = vector.load %arg5[%c0_7, %c0_8] : memref<1x128xf32, #tpu.memory_space<vmem>>, vector<1x128xf32>
    %cst = arith.constant dense<0.000000e+00> : vector<1x128xf32>
    %4 = vector.multi_reduction <add>, %0, %cst [0] : vector<2x1x128xf32> to vector<1x128xf32>
    %cst_9 = arith.constant 0.001953125 : f32
    %5 = vector.broadcast %cst_9 : f32 to vector<1x128xf32>
    %6 = arith.mulf %4, %5 : vector<1x128xf32>
    %cst_10 = arith.constant dense<0.000000e+00> : vector<1x128xf32>
    %7 = vector.multi_reduction <add>, %1, %cst_10 [0] : vector<2x1x128xf32> to vector<1x128xf32>
    %cst_11 = arith.constant 0.001953125 : f32
    %8 = vector.broadcast %cst_11 : f32 to vector<1x128xf32>
    %9 = arith.mulf %7, %8 : vector<1x128xf32>
    %10 = arith.mulf %6, %6 : vector<1x128xf32>
    %11 = arith.subf %9, %10 : vector<1x128xf32>
    %cst_12 = arith.constant 0.000000e+00 : f32
    %12 = vector.broadcast %cst_12 : f32 to vector<1x128xf32>
    %13 = arith.maximumf %11, %12 : vector<1x128xf32>
    %cst_13 = arith.constant 9.99999974E-6 : f32
    %14 = vector.broadcast %cst_13 : f32 to vector<1x128xf32>
    %15 = arith.addf %13, %14 : vector<1x128xf32>
    %16 = math.rsqrt %15 : vector<1x128xf32>
    %17 = arith.mulf %2, %16 : vector<1x128xf32>
    %18 = arith.mulf %6, %17 : vector<1x128xf32>
    %19 = arith.subf %3, %18 : vector<1x128xf32>
    %cst_14 = arith.constant 0.000000e+00 : f32
    %20 = vector.broadcast %cst_14 : f32 to vector<1x18x18x128xf32>
    %c0_15 = arith.constant 0 : index
    %c0_16 = arith.constant 0 : index
    %c0_17 = arith.constant 0 : index
    %c0_18 = arith.constant 0 : index
    %21 = vector.load %arg6[%c0_15, %c0_16, %c0_17, %c0_18] : memref<1x18x18x128xf32, #tpu.memory_space<vmem>>, vector<1x18x18x128xf32>
    tpu.vector_store %arg6[%c0_15, %c0_16, %c0_17, %c0_18], %20 {strides = array<i32>} : memref<1x18x18x128xf32, #tpu.memory_space<vmem>>, vector<1x18x18x128xf32>,
    %c0_19 = arith.constant 0 : index
    %c0_20 = arith.constant 0 : index
    %c0_21 = arith.constant 0 : index
    %22 = vector.load %arg1[%c0_19, %c0_20, %c0_21] : memref<1x256x128xf32, #tpu.memory_space<vmem>>, vector<1x256x128xf32>
    %23 = vector.shape_cast %22 : vector<1x256x128xf32> to vector<256x128xf32>
    %24 = vector.broadcast %17 : vector<1x128xf32> to vector<256x128xf32>
    %25 = arith.mulf %23, %24 : vector<256x128xf32>
    %26 = vector.broadcast %19 : vector<1x128xf32> to vector<256x128xf32>
    %27 = arith.addf %25, %26 : vector<256x128xf32>
    %cst_22 = arith.constant 0.000000e+00 : f32
    %28 = vector.broadcast %cst_22 : f32 to vector<256x128xf32>
    %29 = arith.maximumf %27, %28 : vector<256x128xf32>
    %30 = vector.shape_cast %29 : vector<256x128xf32> to vector<16x16x128xf32>
    %c0_23 = arith.constant 0 : index
    %c1 = arith.constant 1 : index
    %c1_24 = arith.constant 1 : index
    %c0_25 = arith.constant 0 : index
    %31 = vector.load %arg6[%c0_23, %c1, %c1_24, %c0_25] : memref<1x18x18x128xf32, #tpu.memory_space<vmem>>, vector<1x16x16x128xf32>
    %32 = vector.shape_cast %31 : vector<1x16x16x128xf32> to vector<16x16x128xf32>
    %33 = vector.shape_cast %30 : vector<16x16x128xf32> to vector<1x16x16x128xf32>
    tpu.vector_store %arg6[%c0_23, %c1, %c1_24, %c0_25], %33 {strides = array<i32>} : memref<1x18x18x128xf32, #tpu.memory_space<vmem>>, vector<1x16x16x128xf32>,
    return
  }
  func.func @transform_0(%arg0: i32) -> (i32, i32, i32) {
    %c0_i32 = arith.constant 0 : i32
    %c0_i32_0 = arith.constant 0 : i32
    %c0_i32_1 = arith.constant 0 : i32
    return %arg0, %c0_i32, %c0_i32_0 : i32, i32, i32
  }
  func.func @transform_1(%arg0: i32) -> (i32, i32, i32) {
    %c0_i32 = arith.constant 0 : i32
    %c0_i32_0 = arith.constant 0 : i32
    %c0_i32_1 = arith.constant 0 : i32
    %c0_i32_2 = arith.constant 0 : i32
    return %c0_i32, %c0_i32_0, %c0_i32_1 : i32, i32, i32
  }
  func.func @transform_2(%arg0: i32) -> (i32, i32, i32) {
    %c0_i32 = arith.constant 0 : i32
    %c0_i32_0 = arith.constant 0 : i32
    %c0_i32_1 = arith.constant 0 : i32
    %c0_i32_2 = arith.constant 0 : i32
    return %c0_i32, %c0_i32_0, %c0_i32_1 : i32, i32, i32
  }
  func.func @transform_3(%arg0: i32) -> (i32, i32) {
    %c0_i32 = arith.constant 0 : i32
    %c0_i32_0 = arith.constant 0 : i32
    %c0_i32_1 = arith.constant 0 : i32
    return %c0_i32, %c0_i32_0 : i32, i32
  }
  func.func @transform_4(%arg0: i32) -> (i32, i32) {
    %c0_i32 = arith.constant 0 : i32
    %c0_i32_0 = arith.constant 0 : i32
    %c0_i32_1 = arith.constant 0 : i32
    return %c0_i32, %c0_i32_0 : i32, i32
  }
  func.func @transform_5(%arg0: i32) -> (i32, i32, i32, i32) {
    %c0_i32 = arith.constant 0 : i32
    %c0_i32_0 = arith.constant 0 : i32
    %c0_i32_1 = arith.constant 0 : i32
    %c0_i32_2 = arith.constant 0 : i32
    return %arg0, %c0_i32, %c0_i32_0, %c0_i32_1 : i32, i32, i32, i32
  }
}

module attributes {stable_mosaic.version = 11 : i64} {
  func.func @_fused_conv_kernel(%arg0: i32, %arg1: memref<1x16x16x128xf32, #tpu.memory_space<vmem>>, %arg2: memref<128x128xbf16, #tpu.memory_space<vmem>>, %arg3: memref<1x256x128xf32, #tpu.memory_space<vmem>>, %arg4: memref<1x1x128xf32, #tpu.memory_space<vmem>>, %arg5: memref<1x1x128xf32, #tpu.memory_space<vmem>>) attributes {dimension_semantics = [#tpu.dimension_semantics<parallel>], iteration_bounds = array<i64: 2>, scalar_prefetch = 0 : i64, scratch_operands = 0 : i64, tpu.core_type = #tpu.core_type<tc>, window_params = [{transform_indices = @transform_0, window_bounds = array<i64: 1, 16, 16, 128>}, {pipeline_mode = #tpu.pipeline_mode<synchronous>, transform_indices = @transform_1, window_bounds = array<i64: 128, 128>}, {transform_indices = @transform_2, window_bounds = array<i64: 1, 256, 128>}, {transform_indices = @transform_3, window_bounds = array<i64: 1, 1, 128>}, {transform_indices = @transform_4, window_bounds = array<i64: 1, 1, 128>}]} {
    %cst = arith.constant 0.000000e+00 : f32
    %0 = vector.broadcast %cst : f32 to vector<1x256x128xf32>
    %c0 = arith.constant 0 : index
    %c0_0 = arith.constant 0 : index
    %c0_1 = arith.constant 0 : index
    %1 = vector.load %arg3[%c0, %c0_0, %c0_1] : memref<1x256x128xf32, #tpu.memory_space<vmem>>, vector<1x256x128xf32>
    tpu.vector_store %arg3[%c0, %c0_0, %c0_1], %0 {strides = array<i32>} : memref<1x256x128xf32, #tpu.memory_space<vmem>>, vector<1x256x128xf32>,
    %c0_2 = arith.constant 0 : index
    %c0_3 = arith.constant 0 : index
    %c0_4 = arith.constant 0 : index
    %c0_5 = arith.constant 0 : index
    %2 = vector.load %arg1[%c0_2, %c0_3, %c0_4, %c0_5] : memref<1x16x16x128xf32, #tpu.memory_space<vmem>>, vector<1x16x16x128xf32>
    %3 = vector.shape_cast %2 : vector<1x16x16x128xf32> to vector<16x16x128xf32>
    %4 = vector.shape_cast %3 : vector<16x16x128xf32> to vector<256x128xf32>
    %5 = arith.truncf %4 : vector<256x128xf32> to vector<256x128xbf16>
    %c0_6 = arith.constant 0 : index
    %c0_7 = arith.constant 0 : index
    %6 = vector.load %arg2[%c0_6, %c0_7] : memref<128x128xbf16, #tpu.memory_space<vmem>>, vector<128x128xbf16>
    %c0_8 = arith.constant 0 : index
    %c0_9 = arith.constant 0 : index
    %c0_10 = arith.constant 0 : index
    %7 = vector.load %arg3[%c0_8, %c0_9, %c0_10] : memref<1x256x128xf32, #tpu.memory_space<vmem>>, vector<1x256x128xf32>
    %8 = vector.shape_cast %7 : vector<1x256x128xf32> to vector<256x128xf32>
    %cst_11 = arith.constant dense<0.000000e+00> : vector<256x128xf32>
    %9 = tpu.matmul %5, %6, %cst_11 {dimension_numbers = #tpu.dot_dimension_numbers<[1], [0], [0], [1], [0, 0, 1, 1], [], []>} : vector<256x128xbf16>, vector<128x128xbf16>, vector<256x128xf32> -> vector<256x128xf32>
    %10 = arith.addf %8, %9 : vector<256x128xf32>
    %c0_12 = arith.constant 0 : index
    %c0_13 = arith.constant 0 : index
    %c0_14 = arith.constant 0 : index
    %11 = vector.load %arg3[%c0_12, %c0_13, %c0_14] : memref<1x256x128xf32, #tpu.memory_space<vmem>>, vector<1x256x128xf32>
    %12 = vector.shape_cast %11 : vector<1x256x128xf32> to vector<256x128xf32>
    %13 = vector.shape_cast %10 : vector<256x128xf32> to vector<1x256x128xf32>
    tpu.vector_store %arg3[%c0_12, %c0_13, %c0_14], %13 {strides = array<i32>} : memref<1x256x128xf32, #tpu.memory_space<vmem>>, vector<1x256x128xf32>,
    %c0_15 = arith.constant 0 : index
    %c0_16 = arith.constant 0 : index
    %c0_17 = arith.constant 0 : index
    %14 = vector.load %arg3[%c0_15, %c0_16, %c0_17] : memref<1x256x128xf32, #tpu.memory_space<vmem>>, vector<1x256x128xf32>
    %15 = vector.shape_cast %14 : vector<1x256x128xf32> to vector<256x128xf32>
    %cst_18 = arith.constant dense<0.000000e+00> : vector<128xf32>
    %16 = vector.multi_reduction <add>, %15, %cst_18 [0] : vector<256x128xf32> to vector<128xf32>
    %17 = vector.shape_cast %16 : vector<128xf32> to vector<1x128xf32>
    %c0_19 = arith.constant 0 : index
    %c0_20 = arith.constant 0 : index
    %c0_21 = arith.constant 0 : index
    %18 = vector.load %arg4[%c0_19, %c0_20, %c0_21] : memref<1x1x128xf32, #tpu.memory_space<vmem>>, vector<1x1x128xf32>
    %19 = vector.shape_cast %18 : vector<1x1x128xf32> to vector<1x128xf32>
    %20 = vector.shape_cast %17 : vector<1x128xf32> to vector<1x1x128xf32>
    tpu.vector_store %arg4[%c0_19, %c0_20, %c0_21], %20 {strides = array<i32>} : memref<1x1x128xf32, #tpu.memory_space<vmem>>, vector<1x1x128xf32>,
    %21 = arith.mulf %15, %15 : vector<256x128xf32>
    %cst_22 = arith.constant dense<0.000000e+00> : vector<128xf32>
    %22 = vector.multi_reduction <add>, %21, %cst_22 [0] : vector<256x128xf32> to vector<128xf32>
    %23 = vector.shape_cast %22 : vector<128xf32> to vector<1x128xf32>
    %c0_23 = arith.constant 0 : index
    %c0_24 = arith.constant 0 : index
    %c0_25 = arith.constant 0 : index
    %24 = vector.load %arg5[%c0_23, %c0_24, %c0_25] : memref<1x1x128xf32, #tpu.memory_space<vmem>>, vector<1x1x128xf32>
    %25 = vector.shape_cast %24 : vector<1x1x128xf32> to vector<1x128xf32>
    %26 = vector.shape_cast %23 : vector<1x128xf32> to vector<1x1x128xf32>
    tpu.vector_store %arg5[%c0_23, %c0_24, %c0_25], %26 {strides = array<i32>} : memref<1x1x128xf32, #tpu.memory_space<vmem>>, vector<1x1x128xf32>,
    return
  }
  func.func @transform_0(%arg0: i32) -> (i32, i32, i32, i32) {
    %c0_i32 = arith.constant 0 : i32
    %c0_i32_0 = arith.constant 0 : i32
    %c0_i32_1 = arith.constant 0 : i32
    %c0_i32_2 = arith.constant 0 : i32
    return %arg0, %c0_i32, %c0_i32_0, %c0_i32_1 : i32, i32, i32, i32
  }
  func.func @transform_1(%arg0: i32) -> (i32, i32) {
    %c0_i32 = arith.constant 0 : i32
    %c0_i32_0 = arith.constant 0 : i32
    %c0_i32_1 = arith.constant 0 : i32
    return %c0_i32, %c0_i32_0 : i32, i32
  }
  func.func @transform_2(%arg0: i32) -> (i32, i32, i32) {
    %c0_i32 = arith.constant 0 : i32
    %c0_i32_0 = arith.constant 0 : i32
    %c0_i32_1 = arith.constant 0 : i32
    return %arg0, %c0_i32, %c0_i32_0 : i32, i32, i32
  }
  func.func @transform_3(%arg0: i32) -> (i32, i32, i32) {
    %c0_i32 = arith.constant 0 : i32
    %c0_i32_0 = arith.constant 0 : i32
    %c0_i32_1 = arith.constant 0 : i32
    return %arg0, %c0_i32, %c0_i32_0 : i32, i32, i32
  }
  func.func @transform_4(%arg0: i32) -> (i32, i32, i32) {
    %c0_i32 = arith.constant 0 : i32
    %c0_i32_0 = arith.constant 0 : i32
    %c0_i32_1 = arith.constant 0 : i32
    return %arg0, %c0_i32, %c0_i32_0 : i32, i32, i32
  }
}

module attributes {stable_mosaic.version = 11 : i64} {
  func.func @_residual_proj_kernel(%arg0: i32, %arg1: memref<1x256x128xf32, #tpu.memory_space<vmem>>, %arg2: memref<2x1x128xf32, #tpu.memory_space<vmem>>, %arg3: memref<2x1x128xf32, #tpu.memory_space<vmem>>, %arg4: memref<1x128xf32, #tpu.memory_space<vmem>>, %arg5: memref<1x128xf32, #tpu.memory_space<vmem>>, %arg6: memref<1x256x128xf32, #tpu.memory_space<vmem>>, %arg7: memref<2x1x128xf32, #tpu.memory_space<vmem>>, %arg8: memref<2x1x128xf32, #tpu.memory_space<vmem>>, %arg9: memref<1x128xf32, #tpu.memory_space<vmem>>, %arg10: memref<1x128xf32, #tpu.memory_space<vmem>>, %arg11: memref<1x256x128xf32, #tpu.memory_space<vmem>>) attributes {dimension_semantics = [#tpu.dimension_semantics<parallel>], iteration_bounds = array<i64: 2>, scalar_prefetch = 0 : i64, scratch_operands = 0 : i64, tpu.core_type = #tpu.core_type<tc>, window_params = [{transform_indices = @transform_0, window_bounds = array<i64: 1, 256, 128>}, {pipeline_mode = #tpu.pipeline_mode<synchronous>, transform_indices = @transform_1, window_bounds = array<i64: 2, 1, 128>}, {pipeline_mode = #tpu.pipeline_mode<synchronous>, transform_indices = @transform_2, window_bounds = array<i64: 2, 1, 128>}, {pipeline_mode = #tpu.pipeline_mode<synchronous>, transform_indices = @transform_3, window_bounds = array<i64: 1, 128>}, {pipeline_mode = #tpu.pipeline_mode<synchronous>, transform_indices = @transform_4, window_bounds = array<i64: 1, 128>}, {transform_indices = @transform_5, window_bounds = array<i64: 1, 256, 128>}, {pipeline_mode = #tpu.pipeline_mode<synchronous>, transform_indices = @transform_6, window_bounds = array<i64: 2, 1, 128>}, {pipeline_mode = #tpu.pipeline_mode<synchronous>, transform_indices = @transform_7, window_bounds = array<i64: 2, 1, 128>}, {pipeline_mode = #tpu.pipeline_mode<synchronous>, transform_indices = @transform_8, window_bounds = array<i64: 1, 128>}, {pipeline_mode = #tpu.pipeline_mode<synchronous>, transform_indices = @transform_9, window_bounds = array<i64: 1, 128>}, {transform_indices = @transform_10, window_bounds = array<i64: 1, 256, 128>}]} {
    %c0 = arith.constant 0 : index
    %c0_0 = arith.constant 0 : index
    %c0_1 = arith.constant 0 : index
    %0 = vector.load %arg2[%c0, %c0_0, %c0_1] : memref<2x1x128xf32, #tpu.memory_space<vmem>>, vector<2x1x128xf32>
    %c0_2 = arith.constant 0 : index
    %c0_3 = arith.constant 0 : index
    %c0_4 = arith.constant 0 : index
    %1 = vector.load %arg3[%c0_2, %c0_3, %c0_4] : memref<2x1x128xf32, #tpu.memory_space<vmem>>, vector<2x1x128xf32>
    %c0_5 = arith.constant 0 : index
    %c0_6 = arith.constant 0 : index
    %2 = vector.load %arg4[%c0_5, %c0_6] : memref<1x128xf32, #tpu.memory_space<vmem>>, vector<1x128xf32>
    %c0_7 = arith.constant 0 : index
    %c0_8 = arith.constant 0 : index
    %3 = vector.load %arg5[%c0_7, %c0_8] : memref<1x128xf32, #tpu.memory_space<vmem>>, vector<1x128xf32>
    %cst = arith.constant dense<0.000000e+00> : vector<1x128xf32>
    %4 = vector.multi_reduction <add>, %0, %cst [0] : vector<2x1x128xf32> to vector<1x128xf32>
    %cst_9 = arith.constant 0.001953125 : f32
    %5 = vector.broadcast %cst_9 : f32 to vector<1x128xf32>
    %6 = arith.mulf %4, %5 : vector<1x128xf32>
    %cst_10 = arith.constant dense<0.000000e+00> : vector<1x128xf32>
    %7 = vector.multi_reduction <add>, %1, %cst_10 [0] : vector<2x1x128xf32> to vector<1x128xf32>
    %cst_11 = arith.constant 0.001953125 : f32
    %8 = vector.broadcast %cst_11 : f32 to vector<1x128xf32>
    %9 = arith.mulf %7, %8 : vector<1x128xf32>
    %10 = arith.mulf %6, %6 : vector<1x128xf32>
    %11 = arith.subf %9, %10 : vector<1x128xf32>
    %cst_12 = arith.constant 0.000000e+00 : f32
    %12 = vector.broadcast %cst_12 : f32 to vector<1x128xf32>
    %13 = arith.maximumf %11, %12 : vector<1x128xf32>
    %cst_13 = arith.constant 9.99999974E-6 : f32
    %14 = vector.broadcast %cst_13 : f32 to vector<1x128xf32>
    %15 = arith.addf %13, %14 : vector<1x128xf32>
    %16 = math.rsqrt %15 : vector<1x128xf32>
    %17 = arith.mulf %2, %16 : vector<1x128xf32>
    %18 = arith.mulf %6, %17 : vector<1x128xf32>
    %19 = arith.subf %3, %18 : vector<1x128xf32>
    %c0_14 = arith.constant 0 : index
    %c0_15 = arith.constant 0 : index
    %c0_16 = arith.constant 0 : index
    %20 = vector.load %arg7[%c0_14, %c0_15, %c0_16] : memref<2x1x128xf32, #tpu.memory_space<vmem>>, vector<2x1x128xf32>
    %c0_17 = arith.constant 0 : index
    %c0_18 = arith.constant 0 : index
    %c0_19 = arith.constant 0 : index
    %21 = vector.load %arg8[%c0_17, %c0_18, %c0_19] : memref<2x1x128xf32, #tpu.memory_space<vmem>>, vector<2x1x128xf32>
    %c0_20 = arith.constant 0 : index
    %c0_21 = arith.constant 0 : index
    %22 = vector.load %arg9[%c0_20, %c0_21] : memref<1x128xf32, #tpu.memory_space<vmem>>, vector<1x128xf32>
    %c0_22 = arith.constant 0 : index
    %c0_23 = arith.constant 0 : index
    %23 = vector.load %arg10[%c0_22, %c0_23] : memref<1x128xf32, #tpu.memory_space<vmem>>, vector<1x128xf32>
    %cst_24 = arith.constant dense<0.000000e+00> : vector<1x128xf32>
    %24 = vector.multi_reduction <add>, %20, %cst_24 [0] : vector<2x1x128xf32> to vector<1x128xf32>
    %cst_25 = arith.constant 0.001953125 : f32
    %25 = vector.broadcast %cst_25 : f32 to vector<1x128xf32>
    %26 = arith.mulf %24, %25 : vector<1x128xf32>
    %cst_26 = arith.constant dense<0.000000e+00> : vector<1x128xf32>
    %27 = vector.multi_reduction <add>, %21, %cst_26 [0] : vector<2x1x128xf32> to vector<1x128xf32>
    %cst_27 = arith.constant 0.001953125 : f32
    %28 = vector.broadcast %cst_27 : f32 to vector<1x128xf32>
    %29 = arith.mulf %27, %28 : vector<1x128xf32>
    %30 = arith.mulf %26, %26 : vector<1x128xf32>
    %31 = arith.subf %29, %30 : vector<1x128xf32>
    %cst_28 = arith.constant 0.000000e+00 : f32
    %32 = vector.broadcast %cst_28 : f32 to vector<1x128xf32>
    %33 = arith.maximumf %31, %32 : vector<1x128xf32>
    %cst_29 = arith.constant 9.99999974E-6 : f32
    %34 = vector.broadcast %cst_29 : f32 to vector<1x128xf32>
    %35 = arith.addf %33, %34 : vector<1x128xf32>
    %36 = math.rsqrt %35 : vector<1x128xf32>
    %37 = arith.mulf %22, %36 : vector<1x128xf32>
    %38 = arith.mulf %26, %37 : vector<1x128xf32>
    %39 = arith.subf %23, %38 : vector<1x128xf32>
    %c0_30 = arith.constant 0 : index
    %c0_31 = arith.constant 0 : index
    %c0_32 = arith.constant 0 : index
    %40 = vector.load %arg1[%c0_30, %c0_31, %c0_32] : memref<1x256x128xf32, #tpu.memory_space<vmem>>, vector<1x256x128xf32>
    %41 = vector.shape_cast %40 : vector<1x256x128xf32> to vector<256x128xf32>
    %42 = vector.broadcast %17 : vector<1x128xf32> to vector<256x128xf32>
    %43 = arith.mulf %41, %42 : vector<256x128xf32>
    %44 = vector.broadcast %19 : vector<1x128xf32> to vector<256x128xf32>
    %45 = arith.addf %43, %44 : vector<256x128xf32>
    %c0_33 = arith.constant 0 : index
    %c0_34 = arith.constant 0 : index
    %c0_35 = arith.constant 0 : index
    %46 = vector.load %arg6[%c0_33, %c0_34, %c0_35] : memref<1x256x128xf32, #tpu.memory_space<vmem>>, vector<1x256x128xf32>
    %47 = vector.shape_cast %46 : vector<1x256x128xf32> to vector<256x128xf32>
    %48 = vector.broadcast %37 : vector<1x128xf32> to vector<256x128xf32>
    %49 = arith.mulf %47, %48 : vector<256x128xf32>
    %50 = arith.addf %45, %49 : vector<256x128xf32>
    %51 = vector.broadcast %39 : vector<1x128xf32> to vector<256x128xf32>
    %52 = arith.addf %50, %51 : vector<256x128xf32>
    %cst_36 = arith.constant 0.000000e+00 : f32
    %53 = vector.broadcast %cst_36 : f32 to vector<256x128xf32>
    %54 = arith.maximumf %52, %53 : vector<256x128xf32>
    %c0_37 = arith.constant 0 : index
    %c0_38 = arith.constant 0 : index
    %c0_39 = arith.constant 0 : index
    %55 = vector.load %arg11[%c0_37, %c0_38, %c0_39] : memref<1x256x128xf32, #tpu.memory_space<vmem>>, vector<1x256x128xf32>
    %56 = vector.shape_cast %55 : vector<1x256x128xf32> to vector<256x128xf32>
    %57 = vector.shape_cast %54 : vector<256x128xf32> to vector<1x256x128xf32>
    tpu.vector_store %arg11[%c0_37, %c0_38, %c0_39], %57 {strides = array<i32>} : memref<1x256x128xf32, #tpu.memory_space<vmem>>, vector<1x256x128xf32>,
    return
  }
  func.func @transform_0(%arg0: i32) -> (i32, i32, i32) {
    %c0_i32 = arith.constant 0 : i32
    %c0_i32_0 = arith.constant 0 : i32
    %c0_i32_1 = arith.constant 0 : i32
    return %arg0, %c0_i32, %c0_i32_0 : i32, i32, i32
  }
  func.func @transform_1(%arg0: i32) -> (i32, i32, i32) {
    %c0_i32 = arith.constant 0 : i32
    %c0_i32_0 = arith.constant 0 : i32
    %c0_i32_1 = arith.constant 0 : i32
    %c0_i32_2 = arith.constant 0 : i32
    return %c0_i32, %c0_i32_0, %c0_i32_1 : i32, i32, i32
  }
  func.func @transform_2(%arg0: i32) -> (i32, i32, i32) {
    %c0_i32 = arith.constant 0 : i32
    %c0_i32_0 = arith.constant 0 : i32
    %c0_i32_1 = arith.constant 0 : i32
    %c0_i32_2 = arith.constant 0 : i32
    return %c0_i32, %c0_i32_0, %c0_i32_1 : i32, i32, i32
  }
  func.func @transform_3(%arg0: i32) -> (i32, i32) {
    %c0_i32 = arith.constant 0 : i32
    %c0_i32_0 = arith.constant 0 : i32
    %c0_i32_1 = arith.constant 0 : i32
    return %c0_i32, %c0_i32_0 : i32, i32
  }
  func.func @transform_4(%arg0: i32) -> (i32, i32) {
    %c0_i32 = arith.constant 0 : i32
    %c0_i32_0 = arith.constant 0 : i32
    %c0_i32_1 = arith.constant 0 : i32
    return %c0_i32, %c0_i32_0 : i32, i32
  }
  func.func @transform_5(%arg0: i32) -> (i32, i32, i32) {
    %c0_i32 = arith.constant 0 : i32
    %c0_i32_0 = arith.constant 0 : i32
    %c0_i32_1 = arith.constant 0 : i32
    return %arg0, %c0_i32, %c0_i32_0 : i32, i32, i32
  }
  func.func @transform_6(%arg0: i32) -> (i32, i32, i32) {
    %c0_i32 = arith.constant 0 : i32
    %c0_i32_0 = arith.constant 0 : i32
    %c0_i32_1 = arith.constant 0 : i32
    %c0_i32_2 = arith.constant 0 : i32
    return %c0_i32, %c0_i32_0, %c0_i32_1 : i32, i32, i32
  }
  func.func @transform_7(%arg0: i32) -> (i32, i32, i32) {
    %c0_i32 = arith.constant 0 : i32
    %c0_i32_0 = arith.constant 0 : i32
    %c0_i32_1 = arith.constant 0 : i32
    %c0_i32_2 = arith.constant 0 : i32
    return %c0_i32, %c0_i32_0, %c0_i32_1 : i32, i32, i32
  }
  func.func @transform_8(%arg0: i32) -> (i32, i32) {
    %c0_i32 = arith.constant 0 : i32
    %c0_i32_0 = arith.constant 0 : i32
    %c0_i32_1 = arith.constant 0 : i32
    return %c0_i32, %c0_i32_0 : i32, i32
  }
  func.func @transform_9(%arg0: i32) -> (i32, i32) {
    %c0_i32 = arith.constant 0 : i32
    %c0_i32_0 = arith.constant 0 : i32
    %c0_i32_1 = arith.constant 0 : i32
    return %c0_i32, %c0_i32_0 : i32, i32
  }
  func.func @transform_10(%arg0: i32) -> (i32, i32, i32) {
    %c0_i32 = arith.constant 0 : i32
    %c0_i32_0 = arith.constant 0 : i32
    %c0_i32_1 = arith.constant 0 : i32
    return %arg0, %c0_i32, %c0_i32_0 : i32, i32, i32
  }
}

</mosaic_0001>

<llo_original>
// kernel: basic_block_forward.6
$region0: #{basic_block_forward.6}
  #allocation0 [shape = 'u32[]', space=smem, size = 0x4, offset = 0x4, fixed_abs, tag = 'smem constant byte address 0x4 - core index']
  #allocation1 [shape = 'u32[144,128]{1,0:T(1,128)}', space=vmem, size = 0x12000, scoped, tag = 'internal scratch']
  %s0 = inlined_call_operand.vmem [shape: f32[2,256,128], index: 0, kind: input, shape index: {}]
  %s1 = inlined_call_operand.vmem [shape: f32[2,1,128], index: 1, kind: input, shape index: {}]
  %s2 = inlined_call_operand.vmem [shape: f32[2,1,128], index: 2, kind: input, shape index: {}]
  %s3 = inlined_call_operand.vmem [shape: f32[1,128], index: 3, kind: input, shape index: {}]
  %s4 = inlined_call_operand.vmem [shape: f32[1,128], index: 4, kind: input, shape index: {}]
  %s5 = inlined_call_operand.vmem [shape: f32[2,18,18,128], index: 5, kind: output, shape index: {}]
  %s6 = sld [smem:[#allocation0]]
  $region53: #{basic_block_forward.6} parent=0
    _
  %s8 = ssub.s32 1, %s6
  %s9 = scalar_select 0, %s8, %s6
  loop: start=0, step=1, limit=4
  $region2: #{basic_block_forward.6} parent=0 // loop_pre_header
    _
  $region3: #{basic_block_forward.6} parent=0 // loop_header
    %s11 = sphi 0, %s15
    %p12 = scmp.ge.s32.totalorder %s11, 4
    %s21 = sphi 0, %s23
    %s24 = sphi 0, %s21
    %s25 = sphi 0, %s24
    %s41 = sphi 0, %s25
    %s45 = sphi 0, %s45
    %s47 = sphi 0, %s45
    %s48 = sphi 0, %s47
    %s62 = sphi 0, %s48
    %s66 = sphi 0, %s66
    %s68 = sphi 0, %s66
    %s69 = sphi 0, %s68
    %s83 = sphi 0, %s69
    %s87 = sphi 0, %s87
    %s89 = sphi 0, %s87
    %s90 = sphi 0, %s89
    %s104 = sphi 0, %s90
    %s108 = sphi 0, %s108
    %s110 = sphi 0, %s108
    %s111 = sphi 0, %s110
    %s125 = sphi 0, %s111
    %s131 = sphi 0, %s133
    %s134 = sphi 0, %s131
    %s135 = sphi 0, %s134
    %s151 = sphi 0, %s135
  $region4: #{basic_block_forward.6} parent=0 // loop_header_branch
    %14 = sbr.rel (%p12) target = $region8
  $region5: #{basic_block_forward.6} parent=0 // loop_body
    %s16 = ssub.s32 %s11, 1
    %s17 = ssub.s32 %s11, 2
    %s18 = sadd.s32 %s11, 1
    %s19 = ssub.s32 %s11, %s18
    %p20 = scmp.eq.s32.totalorder %s19, 0
    %s22 = sadd.s32 %s21, 1
    %s23 = scalar_select %p20, %s21, %s22
    %p26 = pneg %p20
    %p27 = scmp.eq.s32.totalorder %s11, 1
    %p28 = por %p26, %p27
    %p29 = scmp.ne.s32.totalorder %s21, %s24
    %p30 = scmp.eq.s32.totalorder %s11, 0
    %p31 = por %p29, %p30
    %p32 = scmp.ne.s32.totalorder %s21, %s24
    %p33 = scmp.eq.s32.totalorder %s16, 1
    %p34 = por %p32, %p33
    %p35 = scmp.ne.s32.totalorder %s24, %s25
    %p36 = scmp.eq.s32.totalorder %s16, 0
    %p37 = por %p35, %p36
    %p38 = scmp.ne.s32.totalorder %s24, %s25
    %p39 = scmp.eq.s32.totalorder %s17, 1
    %p40 = por %p38, %p39
    %p42 = scmp.ne.s32.totalorder %s25, %s41
    %p43 = scmp.eq.s32.totalorder %s17, 0
    %p44 = por %p42, %p43
    %s46 = sadd.s32 %s45, 1
    %p49 = scmp.eq.s32.totalorder %s11, 1
    %p50 = scmp.ne.s32.totalorder %s45, %s47
    %p51 = scmp.eq.s32.totalorder %s11, 0
    %p52 = por %p50, %p51
    %p53 = scmp.ne.s32.totalorder %s45, %s47
    %p54 = scmp.eq.s32.totalorder %s16, 1
    %p55 = por %p53, %p54
    %p56 = scmp.ne.s32.totalorder %s47, %s48
    %p57 = scmp.eq.s32.totalorder %s16, 0
    %p58 = por %p56, %p57
    %p59 = scmp.ne.s32.totalorder %s47, %s48
    %p60 = scmp.eq.s32.totalorder %s17, 1
    %p61 = por %p59, %p60
    %p63 = scmp.ne.s32.totalorder %s48, %s62
    %p64 = scmp.eq.s32.totalorder %s17, 0
    %p65 = por %p63, %p64
    %s67 = sadd.s32 %s66, 1
    %p70 = scmp.eq.s32.totalorder %s11, 1
    %p71 = scmp.ne.s32.totalorder %s66, %s68
    %p72 = scmp.eq.s32.totalorder %s11, 0
    %p73 = por %p71, %p72
    %p74 = scmp.ne.s32.totalorder %s66, %s68
    %p75 = scmp.eq.s32.totalorder %s16, 1
    %p76 = por %p74, %p75
    %p77 = scmp.ne.s32.totalorder %s68, %s69
    %p78 = scmp.eq.s32.totalorder %s16, 0
    %p79 = por %p77, %p78
    %p80 = scmp.ne.s32.totalorder %s68, %s69
    %p81 = scmp.eq.s32.totalorder %s17, 1
    %p82 = por %p80, %p81
    %p84 = scmp.ne.s32.totalorder %s69, %s83
    %p85 = scmp.eq.s32.totalorder %s17, 0
    %p86 = por %p84, %p85
    %s88 = sadd.s32 %s87, 1
    %p91 = scmp.eq.s32.totalorder %s11, 1
    %p92 = scmp.ne.s32.totalorder %s87, %s89
    %p93 = scmp.eq.s32.totalorder %s11, 0
    %p94 = por %p92, %p93
    %p95 = scmp.ne.s32.totalorder %s87, %s89
    %p96 = scmp.eq.s32.totalorder %s16, 1
    %p97 = por %p95, %p96
    %p98 = scmp.ne.s32.totalorder %s89, %s90
    %p99 = scmp.eq.s32.totalorder %s16, 0
    %p100 = por %p98, %p99
    %p101 = scmp.ne.s32.totalorder %s89, %s90
    %p102 = scmp.eq.s32.totalorder %s17, 1
    %p103 = por %p101, %p102
    %p105 = scmp.ne.s32.totalorder %s90, %s104
    %p106 = scmp.eq.s32.totalorder %s17, 0
    %p107 = por %p105, %p106
    %s109 = sadd.s32 %s108, 1
    %p112 = scmp.eq.s32.totalorder %s11, 1
    %p113 = scmp.ne.s32.totalorder %s108, %s110
    %p114 = scmp.eq.s32.totalorder %s11, 0
    %p115 = por %p113, %p114
    %p116 = scmp.ne.s32.totalorder %s108, %s110
    %p117 = scmp.eq.s32.totalorder %s16, 1
    %p118 = por %p116, %p117
    %p119 = scmp.ne.s32.totalorder %s110, %s111
    %p120 = scmp.eq.s32.totalorder %s16, 0
    %p121 = por %p119, %p120
    %p122 = scmp.ne.s32.totalorder %s110, %s111
    %p123 = scmp.eq.s32.totalorder %s17, 1
    %p124 = por %p122, %p123
    %p126 = scmp.ne.s32.totalorder %s111, %s125
    %p127 = scmp.eq.s32.totalorder %s17, 0
    %p128 = por %p126, %p127
    %s129 = ssub.s32 %s11, %s18
    %p130 = scmp.eq.s32.totalorder %s129, 0
    %s132 = sadd.s32 %s131, 1
    %s133 = scalar_select %p130, %s131, %s132
    %p136 = pneg %p130
    %p137 = scmp.eq.s32.totalorder %s11, 1
    %p138 = por %p136, %p137
    %p139 = scmp.ne.s32.totalorder %s131, %s134
    %p140 = scmp.eq.s32.totalorder %s11, 0
    %p141 = por %p139, %p140
    %p142 = scmp.ne.s32.totalorder %s131, %s134
    %p143 = scmp.eq.s32.totalorder %s16, 1
    %p144 = por %p142, %p143
    %p145 = scmp.ne.s32.totalorder %s134, %s135
    %p146 = scmp.eq.s32.totalorder %s16, 0
    %p147 = por %p145, %p146
    %p148 = scmp.ne.s32.totalorder %s134, %s135
    %p149 = scmp.eq.s32.totalorder %s17, 1
    %p150 = por %p148, %p149
    %p152 = scmp.ne.s32.totalorder %s135, %s151
    %p153 = scmp.eq.s32.totalorder %s17, 0
    %p154 = por %p152, %p153
    %p155 = scmp.le.s32.totalorder 1, %s11
    %p156 = scmp.lt.s32.totalorder %s11, 3
    %p157 = pnand %p155, %p156
    %p158 = pneg %p157
    // Predicated region
    $region9: #{basic_block_forward.6} parent=5 // pred_check
      _
    $region10: #{basic_block_forward.6} parent=5 // pred_check_branch
      %160 = sbr.rel (%p157) target = $region12
    $region11: #{basic_block_forward.6} parent=5 // pred_region
      %s161 = ssub.s32 %s11, 1
      // Predicated region
      $region13: #{basic_block_forward.6} parent=11 // pred_check
        %p162 = pneg %p58
      $region14: #{basic_block_forward.6} parent=11 // pred_check_branch
        %164 = sbr.rel (%p162) target = $region16
      $region15: #{basic_block_forward.6} parent=11 // pred_region
        _
      $region16: #{basic_block_forward.6} parent=11 // pred_fallthru
        _
      // Predicated region
      $region17: #{basic_block_forward.6} parent=11 // pred_check
        %p165 = pneg %p79
      $region18: #{basic_block_forward.6} parent=11 // pred_check_branch
        %167 = sbr.rel (%p165) target = $region20
      $region19: #{basic_block_forward.6} parent=11 // pred_region
        _
      $region20: #{basic_block_forward.6} parent=11 // pred_fallthru
        _
      // Predicated region
      $region21: #{basic_block_forward.6} parent=11 // pred_check
        %p168 = pneg %p100
      $region22: #{basic_block_forward.6} parent=11 // pred_check_branch
        %170 = sbr.rel (%p168) target = $region24
      $region23: #{basic_block_forward.6} parent=11 // pred_region
        _
      $region24: #{basic_block_forward.6} parent=11 // pred_fallthru
        _
      // Predicated region
      $region25: #{basic_block_forward.6} parent=11 // pred_check
        %p171 = pneg %p121
      $region26: #{basic_block_forward.6} parent=11 // pred_check_branch
        %173 = sbr.rel (%p171) target = $region28
      $region27: #{basic_block_forward.6} parent=11 // pred_region
        _
      $region28: #{basic_block_forward.6} parent=11 // pred_fallthru
        _
    $region12: #{basic_block_forward.6} parent=5 // pred_fallthru
      _
    %p174 = scmp.lt.s32.totalorder %s11, 2
    // Predicated region
    $region29: #{basic_block_forward.6} parent=5 // pred_check
      %p175 = pneg %p174
    $region30: #{basic_block_forward.6} parent=5 // pred_check_branch
      %177 = sbr.rel (%p175) target = $region32
    $region31: #{basic_block_forward.6} parent=5 // pred_region
      // Predicated region
      $region33: #{basic_block_forward.6} parent=31 // pred_check
        %p178 = pneg %p31
      $region34: #{basic_block_forward.6} parent=31 // pred_check_branch
        %180 = sbr.rel (%p178) target = $region36
      $region35: #{basic_block_forward.6} parent=31 // pred_region
        %p181 = scmp.lt.s32.totalorder %s11, 1
        %s182 = scalar_select %p181, %s11, 1
        %s183 = smul.addr %s182, 32
        %s184 = smul.addr %s183, 8
        %s185 = scalar_lea.vmem %s0, %s184
      $region36: #{basic_block_forward.6} parent=31 // pred_fallthru
        _
    $region32: #{basic_block_forward.6} parent=5 // pred_fallthru
      _
    %p186 = scmp.le.s32.totalorder 1, %s11
    %p187 = scmp.lt.s32.totalorder %s11, 3
    %p188 = pnand %p186, %p187
    %p189 = pneg %p188
    // Predicated region
    $region37: #{basic_block_forward.6} parent=5 // pred_check
      _
    $region38: #{basic_block_forward.6} parent=5 // pred_check_branch
      %191 = sbr.rel (%p188) target = $region40
    $region39: #{basic_block_forward.6} parent=5 // pred_region
      %s192 = ssub.s32 %s11, 1
      %p193 = scmp.lt.s32.totalorder %s16, 1
      %s194 = scalar_select %p193, %s16, 1
      %s195 = smul.addr %s194, 32
      %s196 = smul.addr %s195, 8
      %s197 = scalar_lea.vmem %s0, %s196
      %p198 = pneg %p37
      %p199 = pneg %p34
      %p200 = pneg %p58
      %p201 = pneg %p55
      %p202 = pneg %p79
      %p203 = pneg %p76
      %p204 = pneg %p100
      %p205 = pneg %p97
      %p206 = pneg %p121
      %p207 = pneg %p118
      %p208 = pneg %p147
      %p209 = pneg %p144
      %p210 = scmp.lt.s32.totalorder %s16, 1
      %s211 = scalar_select %p210, %s16, 1
      %s212 = smul.addr %s211, 54
      %s213 = smul.addr %s212, 8
      %s214 = scalar_lea.vmem %s5, %s213
      %p215 = scmp.lt.s32.totalorder %s16, 1
      %s216 = scalar_select %p215, %s16, 1
      %s217 = smul.addr %s216, 32
      %s218 = smul.addr %s217, 8
      %s219 = scalar_lea.vmem %s0, %s218
      %p220 = scmp.lt.s32.totalorder %s16, 1
      %s221 = scalar_select %p220, %s16, 1
      %s222 = smul.addr %s221, 54
      %s223 = smul.addr %s222, 8
      %s224 = scalar_lea.vmem %s5, %s223
      %v225 = vld [vmem:[%s1] sm:$0x1]
      %v226 = vld [vmem:[%s1 + $0x1] sm:$0x1]
      %v227 = vld [vmem:[%s2] sm:$0x1]
      %v228 = vld [vmem:[%s2 + $0x1] sm:$0x1]
      %v229 = vld [vmem:[%s3] sm:$0x1]
      %v230 = vld [vmem:[%s4] sm:$0x1]
      %vm231 = vcmask 1040384
      %v232 = vsel %vm231, %v225, 0.0
      %v233 = vsel %vm231, %v226, 0.0
      %v234 = vadd.f32 %v232, %v233
      %v235 = vmul.f32 %v234, 0.001953125
      %v236 = vsel %vm231, %v227, 0.0
      %v237 = vsel %vm231, %v228, 0.0
      %v238 = vadd.f32 %v236, %v237
      %v239 = vmul.f32 %v238, 0.001953125
      %v240 = vmul.f32 %v235, %v235
      %v241 = vsub.f32 %v239, %v240
      %v242 = vmax.f32 %v241, 0.0
      %v243 = vadd.f32 %v242, 1e-05
      %v244 = vrsqrt.pop %v243
      %v245 = vmul.f32 %v229, %v244
      %v246 = vmul.f32 %v235, %v245
      %v247 = vsub.f32 %v230, %v246
      %248 = vst [vmem:[%s224] sm:$0xff] 0.0
      %249 = vst [vmem:[%s224 + $0x8] sm:$0xff] 0.0
      %250 = vst [vmem:[%s224 + $0x10] sm:$0x3] 0.0
      %251 = vst [vmem:[%s224 + $0x18] sm:$0xff] 0.0
      %252 = vst [vmem:[%s224 + $0x20] sm:$0xff] 0.0
      %253 = vst [vmem:[%s224 + $0x28] sm:$0x3] 0.0
      %254 = vst [vmem:[%s224 + $0x30] sm:$0xff] 0.0
      %255 = vst [vmem:[%s224 + $0x38] sm:$0xff] 0.0
      %256 = vst [vmem:[%s224 + $0x40] sm:$0x3] 0.0
      %257 = vst [vmem:[%s224 + $0x48] sm:$0xff] 0.0
      %258 = vst [vmem:[%s224 + $0x50] sm:$0xff] 0.0
      %259 = vst [vmem:[%s224 + $0x58] sm:$0x3] 0.0
      %260 = vst [vmem:[%s224 + $0x60] sm:$0xff] 0.0
      %261 = vst [vmem:[%s224 + $0x68] sm:$0xff] 0.0
      %262 = vst [vmem:[%s224 + $0x70] sm:$0x3] 0.0
      %263 = vst [vmem:[%s224 + $0x78] sm:$0xff] 0.0
      %264 = vst [vmem:[%s224 + $0x80] sm:$0xff] 0.0
      %265 = vst [vmem:[%s224 + $0x88] sm:$0x3] 0.0
      %266 = vst [vmem:[%s224 + $0x90] sm:$0xff] 0.0
      %267 = vst [vmem:[%s224 + $0x98] sm:$0xff] 0.0
      %268 = vst [vmem:[%s224 + $0xa0] sm:$0x3] 0.0
      %269 = vst [vmem:[%s224 + $0xa8] sm:$0xff] 0.0
      %270 = vst [vmem:[%s224 + $0xb0] sm:$0xff] 0.0
      %271 = vst [vmem:[%s224 + $0xb8] sm:$0x3] 0.0
      %272 = vst [vmem:[%s224 + $0xc0] sm:$0xff] 0.0
      %273 = vst [vmem:[%s224 + $0xc8] sm:$0xff] 0.0
      %274 = vst [vmem:[%s224 + $0xd0] sm:$0x3] 0.0
      %275 = vst [vmem:[%s224 + $0xd8] sm:$0xff] 0.0
      %276 = vst [vmem:[%s224 + $0xe0] sm:$0xff] 0.0
      %277 = vst [vmem:[%s224 + $0xe8] sm:$0x3] 0.0
      %278 = vst [vmem:[%s224 + $0xf0] sm:$0xff] 0.0
      %279 = vst [vmem:[%s224 + $0xf8] sm:$0xff] 0.0
      %280 = vst [vmem:[%s224 + $0x100] sm:$0x3] 0.0
      %281 = vst [vmem:[%s224 + $0x108] sm:$0xff] 0.0
      %282 = vst [vmem:[%s224 + $0x110] sm:$0xff] 0.0
      %283 = vst [vmem:[%s224 + $0x118] sm:$0x3] 0.0
      %284 = vst [vmem:[%s224 + $0x120] sm:$0xff] 0.0
      %285 = vst [vmem:[%s224 + $0x128] sm:$0xff] 0.0
      %286 = vst [vmem:[%s224 + $0x130] sm:$0x3] 0.0
      %287 = vst [vmem:[%s224 + $0x138] sm:$0xff] 0.0
      %288 = vst [vmem:[%s224 + $0x140] sm:$0xff] 0.0
      %289 = vst [vmem:[%s224 + $0x148] sm:$0x3] 0.0
      %290 = vst [vmem:[%s224 + $0x150] sm:$0xff] 0.0
      %291 = vst [vmem:[%s224 + $0x158] sm:$0xff] 0.0
      %292 = vst [vmem:[%s224 + $0x160] sm:$0x3] 0.0
      %293 = vst [vmem:[%s224 + $0x168] sm:$0xff] 0.0
      %294 = vst [vmem:[%s224 + $0x170] sm:$0xff] 0.0
      %295 = vst [vmem:[%s224 + $0x178] sm:$0x3] 0.0
      %296 = vst [vmem:[%s224 + $0x180] sm:$0xff] 0.0
      %297 = vst [vmem:[%s224 + $0x188] sm:$0xff] 0.0
      %298 = vst [vmem:[%s224 + $0x190] sm:$0x3] 0.0
      %299 = vst [vmem:[%s224 + $0x198] sm:$0xff] 0.0
      %300 = vst [vmem:[%s224 + $0x1a0] sm:$0xff] 0.0
      %301 = vst [vmem:[%s224 + $0x1a8] sm:$0x3] 0.0
      %v302 = vld [vmem:[%s219] sm:$0xff]
      %v303 = vld [vmem:[%s219 + $0x8] sm:$0xff]
      %v304 = vld [vmem:[%s219 + $0x10] sm:$0xff]
      %v305 = vld [vmem:[%s219 + $0x18] sm:$0xff]
      %v306 = vld [vmem:[%s219 + $0x20] sm:$0xff]
      %v307 = vld [vmem:[%s219 + $0x28] sm:$0xff]
      %v308 = vld [vmem:[%s219 + $0x30] sm:$0xff]
      %v309 = vld [vmem:[%s219 + $0x38] sm:$0xff]
      %v310 = vld [vmem:[%s219 + $0x40] sm:$0xff]
      %v311 = vld [vmem:[%s219 + $0x48] sm:$0xff]
      %v312 = vld [vmem:[%s219 + $0x50] sm:$0xff]
      %v313 = vld [vmem:[%s219 + $0x58] sm:$0xff]
      %v314 = vld [vmem:[%s219 + $0x60] sm:$0xff]
      %v315 = vld [vmem:[%s219 + $0x68] sm:$0xff]
      %v316 = vld [vmem:[%s219 + $0x70] sm:$0xff]
      %v317 = vld [vmem:[%s219 + $0x78] sm:$0xff]
      %v318 = vld [vmem:[%s219 + $0x80] sm:$0xff]
      %v319 = vld [vmem:[%s219 + $0x88] sm:$0xff]
      %v320 = vld [vmem:[%s219 + $0x90] sm:$0xff]
      %v321 = vld [vmem:[%s219 + $0x98] sm:$0xff]
      %v322 = vld [vmem:[%s219 + $0xa0] sm:$0xff]
      %v323 = vld [vmem:[%s219 + $0xa8] sm:$0xff]
      %v324 = vld [vmem:[%s219 + $0xb0] sm:$0xff]
      %v325 = vld [vmem:[%s219 + $0xb8] sm:$0xff]
      %v326 = vld [vmem:[%s219 + $0xc0] sm:$0xff]
      %v327 = vld [vmem:[%s219 + $0xc8] sm:$0xff]
      %v328 = vld [vmem:[%s219 + $0xd0] sm:$0xff]
      %v329 = vld [vmem:[%s219 + $0xd8] sm:$0xff]
      %v330 = vld [vmem:[%s219 + $0xe0] sm:$0xff]
      %v331 = vld [vmem:[%s219 + $0xe8] sm:$0xff]
      %v332 = vld [vmem:[%s219 + $0xf0] sm:$0xff]
      %v333 = vld [vmem:[%s219 + $0xf8] sm:$0xff]
      %v335 = vlaneseq
      %v336 = vshrl.u32 %v335, 7
      %v337 = vsub.s32 0, %v336
      %v338 = vrot.slane %v245, %v337
      %v340 = vmul.f32 %v302, %v338
      %v341 = vmul.f32 %v303, %v338
      %v342 = vmul.f32 %v304, %v338
      %v343 = vmul.f32 %v305, %v338
      %v344 = vmul.f32 %v306, %v338
      %v345 = vmul.f32 %v307, %v338
      %v346 = vmul.f32 %v308, %v338
      %v347 = vmul.f32 %v309, %v338
      %v348 = vmul.f32 %v310, %v338
      %v349 = vmul.f32 %v311, %v338
      %v350 = vmul.f32 %v312, %v338
      %v351 = vmul.f32 %v313, %v338
      %v352 = vmul.f32 %v314, %v338
      %v353 = vmul.f32 %v315, %v338
      %v354 = vmul.f32 %v316, %v338
      %v355 = vmul.f32 %v317, %v338
      %v356 = vmul.f32 %v318, %v338
      %v357 = vmul.f32 %v319, %v338
      %v358 = vmul.f32 %v320, %v338
      %v359 = vmul.f32 %v321, %v338
      %v360 = vmul.f32 %v322, %v338
      %v361 = vmul.f32 %v323, %v338
      %v362 = vmul.f32 %v324, %v338
      %v363 = vmul.f32 %v325, %v338
      %v364 = vmul.f32 %v326, %v338
      %v365 = vmul.f32 %v327, %v338
      %v366 = vmul.f32 %v328, %v338
      %v367 = vmul.f32 %v329, %v338
      %v368 = vmul.f32 %v330, %v338
      %v369 = vmul.f32 %v331, %v338
      %v370 = vmul.f32 %v332, %v338
      %v371 = vmul.f32 %v333, %v338
      %v373 = vlaneseq
      %v374 = vshrl.u32 %v373, 7
      %v375 = vsub.s32 0, %v374
      %v376 = vrot.slane %v247, %v375
      %v378 = vadd.f32 %v340, %v376
      %v379 = vadd.f32 %v341, %v376
      %v380 = vadd.f32 %v342, %v376
      %v381 = vadd.f32 %v343, %v376
      %v382 = vadd.f32 %v344, %v376
      %v383 = vadd.f32 %v345, %v376
      %v384 = vadd.f32 %v346, %v376
      %v385 = vadd.f32 %v347, %v376
      %v386 = vadd.f32 %v348, %v376
      %v387 = vadd.f32 %v349, %v376
      %v388 = vadd.f32 %v350, %v376
      %v389 = vadd.f32 %v351, %v376
      %v390 = vadd.f32 %v352, %v376
      %v391 = vadd.f32 %v353, %v376
      %v392 = vadd.f32 %v354, %v376
      %v393 = vadd.f32 %v355, %v376
      %v394 = vadd.f32 %v356, %v376
      %v395 = vadd.f32 %v357, %v376
      %v396 = vadd.f32 %v358, %v376
      %v397 = vadd.f32 %v359, %v376
      %v398 = vadd.f32 %v360, %v376
      %v399 = vadd.f32 %v361, %v376
      %v400 = vadd.f32 %v362, %v376
      %v401 = vadd.f32 %v363, %v376
      %v402 = vadd.f32 %v364, %v376
      %v403 = vadd.f32 %v365, %v376
      %v404 = vadd.f32 %v366, %v376
      %v405 = vadd.f32 %v367, %v376
      %v406 = vadd.f32 %v368, %v376
      %v407 = vadd.f32 %v369, %v376
      %v408 = vadd.f32 %v370, %v376
      %v409 = vadd.f32 %v371, %v376
      %v410 = vmax.f32 %v378, 0.0
      %v411 = vmax.f32 %v379, 0.0
      %v412 = vmax.f32 %v380, 0.0
      %v413 = vmax.f32 %v381, 0.0
      %v414 = vmax.f32 %v382, 0.0
      %v415 = vmax.f32 %v383, 0.0
      %v416 = vmax.f32 %v384, 0.0
      %v417 = vmax.f32 %v385, 0.0
      %v418 = vmax.f32 %v386, 0.0
      %v419 = vmax.f32 %v387, 0.0
      %v420 = vmax.f32 %v388, 0.0
      %v421 = vmax.f32 %v389, 0.0
      %v422 = vmax.f32 %v390, 0.0
      %v423 = vmax.f32 %v391, 0.0
      %v424 = vmax.f32 %v392, 0.0
      %v425 = vmax.f32 %v393, 0.0
      %v426 = vmax.f32 %v394, 0.0
      %v427 = vmax.f32 %v395, 0.0
      %v428 = vmax.f32 %v396, 0.0
      %v429 = vmax.f32 %v397, 0.0
      %v430 = vmax.f32 %v398, 0.0
      %v431 = vmax.f32 %v399, 0.0
      %v432 = vmax.f32 %v400, 0.0
      %v433 = vmax.f32 %v401, 0.0
      %v434 = vmax.f32 %v402, 0.0
      %v435 = vmax.f32 %v403, 0.0
      %v436 = vmax.f32 %v404, 0.0
      %v437 = vmax.f32 %v405, 0.0
      %v438 = vmax.f32 %v406, 0.0
      %v439 = vmax.f32 %v407, 0.0
      %v440 = vmax.f32 %v408, 0.0
      %v441 = vmax.f32 %v409, 0.0
      %s442 = scalar_lea.vmem %s224, 24
      %443 = vst [vmem:[%s442 + $0x1] sm:$0xff] %v410
      %444 = vst [vmem:[%s442 + $0x9] sm:$0xff] %v411
      %445 = vst [vmem:[%s442 + $0x19] sm:$0xff] %v412
      %446 = vst [vmem:[%s442 + $0x21] sm:$0xff] %v413
      %447 = vst [vmem:[%s442 + $0x31] sm:$0xff] %v414
      %448 = vst [vmem:[%s442 + $0x39] sm:$0xff] %v415
      %449 = vst [vmem:[%s442 + $0x49] sm:$0xff] %v416
      %450 = vst [vmem:[%s442 + $0x51] sm:$0xff] %v417
      %451 = vst [vmem:[%s442 + $0x61] sm:$0xff] %v418
      %452 = vst [vmem:[%s442 + $0x69] sm:$0xff] %v419
      %453 = vst [vmem:[%s442 + $0x79] sm:$0xff] %v420
      %454 = vst [vmem:[%s442 + $0x81] sm:$0xff] %v421
      %455 = vst [vmem:[%s442 + $0x91] sm:$0xff] %v422
      %456 = vst [vmem:[%s442 + $0x99] sm:$0xff] %v423
      %457 = vst [vmem:[%s442 + $0xa9] sm:$0xff] %v424
      %458 = vst [vmem:[%s442 + $0xb1] sm:$0xff] %v425
      %459 = vst [vmem:[%s442 + $0xc1] sm:$0xff] %v426
      %460 = vst [vmem:[%s442 + $0xc9] sm:$0xff] %v427
      %461 = vst [vmem:[%s442 + $0xd9] sm:$0xff] %v428
      %462 = vst [vmem:[%s442 + $0xe1] sm:$0xff] %v429
      %463 = vst [vmem:[%s442 + $0xf1] sm:$0xff] %v430
      %464 = vst [vmem:[%s442 + $0xf9] sm:$0xff] %v431
      %465 = vst [vmem:[%s442 + $0x109] sm:$0xff] %v432
      %466 = vst [vmem:[%s442 + $0x111] sm:$0xff] %v433
      %467 = vst [vmem:[%s442 + $0x121] sm:$0xff] %v434
      %468 = vst [vmem:[%s442 + $0x129] sm:$0xff] %v435
      %469 = vst [vmem:[%s442 + $0x139] sm:$0xff] %v436
      %470 = vst [vmem:[%s442 + $0x141] sm:$0xff] %v437
      %471 = vst [vmem:[%s442 + $0x151] sm:$0xff] %v438
      %472 = vst [vmem:[%s442 + $0x159] sm:$0xff] %v439
      %473 = vst [vmem:[%s442 + $0x169] sm:$0xff] %v440
      %474 = vst [vmem:[%s442 + $0x171] sm:$0xff] %v441
      %p475 = scmp.lt.s32.totalorder %s16, 1
      %s476 = scalar_select %p475, %s16, 1
      %s477 = smul.addr %s476, 54
      %s478 = smul.addr %s477, 8
      %s479 = scalar_lea.vmem %s5, %s478
      // Predicated region
      $region41: #{basic_block_forward.6} parent=39 // pred_check
        %p480 = pneg %p144
      $region42: #{basic_block_forward.6} parent=39 // pred_check_branch
        %482 = sbr.rel (%p480) target = $region44
      $region43: #{basic_block_forward.6} parent=39 // pred_region
        _
      $region44: #{basic_block_forward.6} parent=39 // pred_fallthru
        _
    $region40: #{basic_block_forward.6} parent=5 // pred_fallthru
      _
    %p483 = scmp.le.s32.totalorder 2, %s11
    // Predicated region
    $region45: #{basic_block_forward.6} parent=5 // pred_check
      %p484 = pneg %p483
    $region46: #{basic_block_forward.6} parent=5 // pred_check_branch
      %486 = sbr.rel (%p484) target = $region48
    $region47: #{basic_block_forward.6} parent=5 // pred_region
      %s487 = ssub.s32 %s11, 2
      // Predicated region
      $region49: #{basic_block_forward.6} parent=47 // pred_check
        %p488 = pneg %p150
      $region50: #{basic_block_forward.6} parent=47 // pred_check_branch
        %490 = sbr.rel (%p488) target = $region52
      $region51: #{basic_block_forward.6} parent=47 // pred_region
        %p491 = scmp.lt.s32.totalorder %s17, 1
        %s492 = scalar_select %p491, %s17, 1
        %s493 = smul.addr %s492, 54
        %s494 = smul.addr %s493, 8
        %s495 = scalar_lea.vmem %s5, %s494
      $region52: #{basic_block_forward.6} parent=47 // pred_fallthru
        _
    $region48: #{basic_block_forward.6} parent=5 // pred_fallthru
      _
  $region6: #{basic_block_forward.6} parent=0 // loop_footer
    %s15 = sadd.s32 1, %s11
  $region7: #{basic_block_forward.6} parent=0 // loop_footer_branch
    %10 = sbr.rel target = $region3
  $region8: #{basic_block_forward.6} parent=0 // loop_exit
    _

// kernel: basic_block_forward.9
$region0: #{basic_block_forward.9}
  #allocation0 [shape = 'u32[]', space=smem, size = 0x4, offset = 0x4, fixed_abs, tag = 'smem constant byte address 0x4 - core index']
  #allocation1 [shape = 'u32[144,128]{1,0:T(1,128)}', space=vmem, size = 0x12000, scoped, tag = 'internal scratch']
  %s0 = inlined_call_operand.vmem [shape: f32[2,256,128], index: 0, kind: input, shape index: {}]
  %s1 = inlined_call_operand.vmem [shape: f32[2,1,128], index: 1, kind: input, shape index: {}]
  %s2 = inlined_call_operand.vmem [shape: f32[2,1,128], index: 2, kind: input, shape index: {}]
  %s3 = inlined_call_operand.vmem [shape: f32[1,128], index: 3, kind: input, shape index: {}]
  %s4 = inlined_call_operand.vmem [shape: f32[1,128], index: 4, kind: input, shape index: {}]
  %s5 = inlined_call_operand.vmem [shape: f32[2,256,128], index: 5, kind: input, shape index: {}]
  %s6 = inlined_call_operand.vmem [shape: f32[2,1,128], index: 6, kind: input, shape index: {}]
  %s7 = inlined_call_operand.vmem [shape: f32[2,1,128], index: 7, kind: input, shape index: {}]
  %s8 = inlined_call_operand.vmem [shape: f32[1,128], index: 8, kind: input, shape index: {}]
  %s9 = inlined_call_operand.vmem [shape: f32[1,128], index: 9, kind: input, shape index: {}]
  %s10 = inlined_call_operand.vmem [shape: f32[2,256,128], index: 10, kind: output, shape index: {}]
  %s11 = sld [smem:[#allocation0]]
  $region73: #{basic_block_forward.9} parent=0
    _
  %s13 = ssub.s32 1, %s11
  %s14 = scalar_select 0, %s13, %s11
  loop: start=0, step=1, limit=4
  $region2: #{basic_block_forward.9} parent=0 // loop_pre_header
    _
  $region3: #{basic_block_forward.9} parent=0 // loop_header
    %s16 = sphi 0, %s20
    %p17 = scmp.ge.s32.totalorder %s16, 4
    %s26 = sphi 0, %s28
    %s29 = sphi 0, %s26
    %s30 = sphi 0, %s29
    %s46 = sphi 0, %s30
    %s50 = sphi 0, %s50
    %s52 = sphi 0, %s50
    %s53 = sphi 0, %s52
    %s67 = sphi 0, %s53
    %s71 = sphi 0, %s71
    %s73 = sphi 0, %s71
    %s74 = sphi 0, %s73
    %s88 = sphi 0, %s74
    %s92 = sphi 0, %s92
    %s94 = sphi 0, %s92
    %s95 = sphi 0, %s94
    %s109 = sphi 0, %s95
    %s113 = sphi 0, %s113
    %s115 = sphi 0, %s113
    %s116 = sphi 0, %s115
    %s130 = sphi 0, %s116
    %s136 = sphi 0, %s138
    %s139 = sphi 0, %s136
    %s140 = sphi 0, %s139
    %s156 = sphi 0, %s140
    %s160 = sphi 0, %s160
    %s162 = sphi 0, %s160
    %s163 = sphi 0, %s162
    %s177 = sphi 0, %s163
    %s181 = sphi 0, %s181
    %s183 = sphi 0, %s181
    %s184 = sphi 0, %s183
    %s198 = sphi 0, %s184
    %s202 = sphi 0, %s202
    %s204 = sphi 0, %s202
    %s205 = sphi 0, %s204
    %s219 = sphi 0, %s205
    %s223 = sphi 0, %s223
    %s225 = sphi 0, %s223
    %s226 = sphi 0, %s225
    %s240 = sphi 0, %s226
    %s246 = sphi 0, %s248
    %s249 = sphi 0, %s246
    %s250 = sphi 0, %s249
    %s266 = sphi 0, %s250
  $region4: #{basic_block_forward.9} parent=0 // loop_header_branch
    %19 = sbr.rel (%p17) target = $region8
  $region5: #{basic_block_forward.9} parent=0 // loop_body
    %s21 = ssub.s32 %s16, 1
    %s22 = ssub.s32 %s16, 2
    %s23 = sadd.s32 %s16, 1
    %s24 = ssub.s32 %s16, %s23
    %p25 = scmp.eq.s32.totalorder %s24, 0
    %s27 = sadd.s32 %s26, 1
    %s28 = scalar_select %p25, %s26, %s27
    %p31 = pneg %p25
    %p32 = scmp.eq.s32.totalorder %s16, 1
    %p33 = por %p31, %p32
    %p34 = scmp.ne.s32.totalorder %s26, %s29
    %p35 = scmp.eq.s32.totalorder %s16, 0
    %p36 = por %p34, %p35
    %p37 = scmp.ne.s32.totalorder %s26, %s29
    %p38 = scmp.eq.s32.totalorder %s21, 1
    %p39 = por %p37, %p38
    %p40 = scmp.ne.s32.totalorder %s29, %s30
    %p41 = scmp.eq.s32.totalorder %s21, 0
    %p42 = por %p40, %p41
    %p43 = scmp.ne.s32.totalorder %s29, %s30
    %p44 = scmp.eq.s32.totalorder %s22, 1
    %p45 = por %p43, %p44
    %p47 = scmp.ne.s32.totalorder %s30, %s46
    %p48 = scmp.eq.s32.totalorder %s22, 0
    %p49 = por %p47, %p48
    %s51 = sadd.s32 %s50, 1
    %p54 = scmp.eq.s32.totalorder %s16, 1
    %p55 = scmp.ne.s32.totalorder %s50, %s52
    %p56 = scmp.eq.s32.totalorder %s16, 0
    %p57 = por %p55, %p56
    %p58 = scmp.ne.s32.totalorder %s50, %s52
    %p59 = scmp.eq.s32.totalorder %s21, 1
    %p60 = por %p58, %p59
    %p61 = scmp.ne.s32.totalorder %s52, %s53
    %p62 = scmp.eq.s32.totalorder %s21, 0
    %p63 = por %p61, %p62
    %p64 = scmp.ne.s32.totalorder %s52, %s53
    %p65 = scmp.eq.s32.totalorder %s22, 1
    %p66 = por %p64, %p65
    %p68 = scmp.ne.s32.totalorder %s53, %s67
    %p69 = scmp.eq.s32.totalorder %s22, 0
    %p70 = por %p68, %p69
    %s72 = sadd.s32 %s71, 1
    %p75 = scmp.eq.s32.totalorder %s16, 1
    %p76 = scmp.ne.s32.totalorder %s71, %s73
    %p77 = scmp.eq.s32.totalorder %s16, 0
    %p78 = por %p76, %p77
    %p79 = scmp.ne.s32.totalorder %s71, %s73
    %p80 = scmp.eq.s32.totalorder %s21, 1
    %p81 = por %p79, %p80
    %p82 = scmp.ne.s32.totalorder %s73, %s74
    %p83 = scmp.eq.s32.totalorder %s21, 0
    %p84 = por %p82, %p83
    %p85 = scmp.ne.s32.totalorder %s73, %s74
    %p86 = scmp.eq.s32.totalorder %s22, 1
    %p87 = por %p85, %p86
    %p89 = scmp.ne.s32.totalorder %s74, %s88
    %p90 = scmp.eq.s32.totalorder %s22, 0
    %p91 = por %p89, %p90
    %s93 = sadd.s32 %s92, 1
    %p96 = scmp.eq.s32.totalorder %s16, 1
    %p97 = scmp.ne.s32.totalorder %s92, %s94
    %p98 = scmp.eq.s32.totalorder %s16, 0
    %p99 = por %p97, %p98
    %p100 = scmp.ne.s32.totalorder %s92, %s94
    %p101 = scmp.eq.s32.totalorder %s21, 1
    %p102 = por %p100, %p101
    %p103 = scmp.ne.s32.totalorder %s94, %s95
    %p104 = scmp.eq.s32.totalorder %s21, 0
    %p105 = por %p103, %p104
    %p106 = scmp.ne.s32.totalorder %s94, %s95
    %p107 = scmp.eq.s32.totalorder %s22, 1
    %p108 = por %p106, %p107
    %p110 = scmp.ne.s32.totalorder %s95, %s109
    %p111 = scmp.eq.s32.totalorder %s22, 0
    %p112 = por %p110, %p111
    %s114 = sadd.s32 %s113, 1
    %p117 = scmp.eq.s32.totalorder %s16, 1
    %p118 = scmp.ne.s32.totalorder %s113, %s115
    %p119 = scmp.eq.s32.totalorder %s16, 0
    %p120 = por %p118, %p119
    %p121 = scmp.ne.s32.totalorder %s113, %s115
    %p122 = scmp.eq.s32.totalorder %s21, 1
    %p123 = por %p121, %p122
    %p124 = scmp.ne.s32.totalorder %s115, %s116
    %p125 = scmp.eq.s32.totalorder %s21, 0
    %p126 = por %p124, %p125
    %p127 = scmp.ne.s32.totalorder %s115, %s116
    %p128 = scmp.eq.s32.totalorder %s22, 1
    %p129 = por %p127, %p128
    %p131 = scmp.ne.s32.totalorder %s116, %s130
    %p132 = scmp.eq.s32.totalorder %s22, 0
    %p133 = por %p131, %p132
    %s134 = ssub.s32 %s16, %s23
    %p135 = scmp.eq.s32.totalorder %s134, 0
    %s137 = sadd.s32 %s136, 1
    %s138 = scalar_select %p135, %s136, %s137
    %p141 = pneg %p135
    %p142 = scmp.eq.s32.totalorder %s16, 1
    %p143 = por %p141, %p142
    %p144 = scmp.ne.s32.totalorder %s136, %s139
    %p145 = scmp.eq.s32.totalorder %s16, 0
    %p146 = por %p144, %p145
    %p147 = scmp.ne.s32.totalorder %s136, %s139
    %p148 = scmp.eq.s32.totalorder %s21, 1
    %p149 = por %p147, %p148
    %p150 = scmp.ne.s32.totalorder %s139, %s140
    %p151 = scmp.eq.s32.totalorder %s21, 0
    %p152 = por %p150, %p151
    %p153 = scmp.ne.s32.totalorder %s139, %s140
    %p154 = scmp.eq.s32.totalorder %s22, 1
    %p155 = por %p153, %p154
    %p157 = scmp.ne.s32.totalorder %s140, %s156
    %p158 = scmp.eq.s32.totalorder %s22, 0
    %p159 = por %p157, %p158
    %s161 = sadd.s32 %s160, 1
    %p164 = scmp.eq.s32.totalorder %s16, 1
    %p165 = scmp.ne.s32.totalorder %s160, %s162
    %p166 = scmp.eq.s32.totalorder %s16, 0
    %p167 = por %p165, %p166
    %p168 = scmp.ne.s32.totalorder %s160, %s162
    %p169 = scmp.eq.s32.totalorder %s21, 1
    %p170 = por %p168, %p169
    %p171 = scmp.ne.s32.totalorder %s162, %s163
    %p172 = scmp.eq.s32.totalorder %s21, 0
    %p173 = por %p171, %p172
    %p174 = scmp.ne.s32.totalorder %s162, %s163
    %p175 = scmp.eq.s32.totalorder %s22, 1
    %p176 = por %p174, %p175
    %p178 = scmp.ne.s32.totalorder %s163, %s177
    %p179 = scmp.eq.s32.totalorder %s22, 0
    %p180 = por %p178, %p179
    %s182 = sadd.s32 %s181, 1
    %p185 = scmp.eq.s32.totalorder %s16, 1
    %p186 = scmp.ne.s32.totalorder %s181, %s183
    %p187 = scmp.eq.s32.totalorder %s16, 0
    %p188 = por %p186, %p187
    %p189 = scmp.ne.s32.totalorder %s181, %s183
    %p190 = scmp.eq.s32.totalorder %s21, 1
    %p191 = por %p189, %p190
    %p192 = scmp.ne.s32.totalorder %s183, %s184
    %p193 = scmp.eq.s32.totalorder %s21, 0
    %p194 = por %p192, %p193
    %p195 = scmp.ne.s32.totalorder %s183, %s184
    %p196 = scmp.eq.s32.totalorder %s22, 1
    %p197 = por %p195, %p196
    %p199 = scmp.ne.s32.totalorder %s184, %s198
    %p200 = scmp.eq.s32.totalorder %s22, 0
    %p201 = por %p199, %p200
    %s203 = sadd.s32 %s202, 1
    %p206 = scmp.eq.s32.totalorder %s16, 1
    %p207 = scmp.ne.s32.totalorder %s202, %s204
    %p208 = scmp.eq.s32.totalorder %s16, 0
    %p209 = por %p207, %p208
    %p210 = scmp.ne.s32.totalorder %s202, %s204
    %p211 = scmp.eq.s32.totalorder %s21, 1
    %p212 = por %p210, %p211
    %p213 = scmp.ne.s32.totalorder %s204, %s205
    %p214 = scmp.eq.s32.totalorder %s21, 0
    %p215 = por %p213, %p214
    %p216 = scmp.ne.s32.totalorder %s204, %s205
    %p217 = scmp.eq.s32.totalorder %s22, 1
    %p218 = por %p216, %p217
    %p220 = scmp.ne.s32.totalorder %s205, %s219
    %p221 = scmp.eq.s32.totalorder %s22, 0
    %p222 = por %p220, %p221
    %s224 = sadd.s32 %s223, 1
    %p227 = scmp.eq.s32.totalorder %s16, 1
    %p228 = scmp.ne.s32.totalorder %s223, %s225
    %p229 = scmp.eq.s32.totalorder %s16, 0
    %p230 = por %p228, %p229
    %p231 = scmp.ne.s32.totalorder %s223, %s225
    %p232 = scmp.eq.s32.totalorder %s21, 1
    %p233 = por %p231, %p232
    %p234 = scmp.ne.s32.totalorder %s225, %s226
    %p235 = scmp.eq.s32.totalorder %s21, 0
    %p236 = por %p234, %p235
    %p237 = scmp.ne.s32.totalorder %s225, %s226
    %p238 = scmp.eq.s32.totalorder %s22, 1
    %p239 = por %p237, %p238
    %p241 = scmp.ne.s32.totalorder %s226, %s240
    %p242 = scmp.eq.s32.totalorder %s22, 0
    %p243 = por %p241, %p242
    %s244 = ssub.s32 %s16, %s23
    %p245 = scmp.eq.s32.totalorder %s244, 0
    %s247 = sadd.s32 %s246, 1
    %s248 = scalar_select %p245, %s246, %s247
    %p251 = pneg %p245
    %p252 = scmp.eq.s32.totalorder %s16, 1
    %p253 = por %p251, %p252
    %p254 = scmp.ne.s32.totalorder %s246, %s249
    %p255 = scmp.eq.s32.totalorder %s16, 0
    %p256 = por %p254, %p255
    %p257 = scmp.ne.s32.totalorder %s246, %s249
    %p258 = scmp.eq.s32.totalorder %s21, 1
    %p259 = por %p257, %p258
    %p260 = scmp.ne.s32.totalorder %s249, %s250
    %p261 = scmp.eq.s32.totalorder %s21, 0
    %p262 = por %p260, %p261
    %p263 = scmp.ne.s32.totalorder %s249, %s250
    %p264 = scmp.eq.s32.totalorder %s22, 1
    %p265 = por %p263, %p264
    %p267 = scmp.ne.s32.totalorder %s250, %s266
    %p268 = scmp.eq.s32.totalorder %s22, 0
    %p269 = por %p267, %p268
    %p270 = scmp.le.s32.totalorder 1, %s16
    %p271 = scmp.lt.s32.totalorder %s16, 3
    %p272 = pnand %p270, %p271
    %p273 = pneg %p272
    // Predicated region
    $region9: #{basic_block_forward.9} parent=5 // pred_check
      _
    $region10: #{basic_block_forward.9} parent=5 // pred_check_branch
      %275 = sbr.rel (%p272) target = $region12
    $region11: #{basic_block_forward.9} parent=5 // pred_region
      %s276 = ssub.s32 %s16, 1
      // Predicated region
      $region13: #{basic_block_forward.9} parent=11 // pred_check
        %p277 = pneg %p63
      $region14: #{basic_block_forward.9} parent=11 // pred_check_branch
        %279 = sbr.rel (%p277) target = $region16
      $region15: #{basic_block_forward.9} parent=11 // pred_region
        _
      $region16: #{basic_block_forward.9} parent=11 // pred_fallthru
        _
      // Predicated region
      $region17: #{basic_block_forward.9} parent=11 // pred_check
        %p280 = pneg %p84
      $region18: #{basic_block_forward.9} parent=11 // pred_check_branch
        %282 = sbr.rel (%p280) target = $region20
      $region19: #{basic_block_forward.9} parent=11 // pred_region
        _
      $region20: #{basic_block_forward.9} parent=11 // pred_fallthru
        _
      // Predicated region
      $region21: #{basic_block_forward.9} parent=11 // pred_check
        %p283 = pneg %p105
      $region22: #{basic_block_forward.9} parent=11 // pred_check_branch
        %285 = sbr.rel (%p283) target = $region24
      $region23: #{basic_block_forward.9} parent=11 // pred_region
        _
      $region24: #{basic_block_forward.9} parent=11 // pred_fallthru
        _
      // Predicated region
      $region25: #{basic_block_forward.9} parent=11 // pred_check
        %p286 = pneg %p126
      $region26: #{basic_block_forward.9} parent=11 // pred_check_branch
        %288 = sbr.rel (%p286) target = $region28
      $region27: #{basic_block_forward.9} parent=11 // pred_region
        _
      $region28: #{basic_block_forward.9} parent=11 // pred_fallthru
        _
      // Predicated region
      $region29: #{basic_block_forward.9} parent=11 // pred_check
        %p289 = pneg %p173
      $region30: #{basic_block_forward.9} parent=11 // pred_check_branch
        %291 = sbr.rel (%p289) target = $region32
      $region31: #{basic_block_forward.9} parent=11 // pred_region
        _
      $region32: #{basic_block_forward.9} parent=11 // pred_fallthru
        _
      // Predicated region
      $region33: #{basic_block_forward.9} parent=11 // pred_check
        %p292 = pneg %p194
      $region34: #{basic_block_forward.9} parent=11 // pred_check_branch
        %294 = sbr.rel (%p292) target = $region36
      $region35: #{basic_block_forward.9} parent=11 // pred_region
        _
      $region36: #{basic_block_forward.9} parent=11 // pred_fallthru
        _
      // Predicated region
      $region37: #{basic_block_forward.9} parent=11 // pred_check
        %p295 = pneg %p215
      $region38: #{basic_block_forward.9} parent=11 // pred_check_branch
        %297 = sbr.rel (%p295) target = $region40
      $region39: #{basic_block_forward.9} parent=11 // pred_region
        _
      $region40: #{basic_block_forward.9} parent=11 // pred_fallthru
        _
      // Predicated region
      $region41: #{basic_block_forward.9} parent=11 // pred_check
        %p298 = pneg %p236
      $region42: #{basic_block_forward.9} parent=11 // pred_check_branch
        %300 = sbr.rel (%p298) target = $region44
      $region43: #{basic_block_forward.9} parent=11 // pred_region
        _
      $region44: #{basic_block_forward.9} parent=11 // pred_fallthru
        _
    $region12: #{basic_block_forward.9} parent=5 // pred_fallthru
      _
    %p301 = scmp.lt.s32.totalorder %s16, 2
    // Predicated region
    $region45: #{basic_block_forward.9} parent=5 // pred_check
      %p302 = pneg %p301
    $region46: #{basic_block_forward.9} parent=5 // pred_check_branch
      %304 = sbr.rel (%p302) target = $region48
    $region47: #{basic_block_forward.9} parent=5 // pred_region
      // Predicated region
      $region49: #{basic_block_forward.9} parent=47 // pred_check
        %p305 = pneg %p36
      $region50: #{basic_block_forward.9} parent=47 // pred_check_branch
        %307 = sbr.rel (%p305) target = $region52
      $region51: #{basic_block_forward.9} parent=47 // pred_region
        %p308 = scmp.lt.s32.totalorder %s16, 1
        %s309 = scalar_select %p308, %s16, 1
        %s310 = smul.addr %s309, 32
        %s311 = smul.addr %s310, 8
        %s312 = scalar_lea.vmem %s0, %s311
      $region52: #{basic_block_forward.9} parent=47 // pred_fallthru
        _
      // Predicated region
      $region53: #{basic_block_forward.9} parent=47 // pred_check
        %p313 = pneg %p146
      $region54: #{basic_block_forward.9} parent=47 // pred_check_branch
        %315 = sbr.rel (%p313) target = $region56
      $region55: #{basic_block_forward.9} parent=47 // pred_region
        %p316 = scmp.lt.s32.totalorder %s16, 1
        %s317 = scalar_select %p316, %s16, 1
        %s318 = smul.addr %s317, 32
        %s319 = smul.addr %s318, 8
        %s320 = scalar_lea.vmem %s5, %s319
      $region56: #{basic_block_forward.9} parent=47 // pred_fallthru
        _
    $region48: #{basic_block_forward.9} parent=5 // pred_fallthru
      _
    %p321 = scmp.le.s32.totalorder 1, %s16
    %p322 = scmp.lt.s32.totalorder %s16, 3
    %p323 = pnand %p321, %p322
    %p324 = pneg %p323
    // Predicated region
    $region57: #{basic_block_forward.9} parent=5 // pred_check
      _
    $region58: #{basic_block_forward.9} parent=5 // pred_check_branch
      %326 = sbr.rel (%p323) target = $region60
    $region59: #{basic_block_forward.9} parent=5 // pred_region
      %s327 = ssub.s32 %s16, 1
      %p328 = scmp.lt.s32.totalorder %s21, 1
      %s329 = scalar_select %p328, %s21, 1
      %s330 = smul.addr %s329, 32
      %s331 = smul.addr %s330, 8
      %s332 = scalar_lea.vmem %s0, %s331
      %p333 = pneg %p42
      %p334 = pneg %p39
      %p335 = pneg %p63
      %p336 = pneg %p60
      %p337 = pneg %p84
      %p338 = pneg %p81
      %p339 = pneg %p105
      %p340 = pneg %p102
      %p341 = pneg %p126
      %p342 = pneg %p123
      %p343 = scmp.lt.s32.totalorder %s21, 1
      %s344 = scalar_select %p343, %s21, 1
      %s345 = smul.addr %s344, 32
      %s346 = smul.addr %s345, 8
      %s347 = scalar_lea.vmem %s5, %s346
      %p348 = pneg %p152
      %p349 = pneg %p149
      %p350 = pneg %p173
      %p351 = pneg %p170
      %p352 = pneg %p194
      %p353 = pneg %p191
      %p354 = pneg %p215
      %p355 = pneg %p212
      %p356 = pneg %p236
      %p357 = pneg %p233
      %p358 = pneg %p262
      %p359 = pneg %p259
      %p360 = scmp.lt.s32.totalorder %s21, 1
      %s361 = scalar_select %p360, %s21, 1
      %s362 = smul.addr %s361, 32
      %s363 = smul.addr %s362, 8
      %s364 = scalar_lea.vmem %s10, %s363
      %p365 = scmp.lt.s32.totalorder %s21, 1
      %s366 = scalar_select %p365, %s21, 1
      %s367 = smul.addr %s366, 32
      %s368 = smul.addr %s367, 8
      %s369 = scalar_lea.vmem %s0, %s368
      %p370 = scmp.lt.s32.totalorder %s21, 1
      %s371 = scalar_select %p370, %s21, 1
      %s372 = smul.addr %s371, 32
      %s373 = smul.addr %s372, 8
      %s374 = scalar_lea.vmem %s5, %s373
      %p375 = scmp.lt.s32.totalorder %s21, 1
      %s376 = scalar_select %p375, %s21, 1
      %s377 = smul.addr %s376, 32
      %s378 = smul.addr %s377, 8
      %s379 = scalar_lea.vmem %s10, %s378
      %v380 = vld [vmem:[%s1] sm:$0x1]
      %v381 = vld [vmem:[%s1 + $0x1] sm:$0x1]
      %v382 = vld [vmem:[%s2] sm:$0x1]
      %v383 = vld [vmem:[%s2 + $0x1] sm:$0x1]
      %v384 = vld [vmem:[%s3] sm:$0x1]
      %v385 = vld [vmem:[%s4] sm:$0x1]
      %vm386 = vcmask 1040384
      %v387 = vsel %vm386, %v380, 0.0
      %v388 = vsel %vm386, %v381, 0.0
      %v389 = vadd.f32 %v387, %v388
      %v390 = vmul.f32 %v389, 0.001953125
      %v391 = vsel %vm386, %v382, 0.0
      %v392 = vsel %vm386, %v383, 0.0
      %v393 = vadd.f32 %v391, %v392
      %v394 = vmul.f32 %v393, 0.001953125
      %v395 = vmul.f32 %v390, %v390
      %v396 = vsub.f32 %v394, %v395
      %v397 = vmax.f32 %v396, 0.0
      %v398 = vadd.f32 %v397, 1e-05
      %v399 = vrsqrt.pop %v398
      %v400 = vmul.f32 %v384, %v399
      %v401 = vmul.f32 %v390, %v400
      %v402 = vsub.f32 %v385, %v401
      %v403 = vld [vmem:[%s6] sm:$0x1]
      %v404 = vld [vmem:[%s6 + $0x1] sm:$0x1]
      %v405 = vld [vmem:[%s7] sm:$0x1]
      %v406 = vld [vmem:[%s7 + $0x1] sm:$0x1]
      %v407 = vld [vmem:[%s8] sm:$0x1]
      %v408 = vld [vmem:[%s9] sm:$0x1]
      %v409 = vsel %vm386, %v403, 0.0
      %v410 = vsel %vm386, %v404, 0.0
      %v411 = vadd.f32 %v409, %v410
      %v412 = vmul.f32 %v411, 0.001953125
      %v413 = vsel %vm386, %v405, 0.0
      %v414 = vsel %vm386, %v406, 0.0
      %v415 = vadd.f32 %v413, %v414
      %v416 = vmul.f32 %v415, 0.001953125
      %v417 = vmul.f32 %v412, %v412
      %v418 = vsub.f32 %v416, %v417
      %v419 = vmax.f32 %v418, 0.0
      %v420 = vadd.f32 %v419, 1e-05
      %v421 = vrsqrt.pop %v420
      %v422 = vmul.f32 %v407, %v421
      %v423 = vmul.f32 %v412, %v422
      %v424 = vsub.f32 %v408, %v423
      %v425 = vld [vmem:[%s369] sm:$0xff]
      %v426 = vld [vmem:[%s369 + $0x8] sm:$0xff]
      %v427 = vld [vmem:[%s369 + $0x10] sm:$0xff]
      %v428 = vld [vmem:[%s369 + $0x18] sm:$0xff]
      %v429 = vld [vmem:[%s369 + $0x20] sm:$0xff]
      %v430 = vld [vmem:[%s369 + $0x28] sm:$0xff]
      %v431 = vld [vmem:[%s369 + $0x30] sm:$0xff]
      %v432 = vld [vmem:[%s369 + $0x38] sm:$0xff]
      %v433 = vld [vmem:[%s369 + $0x40] sm:$0xff]
      %v434 = vld [vmem:[%s369 + $0x48] sm:$0xff]
      %v435 = vld [vmem:[%s369 + $0x50] sm:$0xff]
      %v436 = vld [vmem:[%s369 + $0x58] sm:$0xff]
      %v437 = vld [vmem:[%s369 + $0x60] sm:$0xff]
      %v438 = vld [vmem:[%s369 + $0x68] sm:$0xff]
      %v439 = vld [vmem:[%s369 + $0x70] sm:$0xff]
      %v440 = vld [vmem:[%s369 + $0x78] sm:$0xff]
      %v441 = vld [vmem:[%s369 + $0x80] sm:$0xff]
      %v442 = vld [vmem:[%s369 + $0x88] sm:$0xff]
      %v443 = vld [vmem:[%s369 + $0x90] sm:$0xff]
      %v444 = vld [vmem:[%s369 + $0x98] sm:$0xff]
      %v445 = vld [vmem:[%s369 + $0xa0] sm:$0xff]
      %v446 = vld [vmem:[%s369 + $0xa8] sm:$0xff]
      %v447 = vld [vmem:[%s369 + $0xb0] sm:$0xff]
      %v448 = vld [vmem:[%s369 + $0xb8] sm:$0xff]
      %v449 = vld [vmem:[%s369 + $0xc0] sm:$0xff]
      %v450 = vld [vmem:[%s369 + $0xc8] sm:$0xff]
      %v451 = vld [vmem:[%s369 + $0xd0] sm:$0xff]
      %v452 = vld [vmem:[%s369 + $0xd8] sm:$0xff]
      %v453 = vld [vmem:[%s369 + $0xe0] sm:$0xff]
      %v454 = vld [vmem:[%s369 + $0xe8] sm:$0xff]
      %v455 = vld [vmem:[%s369 + $0xf0] sm:$0xff]
      %v456 = vld [vmem:[%s369 + $0xf8] sm:$0xff]
      %v458 = vlaneseq
      %v459 = vshrl.u32 %v458, 7
      %v460 = vsub.s32 0, %v459
      %v461 = vrot.slane %v400, %v460
      %v463 = vmul.f32 %v425, %v461
      %v464 = vmul.f32 %v426, %v461
      %v465 = vmul.f32 %v427, %v461
      %v466 = vmul.f32 %v428, %v461
      %v467 = vmul.f32 %v429, %v461
      %v468 = vmul.f32 %v430, %v461
      %v469 = vmul.f32 %v431, %v461
      %v470 = vmul.f32 %v432, %v461
      %v471 = vmul.f32 %v433, %v461
      %v472 = vmul.f32 %v434, %v461
      %v473 = vmul.f32 %v435, %v461
      %v474 = vmul.f32 %v436, %v461
      %v475 = vmul.f32 %v437, %v461
      %v476 = vmul.f32 %v438, %v461
      %v477 = vmul.f32 %v439, %v461
      %v478 = vmul.f32 %v440, %v461
      %v479 = vmul.f32 %v441, %v461
      %v480 = vmul.f32 %v442, %v461
      %v481 = vmul.f32 %v443, %v461
      %v482 = vmul.f32 %v444, %v461
      %v483 = vmul.f32 %v445, %v461
      %v484 = vmul.f32 %v446, %v461
      %v485 = vmul.f32 %v447, %v461
      %v486 = vmul.f32 %v448, %v461
      %v487 = vmul.f32 %v449, %v461
      %v488 = vmul.f32 %v450, %v461
      %v489 = vmul.f32 %v451, %v461
      %v490 = vmul.f32 %v452, %v461
      %v491 = vmul.f32 %v453, %v461
      %v492 = vmul.f32 %v454, %v461
      %v493 = vmul.f32 %v455, %v461
      %v494 = vmul.f32 %v456, %v461
      %v496 = vlaneseq
      %v497 = vshrl.u32 %v496, 7
      %v498 = vsub.s32 0, %v497
      %v499 = vrot.slane %v402, %v498
      %v501 = vadd.f32 %v463, %v499
      %v502 = vadd.f32 %v464, %v499
      %v503 = vadd.f32 %v465, %v499
      %v504 = vadd.f32 %v466, %v499
      %v505 = vadd.f32 %v467, %v499
      %v506 = vadd.f32 %v468, %v499
      %v507 = vadd.f32 %v469, %v499
      %v508 = vadd.f32 %v470, %v499
      %v509 = vadd.f32 %v471, %v499
      %v510 = vadd.f32 %v472, %v499
      %v511 = vadd.f32 %v473, %v499
      %v512 = vadd.f32 %v474, %v499
      %v513 = vadd.f32 %v475, %v499
      %v514 = vadd.f32 %v476, %v499
      %v515 = vadd.f32 %v477, %v499
      %v516 = vadd.f32 %v478, %v499
      %v517 = vadd.f32 %v479, %v499
      %v518 = vadd.f32 %v480, %v499
      %v519 = vadd.f32 %v481, %v499
      %v520 = vadd.f32 %v482, %v499
      %v521 = vadd.f32 %v483, %v499
      %v522 = vadd.f32 %v484, %v499
      %v523 = vadd.f32 %v485, %v499
      %v524 = vadd.f32 %v486, %v499
      %v525 = vadd.f32 %v487, %v499
      %v526 = vadd.f32 %v488, %v499
      %v527 = vadd.f32 %v489, %v499
      %v528 = vadd.f32 %v490, %v499
      %v529 = vadd.f32 %v491, %v499
      %v530 = vadd.f32 %v492, %v499
      %v531 = vadd.f32 %v493, %v499
      %v532 = vadd.f32 %v494, %v499
      %v533 = vld [vmem:[%s374] sm:$0xff]
      %v534 = vld [vmem:[%s374 + $0x8] sm:$0xff]
      %v535 = vld [vmem:[%s374 + $0x10] sm:$0xff]
      %v536 = vld [vmem:[%s374 + $0x18] sm:$0xff]
      %v537 = vld [vmem:[%s374 + $0x20] sm:$0xff]
      %v538 = vld [vmem:[%s374 + $0x28] sm:$0xff]
      %v539 = vld [vmem:[%s374 + $0x30] sm:$0xff]
      %v540 = vld [vmem:[%s374 + $0x38] sm:$0xff]
      %v541 = vld [vmem:[%s374 + $0x40] sm:$0xff]
      %v542 = vld [vmem:[%s374 + $0x48] sm:$0xff]
      %v543 = vld [vmem:[%s374 + $0x50] sm:$0xff]
      %v544 = vld [vmem:[%s374 + $0x58] sm:$0xff]
      %v545 = vld [vmem:[%s374 + $0x60] sm:$0xff]
      %v546 = vld [vmem:[%s374 + $0x68] sm:$0xff]
      %v547 = vld [vmem:[%s374 + $0x70] sm:$0xff]
      %v548 = vld [vmem:[%s374 + $0x78] sm:$0xff]
      %v549 = vld [vmem:[%s374 + $0x80] sm:$0xff]
      %v550 = vld [vmem:[%s374 + $0x88] sm:$0xff]
      %v551 = vld [vmem:[%s374 + $0x90] sm:$0xff]
      %v552 = vld [vmem:[%s374 + $0x98] sm:$0xff]
      %v553 = vld [vmem:[%s374 + $0xa0] sm:$0xff]
      %v554 = vld [vmem:[%s374 + $0xa8] sm:$0xff]
      %v555 = vld [vmem:[%s374 + $0xb0] sm:$0xff]
      %v556 = vld [vmem:[%s374 + $0xb8] sm:$0xff]
      %v557 = vld [vmem:[%s374 + $0xc0] sm:$0xff]
      %v558 = vld [vmem:[%s374 + $0xc8] sm:$0xff]
      %v559 = vld [vmem:[%s374 + $0xd0] sm:$0xff]
      %v560 = vld [vmem:[%s374 + $0xd8] sm:$0xff]
      %v561 = vld [vmem:[%s374 + $0xe0] sm:$0xff]
      %v562 = vld [vmem:[%s374 + $0xe8] sm:$0xff]
      %v563 = vld [vmem:[%s374 + $0xf0] sm:$0xff]
      %v564 = vld [vmem:[%s374 + $0xf8] sm:$0xff]
      %v566 = vlaneseq
      %v567 = vshrl.u32 %v566, 7
      %v568 = vsub.s32 0, %v567
      %v569 = vrot.slane %v422, %v568
      %v571 = vmul.f32 %v533, %v569
      %v572 = vmul.f32 %v534, %v569
      %v573 = vmul.f32 %v535, %v569
      %v574 = vmul.f32 %v536, %v569
      %v575 = vmul.f32 %v537, %v569
      %v576 = vmul.f32 %v538, %v569
      %v577 = vmul.f32 %v539, %v569
      %v578 = vmul.f32 %v540, %v569
      %v579 = vmul.f32 %v541, %v569
      %v580 = vmul.f32 %v542, %v569
      %v581 = vmul.f32 %v543, %v569
      %v582 = vmul.f32 %v544, %v569
      %v583 = vmul.f32 %v545, %v569
      %v584 = vmul.f32 %v546, %v569
      %v585 = vmul.f32 %v547, %v569
      %v586 = vmul.f32 %v548, %v569
      %v587 = vmul.f32 %v549, %v569
      %v588 = vmul.f32 %v550, %v569
      %v589 = vmul.f32 %v551, %v569
      %v590 = vmul.f32 %v552, %v569
      %v591 = vmul.f32 %v553, %v569
      %v592 = vmul.f32 %v554, %v569
      %v593 = vmul.f32 %v555, %v569
      %v594 = vmul.f32 %v556, %v569
      %v595 = vmul.f32 %v557, %v569
      %v596 = vmul.f32 %v558, %v569
      %v597 = vmul.f32 %v559, %v569
      %v598 = vmul.f32 %v560, %v569
      %v599 = vmul.f32 %v561, %v569
      %v600 = vmul.f32 %v562, %v569
      %v601 = vmul.f32 %v563, %v569
      %v602 = vmul.f32 %v564, %v569
      %v603 = vadd.f32 %v501, %v571
      %v604 = vadd.f32 %v502, %v572
      %v605 = vadd.f32 %v503, %v573
      %v606 = vadd.f32 %v504, %v574
      %v607 = vadd.f32 %v505, %v575
      %v608 = vadd.f32 %v506, %v576
      %v609 = vadd.f32 %v507, %v577
      %v610 = vadd.f32 %v508, %v578
      %v611 = vadd.f32 %v509, %v579
      %v612 = vadd.f32 %v510, %v580
      %v613 = vadd.f32 %v511, %v581
      %v614 = vadd.f32 %v512, %v582
      %v615 = vadd.f32 %v513, %v583
      %v616 = vadd.f32 %v514, %v584
      %v617 = vadd.f32 %v515, %v585
      %v618 = vadd.f32 %v516, %v586
      %v619 = vadd.f32 %v517, %v587
      %v620 = vadd.f32 %v518, %v588
      %v621 = vadd.f32 %v519, %v589
      %v622 = vadd.f32 %v520, %v590
      %v623 = vadd.f32 %v521, %v591
      %v624 = vadd.f32 %v522, %v592
      %v625 = vadd.f32 %v523, %v593
      %v626 = vadd.f32 %v524, %v594
      %v627 = vadd.f32 %v525, %v595
      %v628 = vadd.f32 %v526, %v596
      %v629 = vadd.f32 %v527, %v597
      %v630 = vadd.f32 %v528, %v598
      %v631 = vadd.f32 %v529, %v599
      %v632 = vadd.f32 %v530, %v600
      %v633 = vadd.f32 %v531, %v601
      %v634 = vadd.f32 %v532, %v602
      %v636 = vlaneseq
      %v637 = vshrl.u32 %v636, 7
      %v638 = vsub.s32 0, %v637
      %v639 = vrot.slane %v424, %v638
      %v641 = vadd.f32 %v603, %v639
      %v642 = vadd.f32 %v604, %v639
      %v643 = vadd.f32 %v605, %v639
      %v644 = vadd.f32 %v606, %v639
      %v645 = vadd.f32 %v607, %v639
      %v646 = vadd.f32 %v608, %v639
      %v647 = vadd.f32 %v609, %v639
      %v648 = vadd.f32 %v610, %v639
      %v649 = vadd.f32 %v611, %v639
      %v650 = vadd.f32 %v612, %v639
      %v651 = vadd.f32 %v613, %v639
      %v652 = vadd.f32 %v614, %v639
      %v653 = vadd.f32 %v615, %v639
      %v654 = vadd.f32 %v616, %v639
      %v655 = vadd.f32 %v617, %v639
      %v656 = vadd.f32 %v618, %v639
      %v657 = vadd.f32 %v619, %v639
      %v658 = vadd.f32 %v620, %v639
      %v659 = vadd.f32 %v621, %v639
      %v660 = vadd.f32 %v622, %v639
      %v661 = vadd.f32 %v623, %v639
      %v662 = vadd.f32 %v624, %v639
      %v663 = vadd.f32 %v625, %v639
      %v664 = vadd.f32 %v626, %v639
      %v665 = vadd.f32 %v627, %v639
      %v666 = vadd.f32 %v628, %v639
      %v667 = vadd.f32 %v629, %v639
      %v668 = vadd.f32 %v630, %v639
      %v669 = vadd.f32 %v631, %v639
      %v670 = vadd.f32 %v632, %v639
      %v671 = vadd.f32 %v633, %v639
      %v672 = vadd.f32 %v634, %v639
      %v673 = vmax.f32 %v641, 0.0
      %v674 = vmax.f32 %v642, 0.0
      %v675 = vmax.f32 %v643, 0.0
      %v676 = vmax.f32 %v644, 0.0
      %v677 = vmax.f32 %v645, 0.0
      %v678 = vmax.f32 %v646, 0.0
      %v679 = vmax.f32 %v647, 0.0
      %v680 = vmax.f32 %v648, 0.0
      %v681 = vmax.f32 %v649, 0.0
      %v682 = vmax.f32 %v650, 0.0
      %v683 = vmax.f32 %v651, 0.0
      %v684 = vmax.f32 %v652, 0.0
      %v685 = vmax.f32 %v653, 0.0
      %v686 = vmax.f32 %v654, 0.0
      %v687 = vmax.f32 %v655, 0.0
      %v688 = vmax.f32 %v656, 0.0
      %v689 = vmax.f32 %v657, 0.0
      %v690 = vmax.f32 %v658, 0.0
      %v691 = vmax.f32 %v659, 0.0
      %v692 = vmax.f32 %v660, 0.0
      %v693 = vmax.f32 %v661, 0.0
      %v694 = vmax.f32 %v662, 0.0
      %v695 = vmax.f32 %v663, 0.0
      %v696 = vmax.f32 %v664, 0.0
      %v697 = vmax.f32 %v665, 0.0
      %v698 = vmax.f32 %v666, 0.0
      %v699 = vmax.f32 %v667, 0.0
      %v700 = vmax.f32 %v668, 0.0
      %v701 = vmax.f32 %v669, 0.0
      %v702 = vmax.f32 %v670, 0.0
      %v703 = vmax.f32 %v671, 0.0
      %v704 = vmax.f32 %v672, 0.0
      %705 = vst [vmem:[%s379] sm:$0xff] %v673
      %706 = vst [vmem:[%s379 + $0x8] sm:$0xff] %v674
      %707 = vst [vmem:[%s379 + $0x10] sm:$0xff] %v675
      %708 = vst [vmem:[%s379 + $0x18] sm:$0xff] %v676
      %709 = vst [vmem:[%s379 + $0x20] sm:$0xff] %v677
      %710 = vst [vmem:[%s379 + $0x28] sm:$0xff] %v678
      %711 = vst [vmem:[%s379 + $0x30] sm:$0xff] %v679
      %712 = vst [vmem:[%s379 + $0x38] sm:$0xff] %v680
      %713 = vst [vmem:[%s379 + $0x40] sm:$0xff] %v681
      %714 = vst [vmem:[%s379 + $0x48] sm:$0xff] %v682
      %715 = vst [vmem:[%s379 + $0x50] sm:$0xff] %v683
      %716 = vst [vmem:[%s379 + $0x58] sm:$0xff] %v684
      %717 = vst [vmem:[%s379 + $0x60] sm:$0xff] %v685
      %718 = vst [vmem:[%s379 + $0x68] sm:$0xff] %v686
      %719 = vst [vmem:[%s379 + $0x70] sm:$0xff] %v687
      %720 = vst [vmem:[%s379 + $0x78] sm:$0xff] %v688
      %721 = vst [vmem:[%s379 + $0x80] sm:$0xff] %v689
      %722 = vst [vmem:[%s379 + $0x88] sm:$0xff] %v690
      %723 = vst [vmem:[%s379 + $0x90] sm:$0xff] %v691
      %724 = vst [vmem:[%s379 + $0x98] sm:$0xff] %v692
      %725 = vst [vmem:[%s379 + $0xa0] sm:$0xff] %v693
      %726 = vst [vmem:[%s379 + $0xa8] sm:$0xff] %v694
      %727 = vst [vmem:[%s379 + $0xb0] sm:$0xff] %v695
      %728 = vst [vmem:[%s379 + $0xb8] sm:$0xff] %v696
      %729 = vst [vmem:[%s379 + $0xc0] sm:$0xff] %v697
      %730 = vst [vmem:[%s379 + $0xc8] sm:$0xff] %v698
      %731 = vst [vmem:[%s379 + $0xd0] sm:$0xff] %v699
      %732 = vst [vmem:[%s379 + $0xd8] sm:$0xff] %v700
      %733 = vst [vmem:[%s379 + $0xe0] sm:$0xff] %v701
      %734 = vst [vmem:[%s379 + $0xe8] sm:$0xff] %v702
      %735 = vst [vmem:[%s379 + $0xf0] sm:$0xff] %v703
      %736 = vst [vmem:[%s379 + $0xf8] sm:$0xff] %v704
      %p737 = scmp.lt.s32.totalorder %s21, 1
      %s738 = scalar_select %p737, %s21, 1
      %s739 = smul.addr %s738, 32
      %s740 = smul.addr %s739, 8
      %s741 = scalar_lea.vmem %s10, %s740
      // Predicated region
      $region61: #{basic_block_forward.9} parent=59 // pred_check
        %p742 = pneg %p259
      $region62: #{basic_block_forward.9} parent=59 // pred_check_branch
        %744 = sbr.rel (%p742) target = $region64
      $region63: #{basic_block_forward.9} parent=59 // pred_region
        _
      $region64: #{basic_block_forward.9} parent=59 // pred_fallthru
        _
    $region60: #{basic_block_forward.9} parent=5 // pred_fallthru
      _
    %p745 = scmp.le.s32.totalorder 2, %s16
    // Predicated region
    $region65: #{basic_block_forward.9} parent=5 // pred_check
      %p746 = pneg %p745
    $region66: #{basic_block_forward.9} parent=5 // pred_check_branch
      %748 = sbr.rel (%p746) target = $region68
    $region67: #{basic_block_forward.9} parent=5 // pred_region
      %s749 = ssub.s32 %s16, 2
      // Predicated region
      $region69: #{basic_block_forward.9} parent=67 // pred_check
        %p750 = pneg %p265
      $region70: #{basic_block_forward.9} parent=67 // pred_check_branch
        %752 = sbr.rel (%p750) target = $region72
      $region71: #{basic_block_forward.9} parent=67 // pred_region
        %p753 = scmp.lt.s32.totalorder %s22, 1
        %s754 = scalar_select %p753, %s22, 1
        %s755 = smul.addr %s754, 32
        %s756 = smul.addr %s755, 8
        %s757 = scalar_lea.vmem %s10, %s756
      $region72: #{basic_block_forward.9} parent=67 // pred_fallthru
        _
    $region68: #{basic_block_forward.9} parent=5 // pred_fallthru
      _
  $region6: #{basic_block_forward.9} parent=0 // loop_footer
    %s20 = sadd.s32 1, %s16
  $region7: #{basic_block_forward.9} parent=0 // loop_footer_branch
    %15 = sbr.rel target = $region3
  $region8: #{basic_block_forward.9} parent=0 // loop_exit
    _

// kernel: basic_block_forward.8
$region0: #{basic_block_forward.8}
  #allocation0 [shape = 'u32[]', space=smem, size = 0x4, offset = 0x4, fixed_abs, tag = 'smem constant byte address 0x4 - core index']
  #allocation1 [shape = 'u32[144,128]{1,0:T(1,128)}', space=vmem, size = 0x12000, scoped, tag = 'internal scratch']
  %s0 = inlined_call_operand.vmem [shape: f32[2,16,16,128], index: 0, kind: input, shape index: {}]
  %s1 = inlined_call_operand.vmem [shape: bf16[128,128], index: 1, kind: input, shape index: {}]
  %s2 = inlined_call_operand.vmem [shape: f32[2,256,128], index: 2, kind: output, shape index: {0}]
  %s3 = inlined_call_operand.vmem [shape: f32[2,1,128], index: 3, kind: output, shape index: {1}]
  %s4 = inlined_call_operand.vmem [shape: f32[2,1,128], index: 4, kind: output, shape index: {2}]
  %5 = xla_tuple %s2, %s3, %s4
  %s6 = sld [smem:[#allocation0]]
  $region57: #{basic_block_forward.8} parent=0
    _
  %s8 = ssub.s32 1, %s6
  %s9 = scalar_select 0, %s8, %s6
  loop: start=0, step=1, limit=4
  $region2: #{basic_block_forward.8} parent=0 // loop_pre_header
    _
  $region3: #{basic_block_forward.8} parent=0 // loop_header
    %s11 = sphi 0, %s15
    %p12 = scmp.ge.s32.totalorder %s11, 4
    %s21 = sphi 0, %s23
    %s24 = sphi 0, %s21
    %s25 = sphi 0, %s24
    %s41 = sphi 0, %s25
    %s45 = sphi 0, %s45
    %s47 = sphi 0, %s45
    %s48 = sphi 0, %s47
    %s62 = sphi 0, %s48
    %s68 = sphi 0, %s70
    %s71 = sphi 0, %s68
    %s72 = sphi 0, %s71
    %s88 = sphi 0, %s72
    %s94 = sphi 0, %s96
    %s97 = sphi 0, %s94
    %s98 = sphi 0, %s97
    %s114 = sphi 0, %s98
    %s120 = sphi 0, %s122
    %s123 = sphi 0, %s120
    %s124 = sphi 0, %s123
    %s140 = sphi 0, %s124
  $region4: #{basic_block_forward.8} parent=0 // loop_header_branch
    %14 = sbr.rel (%p12) target = $region8
  $region5: #{basic_block_forward.8} parent=0 // loop_body
    %s16 = ssub.s32 %s11, 1
    %s17 = ssub.s32 %s11, 2
    %s18 = sadd.s32 %s11, 1
    %s19 = ssub.s32 %s11, %s18
    %p20 = scmp.eq.s32.totalorder %s19, 0
    %s22 = sadd.s32 %s21, 1
    %s23 = scalar_select %p20, %s21, %s22
    %p26 = pneg %p20
    %p27 = scmp.eq.s32.totalorder %s11, 1
    %p28 = por %p26, %p27
    %p29 = scmp.ne.s32.totalorder %s21, %s24
    %p30 = scmp.eq.s32.totalorder %s11, 0
    %p31 = por %p29, %p30
    %p32 = scmp.ne.s32.totalorder %s21, %s24
    %p33 = scmp.eq.s32.totalorder %s16, 1
    %p34 = por %p32, %p33
    %p35 = scmp.ne.s32.totalorder %s24, %s25
    %p36 = scmp.eq.s32.totalorder %s16, 0
    %p37 = por %p35, %p36
    %p38 = scmp.ne.s32.totalorder %s24, %s25
    %p39 = scmp.eq.s32.totalorder %s17, 1
    %p40 = por %p38, %p39
    %p42 = scmp.ne.s32.totalorder %s25, %s41
    %p43 = scmp.eq.s32.totalorder %s17, 0
    %p44 = por %p42, %p43
    %s46 = sadd.s32 %s45, 1
    %p49 = scmp.eq.s32.totalorder %s11, 1
    %p50 = scmp.ne.s32.totalorder %s45, %s47
    %p51 = scmp.eq.s32.totalorder %s11, 0
    %p52 = por %p50, %p51
    %p53 = scmp.ne.s32.totalorder %s45, %s47
    %p54 = scmp.eq.s32.totalorder %s16, 1
    %p55 = por %p53, %p54
    %p56 = scmp.ne.s32.totalorder %s47, %s48
    %p57 = scmp.eq.s32.totalorder %s16, 0
    %p58 = por %p56, %p57
    %p59 = scmp.ne.s32.totalorder %s47, %s48
    %p60 = scmp.eq.s32.totalorder %s17, 1
    %p61 = por %p59, %p60
    %p63 = scmp.ne.s32.totalorder %s48, %s62
    %p64 = scmp.eq.s32.totalorder %s17, 0
    %p65 = por %p63, %p64
    %s66 = ssub.s32 %s11, %s18
    %p67 = scmp.eq.s32.totalorder %s66, 0
    %s69 = sadd.s32 %s68, 1
    %s70 = scalar_select %p67, %s68, %s69
    %p73 = pneg %p67
    %p74 = scmp.eq.s32.totalorder %s11, 1
    %p75 = por %p73, %p74
    %p76 = scmp.ne.s32.totalorder %s68, %s71
    %p77 = scmp.eq.s32.totalorder %s11, 0
    %p78 = por %p76, %p77
    %p79 = scmp.ne.s32.totalorder %s68, %s71
    %p80 = scmp.eq.s32.totalorder %s16, 1
    %p81 = por %p79, %p80
    %p82 = scmp.ne.s32.totalorder %s71, %s72
    %p83 = scmp.eq.s32.totalorder %s16, 0
    %p84 = por %p82, %p83
    %p85 = scmp.ne.s32.totalorder %s71, %s72
    %p86 = scmp.eq.s32.totalorder %s17, 1
    %p87 = por %p85, %p86
    %p89 = scmp.ne.s32.totalorder %s72, %s88
    %p90 = scmp.eq.s32.totalorder %s17, 0
    %p91 = por %p89, %p90
    %s92 = ssub.s32 %s11, %s18
    %p93 = scmp.eq.s32.totalorder %s92, 0
    %s95 = sadd.s32 %s94, 1
    %s96 = scalar_select %p93, %s94, %s95
    %p99 = pneg %p93
    %p100 = scmp.eq.s32.totalorder %s11, 1
    %p101 = por %p99, %p100
    %p102 = scmp.ne.s32.totalorder %s94, %s97
    %p103 = scmp.eq.s32.totalorder %s11, 0
    %p104 = por %p102, %p103
    %p105 = scmp.ne.s32.totalorder %s94, %s97
    %p106 = scmp.eq.s32.totalorder %s16, 1
    %p107 = por %p105, %p106
    %p108 = scmp.ne.s32.totalorder %s97, %s98
    %p109 = scmp.eq.s32.totalorder %s16, 0
    %p110 = por %p108, %p109
    %p111 = scmp.ne.s32.totalorder %s97, %s98
    %p112 = scmp.eq.s32.totalorder %s17, 1
    %p113 = por %p111, %p112
    %p115 = scmp.ne.s32.totalorder %s98, %s114
    %p116 = scmp.eq.s32.totalorder %s17, 0
    %p117 = por %p115, %p116
    %s118 = ssub.s32 %s11, %s18
    %p119 = scmp.eq.s32.totalorder %s118, 0
    %s121 = sadd.s32 %s120, 1
    %s122 = scalar_select %p119, %s120, %s121
    %p125 = pneg %p119
    %p126 = scmp.eq.s32.totalorder %s11, 1
    %p127 = por %p125, %p126
    %p128 = scmp.ne.s32.totalorder %s120, %s123
    %p129 = scmp.eq.s32.totalorder %s11, 0
    %p130 = por %p128, %p129
    %p131 = scmp.ne.s32.totalorder %s120, %s123
    %p132 = scmp.eq.s32.totalorder %s16, 1
    %p133 = por %p131, %p132
    %p134 = scmp.ne.s32.totalorder %s123, %s124
    %p135 = scmp.eq.s32.totalorder %s16, 0
    %p136 = por %p134, %p135
    %p137 = scmp.ne.s32.totalorder %s123, %s124
    %p138 = scmp.eq.s32.totalorder %s17, 1
    %p139 = por %p137, %p138
    %p141 = scmp.ne.s32.totalorder %s124, %s140
    %p142 = scmp.eq.s32.totalorder %s17, 0
    %p143 = por %p141, %p142
    %p144 = scmp.le.s32.totalorder 1, %s11
    %p145 = scmp.lt.s32.totalorder %s11, 3
    %p146 = pnand %p144, %p145
    %p147 = pneg %p146
    // Predicated region
    $region9: #{basic_block_forward.8} parent=5 // pred_check
      _
    $region10: #{basic_block_forward.8} parent=5 // pred_check_branch
      %149 = sbr.rel (%p146) target = $region12
    $region11: #{basic_block_forward.8} parent=5 // pred_region
      %s150 = ssub.s32 %s11, 1
      // Predicated region
      $region13: #{basic_block_forward.8} parent=11 // pred_check
        %p151 = pneg %p58
      $region14: #{basic_block_forward.8} parent=11 // pred_check_branch
        %153 = sbr.rel (%p151) target = $region16
      $region15: #{basic_block_forward.8} parent=11 // pred_region
        _
      $region16: #{basic_block_forward.8} parent=11 // pred_fallthru
        _
    $region12: #{basic_block_forward.8} parent=5 // pred_fallthru
      _
    %p154 = scmp.lt.s32.totalorder %s11, 2
    // Predicated region
    $region17: #{basic_block_forward.8} parent=5 // pred_check
      %p155 = pneg %p154
    $region18: #{basic_block_forward.8} parent=5 // pred_check_branch
      %157 = sbr.rel (%p155) target = $region20
    $region19: #{basic_block_forward.8} parent=5 // pred_region
      // Predicated region
      $region21: #{basic_block_forward.8} parent=19 // pred_check
        %p158 = pneg %p31
      $region22: #{basic_block_forward.8} parent=19 // pred_check_branch
        %160 = sbr.rel (%p158) target = $region24
      $region23: #{basic_block_forward.8} parent=19 // pred_region
        %p161 = scmp.lt.s32.totalorder %s11, 1
        %s162 = scalar_select %p161, %s11, 1
        %s163 = smul.addr %s162, 32
        %s164 = smul.addr %s163, 8
        %s165 = scalar_lea.vmem %s0, %s164
      $region24: #{basic_block_forward.8} parent=19 // pred_fallthru
        _
    $region20: #{basic_block_forward.8} parent=5 // pred_fallthru
      _
    %p166 = scmp.le.s32.totalorder 1, %s11
    %p167 = scmp.lt.s32.totalorder %s11, 3
    %p168 = pnand %p166, %p167
    %p169 = pneg %p168
    // Predicated region
    $region25: #{basic_block_forward.8} parent=5 // pred_check
      _
    $region26: #{basic_block_forward.8} parent=5 // pred_check_branch
      %171 = sbr.rel (%p168) target = $region28
    $region27: #{basic_block_forward.8} parent=5 // pred_region
      %s172 = ssub.s32 %s11, 1
      %p173 = scmp.lt.s32.totalorder %s16, 1
      %s174 = scalar_select %p173, %s16, 1
      %s175 = smul.addr %s174, 32
      %s176 = smul.addr %s175, 8
      %s177 = scalar_lea.vmem %s0, %s176
      %p178 = pneg %p37
      %p179 = pneg %p34
      %p180 = pneg %p58
      %p181 = pneg %p55
      %p182 = pneg %p84
      %p183 = pneg %p81
      %p184 = scmp.lt.s32.totalorder %s16, 1
      %s185 = scalar_select %p184, %s16, 1
      %s186 = smul.addr %s185, 32
      %s187 = smul.addr %s186, 8
      %s188 = scalar_lea.vmem %s2, %s187
      %p189 = pneg %p110
      %p190 = pneg %p107
      %p191 = scmp.lt.s32.totalorder %s16, 1
      %s192 = scalar_select %p191, %s16, 1
      %s193 = scalar_lea.vmem %s3, %s192
      %p194 = pneg %p136
      %p195 = pneg %p133
      %p196 = scmp.lt.s32.totalorder %s16, 1
      %s197 = scalar_select %p196, %s16, 1
      %s198 = scalar_lea.vmem %s4, %s197
      %p199 = scmp.lt.s32.totalorder %s16, 1
      %s200 = scalar_select %p199, %s16, 1
      %s201 = smul.addr %s200, 32
      %s202 = smul.addr %s201, 8
      %s203 = scalar_lea.vmem %s0, %s202
      %p204 = scmp.lt.s32.totalorder %s16, 1
      %s205 = scalar_select %p204, %s16, 1
      %s206 = smul.addr %s205, 32
      %s207 = smul.addr %s206, 8
      %s208 = scalar_lea.vmem %s2, %s207
      %p209 = scmp.lt.s32.totalorder %s16, 1
      %s210 = scalar_select %p209, %s16, 1
      %s211 = scalar_lea.vmem %s3, %s210
      %p212 = scmp.lt.s32.totalorder %s16, 1
      %s213 = scalar_select %p212, %s16, 1
      %s214 = scalar_lea.vmem %s4, %s213
      %216 = vst [vmem:[%s208] sm:$0xff] 0.0
      %217 = vst [vmem:[%s208 + $0x8] sm:$0xff] 0.0
      %218 = vst [vmem:[%s208 + $0x10] sm:$0xff] 0.0
      %219 = vst [vmem:[%s208 + $0x18] sm:$0xff] 0.0
      %220 = vst [vmem:[%s208 + $0x20] sm:$0xff] 0.0
      %221 = vst [vmem:[%s208 + $0x28] sm:$0xff] 0.0
      %222 = vst [vmem:[%s208 + $0x30] sm:$0xff] 0.0
      %223 = vst [vmem:[%s208 + $0x38] sm:$0xff] 0.0
      %224 = vst [vmem:[%s208 + $0x40] sm:$0xff] 0.0
      %225 = vst [vmem:[%s208 + $0x48] sm:$0xff] 0.0
      %226 = vst [vmem:[%s208 + $0x50] sm:$0xff] 0.0
      %227 = vst [vmem:[%s208 + $0x58] sm:$0xff] 0.0
      %228 = vst [vmem:[%s208 + $0x60] sm:$0xff] 0.0
      %229 = vst [vmem:[%s208 + $0x68] sm:$0xff] 0.0
      %230 = vst [vmem:[%s208 + $0x70] sm:$0xff] 0.0
      %231 = vst [vmem:[%s208 + $0x78] sm:$0xff] 0.0
      %232 = vst [vmem:[%s208 + $0x80] sm:$0xff] 0.0
      %233 = vst [vmem:[%s208 + $0x88] sm:$0xff] 0.0
      %234 = vst [vmem:[%s208 + $0x90] sm:$0xff] 0.0
      %235 = vst [vmem:[%s208 + $0x98] sm:$0xff] 0.0
      %236 = vst [vmem:[%s208 + $0xa0] sm:$0xff] 0.0
      %237 = vst [vmem:[%s208 + $0xa8] sm:$0xff] 0.0
      %238 = vst [vmem:[%s208 + $0xb0] sm:$0xff] 0.0
      %239 = vst [vmem:[%s208 + $0xb8] sm:$0xff] 0.0
      %240 = vst [vmem:[%s208 + $0xc0] sm:$0xff] 0.0
      %241 = vst [vmem:[%s208 + $0xc8] sm:$0xff] 0.0
      %242 = vst [vmem:[%s208 + $0xd0] sm:$0xff] 0.0
      %243 = vst [vmem:[%s208 + $0xd8] sm:$0xff] 0.0
      %244 = vst [vmem:[%s208 + $0xe0] sm:$0xff] 0.0
      %245 = vst [vmem:[%s208 + $0xe8] sm:$0xff] 0.0
      %246 = vst [vmem:[%s208 + $0xf0] sm:$0xff] 0.0
      %247 = vst [vmem:[%s208 + $0xf8] sm:$0xff] 0.0
      %v248 = vld [vmem:[%s203] sm:$0xff]
      %v249 = vld [vmem:[%s203 + $0x8] sm:$0xff]
      %v250 = vld [vmem:[%s203 + $0x10] sm:$0xff]
      %v251 = vld [vmem:[%s203 + $0x18] sm:$0xff]
      %v252 = vld [vmem:[%s203 + $0x20] sm:$0xff]
      %v253 = vld [vmem:[%s203 + $0x28] sm:$0xff]
      %v254 = vld [vmem:[%s203 + $0x30] sm:$0xff]
      %v255 = vld [vmem:[%s203 + $0x38] sm:$0xff]
      %v256 = vld [vmem:[%s203 + $0x40] sm:$0xff]
      %v257 = vld [vmem:[%s203 + $0x48] sm:$0xff]
      %v258 = vld [vmem:[%s203 + $0x50] sm:$0xff]
      %v259 = vld [vmem:[%s203 + $0x58] sm:$0xff]
      %v260 = vld [vmem:[%s203 + $0x60] sm:$0xff]
      %v261 = vld [vmem:[%s203 + $0x68] sm:$0xff]
      %v262 = vld [vmem:[%s203 + $0x70] sm:$0xff]
      %v263 = vld [vmem:[%s203 + $0x78] sm:$0xff]
      %v264 = vld [vmem:[%s203 + $0x80] sm:$0xff]
      %v265 = vld [vmem:[%s203 + $0x88] sm:$0xff]
      %v266 = vld [vmem:[%s203 + $0x90] sm:$0xff]
      %v267 = vld [vmem:[%s203 + $0x98] sm:$0xff]
      %v268 = vld [vmem:[%s203 + $0xa0] sm:$0xff]
      %v269 = vld [vmem:[%s203 + $0xa8] sm:$0xff]
      %v270 = vld [vmem:[%s203 + $0xb0] sm:$0xff]
      %v271 = vld [vmem:[%s203 + $0xb8] sm:$0xff]
      %v272 = vld [vmem:[%s203 + $0xc0] sm:$0xff]
      %v273 = vld [vmem:[%s203 + $0xc8] sm:$0xff]
      %v274 = vld [vmem:[%s203 + $0xd0] sm:$0xff]
      %v275 = vld [vmem:[%s203 + $0xd8] sm:$0xff]
      %v276 = vld [vmem:[%s203 + $0xe0] sm:$0xff]
      %v277 = vld [vmem:[%s203 + $0xe8] sm:$0xff]
      %v278 = vld [vmem:[%s203 + $0xf0] sm:$0xff]
      %v279 = vld [vmem:[%s203 + $0xf8] sm:$0xff]
      %v280 = vpack.c.bf16 %v249, %v248
      %v281 = vpack.c.bf16 %v251, %v250
      %v282 = vpack.c.bf16 %v253, %v252
      %v283 = vpack.c.bf16 %v255, %v254
      %v284 = vpack.c.bf16 %v257, %v256
      %v285 = vpack.c.bf16 %v259, %v258
      %v286 = vpack.c.bf16 %v261, %v260
      %v287 = vpack.c.bf16 %v263, %v262
      %v288 = vpack.c.bf16 %v265, %v264
      %v289 = vpack.c.bf16 %v267, %v266
      %v290 = vpack.c.bf16 %v269, %v268
      %v291 = vpack.c.bf16 %v271, %v270
      %v292 = vpack.c.bf16 %v273, %v272
      %v293 = vpack.c.bf16 %v275, %v274
      %v294 = vpack.c.bf16 %v277, %v276
      %v295 = vpack.c.bf16 %v279, %v278
      %v296 = vld [vmem:[%s1] sm:$0xf]
      %v297 = vld [vmem:[%s1 + $0x4] sm:$0xf]
      %v298 = vld [vmem:[%s1 + $0x8] sm:$0xf]
      %v299 = vld [vmem:[%s1 + $0xc] sm:$0xf]
      %v300 = vld [vmem:[%s1 + $0x10] sm:$0xf]
      %v301 = vld [vmem:[%s1 + $0x14] sm:$0xf]
      %v302 = vld [vmem:[%s1 + $0x18] sm:$0xf]
      %v303 = vld [vmem:[%s1 + $0x1c] sm:$0xf]
      %v304 = vld [vmem:[%s1 + $0x20] sm:$0xf]
      %v305 = vld [vmem:[%s1 + $0x24] sm:$0xf]
      %v306 = vld [vmem:[%s1 + $0x28] sm:$0xf]
      %v307 = vld [vmem:[%s1 + $0x2c] sm:$0xf]
      %v308 = vld [vmem:[%s1 + $0x30] sm:$0xf]
      %v309 = vld [vmem:[%s1 + $0x34] sm:$0xf]
      %v310 = vld [vmem:[%s1 + $0x38] sm:$0xf]
      %v311 = vld [vmem:[%s1 + $0x3c] sm:$0xf]
      %v312 = vld [vmem:[%s208] sm:$0xff]
      %v313 = vld [vmem:[%s208 + $0x8] sm:$0xff]
      %v314 = vld [vmem:[%s208 + $0x10] sm:$0xff]
      %v315 = vld [vmem:[%s208 + $0x18] sm:$0xff]
      %v316 = vld [vmem:[%s208 + $0x20] sm:$0xff]
      %v317 = vld [vmem:[%s208 + $0x28] sm:$0xff]
      %v318 = vld [vmem:[%s208 + $0x30] sm:$0xff]
      %v319 = vld [vmem:[%s208 + $0x38] sm:$0xff]
      %v320 = vld [vmem:[%s208 + $0x40] sm:$0xff]
      %v321 = vld [vmem:[%s208 + $0x48] sm:$0xff]
      %v322 = vld [vmem:[%s208 + $0x50] sm:$0xff]
      %v323 = vld [vmem:[%s208 + $0x58] sm:$0xff]
      %v324 = vld [vmem:[%s208 + $0x60] sm:$0xff]
      %v325 = vld [vmem:[%s208 + $0x68] sm:$0xff]
      %v326 = vld [vmem:[%s208 + $0x70] sm:$0xff]
      %v327 = vld [vmem:[%s208 + $0x78] sm:$0xff]
      %v328 = vld [vmem:[%s208 + $0x80] sm:$0xff]
      %v329 = vld [vmem:[%s208 + $0x88] sm:$0xff]
      %v330 = vld [vmem:[%s208 + $0x90] sm:$0xff]
      %v331 = vld [vmem:[%s208 + $0x98] sm:$0xff]
      %v332 = vld [vmem:[%s208 + $0xa0] sm:$0xff]
      %v333 = vld [vmem:[%s208 + $0xa8] sm:$0xff]
      %v334 = vld [vmem:[%s208 + $0xb0] sm:$0xff]
      %v335 = vld [vmem:[%s208 + $0xb8] sm:$0xff]
      %v336 = vld [vmem:[%s208 + $0xc0] sm:$0xff]
      %v337 = vld [vmem:[%s208 + $0xc8] sm:$0xff]
      %v338 = vld [vmem:[%s208 + $0xd0] sm:$0xff]
      %v339 = vld [vmem:[%s208 + $0xd8] sm:$0xff]
      %v340 = vld [vmem:[%s208 + $0xe0] sm:$0xff]
      %v341 = vld [vmem:[%s208 + $0xe8] sm:$0xff]
      %v342 = vld [vmem:[%s208 + $0xf0] sm:$0xff]
      %v343 = vld [vmem:[%s208 + $0xf8] sm:$0xff]
      %v360 = vunpack.c.l.b16 %v296
      %v361 = vunpack.c.l.b16 %v297
      %v362 = vunpack.c.l.b16 %v298
      %v363 = vunpack.c.l.b16 %v299
      %v364 = vunpack.c.l.b16 %v300
      %v365 = vunpack.c.l.b16 %v301
      %v366 = vunpack.c.l.b16 %v302
      %v367 = vunpack.c.l.b16 %v303
      %v368 = vunpack.c.l.b16 %v304
      %v369 = vunpack.c.l.b16 %v305
      %v370 = vunpack.c.l.b16 %v306
      %v371 = vunpack.c.l.b16 %v307
      %v372 = vunpack.c.l.b16 %v308
      %v373 = vunpack.c.l.b16 %v309
      %v374 = vunpack.c.l.b16 %v310
      %v375 = vunpack.c.l.b16 %v311
      %v376 = vpack.c.b16 %v361, %v360
      %v377 = vpack.c.b16 %v363, %v362
      %v378 = vpack.c.b16 %v365, %v364
      %v379 = vpack.c.b16 %v367, %v366
      %v380 = vpack.c.b16 %v369, %v368
      %v381 = vpack.c.b16 %v371, %v370
      %v382 = vpack.c.b16 %v373, %v372
      %v383 = vpack.c.b16 %v375, %v374
      %392 = vmatprep.subr.bf16.mxu0 0
      %393 = vmatpush1.bf16.msra.mxu0 %v376
      %394 = vmatprep.subr.bf16.mxu0 0
      %395 = vmatpush1.bf16.msra.mxu0 %v377
      %396 = vmatprep.subr.bf16.mxu0 0
      %397 = vmatpush1.bf16.msra.mxu0 %v378
      %398 = vmatprep.subr.bf16.mxu0 0
      %399 = vmatpush1.bf16.msra.mxu0 %v379
      %400 = vmatprep.subr.bf16.mxu0 0
      %401 = vmatpush1.bf16.msra.mxu0 %v380
      %402 = vmatprep.subr.bf16.mxu0 0
      %403 = vmatpush1.bf16.msra.mxu0 %v381
      %404 = vmatprep.subr.bf16.mxu0 0
      %405 = vmatpush1.bf16.msra.mxu0 %v382
      %406 = vmatprep.subr.bf16.mxu0 0
      %407 = vmatpush1.bf16.msra.mxu0 %v383
      %408 = vmatprep.subr.bf16.mxu0 0
      %409 = vmatpush1.bf16.msra.mxu0 0
      %410 = vmatprep.subr.bf16.mxu0 0
      %411 = vmatpush1.bf16.msra.mxu0 0
      %412 = vmatprep.subr.bf16.mxu0 0
      %413 = vmatpush1.bf16.msra.mxu0 0
      %414 = vmatprep.subr.bf16.mxu0 0
      %415 = vmatpush1.bf16.msra.mxu0 0
      %416 = vmatprep.subr.bf16.mxu0 0
      %417 = vmatpush1.bf16.msra.mxu0 0
      %418 = vmatprep.subr.bf16.mxu0 0
      %419 = vmatpush1.bf16.msra.mxu0 0
      %420 = vmatprep.subr.bf16.mxu0 0
      %421 = vmatpush1.bf16.msra.mxu0 0
      %422 = vmatprep.subr.bf16.mxu0 0
      %423 = vmatpush1.bf16.msra.mxu0 0
      %424 = vmatprep.mubr.bf16.mxu0 0
      %425 = vmatmul.mubr.bf16.gmra.mrb[0].mxu0 %v280
      %v426 = vpop.f32.mrb[0].mxu0
      %v427 = vadd.f32 0.0, %v426
      %v428 = vpop.f32.mrb[0].mxu0
      %v429 = vpop.f32.mrb[0].mxu0
      %v430 = vadd.f32 0.0, %v429
      %v431 = vpop.f32.mrb[0].mxu0
      %432 = vmatprep.mubr.bf16.mxu0 0
      %433 = vmatmul.mubr.bf16.gmra.mrb[0].mxu0 %v281
      %v434 = vpop.f32.mrb[0].mxu0
      %v435 = vadd.f32 0.0, %v434
      %v436 = vpop.f32.mrb[0].mxu0
      %v437 = vpop.f32.mrb[0].mxu0
      %v438 = vadd.f32 0.0, %v437
      %v439 = vpop.f32.mrb[0].mxu0
      %440 = vmatprep.mubr.bf16.mxu0 0
      %441 = vmatmul.mubr.bf16.gmra.mrb[0].mxu0 %v282
      %v442 = vpop.f32.mrb[0].mxu0
      %v443 = vadd.f32 0.0, %v442
      %v444 = vpop.f32.mrb[0].mxu0
      %v445 = vpop.f32.mrb[0].mxu0
      %v446 = vadd.f32 0.0, %v445
      %v447 = vpop.f32.mrb[0].mxu0
      %448 = vmatprep.mubr.bf16.mxu0 0
      %449 = vmatmul.mubr.bf16.gmra.mrb[0].mxu0 %v283
      %v450 = vpop.f32.mrb[0].mxu0
      %v451 = vadd.f32 0.0, %v450
      %v452 = vpop.f32.mrb[0].mxu0
      %v453 = vpop.f32.mrb[0].mxu0
      %v454 = vadd.f32 0.0, %v453
      %v455 = vpop.f32.mrb[0].mxu0
      %456 = vmatprep.mubr.bf16.mxu0 0
      %457 = vmatmul.mubr.bf16.gmra.mrb[0].mxu0 %v284
      %v458 = vpop.f32.mrb[0].mxu0
      %v459 = vadd.f32 0.0, %v458
      %v460 = vpop.f32.mrb[0].mxu0
      %v461 = vpop.f32.mrb[0].mxu0
      %v462 = vadd.f32 0.0, %v461
      %v463 = vpop.f32.mrb[0].mxu0
      %464 = vmatprep.mubr.bf16.mxu0 0
      %465 = vmatmul.mubr.bf16.gmra.mrb[0].mxu0 %v285
      %v466 = vpop.f32.mrb[0].mxu0
      %v467 = vadd.f32 0.0, %v466
      %v468 = vpop.f32.mrb[0].mxu0
      %v469 = vpop.f32.mrb[0].mxu0
      %v470 = vadd.f32 0.0, %v469
      %v471 = vpop.f32.mrb[0].mxu0
      %472 = vmatprep.mubr.bf16.mxu0 0
      %473 = vmatmul.mubr.bf16.gmra.mrb[0].mxu0 %v286
      %v474 = vpop.f32.mrb[0].mxu0
      %v475 = vadd.f32 0.0, %v474
      %v476 = vpop.f32.mrb[0].mxu0
      %v477 = vpop.f32.mrb[0].mxu0
      %v478 = vadd.f32 0.0, %v477
      %v479 = vpop.f32.mrb[0].mxu0
      %480 = vmatprep.mubr.bf16.mxu0 0
      %481 = vmatmul.mubr.bf16.gmra.mrb[0].mxu0 %v287
      %v482 = vpop.f32.mrb[0].mxu0
      %v483 = vadd.f32 0.0, %v482
      %v484 = vpop.f32.mrb[0].mxu0
      %v485 = vpop.f32.mrb[0].mxu0
      %v486 = vadd.f32 0.0, %v485
      %v487 = vpop.f32.mrb[0].mxu0
      %488 = vmatprep.mubr.bf16.mxu0 0
      %489 = vmatmul.mubr.bf16.gmra.mrb[0].mxu0 %v288
      %v490 = vpop.f32.mrb[0].mxu0
      %v491 = vadd.f32 0.0, %v490
      %v492 = vpop.f32.mrb[0].mxu0
      %v493 = vpop.f32.mrb[0].mxu0
      %v494 = vadd.f32 0.0, %v493
      %v495 = vpop.f32.mrb[0].mxu0
      %496 = vmatprep.mubr.bf16.mxu0 0
      %497 = vmatmul.mubr.bf16.gmra.mrb[0].mxu0 %v289
      %v498 = vpop.f32.mrb[0].mxu0
      %v499 = vadd.f32 0.0, %v498
      %v500 = vpop.f32.mrb[0].mxu0
      %v501 = vpop.f32.mrb[0].mxu0
      %v502 = vadd.f32 0.0, %v501
      %v503 = vpop.f32.mrb[0].mxu0
      %504 = vmatprep.mubr.bf16.mxu0 0
      %505 = vmatmul.mubr.bf16.gmra.mrb[0].mxu0 %v290
      %v506 = vpop.f32.mrb[0].mxu0
      %v507 = vadd.f32 0.0, %v506
      %v508 = vpop.f32.mrb[0].mxu0
      %v509 = vpop.f32.mrb[0].mxu0
      %v510 = vadd.f32 0.0, %v509
      %v511 = vpop.f32.mrb[0].mxu0
      %512 = vmatprep.mubr.bf16.mxu0 0
      %513 = vmatmul.mubr.bf16.gmra.mrb[0].mxu0 %v291
      %v514 = vpop.f32.mrb[0].mxu0
      %v515 = vadd.f32 0.0, %v514
      %v516 = vpop.f32.mrb[0].mxu0
      %v517 = vpop.f32.mrb[0].mxu0
      %v518 = vadd.f32 0.0, %v517
      %v519 = vpop.f32.mrb[0].mxu0
      %520 = vmatprep.mubr.bf16.mxu0 0
      %521 = vmatmul.mubr.bf16.gmra.mrb[0].mxu0 %v292
      %v522 = vpop.f32.mrb[0].mxu0
      %v523 = vadd.f32 0.0, %v522
      %v524 = vpop.f32.mrb[0].mxu0
      %v525 = vpop.f32.mrb[0].mxu0
      %v526 = vadd.f32 0.0, %v525
      %v527 = vpop.f32.mrb[0].mxu0
      %528 = vmatprep.mubr.bf16.mxu0 0
      %529 = vmatmul.mubr.bf16.gmra.mrb[0].mxu0 %v293
      %v530 = vpop.f32.mrb[0].mxu0
      %v531 = vadd.f32 0.0, %v530
      %v532 = vpop.f32.mrb[0].mxu0
      %v533 = vpop.f32.mrb[0].mxu0
      %v534 = vadd.f32 0.0, %v533
      %v535 = vpop.f32.mrb[0].mxu0
      %536 = vmatprep.mubr.bf16.mxu0 0
      %537 = vmatmul.mubr.bf16.gmra.mrb[0].mxu0 %v294
      %v538 = vpop.f32.mrb[0].mxu0
      %v539 = vadd.f32 0.0, %v538
      %v540 = vpop.f32.mrb[0].mxu0
      %v541 = vpop.f32.mrb[0].mxu0
      %v542 = vadd.f32 0.0, %v541
      %v543 = vpop.f32.mrb[0].mxu0
      %544 = vmatprep.mubr.bf16.mxu0 0
      %545 = vmatmul.mubr.bf16.gmra.mrb[0].mxu0 %v295
      %v546 = vpop.f32.mrb[0].mxu0
      %v547 = vadd.f32 0.0, %v546
      %v548 = vpop.f32.mrb[0].mxu0
      %v549 = vpop.f32.mrb[0].mxu0
      %v550 = vadd.f32 0.0, %v549
      %v551 = vpop.f32.mrb[0].mxu0
      %552 = vdwg.mxu0
      %v553 = vadd.f32 %v312, %v427
      %v554 = vadd.f32 %v313, %v430
      %v555 = vadd.f32 %v314, %v435
      %v556 = vadd.f32 %v315, %v438
      %v557 = vadd.f32 %v316, %v443
      %v558 = vadd.f32 %v317, %v446
      %v559 = vadd.f32 %v318, %v451
      %v560 = vadd.f32 %v319, %v454
      %v561 = vadd.f32 %v320, %v459
      %v562 = vadd.f32 %v321, %v462
      %v563 = vadd.f32 %v322, %v467
      %v564 = vadd.f32 %v323, %v470
      %v565 = vadd.f32 %v324, %v475
      %v566 = vadd.f32 %v325, %v478
      %v567 = vadd.f32 %v326, %v483
      %v568 = vadd.f32 %v327, %v486
      %v569 = vadd.f32 %v328, %v491
      %v570 = vadd.f32 %v329, %v494
      %v571 = vadd.f32 %v330, %v499
      %v572 = vadd.f32 %v331, %v502
      %v573 = vadd.f32 %v332, %v507
      %v574 = vadd.f32 %v333, %v510
      %v575 = vadd.f32 %v334, %v515
      %v576 = vadd.f32 %v335, %v518
      %v577 = vadd.f32 %v336, %v523
      %v578 = vadd.f32 %v337, %v526
      %v579 = vadd.f32 %v338, %v531
      %v580 = vadd.f32 %v339, %v534
      %v581 = vadd.f32 %v340, %v539
      %v582 = vadd.f32 %v341, %v542
      %v583 = vadd.f32 %v342, %v547
      %v584 = vadd.f32 %v343, %v550
      %585 = vst [vmem:[%s208] sm:$0xff] %v553
      %586 = vst [vmem:[%s208 + $0x8] sm:$0xff] %v554
      %587 = vst [vmem:[%s208 + $0x10] sm:$0xff] %v555
      %588 = vst [vmem:[%s208 + $0x18] sm:$0xff] %v556
      %589 = vst [vmem:[%s208 + $0x20] sm:$0xff] %v557
      %590 = vst [vmem:[%s208 + $0x28] sm:$0xff] %v558
      %591 = vst [vmem:[%s208 + $0x30] sm:$0xff] %v559
      %592 = vst [vmem:[%s208 + $0x38] sm:$0xff] %v560
      %593 = vst [vmem:[%s208 + $0x40] sm:$0xff] %v561
      %594 = vst [vmem:[%s208 + $0x48] sm:$0xff] %v562
      %595 = vst [vmem:[%s208 + $0x50] sm:$0xff] %v563
      %596 = vst [vmem:[%s208 + $0x58] sm:$0xff] %v564
      %597 = vst [vmem:[%s208 + $0x60] sm:$0xff] %v565
      %598 = vst [vmem:[%s208 + $0x68] sm:$0xff] %v566
      %599 = vst [vmem:[%s208 + $0x70] sm:$0xff] %v567
      %600 = vst [vmem:[%s208 + $0x78] sm:$0xff] %v568
      %601 = vst [vmem:[%s208 + $0x80] sm:$0xff] %v569
      %602 = vst [vmem:[%s208 + $0x88] sm:$0xff] %v570
      %603 = vst [vmem:[%s208 + $0x90] sm:$0xff] %v571
      %604 = vst [vmem:[%s208 + $0x98] sm:$0xff] %v572
      %605 = vst [vmem:[%s208 + $0xa0] sm:$0xff] %v573
      %606 = vst [vmem:[%s208 + $0xa8] sm:$0xff] %v574
      %607 = vst [vmem:[%s208 + $0xb0] sm:$0xff] %v575
      %608 = vst [vmem:[%s208 + $0xb8] sm:$0xff] %v576
      %609 = vst [vmem:[%s208 + $0xc0] sm:$0xff] %v577
      %610 = vst [vmem:[%s208 + $0xc8] sm:$0xff] %v578
      %611 = vst [vmem:[%s208 + $0xd0] sm:$0xff] %v579
      %612 = vst [vmem:[%s208 + $0xd8] sm:$0xff] %v580
      %613 = vst [vmem:[%s208 + $0xe0] sm:$0xff] %v581
      %614 = vst [vmem:[%s208 + $0xe8] sm:$0xff] %v582
      %615 = vst [vmem:[%s208 + $0xf0] sm:$0xff] %v583
      %616 = vst [vmem:[%s208 + $0xf8] sm:$0xff] %v584
      %v617 = vld [vmem:[%s208] sm:$0xff]
      %v618 = vld [vmem:[%s208 + $0x8] sm:$0xff]
      %v619 = vld [vmem:[%s208 + $0x10] sm:$0xff]
      %v620 = vld [vmem:[%s208 + $0x18] sm:$0xff]
      %v621 = vld [vmem:[%s208 + $0x20] sm:$0xff]
      %v622 = vld [vmem:[%s208 + $0x28] sm:$0xff]
      %v623 = vld [vmem:[%s208 + $0x30] sm:$0xff]
      %v624 = vld [vmem:[%s208 + $0x38] sm:$0xff]
      %v625 = vld [vmem:[%s208 + $0x40] sm:$0xff]
      %v626 = vld [vmem:[%s208 + $0x48] sm:$0xff]
      %v627 = vld [vmem:[%s208 + $0x50] sm:$0xff]
      %v628 = vld [vmem:[%s208 + $0x58] sm:$0xff]
      %v629 = vld [vmem:[%s208 + $0x60] sm:$0xff]
      %v630 = vld [vmem:[%s208 + $0x68] sm:$0xff]
      %v631 = vld [vmem:[%s208 + $0x70] sm:$0xff]
      %v632 = vld [vmem:[%s208 + $0x78] sm:$0xff]
      %v633 = vld [vmem:[%s208 + $0x80] sm:$0xff]
      %v634 = vld [vmem:[%s208 + $0x88] sm:$0xff]
      %v635 = vld [vmem:[%s208 + $0x90] sm:$0xff]
      %v636 = vld [vmem:[%s208 + $0x98] sm:$0xff]
      %v637 = vld [vmem:[%s208 + $0xa0] sm:$0xff]
      %v638 = vld [vmem:[%s208 + $0xa8] sm:$0xff]
      %v639 = vld [vmem:[%s208 + $0xb0] sm:$0xff]
      %v640 = vld [vmem:[%s208 + $0xb8] sm:$0xff]
      %v641 = vld [vmem:[%s208 + $0xc0] sm:$0xff]
      %v642 = vld [vmem:[%s208 + $0xc8] sm:$0xff]
      %v643 = vld [vmem:[%s208 + $0xd0] sm:$0xff]
      %v644 = vld [vmem:[%s208 + $0xd8] sm:$0xff]
      %v645 = vld [vmem:[%s208 + $0xe0] sm:$0xff]
      %v646 = vld [vmem:[%s208 + $0xe8] sm:$0xff]
      %v647 = vld [vmem:[%s208 + $0xf0] sm:$0xff]
      %v648 = vld [vmem:[%s208 + $0xf8] sm:$0xff]
      %v649 = vadd.f32 %v617, %v618
      %v650 = vadd.f32 %v649, %v619
      %v651 = vadd.f32 %v650, %v620
      %v652 = vadd.f32 %v651, %v621
      %v653 = vadd.f32 %v652, %v622
      %v654 = vadd.f32 %v653, %v623
      %v655 = vadd.f32 %v654, %v624
      %v656 = vadd.f32 %v655, %v625
      %v657 = vadd.f32 %v656, %v626
      %v658 = vadd.f32 %v657, %v627
      %v659 = vadd.f32 %v658, %v628
      %v660 = vadd.f32 %v659, %v629
      %v661 = vadd.f32 %v660, %v630
      %v662 = vadd.f32 %v661, %v631
      %v663 = vadd.f32 %v662, %v632
      %v664 = vadd.f32 %v663, %v633
      %v665 = vadd.f32 %v664, %v634
      %v666 = vadd.f32 %v665, %v635
      %v667 = vadd.f32 %v666, %v636
      %v668 = vadd.f32 %v667, %v637
      %v669 = vadd.f32 %v668, %v638
      %v670 = vadd.f32 %v669, %v639
      %v671 = vadd.f32 %v670, %v640
      %v672 = vadd.f32 %v671, %v641
      %v673 = vadd.f32 %v672, %v642
      %v674 = vadd.f32 %v673, %v643
      %v675 = vadd.f32 %v674, %v644
      %v676 = vadd.f32 %v675, %v645
      %v677 = vadd.f32 %v676, %v646
      %v678 = vadd.f32 %v677, %v647
      %v679 = vadd.f32 %v678, %v648
      %v680 = vrot.slane %v679, 4
      %v681 = vadd.f32 %v679, %v680
      %v682 = vrot.slane %v681, 2
      %v683 = vadd.f32 %v681, %v682
      %v684 = vrot.slane %v683, 1
      %v685 = vadd.f32 %v683, %v684
      %686 = vst [vmem:[%s211] sm:$0x1] %v685
      %v687 = vmul.f32 %v617, %v617
      %v688 = vmul.f32 %v618, %v618
      %v689 = vmul.f32 %v619, %v619
      %v690 = vmul.f32 %v620, %v620
      %v691 = vmul.f32 %v621, %v621
      %v692 = vmul.f32 %v622, %v622
      %v693 = vmul.f32 %v623, %v623
      %v694 = vmul.f32 %v624, %v624
      %v695 = vmul.f32 %v625, %v625
      %v696 = vmul.f32 %v626, %v626
      %v697 = vmul.f32 %v627, %v627
      %v698 = vmul.f32 %v628, %v628
      %v699 = vmul.f32 %v629, %v629
      %v700 = vmul.f32 %v630, %v630
      %v701 = vmul.f32 %v631, %v631
      %v702 = vmul.f32 %v632, %v632
      %v703 = vmul.f32 %v633, %v633
      %v704 = vmul.f32 %v634, %v634
      %v705 = vmul.f32 %v635, %v635
      %v706 = vmul.f32 %v636, %v636
      %v707 = vmul.f32 %v637, %v637
      %v708 = vmul.f32 %v638, %v638
      %v709 = vmul.f32 %v639, %v639
      %v710 = vmul.f32 %v640, %v640
      %v711 = vmul.f32 %v641, %v641
      %v712 = vmul.f32 %v642, %v642
      %v713 = vmul.f32 %v643, %v643
      %v714 = vmul.f32 %v644, %v644
      %v715 = vmul.f32 %v645, %v645
      %v716 = vmul.f32 %v646, %v646
      %v717 = vmul.f32 %v647, %v647
      %v718 = vmul.f32 %v648, %v648
      %v719 = vadd.f32 %v687, %v688
      %v720 = vadd.f32 %v719, %v689
      %v721 = vadd.f32 %v720, %v690
      %v722 = vadd.f32 %v721, %v691
      %v723 = vadd.f32 %v722, %v692
      %v724 = vadd.f32 %v723, %v693
      %v725 = vadd.f32 %v724, %v694
      %v726 = vadd.f32 %v725, %v695
      %v727 = vadd.f32 %v726, %v696
      %v728 = vadd.f32 %v727, %v697
      %v729 = vadd.f32 %v728, %v698
      %v730 = vadd.f32 %v729, %v699
      %v731 = vadd.f32 %v730, %v700
      %v732 = vadd.f32 %v731, %v701
      %v733 = vadd.f32 %v732, %v702
      %v734 = vadd.f32 %v733, %v703
      %v735 = vadd.f32 %v734, %v704
      %v736 = vadd.f32 %v735, %v705
      %v737 = vadd.f32 %v736, %v706
      %v738 = vadd.f32 %v737, %v707
      %v739 = vadd.f32 %v738, %v708
      %v740 = vadd.f32 %v739, %v709
      %v741 = vadd.f32 %v740, %v710
      %v742 = vadd.f32 %v741, %v711
      %v743 = vadd.f32 %v742, %v712
      %v744 = vadd.f32 %v743, %v713
      %v745 = vadd.f32 %v744, %v714
      %v746 = vadd.f32 %v745, %v715
      %v747 = vadd.f32 %v746, %v716
      %v748 = vadd.f32 %v747, %v717
      %v749 = vadd.f32 %v748, %v718
      %v750 = vrot.slane %v749, 4
      %v751 = vadd.f32 %v749, %v750
      %v752 = vrot.slane %v751, 2
      %v753 = vadd.f32 %v751, %v752
      %v754 = vrot.slane %v753, 1
      %v755 = vadd.f32 %v753, %v754
      %756 = vst [vmem:[%s214] sm:$0x1] %v755
      %p757 = scmp.lt.s32.totalorder %s16, 1
      %s758 = scalar_select %p757, %s16, 1
      %s759 = smul.addr %s758, 32
      %s760 = smul.addr %s759, 8
      %s761 = scalar_lea.vmem %s2, %s760
      %p762 = scmp.lt.s32.totalorder %s16, 1
      %s763 = scalar_select %p762, %s16, 1
      %s764 = scalar_lea.vmem %s3, %s763
      %p765 = scmp.lt.s32.totalorder %s16, 1
      %s766 = scalar_select %p765, %s16, 1
      %s767 = scalar_lea.vmem %s4, %s766
      // Predicated region
      $region29: #{basic_block_forward.8} parent=27 // pred_check
        %p768 = pneg %p81
      $region30: #{basic_block_forward.8} parent=27 // pred_check_branch
        %770 = sbr.rel (%p768) target = $region32
      $region31: #{basic_block_forward.8} parent=27 // pred_region
        _
      $region32: #{basic_block_forward.8} parent=27 // pred_fallthru
        _
      // Predicated region
      $region33: #{basic_block_forward.8} parent=27 // pred_check
        %p771 = pneg %p107
      $region34: #{basic_block_forward.8} parent=27 // pred_check_branch
        %773 = sbr.rel (%p771) target = $region36
      $region35: #{basic_block_forward.8} parent=27 // pred_region
        _
      $region36: #{basic_block_forward.8} parent=27 // pred_fallthru
        _
      // Predicated region
      $region37: #{basic_block_forward.8} parent=27 // pred_check
        %p774 = pneg %p133
      $region38: #{basic_block_forward.8} parent=27 // pred_check_branch
        %776 = sbr.rel (%p774) target = $region40
      $region39: #{basic_block_forward.8} parent=27 // pred_region
        _
      $region40: #{basic_block_forward.8} parent=27 // pred_fallthru
        _
    $region28: #{basic_block_forward.8} parent=5 // pred_fallthru
      _
    %p777 = scmp.le.s32.totalorder 2, %s11
    // Predicated region
    $region41: #{basic_block_forward.8} parent=5 // pred_check
      %p778 = pneg %p777
    $region42: #{basic_block_forward.8} parent=5 // pred_check_branch
      %780 = sbr.rel (%p778) target = $region44
    $region43: #{basic_block_forward.8} parent=5 // pred_region
      %s781 = ssub.s32 %s11, 2
      // Predicated region
      $region45: #{basic_block_forward.8} parent=43 // pred_check
        %p782 = pneg %p87
      $region46: #{basic_block_forward.8} parent=43 // pred_check_branch
        %784 = sbr.rel (%p782) target = $region48
      $region47: #{basic_block_forward.8} parent=43 // pred_region
        %p785 = scmp.lt.s32.totalorder %s17, 1
        %s786 = scalar_select %p785, %s17, 1
        %s787 = smul.addr %s786, 32
        %s788 = smul.addr %s787, 8
        %s789 = scalar_lea.vmem %s2, %s788
      $region48: #{basic_block_forward.8} parent=43 // pred_fallthru
        _
      // Predicated region
      $region49: #{basic_block_forward.8} parent=43 // pred_check
        %p790 = pneg %p113
      $region50: #{basic_block_forward.8} parent=43 // pred_check_branch
        %792 = sbr.rel (%p790) target = $region52
      $region51: #{basic_block_forward.8} parent=43 // pred_region
        %p793 = scmp.lt.s32.totalorder %s17, 1
        %s794 = scalar_select %p793, %s17, 1
        %s795 = scalar_lea.vmem %s3, %s794
      $region52: #{basic_block_forward.8} parent=43 // pred_fallthru
        _
      // Predicated region
      $region53: #{basic_block_forward.8} parent=43 // pred_check
        %p796 = pneg %p139
      $region54: #{basic_block_forward.8} parent=43 // pred_check_branch
        %798 = sbr.rel (%p796) target = $region56
      $region55: #{basic_block_forward.8} parent=43 // pred_region
        %p799 = scmp.lt.s32.totalorder %s17, 1
        %s800 = scalar_select %p799, %s17, 1
        %s801 = scalar_lea.vmem %s4, %s800
      $region56: #{basic_block_forward.8} parent=43 // pred_fallthru
        _
    $region44: #{basic_block_forward.8} parent=5 // pred_fallthru
      _
  $region6: #{basic_block_forward.8} parent=0 // loop_footer
    %s15 = sadd.s32 1, %s11
  $region7: #{basic_block_forward.8} parent=0 // loop_footer_branch
    %10 = sbr.rel target = $region3
  $region8: #{basic_block_forward.8} parent=0 // loop_exit
    _

// kernel: basic_block_forward.5
$region0: #{basic_block_forward.5}
  #allocation0 [shape = 'u32[]', space=smem, size = 0x4, offset = 0x4, fixed_abs, tag = 'smem constant byte address 0x4 - core index']
  #allocation1 [shape = 'u32[144,128]{1,0:T(1,128)}', space=vmem, size = 0x12000, scoped, tag = 'internal scratch']
  %s0 = inlined_call_operand.vmem [shape: f32[2,18,18,128], index: 0, kind: input, shape index: {}]
  %s1 = inlined_call_operand.vmem [shape: bf16[1152,128], index: 1, kind: input, shape index: {}]
  %s2 = inlined_call_operand.vmem [shape: f32[2,256,128], index: 2, kind: output, shape index: {0}]
  %s3 = inlined_call_operand.vmem [shape: f32[2,1,128], index: 3, kind: output, shape index: {1}]
  %s4 = inlined_call_operand.vmem [shape: f32[2,1,128], index: 4, kind: output, shape index: {2}]
  %5 = xla_tuple %s2, %s3, %s4
  %s6 = sld [smem:[#allocation0]]
  $region57: #{basic_block_forward.5} parent=0
    _
  %s8 = ssub.s32 1, %s6
  %s9 = scalar_select 0, %s8, %s6
  loop: start=0, step=1, limit=4
  $region2: #{basic_block_forward.5} parent=0 // loop_pre_header
    _
  $region3: #{basic_block_forward.5} parent=0 // loop_header
    %s11 = sphi 0, %s15
    %p12 = scmp.ge.s32.totalorder %s11, 4
    %s21 = sphi 0, %s23
    %s24 = sphi 0, %s21
    %s25 = sphi 0, %s24
    %s41 = sphi 0, %s25
    %s45 = sphi 0, %s45
    %s47 = sphi 0, %s45
    %s48 = sphi 0, %s47
    %s62 = sphi 0, %s48
    %s68 = sphi 0, %s70
    %s71 = sphi 0, %s68
    %s72 = sphi 0, %s71
    %s88 = sphi 0, %s72
    %s94 = sphi 0, %s96
    %s97 = sphi 0, %s94
    %s98 = sphi 0, %s97
    %s114 = sphi 0, %s98
    %s120 = sphi 0, %s122
    %s123 = sphi 0, %s120
    %s124 = sphi 0, %s123
    %s140 = sphi 0, %s124
  $region4: #{basic_block_forward.5} parent=0 // loop_header_branch
    %14 = sbr.rel (%p12) target = $region8
  $region5: #{basic_block_forward.5} parent=0 // loop_body
    %s16 = ssub.s32 %s11, 1
    %s17 = ssub.s32 %s11, 2
    %s18 = sadd.s32 %s11, 1
    %s19 = ssub.s32 %s11, %s18
    %p20 = scmp.eq.s32.totalorder %s19, 0
    %s22 = sadd.s32 %s21, 1
    %s23 = scalar_select %p20, %s21, %s22
    %p26 = pneg %p20
    %p27 = scmp.eq.s32.totalorder %s11, 1
    %p28 = por %p26, %p27
    %p29 = scmp.ne.s32.totalorder %s21, %s24
    %p30 = scmp.eq.s32.totalorder %s11, 0
    %p31 = por %p29, %p30
    %p32 = scmp.ne.s32.totalorder %s21, %s24
    %p33 = scmp.eq.s32.totalorder %s16, 1
    %p34 = por %p32, %p33
    %p35 = scmp.ne.s32.totalorder %s24, %s25
    %p36 = scmp.eq.s32.totalorder %s16, 0
    %p37 = por %p35, %p36
    %p38 = scmp.ne.s32.totalorder %s24, %s25
    %p39 = scmp.eq.s32.totalorder %s17, 1
    %p40 = por %p38, %p39
    %p42 = scmp.ne.s32.totalorder %s25, %s41
    %p43 = scmp.eq.s32.totalorder %s17, 0
    %p44 = por %p42, %p43
    %s46 = sadd.s32 %s45, 1
    %p49 = scmp.eq.s32.totalorder %s11, 1
    %p50 = scmp.ne.s32.totalorder %s45, %s47
    %p51 = scmp.eq.s32.totalorder %s11, 0
    %p52 = por %p50, %p51
    %p53 = scmp.ne.s32.totalorder %s45, %s47
    %p54 = scmp.eq.s32.totalorder %s16, 1
    %p55 = por %p53, %p54
    %p56 = scmp.ne.s32.totalorder %s47, %s48
    %p57 = scmp.eq.s32.totalorder %s16, 0
    %p58 = por %p56, %p57
    %p59 = scmp.ne.s32.totalorder %s47, %s48
    %p60 = scmp.eq.s32.totalorder %s17, 1
    %p61 = por %p59, %p60
    %p63 = scmp.ne.s32.totalorder %s48, %s62
    %p64 = scmp.eq.s32.totalorder %s17, 0
    %p65 = por %p63, %p64
    %s66 = ssub.s32 %s11, %s18
    %p67 = scmp.eq.s32.totalorder %s66, 0
    %s69 = sadd.s32 %s68, 1
    %s70 = scalar_select %p67, %s68, %s69
    %p73 = pneg %p67
    %p74 = scmp.eq.s32.totalorder %s11, 1
    %p75 = por %p73, %p74
    %p76 = scmp.ne.s32.totalorder %s68, %s71
    %p77 = scmp.eq.s32.totalorder %s11, 0
    %p78 = por %p76, %p77
    %p79 = scmp.ne.s32.totalorder %s68, %s71
    %p80 = scmp.eq.s32.totalorder %s16, 1
    %p81 = por %p79, %p80
    %p82 = scmp.ne.s32.totalorder %s71, %s72
    %p83 = scmp.eq.s32.totalorder %s16, 0
    %p84 = por %p82, %p83
    %p85 = scmp.ne.s32.totalorder %s71, %s72
    %p86 = scmp.eq.s32.totalorder %s17, 1
    %p87 = por %p85, %p86
    %p89 = scmp.ne.s32.totalorder %s72, %s88
    %p90 = scmp.eq.s32.totalorder %s17, 0
    %p91 = por %p89, %p90
    %s92 = ssub.s32 %s11, %s18
    %p93 = scmp.eq.s32.totalorder %s92, 0
    %s95 = sadd.s32 %s94, 1
    %s96 = scalar_select %p93, %s94, %s95
    %p99 = pneg %p93
    %p100 = scmp.eq.s32.totalorder %s11, 1
    %p101 = por %p99, %p100
    %p102 = scmp.ne.s32.totalorder %s94, %s97
    %p103 = scmp.eq.s32.totalorder %s11, 0
    %p104 = por %p102, %p103
    %p105 = scmp.ne.s32.totalorder %s94, %s97
    %p106 = scmp.eq.s32.totalorder %s16, 1
    %p107 = por %p105, %p106
    %p108 = scmp.ne.s32.totalorder %s97, %s98
    %p109 = scmp.eq.s32.totalorder %s16, 0
    %p110 = por %p108, %p109
    %p111 = scmp.ne.s32.totalorder %s97, %s98
    %p112 = scmp.eq.s32.totalorder %s17, 1
    %p113 = por %p111, %p112
    %p115 = scmp.ne.s32.totalorder %s98, %s114
    %p116 = scmp.eq.s32.totalorder %s17, 0
    %p117 = por %p115, %p116
    %s118 = ssub.s32 %s11, %s18
    %p119 = scmp.eq.s32.totalorder %s118, 0
    %s121 = sadd.s32 %s120, 1
    %s122 = scalar_select %p119, %s120, %s121
    %p125 = pneg %p119
    %p126 = scmp.eq.s32.totalorder %s11, 1
    %p127 = por %p125, %p126
    %p128 = scmp.ne.s32.totalorder %s120, %s123
    %p129 = scmp.eq.s32.totalorder %s11, 0
    %p130 = por %p128, %p129
    %p131 = scmp.ne.s32.totalorder %s120, %s123
    %p132 = scmp.eq.s32.totalorder %s16, 1
    %p133 = por %p131, %p132
    %p134 = scmp.ne.s32.totalorder %s123, %s124
    %p135 = scmp.eq.s32.totalorder %s16, 0
    %p136 = por %p134, %p135
    %p137 = scmp.ne.s32.totalorder %s123, %s124
    %p138 = scmp.eq.s32.totalorder %s17, 1
    %p139 = por %p137, %p138
    %p141 = scmp.ne.s32.totalorder %s124, %s140
    %p142 = scmp.eq.s32.totalorder %s17, 0
    %p143 = por %p141, %p142
    %p144 = scmp.le.s32.totalorder 1, %s11
    %p145 = scmp.lt.s32.totalorder %s11, 3
    %p146 = pnand %p144, %p145
    %p147 = pneg %p146
    // Predicated region
    $region9: #{basic_block_forward.5} parent=5 // pred_check
      _
    $region10: #{basic_block_forward.5} parent=5 // pred_check_branch
      %149 = sbr.rel (%p146) target = $region12
    $region11: #{basic_block_forward.5} parent=5 // pred_region
      %s150 = ssub.s32 %s11, 1
      // Predicated region
      $region13: #{basic_block_forward.5} parent=11 // pred_check
        %p151 = pneg %p58
      $region14: #{basic_block_forward.5} parent=11 // pred_check_branch
        %153 = sbr.rel (%p151) target = $region16
      $region15: #{basic_block_forward.5} parent=11 // pred_region
        _
      $region16: #{basic_block_forward.5} parent=11 // pred_fallthru
        _
    $region12: #{basic_block_forward.5} parent=5 // pred_fallthru
      _
    %p154 = scmp.lt.s32.totalorder %s11, 2
    // Predicated region
    $region17: #{basic_block_forward.5} parent=5 // pred_check
      %p155 = pneg %p154
    $region18: #{basic_block_forward.5} parent=5 // pred_check_branch
      %157 = sbr.rel (%p155) target = $region20
    $region19: #{basic_block_forward.5} parent=5 // pred_region
      // Predicated region
      $region21: #{basic_block_forward.5} parent=19 // pred_check
        %p158 = pneg %p31
      $region22: #{basic_block_forward.5} parent=19 // pred_check_branch
        %160 = sbr.rel (%p158) target = $region24
      $region23: #{basic_block_forward.5} parent=19 // pred_region
        %p161 = scmp.lt.s32.totalorder %s11, 1
        %s162 = scalar_select %p161, %s11, 1
        %s163 = smul.addr %s162, 54
        %s164 = smul.addr %s163, 8
        %s165 = scalar_lea.vmem %s0, %s164
      $region24: #{basic_block_forward.5} parent=19 // pred_fallthru
        _
    $region20: #{basic_block_forward.5} parent=5 // pred_fallthru
      _
    %p166 = scmp.le.s32.totalorder 1, %s11
    %p167 = scmp.lt.s32.totalorder %s11, 3
    %p168 = pnand %p166, %p167
    %p169 = pneg %p168
    // Predicated region
    $region25: #{basic_block_forward.5} parent=5 // pred_check
      _
    $region26: #{basic_block_forward.5} parent=5 // pred_check_branch
      %171 = sbr.rel (%p168) target = $region28
    $region27: #{basic_block_forward.5} parent=5 // pred_region
      %s172 = ssub.s32 %s11, 1
      %p173 = scmp.lt.s32.totalorder %s16, 1
      %s174 = scalar_select %p173, %s16, 1
      %s175 = smul.addr %s174, 54
      %s176 = smul.addr %s175, 8
      %s177 = scalar_lea.vmem %s0, %s176
      %p178 = pneg %p37
      %p179 = pneg %p34
      %p180 = pneg %p58
      %p181 = pneg %p55
      %p182 = pneg %p84
      %p183 = pneg %p81
      %p184 = scmp.lt.s32.totalorder %s16, 1
      %s185 = scalar_select %p184, %s16, 1
      %s186 = smul.addr %s185, 32
      %s187 = smul.addr %s186, 8
      %s188 = scalar_lea.vmem %s2, %s187
      %p189 = pneg %p110
      %p190 = pneg %p107
      %p191 = scmp.lt.s32.totalorder %s16, 1
      %s192 = scalar_select %p191, %s16, 1
      %s193 = scalar_lea.vmem %s3, %s192
      %p194 = pneg %p136
      %p195 = pneg %p133
      %p196 = scmp.lt.s32.totalorder %s16, 1
      %s197 = scalar_select %p196, %s16, 1
      %s198 = scalar_lea.vmem %s4, %s197
      %p199 = scmp.lt.s32.totalorder %s16, 1
      %s200 = scalar_select %p199, %s16, 1
      %s201 = smul.addr %s200, 54
      %s202 = smul.addr %s201, 8
      %s203 = scalar_lea.vmem %s0, %s202
      %p204 = scmp.lt.s32.totalorder %s16, 1
      %s205 = scalar_select %p204, %s16, 1
      %s206 = smul.addr %s205, 32
      %s207 = smul.addr %s206, 8
      %s208 = scalar_lea.vmem %s2, %s207
      %p209 = scmp.lt.s32.totalorder %s16, 1
      %s210 = scalar_select %p209, %s16, 1
      %s211 = scalar_lea.vmem %s3, %s210
      %p212 = scmp.lt.s32.totalorder %s16, 1
      %s213 = scalar_select %p212, %s16, 1
      %s214 = scalar_lea.vmem %s4, %s213
      %216 = vst [vmem:[%s208] sm:$0xff] 0.0
      %217 = vst [vmem:[%s208 + $0x8] sm:$0xff] 0.0
      %218 = vst [vmem:[%s208 + $0x10] sm:$0xff] 0.0
      %219 = vst [vmem:[%s208 + $0x18] sm:$0xff] 0.0
      %220 = vst [vmem:[%s208 + $0x20] sm:$0xff] 0.0
      %221 = vst [vmem:[%s208 + $0x28] sm:$0xff] 0.0
      %222 = vst [vmem:[%s208 + $0x30] sm:$0xff] 0.0
      %223 = vst [vmem:[%s208 + $0x38] sm:$0xff] 0.0
      %224 = vst [vmem:[%s208 + $0x40] sm:$0xff] 0.0
      %225 = vst [vmem:[%s208 + $0x48] sm:$0xff] 0.0
      %226 = vst [vmem:[%s208 + $0x50] sm:$0xff] 0.0
      %227 = vst [vmem:[%s208 + $0x58] sm:$0xff] 0.0
      %228 = vst [vmem:[%s208 + $0x60] sm:$0xff] 0.0
      %229 = vst [vmem:[%s208 + $0x68] sm:$0xff] 0.0
      %230 = vst [vmem:[%s208 + $0x70] sm:$0xff] 0.0
      %231 = vst [vmem:[%s208 + $0x78] sm:$0xff] 0.0
      %232 = vst [vmem:[%s208 + $0x80] sm:$0xff] 0.0
      %233 = vst [vmem:[%s208 + $0x88] sm:$0xff] 0.0
      %234 = vst [vmem:[%s208 + $0x90] sm:$0xff] 0.0
      %235 = vst [vmem:[%s208 + $0x98] sm:$0xff] 0.0
      %236 = vst [vmem:[%s208 + $0xa0] sm:$0xff] 0.0
      %237 = vst [vmem:[%s208 + $0xa8] sm:$0xff] 0.0
      %238 = vst [vmem:[%s208 + $0xb0] sm:$0xff] 0.0
      %239 = vst [vmem:[%s208 + $0xb8] sm:$0xff] 0.0
      %240 = vst [vmem:[%s208 + $0xc0] sm:$0xff] 0.0
      %241 = vst [vmem:[%s208 + $0xc8] sm:$0xff] 0.0
      %242 = vst [vmem:[%s208 + $0xd0] sm:$0xff] 0.0
      %243 = vst [vmem:[%s208 + $0xd8] sm:$0xff] 0.0
      %244 = vst [vmem:[%s208 + $0xe0] sm:$0xff] 0.0
      %245 = vst [vmem:[%s208 + $0xe8] sm:$0xff] 0.0
      %246 = vst [vmem:[%s208 + $0xf0] sm:$0xff] 0.0
      %247 = vst [vmem:[%s208 + $0xf8] sm:$0xff] 0.0
      %v248 = vld [vmem:[%s203] sm:$0xff]
      %v249 = vld [vmem:[%s203 + $0x8] sm:$0xff]
      %v250 = vld [vmem:[%s203 + $0x18] sm:$0xff]
      %v251 = vld [vmem:[%s203 + $0x20] sm:$0xff]
      %v252 = vld [vmem:[%s203 + $0x30] sm:$0xff]
      %v253 = vld [vmem:[%s203 + $0x38] sm:$0xff]
      %v254 = vld [vmem:[%s203 + $0x48] sm:$0xff]
      %v255 = vld [vmem:[%s203 + $0x50] sm:$0xff]
      %v256 = vld [vmem:[%s203 + $0x60] sm:$0xff]
      %v257 = vld [vmem:[%s203 + $0x68] sm:$0xff]
      %v258 = vld [vmem:[%s203 + $0x78] sm:$0xff]
      %v259 = vld [vmem:[%s203 + $0x80] sm:$0xff]
      %v260 = vld [vmem:[%s203 + $0x90] sm:$0xff]
      %v261 = vld [vmem:[%s203 + $0x98] sm:$0xff]
      %v262 = vld [vmem:[%s203 + $0xa8] sm:$0xff]
      %v263 = vld [vmem:[%s203 + $0xb0] sm:$0xff]
      %v264 = vld [vmem:[%s203 + $0xc0] sm:$0xff]
      %v265 = vld [vmem:[%s203 + $0xc8] sm:$0xff]
      %v266 = vld [vmem:[%s203 + $0xd8] sm:$0xff]
      %v267 = vld [vmem:[%s203 + $0xe0] sm:$0xff]
      %v268 = vld [vmem:[%s203 + $0xf0] sm:$0xff]
      %v269 = vld [vmem:[%s203 + $0xf8] sm:$0xff]
      %v270 = vld [vmem:[%s203 + $0x108] sm:$0xff]
      %v271 = vld [vmem:[%s203 + $0x110] sm:$0xff]
      %v272 = vld [vmem:[%s203 + $0x120] sm:$0xff]
      %v273 = vld [vmem:[%s203 + $0x128] sm:$0xff]
      %v274 = vld [vmem:[%s203 + $0x138] sm:$0xff]
      %v275 = vld [vmem:[%s203 + $0x140] sm:$0xff]
      %v276 = vld [vmem:[%s203 + $0x150] sm:$0xff]
      %v277 = vld [vmem:[%s203 + $0x158] sm:$0xff]
      %v278 = vld [vmem:[%s203 + $0x168] sm:$0xff]
      %v279 = vld [vmem:[%s203 + $0x170] sm:$0xff]
      %v280 = vpack.c.bf16 %v249, %v248
      %v281 = vpack.c.bf16 %v251, %v250
      %v282 = vpack.c.bf16 %v253, %v252
      %v283 = vpack.c.bf16 %v255, %v254
      %v284 = vpack.c.bf16 %v257, %v256
      %v285 = vpack.c.bf16 %v259, %v258
      %v286 = vpack.c.bf16 %v261, %v260
      %v287 = vpack.c.bf16 %v263, %v262
      %v288 = vpack.c.bf16 %v265, %v264
      %v289 = vpack.c.bf16 %v267, %v266
      %v290 = vpack.c.bf16 %v269, %v268
      %v291 = vpack.c.bf16 %v271, %v270
      %v292 = vpack.c.bf16 %v273, %v272
      %v293 = vpack.c.bf16 %v275, %v274
      %v294 = vpack.c.bf16 %v277, %v276
      %v295 = vpack.c.bf16 %v279, %v278
      %v296 = vld [vmem:[%s1] sm:$0xf]
      %v297 = vld [vmem:[%s1 + $0x4] sm:$0xf]
      %v298 = vld [vmem:[%s1 + $0x8] sm:$0xf]
      %v299 = vld [vmem:[%s1 + $0xc] sm:$0xf]
      %v300 = vld [vmem:[%s1 + $0x10] sm:$0xf]
      %v301 = vld [vmem:[%s1 + $0x14] sm:$0xf]
      %v302 = vld [vmem:[%s1 + $0x18] sm:$0xf]
      %v303 = vld [vmem:[%s1 + $0x1c] sm:$0xf]
      %v304 = vld [vmem:[%s1 + $0x20] sm:$0xf]
      %v305 = vld [vmem:[%s1 + $0x24] sm:$0xf]
      %v306 = vld [vmem:[%s1 + $0x28] sm:$0xf]
      %v307 = vld [vmem:[%s1 + $0x2c] sm:$0xf]
      %v308 = vld [vmem:[%s1 + $0x30] sm:$0xf]
      %v309 = vld [vmem:[%s1 + $0x34] sm:$0xf]
      %v310 = vld [vmem:[%s1 + $0x38] sm:$0xf]
      %v311 = vld [vmem:[%s1 + $0x3c] sm:$0xf]
      %v312 = vld [vmem:[%s208] sm:$0xff]
      %v313 = vld [vmem:[%s208 + $0x8] sm:$0xff]
      %v314 = vld [vmem:[%s208 + $0x10] sm:$0xff]
      %v315 = vld [vmem:[%s208 + $0x18] sm:$0xff]
      %v316 = vld [vmem:[%s208 + $0x20] sm:$0xff]
      %v317 = vld [vmem:[%s208 + $0x28] sm:$0xff]
      %v318 = vld [vmem:[%s208 + $0x30] sm:$0xff]
      %v319 = vld [vmem:[%s208 + $0x38] sm:$0xff]
      %v320 = vld [vmem:[%s208 + $0x40] sm:$0xff]
      %v321 = vld [vmem:[%s208 + $0x48] sm:$0xff]
      %v322 = vld [vmem:[%s208 + $0x50] sm:$0xff]
      %v323 = vld [vmem:[%s208 + $0x58] sm:$0xff]
      %v324 = vld [vmem:[%s208 + $0x60] sm:$0xff]
      %v325 = vld [vmem:[%s208 + $0x68] sm:$0xff]
      %v326 = vld [vmem:[%s208 + $0x70] sm:$0xff]
      %v327 = vld [vmem:[%s208 + $0x78] sm:$0xff]
      %v328 = vld [vmem:[%s208 + $0x80] sm:$0xff]
      %v329 = vld [vmem:[%s208 + $0x88] sm:$0xff]
      %v330 = vld [vmem:[%s208 + $0x90] sm:$0xff]
      %v331 = vld [vmem:[%s208 + $0x98] sm:$0xff]
      %v332 = vld [vmem:[%s208 + $0xa0] sm:$0xff]
      %v333 = vld [vmem:[%s208 + $0xa8] sm:$0xff]
      %v334 = vld [vmem:[%s208 + $0xb0] sm:$0xff]
      %v335 = vld [vmem:[%s208 + $0xb8] sm:$0xff]
      %v336 = vld [vmem:[%s208 + $0xc0] sm:$0xff]
      %v337 = vld [vmem:[%s208 + $0xc8] sm:$0xff]
      %v338 = vld [vmem:[%s208 + $0xd0] sm:$0xff]
      %v339 = vld [vmem:[%s208 + $0xd8] sm:$0xff]
      %v340 = vld [vmem:[%s208 + $0xe0] sm:$0xff]
      %v341 = vld [vmem:[%s208 + $0xe8] sm:$0xff]
      %v342 = vld [vmem:[%s208 + $0xf0] sm:$0xff]
      %v343 = vld [vmem:[%s208 + $0xf8] sm:$0xff]
      %v360 = vunpack.c.l.b16 %v296
      %v361 = vunpack.c.l.b16 %v297
      %v362 = vunpack.c.l.b16 %v298
      %v363 = vunpack.c.l.b16 %v299
      %v364 = vunpack.c.l.b16 %v300
      %v365 = vunpack.c.l.b16 %v301
      %v366 = vunpack.c.l.b16 %v302
      %v367 = vunpack.c.l.b16 %v303
      %v368 = vunpack.c.l.b16 %v304
      %v369 = vunpack.c.l.b16 %v305
      %v370 = vunpack.c.l.b16 %v306
      %v371 = vunpack.c.l.b16 %v307
      %v372 = vunpack.c.l.b16 %v308
      %v373 = vunpack.c.l.b16 %v309
      %v374 = vunpack.c.l.b16 %v310
      %v375 = vunpack.c.l.b16 %v311
      %v376 = vpack.c.b16 %v361, %v360
      %v377 = vpack.c.b16 %v363, %v362
      %v378 = vpack.c.b16 %v365, %v364
      %v379 = vpack.c.b16 %v367, %v366
      %v380 = vpack.c.b16 %v369, %v368
      %v381 = vpack.c.b16 %v371, %v370
      %v382 = vpack.c.b16 %v373, %v372
      %v383 = vpack.c.b16 %v375, %v374
      %392 = vmatprep.subr.bf16.mxu0 0
      %393 = vmatpush1.bf16.msra.mxu0 %v376
      %394 = vmatprep.subr.bf16.mxu0 0
      %395 = vmatpush1.bf16.msra.mxu0 %v377
      %396 = vmatprep.subr.bf16.mxu0 0
      %397 = vmatpush1.bf16.msra.mxu0 %v378
      %398 = vmatprep.subr.bf16.mxu0 0
      %399 = vmatpush1.bf16.msra.mxu0 %v379
      %400 = vmatprep.subr.bf16.mxu0 0
      %401 = vmatpush1.bf16.msra.mxu0 %v380
      %402 = vmatprep.subr.bf16.mxu0 0
      %403 = vmatpush1.bf16.msra.mxu0 %v381
      %404 = vmatprep.subr.bf16.mxu0 0
      %405 = vmatpush1.bf16.msra.mxu0 %v382
      %406 = vmatprep.subr.bf16.mxu0 0
      %407 = vmatpush1.bf16.msra.mxu0 %v383
      %408 = vmatprep.subr.bf16.mxu0 0
      %409 = vmatpush1.bf16.msra.mxu0 0
      %410 = vmatprep.subr.bf16.mxu0 0
      %411 = vmatpush1.bf16.msra.mxu0 0
      %412 = vmatprep.subr.bf16.mxu0 0
      %413 = vmatpush1.bf16.msra.mxu0 0
      %414 = vmatprep.subr.bf16.mxu0 0
      %415 = vmatpush1.bf16.msra.mxu0 0
      %416 = vmatprep.subr.bf16.mxu0 0
      %417 = vmatpush1.bf16.msra.mxu0 0
      %418 = vmatprep.subr.bf16.mxu0 0
      %419 = vmatpush1.bf16.msra.mxu0 0
      %420 = vmatprep.subr.bf16.mxu0 0
      %421 = vmatpush1.bf16.msra.mxu0 0
      %422 = vmatprep.subr.bf16.mxu0 0
      %423 = vmatpush1.bf16.msra.mxu0 0
      %424 = vmatprep.mubr.bf16.mxu0 0
      %425 = vmatmul.mubr.bf16.gmra.mrb[0].mxu0 %v280
      %v426 = vpop.f32.mrb[0].mxu0
      %v427 = vadd.f32 0.0, %v426
      %v428 = vpop.f32.mrb[0].mxu0
      %v429 = vpop.f32.mrb[0].mxu0
      %v430 = vadd.f32 0.0, %v429
      %v431 = vpop.f32.mrb[0].mxu0
      %432 = vmatprep.mubr.bf16.mxu0 0
      %433 = vmatmul.mubr.bf16.gmra.mrb[0].mxu0 %v281
      %v434 = vpop.f32.mrb[0].mxu0
      %v435 = vadd.f32 0.0, %v434
      %v436 = vpop.f32.mrb[0].mxu0
      %v437 = vpop.f32.mrb[0].mxu0
      %v438 = vadd.f32 0.0, %v437
      %v439 = vpop.f32.mrb[0].mxu0
      %440 = vmatprep.mubr.bf16.mxu0 0
      %441 = vmatmul.mubr.bf16.gmra.mrb[0].mxu0 %v282
      %v442 = vpop.f32.mrb[0].mxu0
      %v443 = vadd.f32 0.0, %v442
      %v444 = vpop.f32.mrb[0].mxu0
      %v445 = vpop.f32.mrb[0].mxu0
      %v446 = vadd.f32 0.0, %v445
      %v447 = vpop.f32.mrb[0].mxu0
      %448 = vmatprep.mubr.bf16.mxu0 0
      %449 = vmatmul.mubr.bf16.gmra.mrb[0].mxu0 %v283
      %v450 = vpop.f32.mrb[0].mxu0
      %v451 = vadd.f32 0.0, %v450
      %v452 = vpop.f32.mrb[0].mxu0
      %v453 = vpop.f32.mrb[0].mxu0
      %v454 = vadd.f32 0.0, %v453
      %v455 = vpop.f32.mrb[0].mxu0
      %456 = vmatprep.mubr.bf16.mxu0 0
      %457 = vmatmul.mubr.bf16.gmra.mrb[0].mxu0 %v284
      %v458 = vpop.f32.mrb[0].mxu0
      %v459 = vadd.f32 0.0, %v458
      %v460 = vpop.f32.mrb[0].mxu0
      %v461 = vpop.f32.mrb[0].mxu0
      %v462 = vadd.f32 0.0, %v461
      %v463 = vpop.f32.mrb[0].mxu0
      %464 = vmatprep.mubr.bf16.mxu0 0
      %465 = vmatmul.mubr.bf16.gmra.mrb[0].mxu0 %v285
      %v466 = vpop.f32.mrb[0].mxu0
      %v467 = vadd.f32 0.0, %v466
      %v468 = vpop.f32.mrb[0].mxu0
      %v469 = vpop.f32.mrb[0].mxu0
      %v470 = vadd.f32 0.0, %v469
      %v471 = vpop.f32.mrb[0].mxu0
      %472 = vmatprep.mubr.bf16.mxu0 0
      %473 = vmatmul.mubr.bf16.gmra.mrb[0].mxu0 %v286
      %v474 = vpop.f32.mrb[0].mxu0
      %v475 = vadd.f32 0.0, %v474
      %v476 = vpop.f32.mrb[0].mxu0
      %v477 = vpop.f32.mrb[0].mxu0
      %v478 = vadd.f32 0.0, %v477
      %v479 = vpop.f32.mrb[0].mxu0
      %480 = vmatprep.mubr.bf16.mxu0 0
      %481 = vmatmul.mubr.bf16.gmra.mrb[0].mxu0 %v287
      %v482 = vpop.f32.mrb[0].mxu0
      %v483 = vadd.f32 0.0, %v482
      %v484 = vpop.f32.mrb[0].mxu0
      %v485 = vpop.f32.mrb[0].mxu0
      %v486 = vadd.f32 0.0, %v485
      %v487 = vpop.f32.mrb[0].mxu0
      %488 = vmatprep.mubr.bf16.mxu0 0
      %489 = vmatmul.mubr.bf16.gmra.mrb[0].mxu0 %v288
      %v490 = vpop.f32.mrb[0].mxu0
      %v491 = vadd.f32 0.0, %v490
      %v492 = vpop.f32.mrb[0].mxu0
      %v493 = vpop.f32.mrb[0].mxu0
      %v494 = vadd.f32 0.0, %v493
      %v495 = vpop.f32.mrb[0].mxu0
      %496 = vmatprep.mubr.bf16.mxu0 0
      %497 = vmatmul.mubr.bf16.gmra.mrb[0].mxu0 %v289
      %v498 = vpop.f32.mrb[0].mxu0
      %v499 = vadd.f32 0.0, %v498
      %v500 = vpop.f32.mrb[0].mxu0
      %v501 = vpop.f32.mrb[0].mxu0
      %v502 = vadd.f32 0.0, %v501
      %v503 = vpop.f32.mrb[0].mxu0
      %504 = vmatprep.mubr.bf16.mxu0 0
      %505 = vmatmul.mubr.bf16.gmra.mrb[0].mxu0 %v290
      %v506 = vpop.f32.mrb[0].mxu0
      %v507 = vadd.f32 0.0, %v506
      %v508 = vpop.f32.mrb[0].mxu0
      %v509 = vpop.f32.mrb[0].mxu0
      %v510 = vadd.f32 0.0, %v509
      %v511 = vpop.f32.mrb[0].mxu0
      %512 = vmatprep.mubr.bf16.mxu0 0
      %513 = vmatmul.mubr.bf16.gmra.mrb[0].mxu0 %v291
      %v514 = vpop.f32.mrb[0].mxu0
      %v515 = vadd.f32 0.0, %v514
      %v516 = vpop.f32.mrb[0].mxu0
      %v517 = vpop.f32.mrb[0].mxu0
      %v518 = vadd.f32 0.0, %v517
      %v519 = vpop.f32.mrb[0].mxu0
      %520 = vmatprep.mubr.bf16.mxu0 0
      %521 = vmatmul.mubr.bf16.gmra.mrb[0].mxu0 %v292
      %v522 = vpop.f32.mrb[0].mxu0
      %v523 = vadd.f32 0.0, %v522
      %v524 = vpop.f32.mrb[0].mxu0
      %v525 = vpop.f32.mrb[0].mxu0
      %v526 = vadd.f32 0.0, %v525
      %v527 = vpop.f32.mrb[0].mxu0
      %528 = vmatprep.mubr.bf16.mxu0 0
      %529 = vmatmul.mubr.bf16.gmra.mrb[0].mxu0 %v293
      %v530 = vpop.f32.mrb[0].mxu0
      %v531 = vadd.f32 0.0, %v530
      %v532 = vpop.f32.mrb[0].mxu0
      %v533 = vpop.f32.mrb[0].mxu0
      %v534 = vadd.f32 0.0, %v533
      %v535 = vpop.f32.mrb[0].mxu0
      %536 = vmatprep.mubr.bf16.mxu0 0
      %537 = vmatmul.mubr.bf16.gmra.mrb[0].mxu0 %v294
      %v538 = vpop.f32.mrb[0].mxu0
      %v539 = vadd.f32 0.0, %v538
      %v540 = vpop.f32.mrb[0].mxu0
      %v541 = vpop.f32.mrb[0].mxu0
      %v542 = vadd.f32 0.0, %v541
      %v543 = vpop.f32.mrb[0].mxu0
      %544 = vmatprep.mubr.bf16.mxu0 0
      %545 = vmatmul.mubr.bf16.gmra.mrb[0].mxu0 %v295
      %v546 = vpop.f32.mrb[0].mxu0
      %v547 = vadd.f32 0.0, %v546
      %v548 = vpop.f32.mrb[0].mxu0
      %v549 = vpop.f32.mrb[0].mxu0
      %v550 = vadd.f32 0.0, %v549
      %v551 = vpop.f32.mrb[0].mxu0
      %552 = vdwg.mxu0
      %v553 = vadd.f32 %v312, %v427
      %v554 = vadd.f32 %v313, %v430
      %v555 = vadd.f32 %v314, %v435
      %v556 = vadd.f32 %v315, %v438
      %v557 = vadd.f32 %v316, %v443
      %v558 = vadd.f32 %v317, %v446
      %v559 = vadd.f32 %v318, %v451
      %v560 = vadd.f32 %v319, %v454
      %v561 = vadd.f32 %v320, %v459
      %v562 = vadd.f32 %v321, %v462
      %v563 = vadd.f32 %v322, %v467
      %v564 = vadd.f32 %v323, %v470
      %v565 = vadd.f32 %v324, %v475
      %v566 = vadd.f32 %v325, %v478
      %v567 = vadd.f32 %v326, %v483
      %v568 = vadd.f32 %v327, %v486
      %v569 = vadd.f32 %v328, %v491
      %v570 = vadd.f32 %v329, %v494
      %v571 = vadd.f32 %v330, %v499
      %v572 = vadd.f32 %v331, %v502
      %v573 = vadd.f32 %v332, %v507
      %v574 = vadd.f32 %v333, %v510
      %v575 = vadd.f32 %v334, %v515
      %v576 = vadd.f32 %v335, %v518
      %v577 = vadd.f32 %v336, %v523
      %v578 = vadd.f32 %v337, %v526
      %v579 = vadd.f32 %v338, %v531
      %v580 = vadd.f32 %v339, %v534
      %v581 = vadd.f32 %v340, %v539
      %v582 = vadd.f32 %v341, %v542
      %v583 = vadd.f32 %v342, %v547
      %v584 = vadd.f32 %v343, %v550
      %585 = vst [vmem:[%s208] sm:$0xff] %v553
      %586 = vst [vmem:[%s208 + $0x8] sm:$0xff] %v554
      %587 = vst [vmem:[%s208 + $0x10] sm:$0xff] %v555
      %588 = vst [vmem:[%s208 + $0x18] sm:$0xff] %v556
      %589 = vst [vmem:[%s208 + $0x20] sm:$0xff] %v557
      %590 = vst [vmem:[%s208 + $0x28] sm:$0xff] %v558
      %591 = vst [vmem:[%s208 + $0x30] sm:$0xff] %v559
      %592 = vst [vmem:[%s208 + $0x38] sm:$0xff] %v560
      %593 = vst [vmem:[%s208 + $0x40] sm:$0xff] %v561
      %594 = vst [vmem:[%s208 + $0x48] sm:$0xff] %v562
      %595 = vst [vmem:[%s208 + $0x50] sm:$0xff] %v563
      %596 = vst [vmem:[%s208 + $0x58] sm:$0xff] %v564
      %597 = vst [vmem:[%s208 + $0x60] sm:$0xff] %v565
      %598 = vst [vmem:[%s208 + $0x68] sm:$0xff] %v566
      %599 = vst [vmem:[%s208 + $0x70] sm:$0xff] %v567
      %600 = vst [vmem:[%s208 + $0x78] sm:$0xff] %v568
      %601 = vst [vmem:[%s208 + $0x80] sm:$0xff] %v569
      %602 = vst [vmem:[%s208 + $0x88] sm:$0xff] %v570
      %603 = vst [vmem:[%s208 + $0x90] sm:$0xff] %v571
      %604 = vst [vmem:[%s208 + $0x98] sm:$0xff] %v572
      %605 = vst [vmem:[%s208 + $0xa0] sm:$0xff] %v573
      %606 = vst [vmem:[%s208 + $0xa8] sm:$0xff] %v574
      %607 = vst [vmem:[%s208 + $0xb0] sm:$0xff] %v575
      %608 = vst [vmem:[%s208 + $0xb8] sm:$0xff] %v576
      %609 = vst [vmem:[%s208 + $0xc0] sm:$0xff] %v577
      %610 = vst [vmem:[%s208 + $0xc8] sm:$0xff] %v578
      %611 = vst [vmem:[%s208 + $0xd0] sm:$0xff] %v579
      %612 = vst [vmem:[%s208 + $0xd8] sm:$0xff] %v580
      %613 = vst [vmem:[%s208 + $0xe0] sm:$0xff] %v581
      %614 = vst [vmem:[%s208 + $0xe8] sm:$0xff] %v582
      %615 = vst [vmem:[%s208 + $0xf0] sm:$0xff] %v583
      %616 = vst [vmem:[%s208 + $0xf8] sm:$0xff] %v584
      %v617 = vld [vmem:[%s203 + $0x1] sm:$0xff]
      %v618 = vld [vmem:[%s203 + $0x9] sm:$0xff]
      %v619 = vld [vmem:[%s203 + $0x19] sm:$0xff]
      %v620 = vld [vmem:[%s203 + $0x21] sm:$0xff]
      %v621 = vld [vmem:[%s203 + $0x31] sm:$0xff]
      %v622 = vld [vmem:[%s203 + $0x39] sm:$0xff]
      %v623 = vld [vmem:[%s203 + $0x49] sm:$0xff]
      %v624 = vld [vmem:[%s203 + $0x51] sm:$0xff]
      %v625 = vld [vmem:[%s203 + $0x61] sm:$0xff]
      %v626 = vld [vmem:[%s203 + $0x69] sm:$0xff]
      %v627 = vld [vmem:[%s203 + $0x79] sm:$0xff]
      %v628 = vld [vmem:[%s203 + $0x81] sm:$0xff]
      %v629 = vld [vmem:[%s203 + $0x91] sm:$0xff]
      %v630 = vld [vmem:[%s203 + $0x99] sm:$0xff]
      %v631 = vld [vmem:[%s203 + $0xa9] sm:$0xff]
      %v632 = vld [vmem:[%s203 + $0xb1] sm:$0xff]
      %v633 = vld [vmem:[%s203 + $0xc1] sm:$0xff]
      %v634 = vld [vmem:[%s203 + $0xc9] sm:$0xff]
      %v635 = vld [vmem:[%s203 + $0xd9] sm:$0xff]
      %v636 = vld [vmem:[%s203 + $0xe1] sm:$0xff]
      %v637 = vld [vmem:[%s203 + $0xf1] sm:$0xff]
      %v638 = vld [vmem:[%s203 + $0xf9] sm:$0xff]
      %v639 = vld [vmem:[%s203 + $0x109] sm:$0xff]
      %v640 = vld [vmem:[%s203 + $0x111] sm:$0xff]
      %v641 = vld [vmem:[%s203 + $0x121] sm:$0xff]
      %v642 = vld [vmem:[%s203 + $0x129] sm:$0xff]
      %v643 = vld [vmem:[%s203 + $0x139] sm:$0xff]
      %v644 = vld [vmem:[%s203 + $0x141] sm:$0xff]
      %v645 = vld [vmem:[%s203 + $0x151] sm:$0xff]
      %v646 = vld [vmem:[%s203 + $0x159] sm:$0xff]
      %v647 = vld [vmem:[%s203 + $0x169] sm:$0xff]
      %v648 = vld [vmem:[%s203 + $0x171] sm:$0xff]
      %v649 = vpack.c.bf16 %v618, %v617
      %v650 = vpack.c.bf16 %v620, %v619
      %v651 = vpack.c.bf16 %v622, %v621
      %v652 = vpack.c.bf16 %v624, %v623
      %v653 = vpack.c.bf16 %v626, %v625
      %v654 = vpack.c.bf16 %v628, %v627
      %v655 = vpack.c.bf16 %v630, %v629
      %v656 = vpack.c.bf16 %v632, %v631
      %v657 = vpack.c.bf16 %v634, %v633
      %v658 = vpack.c.bf16 %v636, %v635
      %v659 = vpack.c.bf16 %v638, %v637
      %v660 = vpack.c.bf16 %v640, %v639
      %v661 = vpack.c.bf16 %v642, %v641
      %v662 = vpack.c.bf16 %v644, %v643
      %v663 = vpack.c.bf16 %v646, %v645
      %v664 = vpack.c.bf16 %v648, %v647
      %v665 = vld [vmem:[%s1 + $0x40] sm:$0xf]
      %v666 = vld [vmem:[%s1 + $0x44] sm:$0xf]
      %v667 = vld [vmem:[%s1 + $0x48] sm:$0xf]
      %v668 = vld [vmem:[%s1 + $0x4c] sm:$0xf]
      %v669 = vld [vmem:[%s1 + $0x50] sm:$0xf]
      %v670 = vld [vmem:[%s1 + $0x54] sm:$0xf]
      %v671 = vld [vmem:[%s1 + $0x58] sm:$0xf]
      %v672 = vld [vmem:[%s1 + $0x5c] sm:$0xf]
      %v673 = vld [vmem:[%s1 + $0x60] sm:$0xf]
      %v674 = vld [vmem:[%s1 + $0x64] sm:$0xf]
      %v675 = vld [vmem:[%s1 + $0x68] sm:$0xf]
      %v676 = vld [vmem:[%s1 + $0x6c] sm:$0xf]
      %v677 = vld [vmem:[%s1 + $0x70] sm:$0xf]
      %v678 = vld [vmem:[%s1 + $0x74] sm:$0xf]
      %v679 = vld [vmem:[%s1 + $0x78] sm:$0xf]
      %v680 = vld [vmem:[%s1 + $0x7c] sm:$0xf]
      %v681 = vld [vmem:[%s208] sm:$0xff]
      %v682 = vld [vmem:[%s208 + $0x8] sm:$0xff]
      %v683 = vld [vmem:[%s208 + $0x10] sm:$0xff]
      %v684 = vld [vmem:[%s208 + $0x18] sm:$0xff]
      %v685 = vld [vmem:[%s208 + $0x20] sm:$0xff]
      %v686 = vld [vmem:[%s208 + $0x28] sm:$0xff]
      %v687 = vld [vmem:[%s208 + $0x30] sm:$0xff]
      %v688 = vld [vmem:[%s208 + $0x38] sm:$0xff]
      %v689 = vld [vmem:[%s208 + $0x40] sm:$0xff]
      %v690 = vld [vmem:[%s208 + $0x48] sm:$0xff]
      %v691 = vld [vmem:[%s208 + $0x50] sm:$0xff]
      %v692 = vld [vmem:[%s208 + $0x58] sm:$0xff]
      %v693 = vld [vmem:[%s208 + $0x60] sm:$0xff]
      %v694 = vld [vmem:[%s208 + $0x68] sm:$0xff]
      %v695 = vld [vmem:[%s208 + $0x70] sm:$0xff]
      %v696 = vld [vmem:[%s208 + $0x78] sm:$0xff]
      %v697 = vld [vmem:[%s208 + $0x80] sm:$0xff]
      %v698 = vld [vmem:[%s208 + $0x88] sm:$0xff]
      %v699 = vld [vmem:[%s208 + $0x90] sm:$0xff]
      %v700 = vld [vmem:[%s208 + $0x98] sm:$0xff]
      %v701 = vld [vmem:[%s208 + $0xa0] sm:$0xff]
      %v702 = vld [vmem:[%s208 + $0xa8] sm:$0xff]
      %v703 = vld [vmem:[%s208 + $0xb0] sm:$0xff]
      %v704 = vld [vmem:[%s208 + $0xb8] sm:$0xff]
      %v705 = vld [vmem:[%s208 + $0xc0] sm:$0xff]
      %v706 = vld [vmem:[%s208 + $0xc8] sm:$0xff]
      %v707 = vld [vmem:[%s208 + $0xd0] sm:$0xff]
      %v708 = vld [vmem:[%s208 + $0xd8] sm:$0xff]
      %v709 = vld [vmem:[%s208 + $0xe0] sm:$0xff]
      %v710 = vld [vmem:[%s208 + $0xe8] sm:$0xff]
      %v711 = vld [vmem:[%s208 + $0xf0] sm:$0xff]
      %v712 = vld [vmem:[%s208 + $0xf8] sm:$0xff]
      %v729 = vunpack.c.l.b16 %v665
      %v730 = vunpack.c.l.b16 %v666
      %v731 = vunpack.c.l.b16 %v667
      %v732 = vunpack.c.l.b16 %v668
      %v733 = vunpack.c.l.b16 %v669
      %v734 = vunpack.c.l.b16 %v670
      %v735 = vunpack.c.l.b16 %v671
      %v736 = vunpack.c.l.b16 %v672
      %v737 = vunpack.c.l.b16 %v673
      %v738 = vunpack.c.l.b16 %v674
      %v739 = vunpack.c.l.b16 %v675
      %v740 = vunpack.c.l.b16 %v676
      %v741 = vunpack.c.l.b16 %v677
      %v742 = vunpack.c.l.b16 %v678
      %v743 = vunpack.c.l.b16 %v679
      %v744 = vunpack.c.l.b16 %v680
      %v745 = vpack.c.b16 %v730, %v729
      %v746 = vpack.c.b16 %v732, %v731
      %v747 = vpack.c.b16 %v734, %v733
      %v748 = vpack.c.b16 %v736, %v735
      %v749 = vpack.c.b16 %v738, %v737
      %v750 = vpack.c.b16 %v740, %v739
      %v751 = vpack.c.b16 %v742, %v741
      %v752 = vpack.c.b16 %v744, %v743
      %761 = vmatprep.subr.bf16.mxu0 0
      %762 = vmatpush1.bf16.msra.mxu0 %v745
      %763 = vmatprep.subr.bf16.mxu0 0
      %764 = vmatpush1.bf16.msra.mxu0 %v746
      %765 = vmatprep.subr.bf16.mxu0 0
      %766 = vmatpush1.bf16.msra.mxu0 %v747
      %767 = vmatprep.subr.bf16.mxu0 0
      %768 = vmatpush1.bf16.msra.mxu0 %v748
      %769 = vmatprep.subr.bf16.mxu0 0
      %770 = vmatpush1.bf16.msra.mxu0 %v749
      %771 = vmatprep.subr.bf16.mxu0 0
      %772 = vmatpush1.bf16.msra.mxu0 %v750
      %773 = vmatprep.subr.bf16.mxu0 0
      %774 = vmatpush1.bf16.msra.mxu0 %v751
      %775 = vmatprep.subr.bf16.mxu0 0
      %776 = vmatpush1.bf16.msra.mxu0 %v752
      %777 = vmatprep.subr.bf16.mxu0 0
      %778 = vmatpush1.bf16.msra.mxu0 0
      %779 = vmatprep.subr.bf16.mxu0 0
      %780 = vmatpush1.bf16.msra.mxu0 0
      %781 = vmatprep.subr.bf16.mxu0 0
      %782 = vmatpush1.bf16.msra.mxu0 0
      %783 = vmatprep.subr.bf16.mxu0 0
      %784 = vmatpush1.bf16.msra.mxu0 0
      %785 = vmatprep.subr.bf16.mxu0 0
      %786 = vmatpush1.bf16.msra.mxu0 0
      %787 = vmatprep.subr.bf16.mxu0 0
      %788 = vmatpush1.bf16.msra.mxu0 0
      %789 = vmatprep.subr.bf16.mxu0 0
      %790 = vmatpush1.bf16.msra.mxu0 0
      %791 = vmatprep.subr.bf16.mxu0 0
      %792 = vmatpush1.bf16.msra.mxu0 0
      %793 = vmatprep.mubr.bf16.mxu0 0
      %794 = vmatmul.mubr.bf16.gmra.mrb[0].mxu0 %v649
      %v795 = vpop.f32.mrb[0].mxu0
      %v796 = vadd.f32 0.0, %v795
      %v797 = vpop.f32.mrb[0].mxu0
      %v798 = vpop.f32.mrb[0].mxu0
      %v799 = vadd.f32 0.0, %v798
      %v800 = vpop.f32.mrb[0].mxu0
      %801 = vmatprep.mubr.bf16.mxu0 0
      %802 = vmatmul.mubr.bf16.gmra.mrb[0].mxu0 %v650
      %v803 = vpop.f32.mrb[0].mxu0
      %v804 = vadd.f32 0.0, %v803
      %v805 = vpop.f32.mrb[0].mxu0
      %v806 = vpop.f32.mrb[0].mxu0
      %v807 = vadd.f32 0.0, %v806
      %v808 = vpop.f32.mrb[0].mxu0
      %809 = vmatprep.mubr.bf16.mxu0 0
      %810 = vmatmul.mubr.bf16.gmra.mrb[0].mxu0 %v651
      %v811 = vpop.f32.mrb[0].mxu0
      %v812 = vadd.f32 0.0, %v811
      %v813 = vpop.f32.mrb[0].mxu0
      %v814 = vpop.f32.mrb[0].mxu0
      %v815 = vadd.f32 0.0, %v814
      %v816 = vpop.f32.mrb[0].mxu0
      %817 = vmatprep.mubr.bf16.mxu0 0
      %818 = vmatmul.mubr.bf16.gmra.mrb[0].mxu0 %v652
      %v819 = vpop.f32.mrb[0].mxu0
      %v820 = vadd.f32 0.0, %v819
      %v821 = vpop.f32.mrb[0].mxu0
      %v822 = vpop.f32.mrb[0].mxu0
      %v823 = vadd.f32 0.0, %v822
      %v824 = vpop.f32.mrb[0].mxu0
      %825 = vmatprep.mubr.bf16.mxu0 0
      %826 = vmatmul.mubr.bf16.gmra.mrb[0].mxu0 %v653
      %v827 = vpop.f32.mrb[0].mxu0
      %v828 = vadd.f32 0.0, %v827
      %v829 = vpop.f32.mrb[0].mxu0
      %v830 = vpop.f32.mrb[0].mxu0
      %v831 = vadd.f32 0.0, %v830
      %v832 = vpop.f32.mrb[0].mxu0
      %833 = vmatprep.mubr.bf16.mxu0 0
      %834 = vmatmul.mubr.bf16.gmra.mrb[0].mxu0 %v654
      %v835 = vpop.f32.mrb[0].mxu0
      %v836 = vadd.f32 0.0, %v835
      %v837 = vpop.f32.mrb[0].mxu0
      %v838 = vpop.f32.mrb[0].mxu0
      %v839 = vadd.f32 0.0, %v838
      %v840 = vpop.f32.mrb[0].mxu0
      %841 = vmatprep.mubr.bf16.mxu0 0
      %842 = vmatmul.mubr.bf16.gmra.mrb[0].mxu0 %v655
      %v843 = vpop.f32.mrb[0].mxu0
      %v844 = vadd.f32 0.0, %v843
      %v845 = vpop.f32.mrb[0].mxu0
      %v846 = vpop.f32.mrb[0].mxu0
      %v847 = vadd.f32 0.0, %v846
      %v848 = vpop.f32.mrb[0].mxu0
      %849 = vmatprep.mubr.bf16.mxu0 0
      %850 = vmatmul.mubr.bf16.gmra.mrb[0].mxu0 %v656
      %v851 = vpop.f32.mrb[0].mxu0
      %v852 = vadd.f32 0.0, %v851
      %v853 = vpop.f32.mrb[0].mxu0
      %v854 = vpop.f32.mrb[0].mxu0
      %v855 = vadd.f32 0.0, %v854
      %v856 = vpop.f32.mrb[0].mxu0
      %857 = vmatprep.mubr.bf16.mxu0 0
      %858 = vmatmul.mubr.bf16.gmra.mrb[0].mxu0 %v657
      %v859 = vpop.f32.mrb[0].mxu0
      %v860 = vadd.f32 0.0, %v859
      %v861 = vpop.f32.mrb[0].mxu0
      %v862 = vpop.f32.mrb[0].mxu0
      %v863 = vadd.f32 0.0, %v862
      %v864 = vpop.f32.mrb[0].mxu0
      %865 = vmatprep.mubr.bf16.mxu0 0
      %866 = vmatmul.mubr.bf16.gmra.mrb[0].mxu0 %v658
      %v867 = vpop.f32.mrb[0].mxu0
      %v868 = vadd.f32 0.0, %v867
      %v869 = vpop.f32.mrb[0].mxu0
      %v870 = vpop.f32.mrb[0].mxu0
      %v871 = vadd.f32 0.0, %v870
      %v872 = vpop.f32.mrb[0].mxu0
      %873 = vmatprep.mubr.bf16.mxu0 0
      %874 = vmatmul.mubr.bf16.gmra.mrb[0].mxu0 %v659
      %v875 = vpop.f32.mrb[0].mxu0
      %v876 = vadd.f32 0.0, %v875
      %v877 = vpop.f32.mrb[0].mxu0
      %v878 = vpop.f32.mrb[0].mxu0
      %v879 = vadd.f32 0.0, %v878
      %v880 = vpop.f32.mrb[0].mxu0
      %881 = vmatprep.mubr.bf16.mxu0 0
      %882 = vmatmul.mubr.bf16.gmra.mrb[0].mxu0 %v660
      %v883 = vpop.f32.mrb[0].mxu0
      %v884 = vadd.f32 0.0, %v883
      %v885 = vpop.f32.mrb[0].mxu0
      %v886 = vpop.f32.mrb[0].mxu0
      %v887 = vadd.f32 0.0, %v886
      %v888 = vpop.f32.mrb[0].mxu0
      %889 = vmatprep.mubr.bf16.mxu0 0
      %890 = vmatmul.mubr.bf16.gmra.mrb[0].mxu0 %v661
      %v891 = vpop.f32.mrb[0].mxu0
      %v892 = vadd.f32 0.0, %v891
      %v893 = vpop.f32.mrb[0].mxu0
      %v894 = vpop.f32.mrb[0].mxu0
      %v895 = vadd.f32 0.0, %v894
      %v896 = vpop.f32.mrb[0].mxu0
      %897 = vmatprep.mubr.bf16.mxu0 0
      %898 = vmatmul.mubr.bf16.gmra.mrb[0].mxu0 %v662
      %v899 = vpop.f32.mrb[0].mxu0
      %v900 = vadd.f32 0.0, %v899
      %v901 = vpop.f32.mrb[0].mxu0
      %v902 = vpop.f32.mrb[0].mxu0
      %v903 = vadd.f32 0.0, %v902
      %v904 = vpop.f32.mrb[0].mxu0
      %905 = vmatprep.mubr.bf16.mxu0 0
      %906 = vmatmul.mubr.bf16.gmra.mrb[0].mxu0 %v663
      %v907 = vpop.f32.mrb[0].mxu0
      %v908 = vadd.f32 0.0, %v907
      %v909 = vpop.f32.mrb[0].mxu0
      %v910 = vpop.f32.mrb[0].mxu0
      %v911 = vadd.f32 0.0, %v910
      %v912 = vpop.f32.mrb[0].mxu0
      %913 = vmatprep.mubr.bf16.mxu0 0
      %914 = vmatmul.mubr.bf16.gmra.mrb[0].mxu0 %v664
      %v915 = vpop.f32.mrb[0].mxu0
      %v916 = vadd.f32 0.0, %v915
      %v917 = vpop.f32.mrb[0].mxu0
      %v918 = vpop.f32.mrb[0].mxu0
      %v919 = vadd.f32 0.0, %v918
      %v920 = vpop.f32.mrb[0].mxu0
      %921 = vdwg.mxu0
      %v922 = vadd.f32 %v681, %v796
      %v923 = vadd.f32 %v682, %v799
      %v924 = vadd.f32 %v683, %v804
      %v925 = vadd.f32 %v684, %v807
      %v926 = vadd.f32 %v685, %v812
      %v927 = vadd.f32 %v686, %v815
      %v928 = vadd.f32 %v687, %v820
      %v929 = vadd.f32 %v688, %v823
      %v930 = vadd.f32 %v689, %v828
      %v931 = vadd.f32 %v690, %v831
      %v932 = vadd.f32 %v691, %v836
      %v933 = vadd.f32 %v692, %v839
      %v934 = vadd.f32 %v693, %v844
      %v935 = vadd.f32 %v694, %v847
      %v936 = vadd.f32 %v695, %v852
      %v937 = vadd.f32 %v696, %v855
      %v938 = vadd.f32 %v697, %v860
      %v939 = vadd.f32 %v698, %v863
      %v940 = vadd.f32 %v699, %v868
      %v941 = vadd.f32 %v700, %v871
      %v942 = vadd.f32 %v701, %v876
      %v943 = vadd.f32 %v702, %v879
      %v944 = vadd.f32 %v703, %v884
      %v945 = vadd.f32 %v704, %v887
      %v946 = vadd.f32 %v705, %v892
      %v947 = vadd.f32 %v706, %v895
      %v948 = vadd.f32 %v707, %v900
      %v949 = vadd.f32 %v708, %v903
      %v950 = vadd.f32 %v709, %v908
      %v951 = vadd.f32 %v710, %v911
      %v952 = vadd.f32 %v711, %v916
      %v953 = vadd.f32 %v712, %v919
      %954 = vst [vmem:[%s208] sm:$0xff] %v922
      %955 = vst [vmem:[%s208 + $0x8] sm:$0xff] %v923
      %956 = vst [vmem:[%s208 + $0x10] sm:$0xff] %v924
      %957 = vst [vmem:[%s208 + $0x18] sm:$0xff] %v925
      %958 = vst [vmem:[%s208 + $0x20] sm:$0xff] %v926
      %959 = vst [vmem:[%s208 + $0x28] sm:$0xff] %v927
      %960 = vst [vmem:[%s208 + $0x30] sm:$0xff] %v928
      %961 = vst [vmem:[%s208 + $0x38] sm:$0xff] %v929
      %962 = vst [vmem:[%s208 + $0x40] sm:$0xff] %v930
      %963 = vst [vmem:[%s208 + $0x48] sm:$0xff] %v931
      %964 = vst [vmem:[%s208 + $0x50] sm:$0xff] %v932
      %965 = vst [vmem:[%s208 + $0x58] sm:$0xff] %v933
      %966 = vst [vmem:[%s208 + $0x60] sm:$0xff] %v934
      %967 = vst [vmem:[%s208 + $0x68] sm:$0xff] %v935
      %968 = vst [vmem:[%s208 + $0x70] sm:$0xff] %v936
      %969 = vst [vmem:[%s208 + $0x78] sm:$0xff] %v937
      %970 = vst [vmem:[%s208 + $0x80] sm:$0xff] %v938
      %971 = vst [vmem:[%s208 + $0x88] sm:$0xff] %v939
      %972 = vst [vmem:[%s208 + $0x90] sm:$0xff] %v940
      %973 = vst [vmem:[%s208 + $0x98] sm:$0xff] %v941
      %974 = vst [vmem:[%s208 + $0xa0] sm:$0xff] %v942
      %975 = vst [vmem:[%s208 + $0xa8] sm:$0xff] %v943
      %976 = vst [vmem:[%s208 + $0xb0] sm:$0xff] %v944
      %977 = vst [vmem:[%s208 + $0xb8] sm:$0xff] %v945
      %978 = vst [vmem:[%s208 + $0xc0] sm:$0xff] %v946
      %979 = vst [vmem:[%s208 + $0xc8] sm:$0xff] %v947
      %980 = vst [vmem:[%s208 + $0xd0] sm:$0xff] %v948
      %981 = vst [vmem:[%s208 + $0xd8] sm:$0xff] %v949
      %982 = vst [vmem:[%s208 + $0xe0] sm:$0xff] %v950
      %983 = vst [vmem:[%s208 + $0xe8] sm:$0xff] %v951
      %984 = vst [vmem:[%s208 + $0xf0] sm:$0xff] %v952
      %985 = vst [vmem:[%s208 + $0xf8] sm:$0xff] %v953
      %v986 = vld [vmem:[%s203 + $0x2] sm:$0xff]
      %v987 = vld [vmem:[%s203 + $0xa] sm:$0xff]
      %v988 = vld [vmem:[%s203 + $0x1a] sm:$0xff]
      %v989 = vld [vmem:[%s203 + $0x22] sm:$0xff]
      %v990 = vld [vmem:[%s203 + $0x32] sm:$0xff]
      %v991 = vld [vmem:[%s203 + $0x3a] sm:$0xff]
      %v992 = vld [vmem:[%s203 + $0x4a] sm:$0xff]
      %v993 = vld [vmem:[%s203 + $0x52] sm:$0xff]
      %v994 = vld [vmem:[%s203 + $0x62] sm:$0xff]
      %v995 = vld [vmem:[%s203 + $0x6a] sm:$0xff]
      %v996 = vld [vmem:[%s203 + $0x7a] sm:$0xff]
      %v997 = vld [vmem:[%s203 + $0x82] sm:$0xff]
      %v998 = vld [vmem:[%s203 + $0x92] sm:$0xff]
      %v999 = vld [vmem:[%s203 + $0x9a] sm:$0xff]
      %v1000 = vld [vmem:[%s203 + $0xaa] sm:$0xff]
      %v1001 = vld [vmem:[%s203 + $0xb2] sm:$0xff]
      %v1002 = vld [vmem:[%s203 + $0xc2] sm:$0xff]
      %v1003 = vld [vmem:[%s203 + $0xca] sm:$0xff]
      %v1004 = vld [vmem:[%s203 + $0xda] sm:$0xff]
      %v1005 = vld [vmem:[%s203 + $0xe2] sm:$0xff]
      %v1006 = vld [vmem:[%s203 + $0xf2] sm:$0xff]
      %v1007 = vld [vmem:[%s203 + $0xfa] sm:$0xff]
      %v1008 = vld [vmem:[%s203 + $0x10a] sm:$0xff]
      %v1009 = vld [vmem:[%s203 + $0x112] sm:$0xff]
      %v1010 = vld [vmem:[%s203 + $0x122] sm:$0xff]
      %v1011 = vld [vmem:[%s203 + $0x12a] sm:$0xff]
      %v1012 = vld [vmem:[%s203 + $0x13a] sm:$0xff]
      %v1013 = vld [vmem:[%s203 + $0x142] sm:$0xff]
      %v1014 = vld [vmem:[%s203 + $0x152] sm:$0xff]
      %v1015 = vld [vmem:[%s203 + $0x15a] sm:$0xff]
      %v1016 = vld [vmem:[%s203 + $0x16a] sm:$0xff]
      %v1017 = vld [vmem:[%s203 + $0x172] sm:$0xff]
      %v1018 = vpack.c.bf16 %v987, %v986
      %v1019 = vpack.c.bf16 %v989, %v988
      %v1020 = vpack.c.bf16 %v991, %v990
      %v1021 = vpack.c.bf16 %v993, %v992
      %v1022 = vpack.c.bf16 %v995, %v994
      %v1023 = vpack.c.bf16 %v997, %v996
      %v1024 = vpack.c.bf16 %v999, %v998
      %v1025 = vpack.c.bf16 %v1001, %v1000
      %v1026 = vpack.c.bf16 %v1003, %v1002
      %v1027 = vpack.c.bf16 %v1005, %v1004
      %v1028 = vpack.c.bf16 %v1007, %v1006
      %v1029 = vpack.c.bf16 %v1009, %v1008
      %v1030 = vpack.c.bf16 %v1011, %v1010
      %v1031 = vpack.c.bf16 %v1013, %v1012
      %v1032 = vpack.c.bf16 %v1015, %v1014
      %v1033 = vpack.c.bf16 %v1017, %v1016
      %v1034 = vld [vmem:[%s1 + $0x80] sm:$0xf]
      %v1035 = vld [vmem:[%s1 + $0x84] sm:$0xf]
      %v1036 = vld [vmem:[%s1 + $0x88] sm:$0xf]
      %v1037 = vld [vmem:[%s1 + $0x8c] sm:$0xf]
      %v1038 = vld [vmem:[%s1 + $0x90] sm:$0xf]
      %v1039 = vld [vmem:[%s1 + $0x94] sm:$0xf]
      %v1040 = vld [vmem:[%s1 + $0x98] sm:$0xf]
      %v1041 = vld [vmem:[%s1 + $0x9c] sm:$0xf]
      %v1042 = vld [vmem:[%s1 + $0xa0] sm:$0xf]
      %v1043 = vld [vmem:[%s1 + $0xa4] sm:$0xf]
      %v1044 = vld [vmem:[%s1 + $0xa8] sm:$0xf]
      %v1045 = vld [vmem:[%s1 + $0xac] sm:$0xf]
      %v1046 = vld [vmem:[%s1 + $0xb0] sm:$0xf]
      %v1047 = vld [vmem:[%s1 + $0xb4] sm:$0xf]
      %v1048 = vld [vmem:[%s1 + $0xb8] sm:$0xf]
      %v1049 = vld [vmem:[%s1 + $0xbc] sm:$0xf]
      %v1050 = vld [vmem:[%s208] sm:$0xff]
      %v1051 = vld [vmem:[%s208 + $0x8] sm:$0xff]
      %v1052 = vld [vmem:[%s208 + $0x10] sm:$0xff]
      %v1053 = vld [vmem:[%s208 + $0x18] sm:$0xff]
      %v1054 = vld [vmem:[%s208 + $0x20] sm:$0xff]
      %v1055 = vld [vmem:[%s208 + $0x28] sm:$0xff]
      %v1056 = vld [vmem:[%s208 + $0x30] sm:$0xff]
      %v1057 = vld [vmem:[%s208 + $0x38] sm:$0xff]
      %v1058 = vld [vmem:[%s208 + $0x40] sm:$0xff]
      %v1059 = vld [vmem:[%s208 + $0x48] sm:$0xff]
      %v1060 = vld [vmem:[%s208 + $0x50] sm:$0xff]
      %v1061 = vld [vmem:[%s208 + $0x58] sm:$0xff]
      %v1062 = vld [vmem:[%s208 + $0x60] sm:$0xff]
      %v1063 = vld [vmem:[%s208 + $0x68] sm:$0xff]
      %v1064 = vld [vmem:[%s208 + $0x70] sm:$0xff]
      %v1065 = vld [vmem:[%s208 + $0x78] sm:$0xff]
      %v1066 = vld [vmem:[%s208 + $0x80] sm:$0xff]
      %v1067 = vld [vmem:[%s208 + $0x88] sm:$0xff]
      %v1068 = vld [vmem:[%s208 + $0x90] sm:$0xff]
      %v1069 = vld [vmem:[%s208 + $0x98] sm:$0xff]
      %v1070 = vld [vmem:[%s208 + $0xa0] sm:$0xff]
      %v1071 = vld [vmem:[%s208 + $0xa8] sm:$0xff]
      %v1072 = vld [vmem:[%s208 + $0xb0] sm:$0xff]
      %v1073 = vld [vmem:[%s208 + $0xb8] sm:$0xff]
      %v1074 = vld [vmem:[%s208 + $0xc0] sm:$0xff]
      %v1075 = vld [vmem:[%s208 + $0xc8] sm:$0xff]
      %v1076 = vld [vmem:[%s208 + $0xd0] sm:$0xff]
      %v1077 = vld [vmem:[%s208 + $0xd8] sm:$0xff]
      %v1078 = vld [vmem:[%s208 + $0xe0] sm:$0xff]
      %v1079 = vld [vmem:[%s208 + $0xe8] sm:$0xff]
      %v1080 = vld [vmem:[%s208 + $0xf0] sm:$0xff]
      %v1081 = vld [vmem:[%s208 + $0xf8] sm:$0xff]
      %v1098 = vunpack.c.l.b16 %v1034
      %v1099 = vunpack.c.l.b16 %v1035
      %v1100 = vunpack.c.l.b16 %v1036
      %v1101 = vunpack.c.l.b16 %v1037
      %v1102 = vunpack.c.l.b16 %v1038
      %v1103 = vunpack.c.l.b16 %v1039
      %v1104 = vunpack.c.l.b16 %v1040
      %v1105 = vunpack.c.l.b16 %v1041
      %v1106 = vunpack.c.l.b16 %v1042
      %v1107 = vunpack.c.l.b16 %v1043
      %v1108 = vunpack.c.l.b16 %v1044
      %v1109 = vunpack.c.l.b16 %v1045
      %v1110 = vunpack.c.l.b16 %v1046
      %v1111 = vunpack.c.l.b16 %v1047
      %v1112 = vunpack.c.l.b16 %v1048
      %v1113 = vunpack.c.l.b16 %v1049
      %v1114 = vpack.c.b16 %v1099, %v1098
      %v1115 = vpack.c.b16 %v1101, %v1100
      %v1116 = vpack.c.b16 %v1103, %v1102
      %v1117 = vpack.c.b16 %v1105, %v1104
      %v1118 = vpack.c.b16 %v1107, %v1106
      %v1119 = vpack.c.b16 %v1109, %v1108
      %v1120 = vpack.c.b16 %v1111, %v1110
      %v1121 = vpack.c.b16 %v1113, %v1112
      %1130 = vmatprep.subr.bf16.mxu0 0
      %1131 = vmatpush1.bf16.msra.mxu0 %v1114
      %1132 = vmatprep.subr.bf16.mxu0 0
      %1133 = vmatpush1.bf16.msra.mxu0 %v1115
      %1134 = vmatprep.subr.bf16.mxu0 0
      %1135 = vmatpush1.bf16.msra.mxu0 %v1116
      %1136 = vmatprep.subr.bf16.mxu0 0
      %1137 = vmatpush1.bf16.msra.mxu0 %v1117
      %1138 = vmatprep.subr.bf16.mxu0 0
      %1139 = vmatpush1.bf16.msra.mxu0 %v1118
      %1140 = vmatprep.subr.bf16.mxu0 0
      %1141 = vmatpush1.bf16.msra.mxu0 %v1119
      %1142 = vmatprep.subr.bf16.mxu0 0
      %1143 = vmatpush1.bf16.msra.mxu0 %v1120
      %1144 = vmatprep.subr.bf16.mxu0 0
      %1145 = vmatpush1.bf16.msra.mxu0 %v1121
      %1146 = vmatprep.subr.bf16.mxu0 0
      %1147 = vmatpush1.bf16.msra.mxu0 0
      %1148 = vmatprep.subr.bf16.mxu0 0
      %1149 = vmatpush1.bf16.msra.mxu0 0
      %1150 = vmatprep.subr.bf16.mxu0 0
      %1151 = vmatpush1.bf16.msra.mxu0 0
      %1152 = vmatprep.subr.bf16.mxu0 0
      %1153 = vmatpush1.bf16.msra.mxu0 0
      %1154 = vmatprep.subr.bf16.mxu0 0
      %1155 = vmatpush1.bf16.msra.mxu0 0
      %1156 = vmatprep.subr.bf16.mxu0 0
      %1157 = vmatpush1.bf16.msra.mxu0 0
      %1158 = vmatprep.subr.bf16.mxu0 0
      %1159 = vmatpush1.bf16.msra.mxu0 0
      %1160 = vmatprep.subr.bf16.mxu0 0
      %1161 = vmatpush1.bf16.msra.mxu0 0
      %1162 = vmatprep.mubr.bf16.mxu0 0
      %1163 = vmatmul.mubr.bf16.gmra.mrb[0].mxu0 %v1018
      %v1164 = vpop.f32.mrb[0].mxu0
      %v1165 = vadd.f32 0.0, %v1164
      %v1166 = vpop.f32.mrb[0].mxu0
      %v1167 = vpop.f32.mrb[0].mxu0
      %v1168 = vadd.f32 0.0, %v1167
      %v1169 = vpop.f32.mrb[0].mxu0
      %1170 = vmatprep.mubr.bf16.mxu0 0
      %1171 = vmatmul.mubr.bf16.gmra.mrb[0].mxu0 %v1019
      %v1172 = vpop.f32.mrb[0].mxu0
      %v1173 = vadd.f32 0.0, %v1172
      %v1174 = vpop.f32.mrb[0].mxu0
      %v1175 = vpop.f32.mrb[0].mxu0
      %v1176 = vadd.f32 0.0, %v1175
      %v1177 = vpop.f32.mrb[0].mxu0
      %1178 = vmatprep.mubr.bf16.mxu0 0
      %1179 = vmatmul.mubr.bf16.gmra.mrb[0].mxu0 %v1020
      %v1180 = vpop.f32.mrb[0].mxu0
      %v1181 = vadd.f32 0.0, %v1180
      %v1182 = vpop.f32.mrb[0].mxu0
      %v1183 = vpop.f32.mrb[0].mxu0
      %v1184 = vadd.f32 0.0, %v1183
      %v1185 = vpop.f32.mrb[0].mxu0
      %1186 = vmatprep.mubr.bf16.mxu0 0
      %1187 = vmatmul.mubr.bf16.gmra.mrb[0].mxu0 %v1021
      %v1188 = vpop.f32.mrb[0].mxu0
      %v1189 = vadd.f32 0.0, %v1188
      %v1190 = vpop.f32.mrb[0].mxu0
      %v1191 = vpop.f32.mrb[0].mxu0
      %v1192 = vadd.f32 0.0, %v1191
      %v1193 = vpop.f32.mrb[0].mxu0
      %1194 = vmatprep.mubr.bf16.mxu0 0
      %1195 = vmatmul.mubr.bf16.gmra.mrb[0].mxu0 %v1022
      %v1196 = vpop.f32.mrb[0].mxu0
      %v1197 = vadd.f32 0.0, %v1196
      %v1198 = vpop.f32.mrb[0].mxu0
      %v1199 = vpop.f32.mrb[0].mxu0
      %v1200 = vadd.f32 0.0, %v1199
      %v1201 = vpop.f32.mrb[0].mxu0
      %1202 = vmatprep.mubr.bf16.mxu0 0
      %1203 = vmatmul.mubr.bf16.gmra.mrb[0].mxu0 %v1023
      %v1204 = vpop.f32.mrb[0].mxu0
      %v1205 = vadd.f32 0.0, %v1204
      %v1206 = vpop.f32.mrb[0].mxu0
      %v1207 = vpop.f32.mrb[0].mxu0
      %v1208 = vadd.f32 0.0, %v1207
      %v1209 = vpop.f32.mrb[0].mxu0
      %1210 = vmatprep.mubr.bf16.mxu0 0
      %1211 = vmatmul.mubr.bf16.gmra.mrb[0].mxu0 %v1024
      %v1212 = vpop.f32.mrb[0].mxu0
      %v1213 = vadd.f32 0.0, %v1212
      %v1214 = vpop.f32.mrb[0].mxu0
      %v1215 = vpop.f32.mrb[0].mxu0
      %v1216 = vadd.f32 0.0, %v1215
      %v1217 = vpop.f32.mrb[0].mxu0
      %1218 = vmatprep.mubr.bf16.mxu0 0
      %1219 = vmatmul.mubr.bf16.gmra.mrb[0].mxu0 %v1025
      %v1220 = vpop.f32.mrb[0].mxu0
      %v1221 = vadd.f32 0.0, %v1220
      %v1222 = vpop.f32.mrb[0].mxu0
      %v1223 = vpop.f32.mrb[0].mxu0
      %v1224 = vadd.f32 0.0, %v1223
      %v1225 = vpop.f32.mrb[0].mxu0
      %1226 = vmatprep.mubr.bf16.mxu0 0
      %1227 = vmatmul.mubr.bf16.gmra.mrb[0].mxu0 %v1026
      %v1228 = vpop.f32.mrb[0].mxu0
      %v1229 = vadd.f32 0.0, %v1228
      %v1230 = vpop.f32.mrb[0].mxu0
      %v1231 = vpop.f32.mrb[0].mxu0
      %v1232 = vadd.f32 0.0, %v1231
      %v1233 = vpop.f32.mrb[0].mxu0
      %1234 = vmatprep.mubr.bf16.mxu0 0
      %1235 = vmatmul.mubr.bf16.gmra.mrb[0].mxu0 %v1027
      %v1236 = vpop.f32.mrb[0].mxu0
      %v1237 = vadd.f32 0.0, %v1236
      %v1238 = vpop.f32.mrb[0].mxu0
      %v1239 = vpop.f32.mrb[0].mxu0
      %v1240 = vadd.f32 0.0, %v1239
      %v1241 = vpop.f32.mrb[0].mxu0
      %1242 = vmatprep.mubr.bf16.mxu0 0
      %1243 = vmatmul.mubr.bf16.gmra.mrb[0].mxu0 %v1028
      %v1244 = vpop.f32.mrb[0].mxu0
      %v1245 = vadd.f32 0.0, %v1244
      %v1246 = vpop.f32.mrb[0].mxu0
      %v1247 = vpop.f32.mrb[0].mxu0
      %v1248 = vadd.f32 0.0, %v1247
      %v1249 = vpop.f32.mrb[0].mxu0
      %1250 = vmatprep.mubr.bf16.mxu0 0
      %1251 = vmatmul.mubr.bf16.gmra.mrb[0].mxu0 %v1029
      %v1252 = vpop.f32.mrb[0].mxu0
      %v1253 = vadd.f32 0.0, %v1252
      %v1254 = vpop.f32.mrb[0].mxu0
      %v1255 = vpop.f32.mrb[0].mxu0
      %v1256 = vadd.f32 0.0, %v1255
      %v1257 = vpop.f32.mrb[0].mxu0
      %1258 = vmatprep.mubr.bf16.mxu0 0
      %1259 = vmatmul.mubr.bf16.gmra.mrb[0].mxu0 %v1030
      %v1260 = vpop.f32.mrb[0].mxu0
      %v1261 = vadd.f32 0.0, %v1260
      %v1262 = vpop.f32.mrb[0].mxu0
      %v1263 = vpop.f32.mrb[0].mxu0
      %v1264 = vadd.f32 0.0, %v1263
      %v1265 = vpop.f32.mrb[0].mxu0
      %1266 = vmatprep.mubr.bf16.mxu0 0
      %1267 = vmatmul.mubr.bf16.gmra.mrb[0].mxu0 %v1031
      %v1268 = vpop.f32.mrb[0].mxu0
      %v1269 = vadd.f32 0.0, %v1268
      %v1270 = vpop.f32.mrb[0].mxu0
      %v1271 = vpop.f32.mrb[0].mxu0
      %v1272 = vadd.f32 0.0, %v1271
      %v1273 = vpop.f32.mrb[0].mxu0
      %1274 = vmatprep.mubr.bf16.mxu0 0
      %1275 = vmatmul.mubr.bf16.gmra.mrb[0].mxu0 %v1032
      %v1276 = vpop.f32.mrb[0].mxu0
      %v1277 = vadd.f32 0.0, %v1276
      %v1278 = vpop.f32.mrb[0].mxu0
      %v1279 = vpop.f32.mrb[0].mxu0
      %v1280 = vadd.f32 0.0, %v1279
      %v1281 = vpop.f32.mrb[0].mxu0
      %1282 = vmatprep.mubr.bf16.mxu0 0
      %1283 = vmatmul.mubr.bf16.gmra.mrb[0].mxu0 %v1033
      %v1284 = vpop.f32.mrb[0].mxu0
      %v1285 = vadd.f32 0.0, %v1284
      %v1286 = vpop.f32.mrb[0].mxu0
      %v1287 = vpop.f32.mrb[0].mxu0
      %v1288 = vadd.f32 0.0, %v1287
      %v1289 = vpop.f32.mrb[0].mxu0
      %1290 = vdwg.mxu0
      %v1291 = vadd.f32 %v1050, %v1165
      %v1292 = vadd.f32 %v1051, %v1168
      %v1293 = vadd.f32 %v1052, %v1173
      %v1294 = vadd.f32 %v1053, %v1176
      %v1295 = vadd.f32 %v1054, %v1181
      %v1296 = vadd.f32 %v1055, %v1184
      %v1297 = vadd.f32 %v1056, %v1189
      %v1298 = vadd.f32 %v1057, %v1192
      %v1299 = vadd.f32 %v1058, %v1197
      %v1300 = vadd.f32 %v1059, %v1200
      %v1301 = vadd.f32 %v1060, %v1205
      %v1302 = vadd.f32 %v1061, %v1208
      %v1303 = vadd.f32 %v1062, %v1213
      %v1304 = vadd.f32 %v1063, %v1216
      %v1305 = vadd.f32 %v1064, %v1221
      %v1306 = vadd.f32 %v1065, %v1224
      %v1307 = vadd.f32 %v1066, %v1229
      %v1308 = vadd.f32 %v1067, %v1232
      %v1309 = vadd.f32 %v1068, %v1237
      %v1310 = vadd.f32 %v1069, %v1240
      %v1311 = vadd.f32 %v1070, %v1245
      %v1312 = vadd.f32 %v1071, %v1248
      %v1313 = vadd.f32 %v1072, %v1253
      %v1314 = vadd.f32 %v1073, %v1256
      %v1315 = vadd.f32 %v1074, %v1261
      %v1316 = vadd.f32 %v1075, %v1264
      %v1317 = vadd.f32 %v1076, %v1269
      %v1318 = vadd.f32 %v1077, %v1272
      %v1319 = vadd.f32 %v1078, %v1277
      %v1320 = vadd.f32 %v1079, %v1280
      %v1321 = vadd.f32 %v1080, %v1285
      %v1322 = vadd.f32 %v1081, %v1288
      %1323 = vst [vmem:[%s208] sm:$0xff] %v1291
      %1324 = vst [vmem:[%s208 + $0x8] sm:$0xff] %v1292
      %1325 = vst [vmem:[%s208 + $0x10] sm:$0xff] %v1293
      %1326 = vst [vmem:[%s208 + $0x18] sm:$0xff] %v1294
      %1327 = vst [vmem:[%s208 + $0x20] sm:$0xff] %v1295
      %1328 = vst [vmem:[%s208 + $0x28] sm:$0xff] %v1296
      %1329 = vst [vmem:[%s208 + $0x30] sm:$0xff] %v1297
      %1330 = vst [vmem:[%s208 + $0x38] sm:$0xff] %v1298
      %1331 = vst [vmem:[%s208 + $0x40] sm:$0xff] %v1299
      %1332 = vst [vmem:[%s208 + $0x48] sm:$0xff] %v1300
      %1333 = vst [vmem:[%s208 + $0x50] sm:$0xff] %v1301
      %1334 = vst [vmem:[%s208 + $0x58] sm:$0xff] %v1302
      %1335 = vst [vmem:[%s208 + $0x60] sm:$0xff] %v1303
      %1336 = vst [vmem:[%s208 + $0x68] sm:$0xff] %v1304
      %1337 = vst [vmem:[%s208 + $0x70] sm:$0xff] %v1305
      %1338 = vst [vmem:[%s208 + $0x78] sm:$0xff] %v1306
      %1339 = vst [vmem:[%s208 + $0x80] sm:$0xff] %v1307
      %1340 = vst [vmem:[%s208 + $0x88] sm:$0xff] %v1308
      %1341 = vst [vmem:[%s208 + $0x90] sm:$0xff] %v1309
      %1342 = vst [vmem:[%s208 + $0x98] sm:$0xff] %v1310
      %1343 = vst [vmem:[%s208 + $0xa0] sm:$0xff] %v1311
      %1344 = vst [vmem:[%s208 + $0xa8] sm:$0xff] %v1312
      %1345 = vst [vmem:[%s208 + $0xb0] sm:$0xff] %v1313
      %1346 = vst [vmem:[%s208 + $0xb8] sm:$0xff] %v1314
      %1347 = vst [vmem:[%s208 + $0xc0] sm:$0xff] %v1315
      %1348 = vst [vmem:[%s208 + $0xc8] sm:$0xff] %v1316
      %1349 = vst [vmem:[%s208 + $0xd0] sm:$0xff] %v1317
      %1350 = vst [vmem:[%s208 + $0xd8] sm:$0xff] %v1318
      %1351 = vst [vmem:[%s208 + $0xe0] sm:$0xff] %v1319
      %1352 = vst [vmem:[%s208 + $0xe8] sm:$0xff] %v1320
      %1353 = vst [vmem:[%s208 + $0xf0] sm:$0xff] %v1321
      %1354 = vst [vmem:[%s208 + $0xf8] sm:$0xff] %v1322
      %s1355 = scalar_lea.vmem %s203, 24
      %v1356 = vld [vmem:[%s1355] sm:$0xff]
      %v1357 = vld [vmem:[%s1355 + $0x8] sm:$0xff]
      %v1358 = vld [vmem:[%s1355 + $0x18] sm:$0xff]
      %v1359 = vld [vmem:[%s1355 + $0x20] sm:$0xff]
      %v1360 = vld [vmem:[%s1355 + $0x30] sm:$0xff]
      %v1361 = vld [vmem:[%s1355 + $0x38] sm:$0xff]
      %v1362 = vld [vmem:[%s1355 + $0x48] sm:$0xff]
      %v1363 = vld [vmem:[%s1355 + $0x50] sm:$0xff]
      %v1364 = vld [vmem:[%s1355 + $0x60] sm:$0xff]
      %v1365 = vld [vmem:[%s1355 + $0x68] sm:$0xff]
      %v1366 = vld [vmem:[%s1355 + $0x78] sm:$0xff]
      %v1367 = vld [vmem:[%s1355 + $0x80] sm:$0xff]
      %v1368 = vld [vmem:[%s1355 + $0x90] sm:$0xff]
      %v1369 = vld [vmem:[%s1355 + $0x98] sm:$0xff]
      %v1370 = vld [vmem:[%s1355 + $0xa8] sm:$0xff]
      %v1371 = vld [vmem:[%s1355 + $0xb0] sm:$0xff]
      %v1372 = vld [vmem:[%s1355 + $0xc0] sm:$0xff]
      %v1373 = vld [vmem:[%s1355 + $0xc8] sm:$0xff]
      %v1374 = vld [vmem:[%s1355 + $0xd8] sm:$0xff]
      %v1375 = vld [vmem:[%s1355 + $0xe0] sm:$0xff]
      %v1376 = vld [vmem:[%s1355 + $0xf0] sm:$0xff]
      %v1377 = vld [vmem:[%s1355 + $0xf8] sm:$0xff]
      %v1378 = vld [vmem:[%s1355 + $0x108] sm:$0xff]
      %v1379 = vld [vmem:[%s1355 + $0x110] sm:$0xff]
      %v1380 = vld [vmem:[%s1355 + $0x120] sm:$0xff]
      %v1381 = vld [vmem:[%s1355 + $0x128] sm:$0xff]
      %v1382 = vld [vmem:[%s1355 + $0x138] sm:$0xff]
      %v1383 = vld [vmem:[%s1355 + $0x140] sm:$0xff]
      %v1384 = vld [vmem:[%s1355 + $0x150] sm:$0xff]
      %v1385 = vld [vmem:[%s1355 + $0x158] sm:$0xff]
      %v1386 = vld [vmem:[%s1355 + $0x168] sm:$0xff]
      %v1387 = vld [vmem:[%s1355 + $0x170] sm:$0xff]
      %v1388 = vpack.c.bf16 %v1357, %v1356
      %v1389 = vpack.c.bf16 %v1359, %v1358
      %v1390 = vpack.c.bf16 %v1361, %v1360
      %v1391 = vpack.c.bf16 %v1363, %v1362
      %v1392 = vpack.c.bf16 %v1365, %v1364
      %v1393 = vpack.c.bf16 %v1367, %v1366
      %v1394 = vpack.c.bf16 %v1369, %v1368
      %v1395 = vpack.c.bf16 %v1371, %v1370
      %v1396 = vpack.c.bf16 %v1373, %v1372
      %v1397 = vpack.c.bf16 %v1375, %v1374
      %v1398 = vpack.c.bf16 %v1377, %v1376
      %v1399 = vpack.c.bf16 %v1379, %v1378
      %v1400 = vpack.c.bf16 %v1381, %v1380
      %v1401 = vpack.c.bf16 %v1383, %v1382
      %v1402 = vpack.c.bf16 %v1385, %v1384
      %v1403 = vpack.c.bf16 %v1387, %v1386
      %v1404 = vld [vmem:[%s1 + $0xc0] sm:$0xf]
      %v1405 = vld [vmem:[%s1 + $0xc4] sm:$0xf]
      %v1406 = vld [vmem:[%s1 + $0xc8] sm:$0xf]
      %v1407 = vld [vmem:[%s1 + $0xcc] sm:$0xf]
      %v1408 = vld [vmem:[%s1 + $0xd0] sm:$0xf]
      %v1409 = vld [vmem:[%s1 + $0xd4] sm:$0xf]
      %v1410 = vld [vmem:[%s1 + $0xd8] sm:$0xf]
      %v1411 = vld [vmem:[%s1 + $0xdc] sm:$0xf]
      %v1412 = vld [vmem:[%s1 + $0xe0] sm:$0xf]
      %v1413 = vld [vmem:[%s1 + $0xe4] sm:$0xf]
      %v1414 = vld [vmem:[%s1 + $0xe8] sm:$0xf]
      %v1415 = vld [vmem:[%s1 + $0xec] sm:$0xf]
      %v1416 = vld [vmem:[%s1 + $0xf0] sm:$0xf]
      %v1417 = vld [vmem:[%s1 + $0xf4] sm:$0xf]
      %v1418 = vld [vmem:[%s1 + $0xf8] sm:$0xf]
      %v1419 = vld [vmem:[%s1 + $0xfc] sm:$0xf]
      %v1420 = vld [vmem:[%s208] sm:$0xff]
      %v1421 = vld [vmem:[%s208 + $0x8] sm:$0xff]
      %v1422 = vld [vmem:[%s208 + $0x10] sm:$0xff]
      %v1423 = vld [vmem:[%s208 + $0x18] sm:$0xff]
      %v1424 = vld [vmem:[%s208 + $0x20] sm:$0xff]
      %v1425 = vld [vmem:[%s208 + $0x28] sm:$0xff]
      %v1426 = vld [vmem:[%s208 + $0x30] sm:$0xff]
      %v1427 = vld [vmem:[%s208 + $0x38] sm:$0xff]
      %v1428 = vld [vmem:[%s208 + $0x40] sm:$0xff]
      %v1429 = vld [vmem:[%s208 + $0x48] sm:$0xff]
      %v1430 = vld [vmem:[%s208 + $0x50] sm:$0xff]
      %v1431 = vld [vmem:[%s208 + $0x58] sm:$0xff]
      %v1432 = vld [vmem:[%s208 + $0x60] sm:$0xff]
      %v1433 = vld [vmem:[%s208 + $0x68] sm:$0xff]
      %v1434 = vld [vmem:[%s208 + $0x70] sm:$0xff]
      %v1435 = vld [vmem:[%s208 + $0x78] sm:$0xff]
      %v1436 = vld [vmem:[%s208 + $0x80] sm:$0xff]
      %v1437 = vld [vmem:[%s208 + $0x88] sm:$0xff]
      %v1438 = vld [vmem:[%s208 + $0x90] sm:$0xff]
      %v1439 = vld [vmem:[%s208 + $0x98] sm:$0xff]
      %v1440 = vld [vmem:[%s208 + $0xa0] sm:$0xff]
      %v1441 = vld [vmem:[%s208 + $0xa8] sm:$0xff]
      %v1442 = vld [vmem:[%s208 + $0xb0] sm:$0xff]
      %v1443 = vld [vmem:[%s208 + $0xb8] sm:$0xff]
      %v1444 = vld [vmem:[%s208 + $0xc0] sm:$0xff]
      %v1445 = vld [vmem:[%s208 + $0xc8] sm:$0xff]
      %v1446 = vld [vmem:[%s208 + $0xd0] sm:$0xff]
      %v1447 = vld [vmem:[%s208 + $0xd8] sm:$0xff]
      %v1448 = vld [vmem:[%s208 + $0xe0] sm:$0xff]
      %v1449 = vld [vmem:[%s208 + $0xe8] sm:$0xff]
      %v1450 = vld [vmem:[%s208 + $0xf0] sm:$0xff]
      %v1451 = vld [vmem:[%s208 + $0xf8] sm:$0xff]
      %v1468 = vunpack.c.l.b16 %v1404
      %v1469 = vunpack.c.l.b16 %v1405
      %v1470 = vunpack.c.l.b16 %v1406
      %v1471 = vunpack.c.l.b16 %v1407
      %v1472 = vunpack.c.l.b16 %v1408
      %v1473 = vunpack.c.l.b16 %v1409
      %v1474 = vunpack.c.l.b16 %v1410
      %v1475 = vunpack.c.l.b16 %v1411
      %v1476 = vunpack.c.l.b16 %v1412
      %v1477 = vunpack.c.l.b16 %v1413
      %v1478 = vunpack.c.l.b16 %v1414
      %v1479 = vunpack.c.l.b16 %v1415
      %v1480 = vunpack.c.l.b16 %v1416
      %v1481 = vunpack.c.l.b16 %v1417
      %v1482 = vunpack.c.l.b16 %v1418
      %v1483 = vunpack.c.l.b16 %v1419
      %v1484 = vpack.c.b16 %v1469, %v1468
      %v1485 = vpack.c.b16 %v1471, %v1470
      %v1486 = vpack.c.b16 %v1473, %v1472
      %v1487 = vpack.c.b16 %v1475, %v1474
      %v1488 = vpack.c.b16 %v1477, %v1476
      %v1489 = vpack.c.b16 %v1479, %v1478
      %v1490 = vpack.c.b16 %v1481, %v1480
      %v1491 = vpack.c.b16 %v1483, %v1482
      %1500 = vmatprep.subr.bf16.mxu0 0
      %1501 = vmatpush1.bf16.msra.mxu0 %v1484
      %1502 = vmatprep.subr.bf16.mxu0 0
      %1503 = vmatpush1.bf16.msra.mxu0 %v1485
      %1504 = vmatprep.subr.bf16.mxu0 0
      %1505 = vmatpush1.bf16.msra.mxu0 %v1486
      %1506 = vmatprep.subr.bf16.mxu0 0
      %1507 = vmatpush1.bf16.msra.mxu0 %v1487
      %1508 = vmatprep.subr.bf16.mxu0 0
      %1509 = vmatpush1.bf16.msra.mxu0 %v1488
      %1510 = vmatprep.subr.bf16.mxu0 0
      %1511 = vmatpush1.bf16.msra.mxu0 %v1489
      %1512 = vmatprep.subr.bf16.mxu0 0
      %1513 = vmatpush1.bf16.msra.mxu0 %v1490
      %1514 = vmatprep.subr.bf16.mxu0 0
      %1515 = vmatpush1.bf16.msra.mxu0 %v1491
      %1516 = vmatprep.subr.bf16.mxu0 0
      %1517 = vmatpush1.bf16.msra.mxu0 0
      %1518 = vmatprep.subr.bf16.mxu0 0
      %1519 = vmatpush1.bf16.msra.mxu0 0
      %1520 = vmatprep.subr.bf16.mxu0 0
      %1521 = vmatpush1.bf16.msra.mxu0 0
      %1522 = vmatprep.subr.bf16.mxu0 0
      %1523 = vmatpush1.bf16.msra.mxu0 0
      %1524 = vmatprep.subr.bf16.mxu0 0
      %1525 = vmatpush1.bf16.msra.mxu0 0
      %1526 = vmatprep.subr.bf16.mxu0 0
      %1527 = vmatpush1.bf16.msra.mxu0 0
      %1528 = vmatprep.subr.bf16.mxu0 0
      %1529 = vmatpush1.bf16.msra.mxu0 0
      %1530 = vmatprep.subr.bf16.mxu0 0
      %1531 = vmatpush1.bf16.msra.mxu0 0
      %1532 = vmatprep.mubr.bf16.mxu0 0
      %1533 = vmatmul.mubr.bf16.gmra.mrb[0].mxu0 %v1388
      %v1534 = vpop.f32.mrb[0].mxu0
      %v1535 = vadd.f32 0.0, %v1534
      %v1536 = vpop.f32.mrb[0].mxu0
      %v1537 = vpop.f32.mrb[0].mxu0
      %v1538 = vadd.f32 0.0, %v1537
      %v1539 = vpop.f32.mrb[0].mxu0
      %1540 = vmatprep.mubr.bf16.mxu0 0
      %1541 = vmatmul.mubr.bf16.gmra.mrb[0].mxu0 %v1389
      %v1542 = vpop.f32.mrb[0].mxu0
      %v1543 = vadd.f32 0.0, %v1542
      %v1544 = vpop.f32.mrb[0].mxu0
      %v1545 = vpop.f32.mrb[0].mxu0
      %v1546 = vadd.f32 0.0, %v1545
      %v1547 = vpop.f32.mrb[0].mxu0
      %1548 = vmatprep.mubr.bf16.mxu0 0
      %1549 = vmatmul.mubr.bf16.gmra.mrb[0].mxu0 %v1390
      %v1550 = vpop.f32.mrb[0].mxu0
      %v1551 = vadd.f32 0.0, %v1550
      %v1552 = vpop.f32.mrb[0].mxu0
      %v1553 = vpop.f32.mrb[0].mxu0
      %v1554 = vadd.f32 0.0, %v1553
      %v1555 = vpop.f32.mrb[0].mxu0
      %1556 = vmatprep.mubr.bf16.mxu0 0
      %1557 = vmatmul.mubr.bf16.gmra.mrb[0].mxu0 %v1391
      %v1558 = vpop.f32.mrb[0].mxu0
      %v1559 = vadd.f32 0.0, %v1558
      %v1560 = vpop.f32.mrb[0].mxu0
      %v1561 = vpop.f32.mrb[0].mxu0
      %v1562 = vadd.f32 0.0, %v1561
      %v1563 = vpop.f32.mrb[0].mxu0
      %1564 = vmatprep.mubr.bf16.mxu0 0
      %1565 = vmatmul.mubr.bf16.gmra.mrb[0].mxu0 %v1392
      %v1566 = vpop.f32.mrb[0].mxu0
      %v1567 = vadd.f32 0.0, %v1566
      %v1568 = vpop.f32.mrb[0].mxu0
      %v1569 = vpop.f32.mrb[0].mxu0
      %v1570 = vadd.f32 0.0, %v1569
      %v1571 = vpop.f32.mrb[0].mxu0
      %1572 = vmatprep.mubr.bf16.mxu0 0
      %1573 = vmatmul.mubr.bf16.gmra.mrb[0].mxu0 %v1393
      %v1574 = vpop.f32.mrb[0].mxu0
      %v1575 = vadd.f32 0.0, %v1574
      %v1576 = vpop.f32.mrb[0].mxu0
      %v1577 = vpop.f32.mrb[0].mxu0
      %v1578 = vadd.f32 0.0, %v1577
      %v1579 = vpop.f32.mrb[0].mxu0
      %1580 = vmatprep.mubr.bf16.mxu0 0
      %1581 = vmatmul.mubr.bf16.gmra.mrb[0].mxu0 %v1394
      %v1582 = vpop.f32.mrb[0].mxu0
      %v1583 = vadd.f32 0.0, %v1582
      %v1584 = vpop.f32.mrb[0].mxu0
      %v1585 = vpop.f32.mrb[0].mxu0
      %v1586 = vadd.f32 0.0, %v1585
      %v1587 = vpop.f32.mrb[0].mxu0
      %1588 = vmatprep.mubr.bf16.mxu0 0
      %1589 = vmatmul.mubr.bf16.gmra.mrb[0].mxu0 %v1395
      %v1590 = vpop.f32.mrb[0].mxu0
      %v1591 = vadd.f32 0.0, %v1590
      %v1592 = vpop.f32.mrb[0].mxu0
      %v1593 = vpop.f32.mrb[0].mxu0
      %v1594 = vadd.f32 0.0, %v1593
      %v1595 = vpop.f32.mrb[0].mxu0
      %1596 = vmatprep.mubr.bf16.mxu0 0
      %1597 = vmatmul.mubr.bf16.gmra.mrb[0].mxu0 %v1396
      %v1598 = vpop.f32.mrb[0].mxu0
      %v1599 = vadd.f32 0.0, %v1598
      %v1600 = vpop.f32.mrb[0].mxu0
      %v1601 = vpop.f32.mrb[0].mxu0
      %v1602 = vadd.f32 0.0, %v1601
      %v1603 = vpop.f32.mrb[0].mxu0
      %1604 = vmatprep.mubr.bf16.mxu0 0
      %1605 = vmatmul.mubr.bf16.gmra.mrb[0].mxu0 %v1397
      %v1606 = vpop.f32.mrb[0].mxu0
      %v1607 = vadd.f32 0.0, %v1606
      %v1608 = vpop.f32.mrb[0].mxu0
      %v1609 = vpop.f32.mrb[0].mxu0
      %v1610 = vadd.f32 0.0, %v1609
      %v1611 = vpop.f32.mrb[0].mxu0
      %1612 = vmatprep.mubr.bf16.mxu0 0
      %1613 = vmatmul.mubr.bf16.gmra.mrb[0].mxu0 %v1398
      %v1614 = vpop.f32.mrb[0].mxu0
      %v1615 = vadd.f32 0.0, %v1614
      %v1616 = vpop.f32.mrb[0].mxu0
      %v1617 = vpop.f32.mrb[0].mxu0
      %v1618 = vadd.f32 0.0, %v1617
      %v1619 = vpop.f32.mrb[0].mxu0
      %1620 = vmatprep.mubr.bf16.mxu0 0
      %1621 = vmatmul.mubr.bf16.gmra.mrb[0].mxu0 %v1399
      %v1622 = vpop.f32.mrb[0].mxu0
      %v1623 = vadd.f32 0.0, %v1622
      %v1624 = vpop.f32.mrb[0].mxu0
      %v1625 = vpop.f32.mrb[0].mxu0
      %v1626 = vadd.f32 0.0, %v1625
      %v1627 = vpop.f32.mrb[0].mxu0
      %1628 = vmatprep.mubr.bf16.mxu0 0
      %1629 = vmatmul.mubr.bf16.gmra.mrb[0].mxu0 %v1400
      %v1630 = vpop.f32.mrb[0].mxu0
      %v1631 = vadd.f32 0.0, %v1630
      %v1632 = vpop.f32.mrb[0].mxu0
      %v1633 = vpop.f32.mrb[0].mxu0
      %v1634 = vadd.f32 0.0, %v1633
      %v1635 = vpop.f32.mrb[0].mxu0
      %1636 = vmatprep.mubr.bf16.mxu0 0
      %1637 = vmatmul.mubr.bf16.gmra.mrb[0].mxu0 %v1401
      %v1638 = vpop.f32.mrb[0].mxu0
      %v1639 = vadd.f32 0.0, %v1638
      %v1640 = vpop.f32.mrb[0].mxu0
      %v1641 = vpop.f32.mrb[0].mxu0
      %v1642 = vadd.f32 0.0, %v1641
      %v1643 = vpop.f32.mrb[0].mxu0
      %1644 = vmatprep.mubr.bf16.mxu0 0
      %1645 = vmatmul.mubr.bf16.gmra.mrb[0].mxu0 %v1402
      %v1646 = vpop.f32.mrb[0].mxu0
      %v1647 = vadd.f32 0.0, %v1646
      %v1648 = vpop.f32.mrb[0].mxu0
      %v1649 = vpop.f32.mrb[0].mxu0
      %v1650 = vadd.f32 0.0, %v1649
      %v1651 = vpop.f32.mrb[0].mxu0
      %1652 = vmatprep.mubr.bf16.mxu0 0
      %1653 = vmatmul.mubr.bf16.gmra.mrb[0].mxu0 %v1403
      %v1654 = vpop.f32.mrb[0].mxu0
      %v1655 = vadd.f32 0.0, %v1654
      %v1656 = vpop.f32.mrb[0].mxu0
      %v1657 = vpop.f32.mrb[0].mxu0
      %v1658 = vadd.f32 0.0, %v1657
      %v1659 = vpop.f32.mrb[0].mxu0
      %1660 = vdwg.mxu0
      %v1661 = vadd.f32 %v1420, %v1535
      %v1662 = vadd.f32 %v1421, %v1538
      %v1663 = vadd.f32 %v1422, %v1543
      %v1664 = vadd.f32 %v1423, %v1546
      %v1665 = vadd.f32 %v1424, %v1551
      %v1666 = vadd.f32 %v1425, %v1554
      %v1667 = vadd.f32 %v1426, %v1559
      %v1668 = vadd.f32 %v1427, %v1562
      %v1669 = vadd.f32 %v1428, %v1567
      %v1670 = vadd.f32 %v1429, %v1570
      %v1671 = vadd.f32 %v1430, %v1575
      %v1672 = vadd.f32 %v1431, %v1578
      %v1673 = vadd.f32 %v1432, %v1583
      %v1674 = vadd.f32 %v1433, %v1586
      %v1675 = vadd.f32 %v1434, %v1591
      %v1676 = vadd.f32 %v1435, %v1594
      %v1677 = vadd.f32 %v1436, %v1599
      %v1678 = vadd.f32 %v1437, %v1602
      %v1679 = vadd.f32 %v1438, %v1607
      %v1680 = vadd.f32 %v1439, %v1610
      %v1681 = vadd.f32 %v1440, %v1615
      %v1682 = vadd.f32 %v1441, %v1618
      %v1683 = vadd.f32 %v1442, %v1623
      %v1684 = vadd.f32 %v1443, %v1626
      %v1685 = vadd.f32 %v1444, %v1631
      %v1686 = vadd.f32 %v1445, %v1634
      %v1687 = vadd.f32 %v1446, %v1639
      %v1688 = vadd.f32 %v1447, %v1642
      %v1689 = vadd.f32 %v1448, %v1647
      %v1690 = vadd.f32 %v1449, %v1650
      %v1691 = vadd.f32 %v1450, %v1655
      %v1692 = vadd.f32 %v1451, %v1658
      %1693 = vst [vmem:[%s208] sm:$0xff] %v1661
      %1694 = vst [vmem:[%s208 + $0x8] sm:$0xff] %v1662
      %1695 = vst [vmem:[%s208 + $0x10] sm:$0xff] %v1663
      %1696 = vst [vmem:[%s208 + $0x18] sm:$0xff] %v1664
      %1697 = vst [vmem:[%s208 + $0x20] sm:$0xff] %v1665
      %1698 = vst [vmem:[%s208 + $0x28] sm:$0xff] %v1666
      %1699 = vst [vmem:[%s208 + $0x30] sm:$0xff] %v1667
      %1700 = vst [vmem:[%s208 + $0x38] sm:$0xff] %v1668
      %1701 = vst [vmem:[%s208 + $0x40] sm:$0xff] %v1669
      %1702 = vst [vmem:[%s208 + $0x48] sm:$0xff] %v1670
      %1703 = vst [vmem:[%s208 + $0x50] sm:$0xff] %v1671
      %1704 = vst [vmem:[%s208 + $0x58] sm:$0xff] %v1672
      %1705 = vst [vmem:[%s208 + $0x60] sm:$0xff] %v1673
      %1706 = vst [vmem:[%s208 + $0x68] sm:$0xff] %v1674
      %1707 = vst [vmem:[%s208 + $0x70] sm:$0xff] %v1675
      %1708 = vst [vmem:[%s208 + $0x78] sm:$0xff] %v1676
      %1709 = vst [vmem:[%s208 + $0x80] sm:$0xff] %v1677
      %1710 = vst [vmem:[%s208 + $0x88] sm:$0xff] %v1678
      %1711 = vst [vmem:[%s208 + $0x90] sm:$0xff] %v1679
      %1712 = vst [vmem:[%s208 + $0x98] sm:$0xff] %v1680
      %1713 = vst [vmem:[%s208 + $0xa0] sm:$0xff] %v1681
      %1714 = vst [vmem:[%s208 + $0xa8] sm:$0xff] %v1682
      %1715 = vst [vmem:[%s208 + $0xb0] sm:$0xff] %v1683
      %1716 = vst [vmem:[%s208 + $0xb8] sm:$0xff] %v1684
      %1717 = vst [vmem:[%s208 + $0xc0] sm:$0xff] %v1685
      %1718 = vst [vmem:[%s208 + $0xc8] sm:$0xff] %v1686
      %1719 = vst [vmem:[%s208 + $0xd0] sm:$0xff] %v1687
      %1720 = vst [vmem:[%s208 + $0xd8] sm:$0xff] %v1688
      %1721 = vst [vmem:[%s208 + $0xe0] sm:$0xff] %v1689
      %1722 = vst [vmem:[%s208 + $0xe8] sm:$0xff] %v1690
      %1723 = vst [vmem:[%s208 + $0xf0] sm:$0xff] %v1691
      %1724 = vst [vmem:[%s208 + $0xf8] sm:$0xff] %v1692
      %v1725 = vld [vmem:[%s1355 + $0x1] sm:$0xff]
      %v1726 = vld [vmem:[%s1355 + $0x9] sm:$0xff]
      %v1727 = vld [vmem:[%s1355 + $0x19] sm:$0xff]
      %v1728 = vld [vmem:[%s1355 + $0x21] sm:$0xff]
      %v1729 = vld [vmem:[%s1355 + $0x31] sm:$0xff]
      %v1730 = vld [vmem:[%s1355 + $0x39] sm:$0xff]
      %v1731 = vld [vmem:[%s1355 + $0x49] sm:$0xff]
      %v1732 = vld [vmem:[%s1355 + $0x51] sm:$0xff]
      %v1733 = vld [vmem:[%s1355 + $0x61] sm:$0xff]
      %v1734 = vld [vmem:[%s1355 + $0x69] sm:$0xff]
      %v1735 = vld [vmem:[%s1355 + $0x79] sm:$0xff]
      %v1736 = vld [vmem:[%s1355 + $0x81] sm:$0xff]
      %v1737 = vld [vmem:[%s1355 + $0x91] sm:$0xff]
      %v1738 = vld [vmem:[%s1355 + $0x99] sm:$0xff]
      %v1739 = vld [vmem:[%s1355 + $0xa9] sm:$0xff]
      %v1740 = vld [vmem:[%s1355 + $0xb1] sm:$0xff]
      %v1741 = vld [vmem:[%s1355 + $0xc1] sm:$0xff]
      %v1742 = vld [vmem:[%s1355 + $0xc9] sm:$0xff]
      %v1743 = vld [vmem:[%s1355 + $0xd9] sm:$0xff]
      %v1744 = vld [vmem:[%s1355 + $0xe1] sm:$0xff]
      %v1745 = vld [vmem:[%s1355 + $0xf1] sm:$0xff]
      %v1746 = vld [vmem:[%s1355 + $0xf9] sm:$0xff]
      %v1747 = vld [vmem:[%s1355 + $0x109] sm:$0xff]
      %v1748 = vld [vmem:[%s1355 + $0x111] sm:$0xff]
      %v1749 = vld [vmem:[%s1355 + $0x121] sm:$0xff]
      %v1750 = vld [vmem:[%s1355 + $0x129] sm:$0xff]
      %v1751 = vld [vmem:[%s1355 + $0x139] sm:$0xff]
      %v1752 = vld [vmem:[%s1355 + $0x141] sm:$0xff]
      %v1753 = vld [vmem:[%s1355 + $0x151] sm:$0xff]
      %v1754 = vld [vmem:[%s1355 + $0x159] sm:$0xff]
      %v1755 = vld [vmem:[%s1355 + $0x169] sm:$0xff]
      %v1756 = vld [vmem:[%s1355 + $0x171] sm:$0xff]
      %v1757 = vpack.c.bf16 %v1726, %v1725
      %v1758 = vpack.c.bf16 %v1728, %v1727
      %v1759 = vpack.c.bf16 %v1730, %v1729
      %v1760 = vpack.c.bf16 %v1732, %v1731
      %v1761 = vpack.c.bf16 %v1734, %v1733
      %v1762 = vpack.c.bf16 %v1736, %v1735
      %v1763 = vpack.c.bf16 %v1738, %v1737
      %v1764 = vpack.c.bf16 %v1740, %v1739
      %v1765 = vpack.c.bf16 %v1742, %v1741
      %v1766 = vpack.c.bf16 %v1744, %v1743
      %v1767 = vpack.c.bf16 %v1746, %v1745
      %v1768 = vpack.c.bf16 %v1748, %v1747
      %v1769 = vpack.c.bf16 %v1750, %v1749
      %v1770 = vpack.c.bf16 %v1752, %v1751
      %v1771 = vpack.c.bf16 %v1754, %v1753
      %v1772 = vpack.c.bf16 %v1756, %v1755
      %v1773 = vld [vmem:[%s1 + $0x100] sm:$0xf]
      %v1774 = vld [vmem:[%s1 + $0x104] sm:$0xf]
      %v1775 = vld [vmem:[%s1 + $0x108] sm:$0xf]
      %v1776 = vld [vmem:[%s1 + $0x10c] sm:$0xf]
      %v1777 = vld [vmem:[%s1 + $0x110] sm:$0xf]
      %v1778 = vld [vmem:[%s1 + $0x114] sm:$0xf]
      %v1779 = vld [vmem:[%s1 + $0x118] sm:$0xf]
      %v1780 = vld [vmem:[%s1 + $0x11c] sm:$0xf]
      %v1781 = vld [vmem:[%s1 + $0x120] sm:$0xf]
      %v1782 = vld [vmem:[%s1 + $0x124] sm:$0xf]
      %v1783 = vld [vmem:[%s1 + $0x128] sm:$0xf]
      %v1784 = vld [vmem:[%s1 + $0x12c] sm:$0xf]
      %v1785 = vld [vmem:[%s1 + $0x130] sm:$0xf]
      %v1786 = vld [vmem:[%s1 + $0x134] sm:$0xf]
      %v1787 = vld [vmem:[%s1 + $0x138] sm:$0xf]
      %v1788 = vld [vmem:[%s1 + $0x13c] sm:$0xf]
      %v1789 = vld [vmem:[%s208] sm:$0xff]
      %v1790 = vld [vmem:[%s208 + $0x8] sm:$0xff]
      %v1791 = vld [vmem:[%s208 + $0x10] sm:$0xff]
      %v1792 = vld [vmem:[%s208 + $0x18] sm:$0xff]
      %v1793 = vld [vmem:[%s208 + $0x20] sm:$0xff]
      %v1794 = vld [vmem:[%s208 + $0x28] sm:$0xff]
      %v1795 = vld [vmem:[%s208 + $0x30] sm:$0xff]
      %v1796 = vld [vmem:[%s208 + $0x38] sm:$0xff]
      %v1797 = vld [vmem:[%s208 + $0x40] sm:$0xff]
      %v1798 = vld [vmem:[%s208 + $0x48] sm:$0xff]
      %v1799 = vld [vmem:[%s208 + $0x50] sm:$0xff]
      %v1800 = vld [vmem:[%s208 + $0x58] sm:$0xff]
      %v1801 = vld [vmem:[%s208 + $0x60] sm:$0xff]
      %v1802 = vld [vmem:[%s208 + $0x68] sm:$0xff]
      %v1803 = vld [vmem:[%s208 + $0x70] sm:$0xff]
      %v1804 = vld [vmem:[%s208 + $0x78] sm:$0xff]
      %v1805 = vld [vmem:[%s208 + $0x80] sm:$0xff]
      %v1806 = vld [vmem:[%s208 + $0x88] sm:$0xff]
      %v1807 = vld [vmem:[%s208 + $0x90] sm:$0xff]
      %v1808 = vld [vmem:[%s208 + $0x98] sm:$0xff]
      %v1809 = vld [vmem:[%s208 + $0xa0] sm:$0xff]
      %v1810 = vld [vmem:[%s208 + $0xa8] sm:$0xff]
      %v1811 = vld [vmem:[%s208 + $0xb0] sm:$0xff]
      %v1812 = vld [vmem:[%s208 + $0xb8] sm:$0xff]
      %v1813 = vld [vmem:[%s208 + $0xc0] sm:$0xff]
      %v1814 = vld [vmem:[%s208 + $0xc8] sm:$0xff]
      %v1815 = vld [vmem:[%s208 + $0xd0] sm:$0xff]
      %v1816 = vld [vmem:[%s208 + $0xd8] sm:$0xff]
      %v1817 = vld [vmem:[%s208 + $0xe0] sm:$0xff]
      %v1818 = vld [vmem:[%s208 + $0xe8] sm:$0xff]
      %v1819 = vld [vmem:[%s208 + $0xf0] sm:$0xff]
      %v1820 = vld [vmem:[%s208 + $0xf8] sm:$0xff]
      %v1837 = vunpack.c.l.b16 %v1773
      %v1838 = vunpack.c.l.b16 %v1774
      %v1839 = vunpack.c.l.b16 %v1775
      %v1840 = vunpack.c.l.b16 %v1776
      %v1841 = vunpack.c.l.b16 %v1777
      %v1842 = vunpack.c.l.b16 %v1778
      %v1843 = vunpack.c.l.b16 %v1779
      %v1844 = vunpack.c.l.b16 %v1780
      %v1845 = vunpack.c.l.b16 %v1781
      %v1846 = vunpack.c.l.b16 %v1782
      %v1847 = vunpack.c.l.b16 %v1783
      %v1848 = vunpack.c.l.b16 %v1784
      %v1849 = vunpack.c.l.b16 %v1785
      %v1850 = vunpack.c.l.b16 %v1786
      %v1851 = vunpack.c.l.b16 %v1787
      %v1852 = vunpack.c.l.b16 %v1788
      %v1853 = vpack.c.b16 %v1838, %v1837
      %v1854 = vpack.c.b16 %v1840, %v1839
      %v1855 = vpack.c.b16 %v1842, %v1841
      %v1856 = vpack.c.b16 %v1844, %v1843
      %v1857 = vpack.c.b16 %v1846, %v1845
      %v1858 = vpack.c.b16 %v1848, %v1847
      %v1859 = vpack.c.b16 %v1850, %v1849
      %v1860 = vpack.c.b16 %v1852, %v1851
      %1869 = vmatprep.subr.bf16.mxu0 0
      %1870 = vmatpush1.bf16.msra.mxu0 %v1853
      %1871 = vmatprep.subr.bf16.mxu0 0
      %1872 = vmatpush1.bf16.msra.mxu0 %v1854
      %1873 = vmatprep.subr.bf16.mxu0 0
      %1874 = vmatpush1.bf16.msra.mxu0 %v1855
      %1875 = vmatprep.subr.bf16.mxu0 0
      %1876 = vmatpush1.bf16.msra.mxu0 %v1856
      %1877 = vmatprep.subr.bf16.mxu0 0
      %1878 = vmatpush1.bf16.msra.mxu0 %v1857
      %1879 = vmatprep.subr.bf16.mxu0 0
      %1880 = vmatpush1.bf16.msra.mxu0 %v1858
      %1881 = vmatprep.subr.bf16.mxu0 0
      %1882 = vmatpush1.bf16.msra.mxu0 %v1859
      %1883 = vmatprep.subr.bf16.mxu0 0
      %1884 = vmatpush1.bf16.msra.mxu0 %v1860
      %1885 = vmatprep.subr.bf16.mxu0 0
      %1886 = vmatpush1.bf16.msra.mxu0 0
      %1887 = vmatprep.subr.bf16.mxu0 0
      %1888 = vmatpush1.bf16.msra.mxu0 0
      %1889 = vmatprep.subr.bf16.mxu0 0
      %1890 = vmatpush1.bf16.msra.mxu0 0
      %1891 = vmatprep.subr.bf16.mxu0 0
      %1892 = vmatpush1.bf16.msra.mxu0 0
      %1893 = vmatprep.subr.bf16.mxu0 0
      %1894 = vmatpush1.bf16.msra.mxu0 0
      %1895 = vmatprep.subr.bf16.mxu0 0
      %1896 = vmatpush1.bf16.msra.mxu0 0
      %1897 = vmatprep.subr.bf16.mxu0 0
      %1898 = vmatpush1.bf16.msra.mxu0 0
      %1899 = vmatprep.subr.bf16.mxu0 0
      %1900 = vmatpush1.bf16.msra.mxu0 0
      %1901 = vmatprep.mubr.bf16.mxu0 0
      %1902 = vmatmul.mubr.bf16.gmra.mrb[0].mxu0 %v1757
      %v1903 = vpop.f32.mrb[0].mxu0
      %v1904 = vadd.f32 0.0, %v1903
      %v1905 = vpop.f32.mrb[0].mxu0
      %v1906 = vpop.f32.mrb[0].mxu0
      %v1907 = vadd.f32 0.0, %v1906
      %v1908 = vpop.f32.mrb[0].mxu0
      %1909 = vmatprep.mubr.bf16.mxu0 0
      %1910 = vmatmul.mubr.bf16.gmra.mrb[0].mxu0 %v1758
      %v1911 = vpop.f32.mrb[0].mxu0
      %v1912 = vadd.f32 0.0, %v1911
      %v1913 = vpop.f32.mrb[0].mxu0
      %v1914 = vpop.f32.mrb[0].mxu0
      %v1915 = vadd.f32 0.0, %v1914
      %v1916 = vpop.f32.mrb[0].mxu0
      %1917 = vmatprep.mubr.bf16.mxu0 0
      %1918 = vmatmul.mubr.bf16.gmra.mrb[0].mxu0 %v1759
      %v1919 = vpop.f32.mrb[0].mxu0
      %v1920 = vadd.f32 0.0, %v1919
      %v1921 = vpop.f32.mrb[0].mxu0
      %v1922 = vpop.f32.mrb[0].mxu0
      %v1923 = vadd.f32 0.0, %v1922
      %v1924 = vpop.f32.mrb[0].mxu0
      %1925 = vmatprep.mubr.bf16.mxu0 0
      %1926 = vmatmul.mubr.bf16.gmra.mrb[0].mxu0 %v1760
      %v1927 = vpop.f32.mrb[0].mxu0
      %v1928 = vadd.f32 0.0, %v1927
      %v1929 = vpop.f32.mrb[0].mxu0
      %v1930 = vpop.f32.mrb[0].mxu0
      %v1931 = vadd.f32 0.0, %v1930
      %v1932 = vpop.f32.mrb[0].mxu0
      %1933 = vmatprep.mubr.bf16.mxu0 0
      %1934 = vmatmul.mubr.bf16.gmra.mrb[0].mxu0 %v1761
      %v1935 = vpop.f32.mrb[0].mxu0
      %v1936 = vadd.f32 0.0, %v1935
      %v1937 = vpop.f32.mrb[0].mxu0
      %v1938 = vpop.f32.mrb[0].mxu0
      %v1939 = vadd.f32 0.0, %v1938
      %v1940 = vpop.f32.mrb[0].mxu0
      %1941 = vmatprep.mubr.bf16.mxu0 0
      %1942 = vmatmul.mubr.bf16.gmra.mrb[0].mxu0 %v1762
      %v1943 = vpop.f32.mrb[0].mxu0
      %v1944 = vadd.f32 0.0, %v1943
      %v1945 = vpop.f32.mrb[0].mxu0
      %v1946 = vpop.f32.mrb[0].mxu0
      %v1947 = vadd.f32 0.0, %v1946
      %v1948 = vpop.f32.mrb[0].mxu0
      %1949 = vmatprep.mubr.bf16.mxu0 0
      %1950 = vmatmul.mubr.bf16.gmra.mrb[0].mxu0 %v1763
      %v1951 = vpop.f32.mrb[0].mxu0
      %v1952 = vadd.f32 0.0, %v1951
      %v1953 = vpop.f32.mrb[0].mxu0
      %v1954 = vpop.f32.mrb[0].mxu0
      %v1955 = vadd.f32 0.0, %v1954
      %v1956 = vpop.f32.mrb[0].mxu0
      %1957 = vmatprep.mubr.bf16.mxu0 0
      %1958 = vmatmul.mubr.bf16.gmra.mrb[0].mxu0 %v1764
      %v1959 = vpop.f32.mrb[0].mxu0
      %v1960 = vadd.f32 0.0, %v1959
      %v1961 = vpop.f32.mrb[0].mxu0
      %v1962 = vpop.f32.mrb[0].mxu0
      %v1963 = vadd.f32 0.0, %v1962
      %v1964 = vpop.f32.mrb[0].mxu0
      %1965 = vmatprep.mubr.bf16.mxu0 0
      %1966 = vmatmul.mubr.bf16.gmra.mrb[0].mxu0 %v1765
      %v1967 = vpop.f32.mrb[0].mxu0
      %v1968 = vadd.f32 0.0, %v1967
      %v1969 = vpop.f32.mrb[0].mxu0
      %v1970 = vpop.f32.mrb[0].mxu0
      %v1971 = vadd.f32 0.0, %v1970
      %v1972 = vpop.f32.mrb[0].mxu0
      %1973 = vmatprep.mubr.bf16.mxu0 0
      %1974 = vmatmul.mubr.bf16.gmra.mrb[0].mxu0 %v1766
      %v1975 = vpop.f32.mrb[0].mxu0
      %v1976 = vadd.f32 0.0, %v1975
      %v1977 = vpop.f32.mrb[0].mxu0
      %v1978 = vpop.f32.mrb[0].mxu0
      %v1979 = vadd.f32 0.0, %v1978
      %v1980 = vpop.f32.mrb[0].mxu0
      %1981 = vmatprep.mubr.bf16.mxu0 0
      %1982 = vmatmul.mubr.bf16.gmra.mrb[0].mxu0 %v1767
      %v1983 = vpop.f32.mrb[0].mxu0
      %v1984 = vadd.f32 0.0, %v1983
      %v1985 = vpop.f32.mrb[0].mxu0
      %v1986 = vpop.f32.mrb[0].mxu0
      %v1987 = vadd.f32 0.0, %v1986
      %v1988 = vpop.f32.mrb[0].mxu0
      %1989 = vmatprep.mubr.bf16.mxu0 0
      %1990 = vmatmul.mubr.bf16.gmra.mrb[0].mxu0 %v1768
      %v1991 = vpop.f32.mrb[0].mxu0
      %v1992 = vadd.f32 0.0, %v1991
      %v1993 = vpop.f32.mrb[0].mxu0
      %v1994 = vpop.f32.mrb[0].mxu0
      %v1995 = vadd.f32 0.0, %v1994
      %v1996 = vpop.f32.mrb[0].mxu0
      %1997 = vmatprep.mubr.bf16.mxu0 0
      %1998 = vmatmul.mubr.bf16.gmra.mrb[0].mxu0 %v1769
      %v1999 = vpop.f32.mrb[0].mxu0
      %v2000 = vadd.f32 0.0, %v1999
      %v2001 = vpop.f32.mrb[0].mxu0
      %v2002 = vpop.f32.mrb[0].mxu0
      %v2003 = vadd.f32 0.0, %v2002
      %v2004 = vpop.f32.mrb[0].mxu0
      %2005 = vmatprep.mubr.bf16.mxu0 0
      %2006 = vmatmul.mubr.bf16.gmra.mrb[0].mxu0 %v1770
      %v2007 = vpop.f32.mrb[0].mxu0
      %v2008 = vadd.f32 0.0, %v2007
      %v2009 = vpop.f32.mrb[0].mxu0
      %v2010 = vpop.f32.mrb[0].mxu0
      %v2011 = vadd.f32 0.0, %v2010
      %v2012 = vpop.f32.mrb[0].mxu0
      %2013 = vmatprep.mubr.bf16.mxu0 0
      %2014 = vmatmul.mubr.bf16.gmra.mrb[0].mxu0 %v1771
      %v2015 = vpop.f32.mrb[0].mxu0
      %v2016 = vadd.f32 0.0, %v2015
      %v2017 = vpop.f32.mrb[0].mxu0
      %v2018 = vpop.f32.mrb[0].mxu0
      %v2019 = vadd.f32 0.0, %v2018
      %v2020 = vpop.f32.mrb[0].mxu0
      %2021 = vmatprep.mubr.bf16.mxu0 0
      %2022 = vmatmul.mubr.bf16.gmra.mrb[0].mxu0 %v1772
      %v2023 = vpop.f32.mrb[0].mxu0
      %v2024 = vadd.f32 0.0, %v2023
      %v2025 = vpop.f32.mrb[0].mxu0
      %v2026 = vpop.f32.mrb[0].mxu0
      %v2027 = vadd.f32 0.0, %v2026
      %v2028 = vpop.f32.mrb[0].mxu0
      %2029 = vdwg.mxu0
      %v2030 = vadd.f32 %v1789, %v1904
      %v2031 = vadd.f32 %v1790, %v1907
      %v2032 = vadd.f32 %v1791, %v1912
      %v2033 = vadd.f32 %v1792, %v1915
      %v2034 = vadd.f32 %v1793, %v1920
      %v2035 = vadd.f32 %v1794, %v1923
      %v2036 = vadd.f32 %v1795, %v1928
      %v2037 = vadd.f32 %v1796, %v1931
      %v2038 = vadd.f32 %v1797, %v1936
      %v2039 = vadd.f32 %v1798, %v1939
      %v2040 = vadd.f32 %v1799, %v1944
      %v2041 = vadd.f32 %v1800, %v1947
      %v2042 = vadd.f32 %v1801, %v1952
      %v2043 = vadd.f32 %v1802, %v1955
      %v2044 = vadd.f32 %v1803, %v1960
      %v2045 = vadd.f32 %v1804, %v1963
      %v2046 = vadd.f32 %v1805, %v1968
      %v2047 = vadd.f32 %v1806, %v1971
      %v2048 = vadd.f32 %v1807, %v1976
      %v2049 = vadd.f32 %v1808, %v1979
      %v2050 = vadd.f32 %v1809, %v1984
      %v2051 = vadd.f32 %v1810, %v1987
      %v2052 = vadd.f32 %v1811, %v1992
      %v2053 = vadd.f32 %v1812, %v1995
      %v2054 = vadd.f32 %v1813, %v2000
      %v2055 = vadd.f32 %v1814, %v2003
      %v2056 = vadd.f32 %v1815, %v2008
      %v2057 = vadd.f32 %v1816, %v2011
      %v2058 = vadd.f32 %v1817, %v2016
      %v2059 = vadd.f32 %v1818, %v2019
      %v2060 = vadd.f32 %v1819, %v2024
      %v2061 = vadd.f32 %v1820, %v2027
      %2062 = vst [vmem:[%s208] sm:$0xff] %v2030
      %2063 = vst [vmem:[%s208 + $0x8] sm:$0xff] %v2031
      %2064 = vst [vmem:[%s208 + $0x10] sm:$0xff] %v2032
      %2065 = vst [vmem:[%s208 + $0x18] sm:$0xff] %v2033
      %2066 = vst [vmem:[%s208 + $0x20] sm:$0xff] %v2034
      %2067 = vst [vmem:[%s208 + $0x28] sm:$0xff] %v2035
      %2068 = vst [vmem:[%s208 + $0x30] sm:$0xff] %v2036
      %2069 = vst [vmem:[%s208 + $0x38] sm:$0xff] %v2037
      %2070 = vst [vmem:[%s208 + $0x40] sm:$0xff] %v2038
      %2071 = vst [vmem:[%s208 + $0x48] sm:$0xff] %v2039
      %2072 = vst [vmem:[%s208 + $0x50] sm:$0xff] %v2040
      %2073 = vst [vmem:[%s208 + $0x58] sm:$0xff] %v2041
      %2074 = vst [vmem:[%s208 + $0x60] sm:$0xff] %v2042
      %2075 = vst [vmem:[%s208 + $0x68] sm:$0xff] %v2043
      %2076 = vst [vmem:[%s208 + $0x70] sm:$0xff] %v2044
      %2077 = vst [vmem:[%s208 + $0x78] sm:$0xff] %v2045
      %2078 = vst [vmem:[%s208 + $0x80] sm:$0xff] %v2046
      %2079 = vst [vmem:[%s208 + $0x88] sm:$0xff] %v2047
      %2080 = vst [vmem:[%s208 + $0x90] sm:$0xff] %v2048
      %2081 = vst [vmem:[%s208 + $0x98] sm:$0xff] %v2049
      %2082 = vst [vmem:[%s208 + $0xa0] sm:$0xff] %v2050
      %2083 = vst [vmem:[%s208 + $0xa8] sm:$0xff] %v2051
      %2084 = vst [vmem:[%s208 + $0xb0] sm:$0xff] %v2052
      %2085 = vst [vmem:[%s208 + $0xb8] sm:$0xff] %v2053
      %2086 = vst [vmem:[%s208 + $0xc0] sm:$0xff] %v2054
      %2087 = vst [vmem:[%s208 + $0xc8] sm:$0xff] %v2055
      %2088 = vst [vmem:[%s208 + $0xd0] sm:$0xff] %v2056
      %2089 = vst [vmem:[%s208 + $0xd8] sm:$0xff] %v2057
      %2090 = vst [vmem:[%s208 + $0xe0] sm:$0xff] %v2058
      %2091 = vst [vmem:[%s208 + $0xe8] sm:$0xff] %v2059
      %2092 = vst [vmem:[%s208 + $0xf0] sm:$0xff] %v2060
      %2093 = vst [vmem:[%s208 + $0xf8] sm:$0xff] %v2061
      %v2094 = vld [vmem:[%s1355 + $0x2] sm:$0xff]
      %v2095 = vld [vmem:[%s1355 + $0xa] sm:$0xff]
      %v2096 = vld [vmem:[%s1355 + $0x1a] sm:$0xff]
      %v2097 = vld [vmem:[%s1355 + $0x22] sm:$0xff]
      %v2098 = vld [vmem:[%s1355 + $0x32] sm:$0xff]
      %v2099 = vld [vmem:[%s1355 + $0x3a] sm:$0xff]
      %v2100 = vld [vmem:[%s1355 + $0x4a] sm:$0xff]
      %v2101 = vld [vmem:[%s1355 + $0x52] sm:$0xff]
      %v2102 = vld [vmem:[%s1355 + $0x62] sm:$0xff]
      %v2103 = vld [vmem:[%s1355 + $0x6a] sm:$0xff]
      %v2104 = vld [vmem:[%s1355 + $0x7a] sm:$0xff]
      %v2105 = vld [vmem:[%s1355 + $0x82] sm:$0xff]
      %v2106 = vld [vmem:[%s1355 + $0x92] sm:$0xff]
      %v2107 = vld [vmem:[%s1355 + $0x9a] sm:$0xff]
      %v2108 = vld [vmem:[%s1355 + $0xaa] sm:$0xff]
      %v2109 = vld [vmem:[%s1355 + $0xb2] sm:$0xff]
      %v2110 = vld [vmem:[%s1355 + $0xc2] sm:$0xff]
      %v2111 = vld [vmem:[%s1355 + $0xca] sm:$0xff]
      %v2112 = vld [vmem:[%s1355 + $0xda] sm:$0xff]
      %v2113 = vld [vmem:[%s1355 + $0xe2] sm:$0xff]
      %v2114 = vld [vmem:[%s1355 + $0xf2] sm:$0xff]
      %v2115 = vld [vmem:[%s1355 + $0xfa] sm:$0xff]
      %v2116 = vld [vmem:[%s1355 + $0x10a] sm:$0xff]
      %v2117 = vld [vmem:[%s1355 + $0x112] sm:$0xff]
      %v2118 = vld [vmem:[%s1355 + $0x122] sm:$0xff]
      %v2119 = vld [vmem:[%s1355 + $0x12a] sm:$0xff]
      %v2120 = vld [vmem:[%s1355 + $0x13a] sm:$0xff]
      %v2121 = vld [vmem:[%s1355 + $0x142] sm:$0xff]
      %v2122 = vld [vmem:[%s1355 + $0x152] sm:$0xff]
      %v2123 = vld [vmem:[%s1355 + $0x15a] sm:$0xff]
      %v2124 = vld [vmem:[%s1355 + $0x16a] sm:$0xff]
      %v2125 = vld [vmem:[%s1355 + $0x172] sm:$0xff]
      %v2126 = vpack.c.bf16 %v2095, %v2094
      %v2127 = vpack.c.bf16 %v2097, %v2096
      %v2128 = vpack.c.bf16 %v2099, %v2098
      %v2129 = vpack.c.bf16 %v2101, %v2100
      %v2130 = vpack.c.bf16 %v2103, %v2102
      %v2131 = vpack.c.bf16 %v2105, %v2104
      %v2132 = vpack.c.bf16 %v2107, %v2106
      %v2133 = vpack.c.bf16 %v2109, %v2108
      %v2134 = vpack.c.bf16 %v2111, %v2110
      %v2135 = vpack.c.bf16 %v2113, %v2112
      %v2136 = vpack.c.bf16 %v2115, %v2114
      %v2137 = vpack.c.bf16 %v2117, %v2116
      %v2138 = vpack.c.bf16 %v2119, %v2118
      %v2139 = vpack.c.bf16 %v2121, %v2120
      %v2140 = vpack.c.bf16 %v2123, %v2122
      %v2141 = vpack.c.bf16 %v2125, %v2124
      %v2142 = vld [vmem:[%s1 + $0x140] sm:$0xf]
      %v2143 = vld [vmem:[%s1 + $0x144] sm:$0xf]
      %v2144 = vld [vmem:[%s1 + $0x148] sm:$0xf]
      %v2145 = vld [vmem:[%s1 + $0x14c] sm:$0xf]
      %v2146 = vld [vmem:[%s1 + $0x150] sm:$0xf]
      %v2147 = vld [vmem:[%s1 + $0x154] sm:$0xf]
      %v2148 = vld [vmem:[%s1 + $0x158] sm:$0xf]
      %v2149 = vld [vmem:[%s1 + $0x15c] sm:$0xf]
      %v2150 = vld [vmem:[%s1 + $0x160] sm:$0xf]
      %v2151 = vld [vmem:[%s1 + $0x164] sm:$0xf]
      %v2152 = vld [vmem:[%s1 + $0x168] sm:$0xf]
      %v2153 = vld [vmem:[%s1 + $0x16c] sm:$0xf]
      %v2154 = vld [vmem:[%s1 + $0x170] sm:$0xf]
      %v2155 = vld [vmem:[%s1 + $0x174] sm:$0xf]
      %v2156 = vld [vmem:[%s1 + $0x178] sm:$0xf]
      %v2157 = vld [vmem:[%s1 + $0x17c] sm:$0xf]
      %v2158 = vld [vmem:[%s208] sm:$0xff]
      %v2159 = vld [vmem:[%s208 + $0x8] sm:$0xff]
      %v2160 = vld [vmem:[%s208 + $0x10] sm:$0xff]
      %v2161 = vld [vmem:[%s208 + $0x18] sm:$0xff]
      %v2162 = vld [vmem:[%s208 + $0x20] sm:$0xff]
      %v2163 = vld [vmem:[%s208 + $0x28] sm:$0xff]
      %v2164 = vld [vmem:[%s208 + $0x30] sm:$0xff]
      %v2165 = vld [vmem:[%s208 + $0x38] sm:$0xff]
      %v2166 = vld [vmem:[%s208 + $0x40] sm:$0xff]
      %v2167 = vld [vmem:[%s208 + $0x48] sm:$0xff]
      %v2168 = vld [vmem:[%s208 + $0x50] sm:$0xff]
      %v2169 = vld [vmem:[%s208 + $0x58] sm:$0xff]
      %v2170 = vld [vmem:[%s208 + $0x60] sm:$0xff]
      %v2171 = vld [vmem:[%s208 + $0x68] sm:$0xff]
      %v2172 = vld [vmem:[%s208 + $0x70] sm:$0xff]
      %v2173 = vld [vmem:[%s208 + $0x78] sm:$0xff]
      %v2174 = vld [vmem:[%s208 + $0x80] sm:$0xff]
      %v2175 = vld [vmem:[%s208 + $0x88] sm:$0xff]
      %v2176 = vld [vmem:[%s208 + $0x90] sm:$0xff]
      %v2177 = vld [vmem:[%s208 + $0x98] sm:$0xff]
      %v2178 = vld [vmem:[%s208 + $0xa0] sm:$0xff]
      %v2179 = vld [vmem:[%s208 + $0xa8] sm:$0xff]
      %v2180 = vld [vmem:[%s208 + $0xb0] sm:$0xff]
      %v2181 = vld [vmem:[%s208 + $0xb8] sm:$0xff]
      %v2182 = vld [vmem:[%s208 + $0xc0] sm:$0xff]
      %v2183 = vld [vmem:[%s208 + $0xc8] sm:$0xff]
      %v2184 = vld [vmem:[%s208 + $0xd0] sm:$0xff]
      %v2185 = vld [vmem:[%s208 + $0xd8] sm:$0xff]
      %v2186 = vld [vmem:[%s208 + $0xe0] sm:$0xff]
      %v2187 = vld [vmem:[%s208 + $0xe8] sm:$0xff]
      %v2188 = vld [vmem:[%s208 + $0xf0] sm:$0xff]
      %v2189 = vld [vmem:[%s208 + $0xf8] sm:$0xff]
      %v2206 = vunpack.c.l.b16 %v2142
      %v2207 = vunpack.c.l.b16 %v2143
      %v2208 = vunpack.c.l.b16 %v2144
      %v2209 = vunpack.c.l.b16 %v2145
      %v2210 = vunpack.c.l.b16 %v2146
      %v2211 = vunpack.c.l.b16 %v2147
      %v2212 = vunpack.c.l.b16 %v2148
      %v2213 = vunpack.c.l.b16 %v2149
      %v2214 = vunpack.c.l.b16 %v2150
      %v2215 = vunpack.c.l.b16 %v2151
      %v2216 = vunpack.c.l.b16 %v2152
      %v2217 = vunpack.c.l.b16 %v2153
      %v2218 = vunpack.c.l.b16 %v2154
      %v2219 = vunpack.c.l.b16 %v2155
      %v2220 = vunpack.c.l.b16 %v2156
      %v2221 = vunpack.c.l.b16 %v2157
      %v2222 = vpack.c.b16 %v2207, %v2206
      %v2223 = vpack.c.b16 %v2209, %v2208
      %v2224 = vpack.c.b16 %v2211, %v2210
      %v2225 = vpack.c.b16 %v2213, %v2212
      %v2226 = vpack.c.b16 %v2215, %v2214
      %v2227 = vpack.c.b16 %v2217, %v2216
      %v2228 = vpack.c.b16 %v2219, %v2218
      %v2229 = vpack.c.b16 %v2221, %v2220
      %2238 = vmatprep.subr.bf16.mxu0 0
      %2239 = vmatpush1.bf16.msra.mxu0 %v2222
      %2240 = vmatprep.subr.bf16.mxu0 0
      %2241 = vmatpush1.bf16.msra.mxu0 %v2223
      %2242 = vmatprep.subr.bf16.mxu0 0
      %2243 = vmatpush1.bf16.msra.mxu0 %v2224
      %2244 = vmatprep.subr.bf16.mxu0 0
      %2245 = vmatpush1.bf16.msra.mxu0 %v2225
      %2246 = vmatprep.subr.bf16.mxu0 0
      %2247 = vmatpush1.bf16.msra.mxu0 %v2226
      %2248 = vmatprep.subr.bf16.mxu0 0
      %2249 = vmatpush1.bf16.msra.mxu0 %v2227
      %2250 = vmatprep.subr.bf16.mxu0 0
      %2251 = vmatpush1.bf16.msra.mxu0 %v2228
      %2252 = vmatprep.subr.bf16.mxu0 0
      %2253 = vmatpush1.bf16.msra.mxu0 %v2229
      %2254 = vmatprep.subr.bf16.mxu0 0
      %2255 = vmatpush1.bf16.msra.mxu0 0
      %2256 = vmatprep.subr.bf16.mxu0 0
      %2257 = vmatpush1.bf16.msra.mxu0 0
      %2258 = vmatprep.subr.bf16.mxu0 0
      %2259 = vmatpush1.bf16.msra.mxu0 0
      %2260 = vmatprep.subr.bf16.mxu0 0
      %2261 = vmatpush1.bf16.msra.mxu0 0
      %2262 = vmatprep.subr.bf16.mxu0 0
      %2263 = vmatpush1.bf16.msra.mxu0 0
      %2264 = vmatprep.subr.bf16.mxu0 0
      %2265 = vmatpush1.bf16.msra.mxu0 0
      %2266 = vmatprep.subr.bf16.mxu0 0
      %2267 = vmatpush1.bf16.msra.mxu0 0
      %2268 = vmatprep.subr.bf16.mxu0 0
      %2269 = vmatpush1.bf16.msra.mxu0 0
      %2270 = vmatprep.mubr.bf16.mxu0 0
      %2271 = vmatmul.mubr.bf16.gmra.mrb[0].mxu0 %v2126
      %v2272 = vpop.f32.mrb[0].mxu0
      %v2273 = vadd.f32 0.0, %v2272
      %v2274 = vpop.f32.mrb[0].mxu0
      %v2275 = vpop.f32.mrb[0].mxu0
      %v2276 = vadd.f32 0.0, %v2275
      %v2277 = vpop.f32.mrb[0].mxu0
      %2278 = vmatprep.mubr.bf16.mxu0 0
      %2279 = vmatmul.mubr.bf16.gmra.mrb[0].mxu0 %v2127
      %v2280 = vpop.f32.mrb[0].mxu0
      %v2281 = vadd.f32 0.0, %v2280
      %v2282 = vpop.f32.mrb[0].mxu0
      %v2283 = vpop.f32.mrb[0].mxu0
      %v2284 = vadd.f32 0.0, %v2283
      %v2285 = vpop.f32.mrb[0].mxu0
      %2286 = vmatprep.mubr.bf16.mxu0 0
      %2287 = vmatmul.mubr.bf16.gmra.mrb[0].mxu0 %v2128
      %v2288 = vpop.f32.mrb[0].mxu0
      %v2289 = vadd.f32 0.0, %v2288
      %v2290 = vpop.f32.mrb[0].mxu0
      %v2291 = vpop.f32.mrb[0].mxu0
      %v2292 = vadd.f32 0.0, %v2291
      %v2293 = vpop.f32.mrb[0].mxu0
      %2294 = vmatprep.mubr.bf16.mxu0 0
      %2295 = vmatmul.mubr.bf16.gmra.mrb[0].mxu0 %v2129
      %v2296 = vpop.f32.mrb[0].mxu0
      %v2297 = vadd.f32 0.0, %v2296
      %v2298 = vpop.f32.mrb[0].mxu0
      %v2299 = vpop.f32.mrb[0].mxu0
      %v2300 = vadd.f32 0.0, %v2299
      %v2301 = vpop.f32.mrb[0].mxu0
      %2302 = vmatprep.mubr.bf16.mxu0 0
      %2303 = vmatmul.mubr.bf16.gmra.mrb[0].mxu0 %v2130
      %v2304 = vpop.f32.mrb[0].mxu0
      %v2305 = vadd.f32 0.0, %v2304
      %v2306 = vpop.f32.mrb[0].mxu0
      %v2307 = vpop.f32.mrb[0].mxu0
      %v2308 = vadd.f32 0.0, %v2307
      %v2309 = vpop.f32.mrb[0].mxu0
      %2310 = vmatprep.mubr.bf16.mxu0 0
      %2311 = vmatmul.mubr.bf16.gmra.mrb[0].mxu0 %v2131
      %v2312 = vpop.f32.mrb[0].mxu0
      %v2313 = vadd.f32 0.0, %v2312
      %v2314 = vpop.f32.mrb[0].mxu0
      %v2315 = vpop.f32.mrb[0].mxu0
      %v2316 = vadd.f32 0.0, %v2315
      %v2317 = vpop.f32.mrb[0].mxu0
      %2318 = vmatprep.mubr.bf16.mxu0 0
      %2319 = vmatmul.mubr.bf16.gmra.mrb[0].mxu0 %v2132
      %v2320 = vpop.f32.mrb[0].mxu0
      %v2321 = vadd.f32 0.0, %v2320
      %v2322 = vpop.f32.mrb[0].mxu0
      %v2323 = vpop.f32.mrb[0].mxu0
      %v2324 = vadd.f32 0.0, %v2323
      %v2325 = vpop.f32.mrb[0].mxu0
      %2326 = vmatprep.mubr.bf16.mxu0 0
      %2327 = vmatmul.mubr.bf16.gmra.mrb[0].mxu0 %v2133
      %v2328 = vpop.f32.mrb[0].mxu0
      %v2329 = vadd.f32 0.0, %v2328
      %v2330 = vpop.f32.mrb[0].mxu0
      %v2331 = vpop.f32.mrb[0].mxu0
      %v2332 = vadd.f32 0.0, %v2331
      %v2333 = vpop.f32.mrb[0].mxu0
      %2334 = vmatprep.mubr.bf16.mxu0 0
      %2335 = vmatmul.mubr.bf16.gmra.mrb[0].mxu0 %v2134
      %v2336 = vpop.f32.mrb[0].mxu0
      %v2337 = vadd.f32 0.0, %v2336
      %v2338 = vpop.f32.mrb[0].mxu0
      %v2339 = vpop.f32.mrb[0].mxu0
      %v2340 = vadd.f32 0.0, %v2339
      %v2341 = vpop.f32.mrb[0].mxu0
      %2342 = vmatprep.mubr.bf16.mxu0 0
      %2343 = vmatmul.mubr.bf16.gmra.mrb[0].mxu0 %v2135
      %v2344 = vpop.f32.mrb[0].mxu0
      %v2345 = vadd.f32 0.0, %v2344
      %v2346 = vpop.f32.mrb[0].mxu0
      %v2347 = vpop.f32.mrb[0].mxu0
      %v2348 = vadd.f32 0.0, %v2347
      %v2349 = vpop.f32.mrb[0].mxu0
      %2350 = vmatprep.mubr.bf16.mxu0 0
      %2351 = vmatmul.mubr.bf16.gmra.mrb[0].mxu0 %v2136
      %v2352 = vpop.f32.mrb[0].mxu0
      %v2353 = vadd.f32 0.0, %v2352
      %v2354 = vpop.f32.mrb[0].mxu0
      %v2355 = vpop.f32.mrb[0].mxu0
      %v2356 = vadd.f32 0.0, %v2355
      %v2357 = vpop.f32.mrb[0].mxu0
      %2358 = vmatprep.mubr.bf16.mxu0 0
      %2359 = vmatmul.mubr.bf16.gmra.mrb[0].mxu0 %v2137
      %v2360 = vpop.f32.mrb[0].mxu0
      %v2361 = vadd.f32 0.0, %v2360
      %v2362 = vpop.f32.mrb[0].mxu0
      %v2363 = vpop.f32.mrb[0].mxu0
      %v2364 = vadd.f32 0.0, %v2363
      %v2365 = vpop.f32.mrb[0].mxu0
      %2366 = vmatprep.mubr.bf16.mxu0 0
      %2367 = vmatmul.mubr.bf16.gmra.mrb[0].mxu0 %v2138
      %v2368 = vpop.f32.mrb[0].mxu0
      %v2369 = vadd.f32 0.0, %v2368
      %v2370 = vpop.f32.mrb[0].mxu0
      %v2371 = vpop.f32.mrb[0].mxu0
      %v2372 = vadd.f32 0.0, %v2371
      %v2373 = vpop.f32.mrb[0].mxu0
      %2374 = vmatprep.mubr.bf16.mxu0 0
      %2375 = vmatmul.mubr.bf16.gmra.mrb[0].mxu0 %v2139
      %v2376 = vpop.f32.mrb[0].mxu0
      %v2377 = vadd.f32 0.0, %v2376
      %v2378 = vpop.f32.mrb[0].mxu0
      %v2379 = vpop.f32.mrb[0].mxu0
      %v2380 = vadd.f32 0.0, %v2379
      %v2381 = vpop.f32.mrb[0].mxu0
      %2382 = vmatprep.mubr.bf16.mxu0 0
      %2383 = vmatmul.mubr.bf16.gmra.mrb[0].mxu0 %v2140
      %v2384 = vpop.f32.mrb[0].mxu0
      %v2385 = vadd.f32 0.0, %v2384
      %v2386 = vpop.f32.mrb[0].mxu0
      %v2387 = vpop.f32.mrb[0].mxu0
      %v2388 = vadd.f32 0.0, %v2387
      %v2389 = vpop.f32.mrb[0].mxu0
      %2390 = vmatprep.mubr.bf16.mxu0 0
      %2391 = vmatmul.mubr.bf16.gmra.mrb[0].mxu0 %v2141
      %v2392 = vpop.f32.mrb[0].mxu0
      %v2393 = vadd.f32 0.0, %v2392
      %v2394 = vpop.f32.mrb[0].mxu0
      %v2395 = vpop.f32.mrb[0].mxu0
      %v2396 = vadd.f32 0.0, %v2395
      %v2397 = vpop.f32.mrb[0].mxu0
      %2398 = vdwg.mxu0
      %v2399 = vadd.f32 %v2158, %v2273
      %v2400 = vadd.f32 %v2159, %v2276
      %v2401 = vadd.f32 %v2160, %v2281
      %v2402 = vadd.f32 %v2161, %v2284
      %v2403 = vadd.f32 %v2162, %v2289
      %v2404 = vadd.f32 %v2163, %v2292
      %v2405 = vadd.f32 %v2164, %v2297
      %v2406 = vadd.f32 %v2165, %v2300
      %v2407 = vadd.f32 %v2166, %v2305
      %v2408 = vadd.f32 %v2167, %v2308
      %v2409 = vadd.f32 %v2168, %v2313
      %v2410 = vadd.f32 %v2169, %v2316
      %v2411 = vadd.f32 %v2170, %v2321
      %v2412 = vadd.f32 %v2171, %v2324
      %v2413 = vadd.f32 %v2172, %v2329
      %v2414 = vadd.f32 %v2173, %v2332
      %v2415 = vadd.f32 %v2174, %v2337
      %v2416 = vadd.f32 %v2175, %v2340
      %v2417 = vadd.f32 %v2176, %v2345
      %v2418 = vadd.f32 %v2177, %v2348
      %v2419 = vadd.f32 %v2178, %v2353
      %v2420 = vadd.f32 %v2179, %v2356
      %v2421 = vadd.f32 %v2180, %v2361
      %v2422 = vadd.f32 %v2181, %v2364
      %v2423 = vadd.f32 %v2182, %v2369
      %v2424 = vadd.f32 %v2183, %v2372
      %v2425 = vadd.f32 %v2184, %v2377
      %v2426 = vadd.f32 %v2185, %v2380
      %v2427 = vadd.f32 %v2186, %v2385
      %v2428 = vadd.f32 %v2187, %v2388
      %v2429 = vadd.f32 %v2188, %v2393
      %v2430 = vadd.f32 %v2189, %v2396
      %2431 = vst [vmem:[%s208] sm:$0xff] %v2399
      %2432 = vst [vmem:[%s208 + $0x8] sm:$0xff] %v2400
      %2433 = vst [vmem:[%s208 + $0x10] sm:$0xff] %v2401
      %2434 = vst [vmem:[%s208 + $0x18] sm:$0xff] %v2402
      %2435 = vst [vmem:[%s208 + $0x20] sm:$0xff] %v2403
      %2436 = vst [vmem:[%s208 + $0x28] sm:$0xff] %v2404
      %2437 = vst [vmem:[%s208 + $0x30] sm:$0xff] %v2405
      %2438 = vst [vmem:[%s208 + $0x38] sm:$0xff] %v2406
      %2439 = vst [vmem:[%s208 + $0x40] sm:$0xff] %v2407
      %2440 = vst [vmem:[%s208 + $0x48] sm:$0xff] %v2408
      %2441 = vst [vmem:[%s208 + $0x50] sm:$0xff] %v2409
      %2442 = vst [vmem:[%s208 + $0x58] sm:$0xff] %v2410
      %2443 = vst [vmem:[%s208 + $0x60] sm:$0xff] %v2411
      %2444 = vst [vmem:[%s208 + $0x68] sm:$0xff] %v2412
      %2445 = vst [vmem:[%s208 + $0x70] sm:$0xff] %v2413
      %2446 = vst [vmem:[%s208 + $0x78] sm:$0xff] %v2414
      %2447 = vst [vmem:[%s208 + $0x80] sm:$0xff] %v2415
      %2448 = vst [vmem:[%s208 + $0x88] sm:$0xff] %v2416
      %2449 = vst [vmem:[%s208 + $0x90] sm:$0xff] %v2417
      %2450 = vst [vmem:[%s208 + $0x98] sm:$0xff] %v2418
      %2451 = vst [vmem:[%s208 + $0xa0] sm:$0xff] %v2419
      %2452 = vst [vmem:[%s208 + $0xa8] sm:$0xff] %v2420
      %2453 = vst [vmem:[%s208 + $0xb0] sm:$0xff] %v2421
      %2454 = vst [vmem:[%s208 + $0xb8] sm:$0xff] %v2422
      %2455 = vst [vmem:[%s208 + $0xc0] sm:$0xff] %v2423
      %2456 = vst [vmem:[%s208 + $0xc8] sm:$0xff] %v2424
      %2457 = vst [vmem:[%s208 + $0xd0] sm:$0xff] %v2425
      %2458 = vst [vmem:[%s208 + $0xd8] sm:$0xff] %v2426
      %2459 = vst [vmem:[%s208 + $0xe0] sm:$0xff] %v2427
      %2460 = vst [vmem:[%s208 + $0xe8] sm:$0xff] %v2428
      %2461 = vst [vmem:[%s208 + $0xf0] sm:$0xff] %v2429
      %2462 = vst [vmem:[%s208 + $0xf8] sm:$0xff] %v2430
      %s2463 = scalar_lea.vmem %s203, 48
      %v2464 = vld [vmem:[%s2463] sm:$0xff]
      %v2465 = vld [vmem:[%s2463 + $0x8] sm:$0xff]
      %v2466 = vld [vmem:[%s2463 + $0x18] sm:$0xff]
      %v2467 = vld [vmem:[%s2463 + $0x20] sm:$0xff]
      %v2468 = vld [vmem:[%s2463 + $0x30] sm:$0xff]
      %v2469 = vld [vmem:[%s2463 + $0x38] sm:$0xff]
      %v2470 = vld [vmem:[%s2463 + $0x48] sm:$0xff]
      %v2471 = vld [vmem:[%s2463 + $0x50] sm:$0xff]
      %v2472 = vld [vmem:[%s2463 + $0x60] sm:$0xff]
      %v2473 = vld [vmem:[%s2463 + $0x68] sm:$0xff]
      %v2474 = vld [vmem:[%s2463 + $0x78] sm:$0xff]
      %v2475 = vld [vmem:[%s2463 + $0x80] sm:$0xff]
      %v2476 = vld [vmem:[%s2463 + $0x90] sm:$0xff]
      %v2477 = vld [vmem:[%s2463 + $0x98] sm:$0xff]
      %v2478 = vld [vmem:[%s2463 + $0xa8] sm:$0xff]
      %v2479 = vld [vmem:[%s2463 + $0xb0] sm:$0xff]
      %v2480 = vld [vmem:[%s2463 + $0xc0] sm:$0xff]
      %v2481 = vld [vmem:[%s2463 + $0xc8] sm:$0xff]
      %v2482 = vld [vmem:[%s2463 + $0xd8] sm:$0xff]
      %v2483 = vld [vmem:[%s2463 + $0xe0] sm:$0xff]
      %v2484 = vld [vmem:[%s2463 + $0xf0] sm:$0xff]
      %v2485 = vld [vmem:[%s2463 + $0xf8] sm:$0xff]
      %v2486 = vld [vmem:[%s2463 + $0x108] sm:$0xff]
      %v2487 = vld [vmem:[%s2463 + $0x110] sm:$0xff]
      %v2488 = vld [vmem:[%s2463 + $0x120] sm:$0xff]
      %v2489 = vld [vmem:[%s2463 + $0x128] sm:$0xff]
      %v2490 = vld [vmem:[%s2463 + $0x138] sm:$0xff]
      %v2491 = vld [vmem:[%s2463 + $0x140] sm:$0xff]
      %v2492 = vld [vmem:[%s2463 + $0x150] sm:$0xff]
      %v2493 = vld [vmem:[%s2463 + $0x158] sm:$0xff]
      %v2494 = vld [vmem:[%s2463 + $0x168] sm:$0xff]
      %v2495 = vld [vmem:[%s2463 + $0x170] sm:$0xff]
      %v2496 = vpack.c.bf16 %v2465, %v2464
      %v2497 = vpack.c.bf16 %v2467, %v2466
      %v2498 = vpack.c.bf16 %v2469, %v2468
      %v2499 = vpack.c.bf16 %v2471, %v2470
      %v2500 = vpack.c.bf16 %v2473, %v2472
      %v2501 = vpack.c.bf16 %v2475, %v2474
      %v2502 = vpack.c.bf16 %v2477, %v2476
      %v2503 = vpack.c.bf16 %v2479, %v2478
      %v2504 = vpack.c.bf16 %v2481, %v2480
      %v2505 = vpack.c.bf16 %v2483, %v2482
      %v2506 = vpack.c.bf16 %v2485, %v2484
      %v2507 = vpack.c.bf16 %v2487, %v2486
      %v2508 = vpack.c.bf16 %v2489, %v2488
      %v2509 = vpack.c.bf16 %v2491, %v2490
      %v2510 = vpack.c.bf16 %v2493, %v2492
      %v2511 = vpack.c.bf16 %v2495, %v2494
      %v2512 = vld [vmem:[%s1 + $0x180] sm:$0xf]
      %v2513 = vld [vmem:[%s1 + $0x184] sm:$0xf]
      %v2514 = vld [vmem:[%s1 + $0x188] sm:$0xf]
      %v2515 = vld [vmem:[%s1 + $0x18c] sm:$0xf]
      %v2516 = vld [vmem:[%s1 + $0x190] sm:$0xf]
      %v2517 = vld [vmem:[%s1 + $0x194] sm:$0xf]
      %v2518 = vld [vmem:[%s1 + $0x198] sm:$0xf]
      %v2519 = vld [vmem:[%s1 + $0x19c] sm:$0xf]
      %v2520 = vld [vmem:[%s1 + $0x1a0] sm:$0xf]
      %v2521 = vld [vmem:[%s1 + $0x1a4] sm:$0xf]
      %v2522 = vld [vmem:[%s1 + $0x1a8] sm:$0xf]
      %v2523 = vld [vmem:[%s1 + $0x1ac] sm:$0xf]
      %v2524 = vld [vmem:[%s1 + $0x1b0] sm:$0xf]
      %v2525 = vld [vmem:[%s1 + $0x1b4] sm:$0xf]
      %v2526 = vld [vmem:[%s1 + $0x1b8] sm:$0xf]
      %v2527 = vld [vmem:[%s1 + $0x1bc] sm:$0xf]
      %v2528 = vld [vmem:[%s208] sm:$0xff]
      %v2529 = vld [vmem:[%s208 + $0x8] sm:$0xff]
      %v2530 = vld [vmem:[%s208 + $0x10] sm:$0xff]
      %v2531 = vld [vmem:[%s208 + $0x18] sm:$0xff]
      %v2532 = vld [vmem:[%s208 + $0x20] sm:$0xff]
      %v2533 = vld [vmem:[%s208 + $0x28] sm:$0xff]
      %v2534 = vld [vmem:[%s208 + $0x30] sm:$0xff]
      %v2535 = vld [vmem:[%s208 + $0x38] sm:$0xff]
      %v2536 = vld [vmem:[%s208 + $0x40] sm:$0xff]
      %v2537 = vld [vmem:[%s208 + $0x48] sm:$0xff]
      %v2538 = vld [vmem:[%s208 + $0x50] sm:$0xff]
      %v2539 = vld [vmem:[%s208 + $0x58] sm:$0xff]
      %v2540 = vld [vmem:[%s208 + $0x60] sm:$0xff]
      %v2541 = vld [vmem:[%s208 + $0x68] sm:$0xff]
      %v2542 = vld [vmem:[%s208 + $0x70] sm:$0xff]
      %v2543 = vld [vmem:[%s208 + $0x78] sm:$0xff]
      %v2544 = vld [vmem:[%s208 + $0x80] sm:$0xff]
      %v2545 = vld [vmem:[%s208 + $0x88] sm:$0xff]
      %v2546 = vld [vmem:[%s208 + $0x90] sm:$0xff]
      %v2547 = vld [vmem:[%s208 + $0x98] sm:$0xff]
      %v2548 = vld [vmem:[%s208 + $0xa0] sm:$0xff]
      %v2549 = vld [vmem:[%s208 + $0xa8] sm:$0xff]
      %v2550 = vld [vmem:[%s208 + $0xb0] sm:$0xff]
      %v2551 = vld [vmem:[%s208 + $0xb8] sm:$0xff]
      %v2552 = vld [vmem:[%s208 + $0xc0] sm:$0xff]
      %v2553 = vld [vmem:[%s208 + $0xc8] sm:$0xff]
      %v2554 = vld [vmem:[%s208 + $0xd0] sm:$0xff]
      %v2555 = vld [vmem:[%s208 + $0xd8] sm:$0xff]
      %v2556 = vld [vmem:[%s208 + $0xe0] sm:$0xff]
      %v2557 = vld [vmem:[%s208 + $0xe8] sm:$0xff]
      %v2558 = vld [vmem:[%s208 + $0xf0] sm:$0xff]
      %v2559 = vld [vmem:[%s208 + $0xf8] sm:$0xff]
      %v2576 = vunpack.c.l.b16 %v2512
      %v2577 = vunpack.c.l.b16 %v2513
      %v2578 = vunpack.c.l.b16 %v2514
      %v2579 = vunpack.c.l.b16 %v2515
      %v2580 = vunpack.c.l.b16 %v2516
      %v2581 = vunpack.c.l.b16 %v2517
      %v2582 = vunpack.c.l.b16 %v2518
      %v2583 = vunpack.c.l.b16 %v2519
      %v2584 = vunpack.c.l.b16 %v2520
      %v2585 = vunpack.c.l.b16 %v2521
      %v2586 = vunpack.c.l.b16 %v2522
      %v2587 = vunpack.c.l.b16 %v2523
      %v2588 = vunpack.c.l.b16 %v2524
      %v2589 = vunpack.c.l.b16 %v2525
      %v2590 = vunpack.c.l.b16 %v2526
      %v2591 = vunpack.c.l.b16 %v2527
      %v2592 = vpack.c.b16 %v2577, %v2576
      %v2593 = vpack.c.b16 %v2579, %v2578
      %v2594 = vpack.c.b16 %v2581, %v2580
      %v2595 = vpack.c.b16 %v2583, %v2582
      %v2596 = vpack.c.b16 %v2585, %v2584
      %v2597 = vpack.c.b16 %v2587, %v2586
      %v2598 = vpack.c.b16 %v2589, %v2588
      %v2599 = vpack.c.b16 %v2591, %v2590
      %2608 = vmatprep.subr.bf16.mxu0 0
      %2609 = vmatpush1.bf16.msra.mxu0 %v2592
      %2610 = vmatprep.subr.bf16.mxu0 0
      %2611 = vmatpush1.bf16.msra.mxu0 %v2593
      %2612 = vmatprep.subr.bf16.mxu0 0
      %2613 = vmatpush1.bf16.msra.mxu0 %v2594
      %2614 = vmatprep.subr.bf16.mxu0 0
      %2615 = vmatpush1.bf16.msra.mxu0 %v2595
      %2616 = vmatprep.subr.bf16.mxu0 0
      %2617 = vmatpush1.bf16.msra.mxu0 %v2596
      %2618 = vmatprep.subr.bf16.mxu0 0
      %2619 = vmatpush1.bf16.msra.mxu0 %v2597
      %2620 = vmatprep.subr.bf16.mxu0 0
      %2621 = vmatpush1.bf16.msra.mxu0 %v2598
      %2622 = vmatprep.subr.bf16.mxu0 0
      %2623 = vmatpush1.bf16.msra.mxu0 %v2599
      %2624 = vmatprep.subr.bf16.mxu0 0
      %2625 = vmatpush1.bf16.msra.mxu0 0
      %2626 = vmatprep.subr.bf16.mxu0 0
      %2627 = vmatpush1.bf16.msra.mxu0 0
      %2628 = vmatprep.subr.bf16.mxu0 0
      %2629 = vmatpush1.bf16.msra.mxu0 0
      %2630 = vmatprep.subr.bf16.mxu0 0
      %2631 = vmatpush1.bf16.msra.mxu0 0
      %2632 = vmatprep.subr.bf16.mxu0 0
      %2633 = vmatpush1.bf16.msra.mxu0 0
      %2634 = vmatprep.subr.bf16.mxu0 0
      %2635 = vmatpush1.bf16.msra.mxu0 0
      %2636 = vmatprep.subr.bf16.mxu0 0
      %2637 = vmatpush1.bf16.msra.mxu0 0
      %2638 = vmatprep.subr.bf16.mxu0 0
      %2639 = vmatpush1.bf16.msra.mxu0 0
      %2640 = vmatprep.mubr.bf16.mxu0 0
      %2641 = vmatmul.mubr.bf16.gmra.mrb[0].mxu0 %v2496
      %v2642 = vpop.f32.mrb[0].mxu0
      %v2643 = vadd.f32 0.0, %v2642
      %v2644 = vpop.f32.mrb[0].mxu0
      %v2645 = vpop.f32.mrb[0].mxu0
      %v2646 = vadd.f32 0.0, %v2645
      %v2647 = vpop.f32.mrb[0].mxu0
      %2648 = vmatprep.mubr.bf16.mxu0 0
      %2649 = vmatmul.mubr.bf16.gmra.mrb[0].mxu0 %v2497
      %v2650 = vpop.f32.mrb[0].mxu0
      %v2651 = vadd.f32 0.0, %v2650
      %v2652 = vpop.f32.mrb[0].mxu0
      %v2653 = vpop.f32.mrb[0].mxu0
      %v2654 = vadd.f32 0.0, %v2653
      %v2655 = vpop.f32.mrb[0].mxu0
      %2656 = vmatprep.mubr.bf16.mxu0 0
      %2657 = vmatmul.mubr.bf16.gmra.mrb[0].mxu0 %v2498
      %v2658 = vpop.f32.mrb[0].mxu0
      %v2659 = vadd.f32 0.0, %v2658
      %v2660 = vpop.f32.mrb[0].mxu0
      %v2661 = vpop.f32.mrb[0].mxu0
      %v2662 = vadd.f32 0.0, %v2661
      %v2663 = vpop.f32.mrb[0].mxu0
      %2664 = vmatprep.mubr.bf16.mxu0 0
      %2665 = vmatmul.mubr.bf16.gmra.mrb[0].mxu0 %v2499
      %v2666 = vpop.f32.mrb[0].mxu0
      %v2667 = vadd.f32 0.0, %v2666
      %v2668 = vpop.f32.mrb[0].mxu0
      %v2669 = vpop.f32.mrb[0].mxu0
      %v2670 = vadd.f32 0.0, %v2669
      %v2671 = vpop.f32.mrb[0].mxu0
      %2672 = vmatprep.mubr.bf16.mxu0 0
      %2673 = vmatmul.mubr.bf16.gmra.mrb[0].mxu0 %v2500
      %v2674 = vpop.f32.mrb[0].mxu0
      %v2675 = vadd.f32 0.0, %v2674
      %v2676 = vpop.f32.mrb[0].mxu0
      %v2677 = vpop.f32.mrb[0].mxu0
      %v2678 = vadd.f32 0.0, %v2677
      %v2679 = vpop.f32.mrb[0].mxu0
      %2680 = vmatprep.mubr.bf16.mxu0 0
      %2681 = vmatmul.mubr.bf16.gmra.mrb[0].mxu0 %v2501
      %v2682 = vpop.f32.mrb[0].mxu0
      %v2683 = vadd.f32 0.0, %v2682
      %v2684 = vpop.f32.mrb[0].mxu0
      %v2685 = vpop.f32.mrb[0].mxu0
      %v2686 = vadd.f32 0.0, %v2685
      %v2687 = vpop.f32.mrb[0].mxu0
      %2688 = vmatprep.mubr.bf16.mxu0 0
      %2689 = vmatmul.mubr.bf16.gmra.mrb[0].mxu0 %v2502
      %v2690 = vpop.f32.mrb[0].mxu0
      %v2691 = vadd.f32 0.0, %v2690
      %v2692 = vpop.f32.mrb[0].mxu0
      %v2693 = vpop.f32.mrb[0].mxu0
      %v2694 = vadd.f32 0.0, %v2693
      %v2695 = vpop.f32.mrb[0].mxu0
      %2696 = vmatprep.mubr.bf16.mxu0 0
      %2697 = vmatmul.mubr.bf16.gmra.mrb[0].mxu0 %v2503
      %v2698 = vpop.f32.mrb[0].mxu0
      %v2699 = vadd.f32 0.0, %v2698
      %v2700 = vpop.f32.mrb[0].mxu0
      %v2701 = vpop.f32.mrb[0].mxu0
      %v2702 = vadd.f32 0.0, %v2701
      %v2703 = vpop.f32.mrb[0].mxu0
      %2704 = vmatprep.mubr.bf16.mxu0 0
      %2705 = vmatmul.mubr.bf16.gmra.mrb[0].mxu0 %v2504
      %v2706 = vpop.f32.mrb[0].mxu0
      %v2707 = vadd.f32 0.0, %v2706
      %v2708 = vpop.f32.mrb[0].mxu0
      %v2709 = vpop.f32.mrb[0].mxu0
      %v2710 = vadd.f32 0.0, %v2709
      %v2711 = vpop.f32.mrb[0].mxu0
      %2712 = vmatprep.mubr.bf16.mxu0 0
      %2713 = vmatmul.mubr.bf16.gmra.mrb[0].mxu0 %v2505
      %v2714 = vpop.f32.mrb[0].mxu0
      %v2715 = vadd.f32 0.0, %v2714
      %v2716 = vpop.f32.mrb[0].mxu0
      %v2717 = vpop.f32.mrb[0].mxu0
      %v2718 = vadd.f32 0.0, %v2717
      %v2719 = vpop.f32.mrb[0].mxu0
      %2720 = vmatprep.mubr.bf16.mxu0 0
      %2721 = vmatmul.mubr.bf16.gmra.mrb[0].mxu0 %v2506
      %v2722 = vpop.f32.mrb[0].mxu0
      %v2723 = vadd.f32 0.0, %v2722
      %v2724 = vpop.f32.mrb[0].mxu0
      %v2725 = vpop.f32.mrb[0].mxu0
      %v2726 = vadd.f32 0.0, %v2725
      %v2727 = vpop.f32.mrb[0].mxu0
      %2728 = vmatprep.mubr.bf16.mxu0 0
      %2729 = vmatmul.mubr.bf16.gmra.mrb[0].mxu0 %v2507
      %v2730 = vpop.f32.mrb[0].mxu0
      %v2731 = vadd.f32 0.0, %v2730
      %v2732 = vpop.f32.mrb[0].mxu0
      %v2733 = vpop.f32.mrb[0].mxu0
      %v2734 = vadd.f32 0.0, %v2733
      %v2735 = vpop.f32.mrb[0].mxu0
      %2736 = vmatprep.mubr.bf16.mxu0 0
      %2737 = vmatmul.mubr.bf16.gmra.mrb[0].mxu0 %v2508
      %v2738 = vpop.f32.mrb[0].mxu0
      %v2739 = vadd.f32 0.0, %v2738
      %v2740 = vpop.f32.mrb[0].mxu0
      %v2741 = vpop.f32.mrb[0].mxu0
      %v2742 = vadd.f32 0.0, %v2741
      %v2743 = vpop.f32.mrb[0].mxu0
      %2744 = vmatprep.mubr.bf16.mxu0 0
      %2745 = vmatmul.mubr.bf16.gmra.mrb[0].mxu0 %v2509
      %v2746 = vpop.f32.mrb[0].mxu0
      %v2747 = vadd.f32 0.0, %v2746
      %v2748 = vpop.f32.mrb[0].mxu0
      %v2749 = vpop.f32.mrb[0].mxu0
      %v2750 = vadd.f32 0.0, %v2749
      %v2751 = vpop.f32.mrb[0].mxu0
      %2752 = vmatprep.mubr.bf16.mxu0 0
      %2753 = vmatmul.mubr.bf16.gmra.mrb[0].mxu0 %v2510
      %v2754 = vpop.f32.mrb[0].mxu0
      %v2755 = vadd.f32 0.0, %v2754
      %v2756 = vpop.f32.mrb[0].mxu0
      %v2757 = vpop.f32.mrb[0].mxu0
      %v2758 = vadd.f32 0.0, %v2757
      %v2759 = vpop.f32.mrb[0].mxu0
      %2760 = vmatprep.mubr.bf16.mxu0 0
      %2761 = vmatmul.mubr.bf16.gmra.mrb[0].mxu0 %v2511
      %v2762 = vpop.f32.mrb[0].mxu0
      %v2763 = vadd.f32 0.0, %v2762
      %v2764 = vpop.f32.mrb[0].mxu0
      %v2765 = vpop.f32.mrb[0].mxu0
      %v2766 = vadd.f32 0.0, %v2765
      %v2767 = vpop.f32.mrb[0].mxu0
      %2768 = vdwg.mxu0
      %v2769 = vadd.f32 %v2528, %v2643
      %v2770 = vadd.f32 %v2529, %v2646
      %v2771 = vadd.f32 %v2530, %v2651
      %v2772 = vadd.f32 %v2531, %v2654
      %v2773 = vadd.f32 %v2532, %v2659
      %v2774 = vadd.f32 %v2533, %v2662
      %v2775 = vadd.f32 %v2534, %v2667
      %v2776 = vadd.f32 %v2535, %v2670
      %v2777 = vadd.f32 %v2536, %v2675
      %v2778 = vadd.f32 %v2537, %v2678
      %v2779 = vadd.f32 %v2538, %v2683
      %v2780 = vadd.f32 %v2539, %v2686
      %v2781 = vadd.f32 %v2540, %v2691
      %v2782 = vadd.f32 %v2541, %v2694
      %v2783 = vadd.f32 %v2542, %v2699
      %v2784 = vadd.f32 %v2543, %v2702
      %v2785 = vadd.f32 %v2544, %v2707
      %v2786 = vadd.f32 %v2545, %v2710
      %v2787 = vadd.f32 %v2546, %v2715
      %v2788 = vadd.f32 %v2547, %v2718
      %v2789 = vadd.f32 %v2548, %v2723
      %v2790 = vadd.f32 %v2549, %v2726
      %v2791 = vadd.f32 %v2550, %v2731
      %v2792 = vadd.f32 %v2551, %v2734
      %v2793 = vadd.f32 %v2552, %v2739
      %v2794 = vadd.f32 %v2553, %v2742
      %v2795 = vadd.f32 %v2554, %v2747
      %v2796 = vadd.f32 %v2555, %v2750
      %v2797 = vadd.f32 %v2556, %v2755
      %v2798 = vadd.f32 %v2557, %v2758
      %v2799 = vadd.f32 %v2558, %v2763
      %v2800 = vadd.f32 %v2559, %v2766
      %2801 = vst [vmem:[%s208] sm:$0xff] %v2769
      %2802 = vst [vmem:[%s208 + $0x8] sm:$0xff] %v2770
      %2803 = vst [vmem:[%s208 + $0x10] sm:$0xff] %v2771
      %2804 = vst [vmem:[%s208 + $0x18] sm:$0xff] %v2772
      %2805 = vst [vmem:[%s208 + $0x20] sm:$0xff] %v2773
      %2806 = vst [vmem:[%s208 + $0x28] sm:$0xff] %v2774
      %2807 = vst [vmem:[%s208 + $0x30] sm:$0xff] %v2775
      %2808 = vst [vmem:[%s208 + $0x38] sm:$0xff] %v2776
      %2809 = vst [vmem:[%s208 + $0x40] sm:$0xff] %v2777
      %2810 = vst [vmem:[%s208 + $0x48] sm:$0xff] %v2778
      %2811 = vst [vmem:[%s208 + $0x50] sm:$0xff] %v2779
      %2812 = vst [vmem:[%s208 + $0x58] sm:$0xff] %v2780
      %2813 = vst [vmem:[%s208 + $0x60] sm:$0xff] %v2781
      %2814 = vst [vmem:[%s208 + $0x68] sm:$0xff] %v2782
      %2815 = vst [vmem:[%s208 + $0x70] sm:$0xff] %v2783
      %2816 = vst [vmem:[%s208 + $0x78] sm:$0xff] %v2784
      %2817 = vst [vmem:[%s208 + $0x80] sm:$0xff] %v2785
      %2818 = vst [vmem:[%s208 + $0x88] sm:$0xff] %v2786
      %2819 = vst [vmem:[%s208 + $0x90] sm:$0xff] %v2787
      %2820 = vst [vmem:[%s208 + $0x98] sm:$0xff] %v2788
      %2821 = vst [vmem:[%s208 + $0xa0] sm:$0xff] %v2789
      %2822 = vst [vmem:[%s208 + $0xa8] sm:$0xff] %v2790
      %2823 = vst [vmem:[%s208 + $0xb0] sm:$0xff] %v2791
      %2824 = vst [vmem:[%s208 + $0xb8] sm:$0xff] %v2792
      %2825 = vst [vmem:[%s208 + $0xc0] sm:$0xff] %v2793
      %2826 = vst [vmem:[%s208 + $0xc8] sm:$0xff] %v2794
      %2827 = vst [vmem:[%s208 + $0xd0] sm:$0xff] %v2795
      %2828 = vst [vmem:[%s208 + $0xd8] sm:$0xff] %v2796
      %2829 = vst [vmem:[%s208 + $0xe0] sm:$0xff] %v2797
      %2830 = vst [vmem:[%s208 + $0xe8] sm:$0xff] %v2798
      %2831 = vst [vmem:[%s208 + $0xf0] sm:$0xff] %v2799
      %2832 = vst [vmem:[%s208 + $0xf8] sm:$0xff] %v2800
      %v2833 = vld [vmem:[%s2463 + $0x1] sm:$0xff]
      %v2834 = vld [vmem:[%s2463 + $0x9] sm:$0xff]
      %v2835 = vld [vmem:[%s2463 + $0x19] sm:$0xff]
      %v2836 = vld [vmem:[%s2463 + $0x21] sm:$0xff]
      %v2837 = vld [vmem:[%s2463 + $0x31] sm:$0xff]
      %v2838 = vld [vmem:[%s2463 + $0x39] sm:$0xff]
      %v2839 = vld [vmem:[%s2463 + $0x49] sm:$0xff]
      %v2840 = vld [vmem:[%s2463 + $0x51] sm:$0xff]
      %v2841 = vld [vmem:[%s2463 + $0x61] sm:$0xff]
      %v2842 = vld [vmem:[%s2463 + $0x69] sm:$0xff]
      %v2843 = vld [vmem:[%s2463 + $0x79] sm:$0xff]
      %v2844 = vld [vmem:[%s2463 + $0x81] sm:$0xff]
      %v2845 = vld [vmem:[%s2463 + $0x91] sm:$0xff]
      %v2846 = vld [vmem:[%s2463 + $0x99] sm:$0xff]
      %v2847 = vld [vmem:[%s2463 + $0xa9] sm:$0xff]
      %v2848 = vld [vmem:[%s2463 + $0xb1] sm:$0xff]
      %v2849 = vld [vmem:[%s2463 + $0xc1] sm:$0xff]
      %v2850 = vld [vmem:[%s2463 + $0xc9] sm:$0xff]
      %v2851 = vld [vmem:[%s2463 + $0xd9] sm:$0xff]
      %v2852 = vld [vmem:[%s2463 + $0xe1] sm:$0xff]
      %v2853 = vld [vmem:[%s2463 + $0xf1] sm:$0xff]
      %v2854 = vld [vmem:[%s2463 + $0xf9] sm:$0xff]
      %v2855 = vld [vmem:[%s2463 + $0x109] sm:$0xff]
      %v2856 = vld [vmem:[%s2463 + $0x111] sm:$0xff]
      %v2857 = vld [vmem:[%s2463 + $0x121] sm:$0xff]
      %v2858 = vld [vmem:[%s2463 + $0x129] sm:$0xff]
      %v2859 = vld [vmem:[%s2463 + $0x139] sm:$0xff]
      %v2860 = vld [vmem:[%s2463 + $0x141] sm:$0xff]
      %v2861 = vld [vmem:[%s2463 + $0x151] sm:$0xff]
      %v2862 = vld [vmem:[%s2463 + $0x159] sm:$0xff]
      %v2863 = vld [vmem:[%s2463 + $0x169] sm:$0xff]
      %v2864 = vld [vmem:[%s2463 + $0x171] sm:$0xff]
      %v2865 = vpack.c.bf16 %v2834, %v2833
      %v2866 = vpack.c.bf16 %v2836, %v2835
      %v2867 = vpack.c.bf16 %v2838, %v2837
      %v2868 = vpack.c.bf16 %v2840, %v2839
      %v2869 = vpack.c.bf16 %v2842, %v2841
      %v2870 = vpack.c.bf16 %v2844, %v2843
      %v2871 = vpack.c.bf16 %v2846, %v2845
      %v2872 = vpack.c.bf16 %v2848, %v2847
      %v2873 = vpack.c.bf16 %v2850, %v2849
      %v2874 = vpack.c.bf16 %v2852, %v2851
      %v2875 = vpack.c.bf16 %v2854, %v2853
      %v2876 = vpack.c.bf16 %v2856, %v2855
      %v2877 = vpack.c.bf16 %v2858, %v2857
      %v2878 = vpack.c.bf16 %v2860, %v2859
      %v2879 = vpack.c.bf16 %v2862, %v2861
      %v2880 = vpack.c.bf16 %v2864, %v2863
      %v2881 = vld [vmem:[%s1 + $0x1c0] sm:$0xf]
      %v2882 = vld [vmem:[%s1 + $0x1c4] sm:$0xf]
      %v2883 = vld [vmem:[%s1 + $0x1c8] sm:$0xf]
      %v2884 = vld [vmem:[%s1 + $0x1cc] sm:$0xf]
      %v2885 = vld [vmem:[%s1 + $0x1d0] sm:$0xf]
      %v2886 = vld [vmem:[%s1 + $0x1d4] sm:$0xf]
      %v2887 = vld [vmem:[%s1 + $0x1d8] sm:$0xf]
      %v2888 = vld [vmem:[%s1 + $0x1dc] sm:$0xf]
      %v2889 = vld [vmem:[%s1 + $0x1e0] sm:$0xf]
      %v2890 = vld [vmem:[%s1 + $0x1e4] sm:$0xf]
      %v2891 = vld [vmem:[%s1 + $0x1e8] sm:$0xf]
      %v2892 = vld [vmem:[%s1 + $0x1ec] sm:$0xf]
      %v2893 = vld [vmem:[%s1 + $0x1f0] sm:$0xf]
      %v2894 = vld [vmem:[%s1 + $0x1f4] sm:$0xf]
      %v2895 = vld [vmem:[%s1 + $0x1f8] sm:$0xf]
      %v2896 = vld [vmem:[%s1 + $0x1fc] sm:$0xf]
      %v2897 = vld [vmem:[%s208] sm:$0xff]
      %v2898 = vld [vmem:[%s208 + $0x8] sm:$0xff]
      %v2899 = vld [vmem:[%s208 + $0x10] sm:$0xff]
      %v2900 = vld [vmem:[%s208 + $0x18] sm:$0xff]
      %v2901 = vld [vmem:[%s208 + $0x20] sm:$0xff]
      %v2902 = vld [vmem:[%s208 + $0x28] sm:$0xff]
      %v2903 = vld [vmem:[%s208 + $0x30] sm:$0xff]
      %v2904 = vld [vmem:[%s208 + $0x38] sm:$0xff]
      %v2905 = vld [vmem:[%s208 + $0x40] sm:$0xff]
      %v2906 = vld [vmem:[%s208 + $0x48] sm:$0xff]
      %v2907 = vld [vmem:[%s208 + $0x50] sm:$0xff]
      %v2908 = vld [vmem:[%s208 + $0x58] sm:$0xff]
      %v2909 = vld [vmem:[%s208 + $0x60] sm:$0xff]
      %v2910 = vld [vmem:[%s208 + $0x68] sm:$0xff]
      %v2911 = vld [vmem:[%s208 + $0x70] sm:$0xff]
      %v2912 = vld [vmem:[%s208 + $0x78] sm:$0xff]
      %v2913 = vld [vmem:[%s208 + $0x80] sm:$0xff]
      %v2914 = vld [vmem:[%s208 + $0x88] sm:$0xff]
      %v2915 = vld [vmem:[%s208 + $0x90] sm:$0xff]
      %v2916 = vld [vmem:[%s208 + $0x98] sm:$0xff]
      %v2917 = vld [vmem:[%s208 + $0xa0] sm:$0xff]
      %v2918 = vld [vmem:[%s208 + $0xa8] sm:$0xff]
      %v2919 = vld [vmem:[%s208 + $0xb0] sm:$0xff]
      %v2920 = vld [vmem:[%s208 + $0xb8] sm:$0xff]
      %v2921 = vld [vmem:[%s208 + $0xc0] sm:$0xff]
      %v2922 = vld [vmem:[%s208 + $0xc8] sm:$0xff]
      %v2923 = vld [vmem:[%s208 + $0xd0] sm:$0xff]
      %v2924 = vld [vmem:[%s208 + $0xd8] sm:$0xff]
      %v2925 = vld [vmem:[%s208 + $0xe0] sm:$0xff]
      %v2926 = vld [vmem:[%s208 + $0xe8] sm:$0xff]
      %v2927 = vld [vmem:[%s208 + $0xf0] sm:$0xff]
      %v2928 = vld [vmem:[%s208 + $0xf8] sm:$0xff]
      %v2945 = vunpack.c.l.b16 %v2881
      %v2946 = vunpack.c.l.b16 %v2882
      %v2947 = vunpack.c.l.b16 %v2883
      %v2948 = vunpack.c.l.b16 %v2884
      %v2949 = vunpack.c.l.b16 %v2885
      %v2950 = vunpack.c.l.b16 %v2886
      %v2951 = vunpack.c.l.b16 %v2887
      %v2952 = vunpack.c.l.b16 %v2888
      %v2953 = vunpack.c.l.b16 %v2889
      %v2954 = vunpack.c.l.b16 %v2890
      %v2955 = vunpack.c.l.b16 %v2891
      %v2956 = vunpack.c.l.b16 %v2892
      %v2957 = vunpack.c.l.b16 %v2893
      %v2958 = vunpack.c.l.b16 %v2894
      %v2959 = vunpack.c.l.b16 %v2895
      %v2960 = vunpack.c.l.b16 %v2896
      %v2961 = vpack.c.b16 %v2946, %v2945
      %v2962 = vpack.c.b16 %v2948, %v2947
      %v2963 = vpack.c.b16 %v2950, %v2949
      %v2964 = vpack.c.b16 %v2952, %v2951
      %v2965 = vpack.c.b16 %v2954, %v2953
      %v2966 = vpack.c.b16 %v2956, %v2955
      %v2967 = vpack.c.b16 %v2958, %v2957
      %v2968 = vpack.c.b16 %v2960, %v2959
      %2977 = vmatprep.subr.bf16.mxu0 0
      %2978 = vmatpush1.bf16.msra.mxu0 %v2961
      %2979 = vmatprep.subr.bf16.mxu0 0
      %2980 = vmatpush1.bf16.msra.mxu0 %v2962
      %2981 = vmatprep.subr.bf16.mxu0 0
      %2982 = vmatpush1.bf16.msra.mxu0 %v2963
      %2983 = vmatprep.subr.bf16.mxu0 0
      %2984 = vmatpush1.bf16.msra.mxu0 %v2964
      %2985 = vmatprep.subr.bf16.mxu0 0
      %2986 = vmatpush1.bf16.msra.mxu0 %v2965
      %2987 = vmatprep.subr.bf16.mxu0 0
      %2988 = vmatpush1.bf16.msra.mxu0 %v2966
      %2989 = vmatprep.subr.bf16.mxu0 0
      %2990 = vmatpush1.bf16.msra.mxu0 %v2967
      %2991 = vmatprep.subr.bf16.mxu0 0
      %2992 = vmatpush1.bf16.msra.mxu0 %v2968
      %2993 = vmatprep.subr.bf16.mxu0 0
      %2994 = vmatpush1.bf16.msra.mxu0 0
      %2995 = vmatprep.subr.bf16.mxu0 0
      %2996 = vmatpush1.bf16.msra.mxu0 0
      %2997 = vmatprep.subr.bf16.mxu0 0
      %2998 = vmatpush1.bf16.msra.mxu0 0
      %2999 = vmatprep.subr.bf16.mxu0 0
      %3000 = vmatpush1.bf16.msra.mxu0 0
      %3001 = vmatprep.subr.bf16.mxu0 0
      %3002 = vmatpush1.bf16.msra.mxu0 0
      %3003 = vmatprep.subr.bf16.mxu0 0
      %3004 = vmatpush1.bf16.msra.mxu0 0
      %3005 = vmatprep.subr.bf16.mxu0 0
      %3006 = vmatpush1.bf16.msra.mxu0 0
      %3007 = vmatprep.subr.bf16.mxu0 0
      %3008 = vmatpush1.bf16.msra.mxu0 0
      %3009 = vmatprep.mubr.bf16.mxu0 0
      %3010 = vmatmul.mubr.bf16.gmra.mrb[0].mxu0 %v2865
      %v3011 = vpop.f32.mrb[0].mxu0
      %v3012 = vadd.f32 0.0, %v3011
      %v3013 = vpop.f32.mrb[0].mxu0
      %v3014 = vpop.f32.mrb[0].mxu0
      %v3015 = vadd.f32 0.0, %v3014
      %v3016 = vpop.f32.mrb[0].mxu0
      %3017 = vmatprep.mubr.bf16.mxu0 0
      %3018 = vmatmul.mubr.bf16.gmra.mrb[0].mxu0 %v2866
      %v3019 = vpop.f32.mrb[0].mxu0
      %v3020 = vadd.f32 0.0, %v3019
      %v3021 = vpop.f32.mrb[0].mxu0
      %v3022 = vpop.f32.mrb[0].mxu0
      %v3023 = vadd.f32 0.0, %v3022
      %v3024 = vpop.f32.mrb[0].mxu0
      %3025 = vmatprep.mubr.bf16.mxu0 0
      %3026 = vmatmul.mubr.bf16.gmra.mrb[0].mxu0 %v2867
      %v3027 = vpop.f32.mrb[0].mxu0
      %v3028 = vadd.f32 0.0, %v3027
      %v3029 = vpop.f32.mrb[0].mxu0
      %v3030 = vpop.f32.mrb[0].mxu0
      %v3031 = vadd.f32 0.0, %v3030
      %v3032 = vpop.f32.mrb[0].mxu0
      %3033 = vmatprep.mubr.bf16.mxu0 0
      %3034 = vmatmul.mubr.bf16.gmra.mrb[0].mxu0 %v2868
      %v3035 = vpop.f32.mrb[0].mxu0
      %v3036 = vadd.f32 0.0, %v3035
      %v3037 = vpop.f32.mrb[0].mxu0
      %v3038 = vpop.f32.mrb[0].mxu0
      %v3039 = vadd.f32 0.0, %v3038
      %v3040 = vpop.f32.mrb[0].mxu0
      %3041 = vmatprep.mubr.bf16.mxu0 0
      %3042 = vmatmul.mubr.bf16.gmra.mrb[0].mxu0 %v2869
      %v3043 = vpop.f32.mrb[0].mxu0
      %v3044 = vadd.f32 0.0, %v3043
      %v3045 = vpop.f32.mrb[0].mxu0
      %v3046 = vpop.f32.mrb[0].mxu0
      %v3047 = vadd.f32 0.0, %v3046
      %v3048 = vpop.f32.mrb[0].mxu0
      %3049 = vmatprep.mubr.bf16.mxu0 0
      %3050 = vmatmul.mubr.bf16.gmra.mrb[0].mxu0 %v2870
      %v3051 = vpop.f32.mrb[0].mxu0
      %v3052 = vadd.f32 0.0, %v3051
      %v3053 = vpop.f32.mrb[0].mxu0
      %v3054 = vpop.f32.mrb[0].mxu0
      %v3055 = vadd.f32 0.0, %v3054
      %v3056 = vpop.f32.mrb[0].mxu0
      %3057 = vmatprep.mubr.bf16.mxu0 0
      %3058 = vmatmul.mubr.bf16.gmra.mrb[0].mxu0 %v2871
      %v3059 = vpop.f32.mrb[0].mxu0
      %v3060 = vadd.f32 0.0, %v3059
      %v3061 = vpop.f32.mrb[0].mxu0
      %v3062 = vpop.f32.mrb[0].mxu0
      %v3063 = vadd.f32 0.0, %v3062
      %v3064 = vpop.f32.mrb[0].mxu0
      %3065 = vmatprep.mubr.bf16.mxu0 0
      %3066 = vmatmul.mubr.bf16.gmra.mrb[0].mxu0 %v2872
      %v3067 = vpop.f32.mrb[0].mxu0
      %v3068 = vadd.f32 0.0, %v3067
      %v3069 = vpop.f32.mrb[0].mxu0
      %v3070 = vpop.f32.mrb[0].mxu0
      %v3071 = vadd.f32 0.0, %v3070
      %v3072 = vpop.f32.mrb[0].mxu0
      %3073 = vmatprep.mubr.bf16.mxu0 0
      %3074 = vmatmul.mubr.bf16.gmra.mrb[0].mxu0 %v2873
      %v3075 = vpop.f32.mrb[0].mxu0
      %v3076 = vadd.f32 0.0, %v3075
      %v3077 = vpop.f32.mrb[0].mxu0
      %v3078 = vpop.f32.mrb[0].mxu0
      %v3079 = vadd.f32 0.0, %v3078
      %v3080 = vpop.f32.mrb[0].mxu0
      %3081 = vmatprep.mubr.bf16.mxu0 0
      %3082 = vmatmul.mubr.bf16.gmra.mrb[0].mxu0 %v2874
      %v3083 = vpop.f32.mrb[0].mxu0
      %v3084 = vadd.f32 0.0, %v3083
      %v3085 = vpop.f32.mrb[0].mxu0
      %v3086 = vpop.f32.mrb[0].mxu0
      %v3087 = vadd.f32 0.0, %v3086
      %v3088 = vpop.f32.mrb[0].mxu0
      %3089 = vmatprep.mubr.bf16.mxu0 0
      %3090 = vmatmul.mubr.bf16.gmra.mrb[0].mxu0 %v2875
      %v3091 = vpop.f32.mrb[0].mxu0
      %v3092 = vadd.f32 0.0, %v3091
      %v3093 = vpop.f32.mrb[0].mxu0
      %v3094 = vpop.f32.mrb[0].mxu0
      %v3095 = vadd.f32 0.0, %v3094
      %v3096 = vpop.f32.mrb[0].mxu0
      %3097 = vmatprep.mubr.bf16.mxu0 0
      %3098 = vmatmul.mubr.bf16.gmra.mrb[0].mxu0 %v2876
      %v3099 = vpop.f32.mrb[0].mxu0
      %v3100 = vadd.f32 0.0, %v3099
      %v3101 = vpop.f32.mrb[0].mxu0
      %v3102 = vpop.f32.mrb[0].mxu0
      %v3103 = vadd.f32 0.0, %v3102
      %v3104 = vpop.f32.mrb[0].mxu0
      %3105 = vmatprep.mubr.bf16.mxu0 0
      %3106 = vmatmul.mubr.bf16.gmra.mrb[0].mxu0 %v2877
      %v3107 = vpop.f32.mrb[0].mxu0
      %v3108 = vadd.f32 0.0, %v3107
      %v3109 = vpop.f32.mrb[0].mxu0
      %v3110 = vpop.f32.mrb[0].mxu0
      %v3111 = vadd.f32 0.0, %v3110
      %v3112 = vpop.f32.mrb[0].mxu0
      %3113 = vmatprep.mubr.bf16.mxu0 0
      %3114 = vmatmul.mubr.bf16.gmra.mrb[0].mxu0 %v2878
      %v3115 = vpop.f32.mrb[0].mxu0
      %v3116 = vadd.f32 0.0, %v3115
      %v3117 = vpop.f32.mrb[0].mxu0
      %v3118 = vpop.f32.mrb[0].mxu0
      %v3119 = vadd.f32 0.0, %v3118
      %v3120 = vpop.f32.mrb[0].mxu0
      %3121 = vmatprep.mubr.bf16.mxu0 0
      %3122 = vmatmul.mubr.bf16.gmra.mrb[0].mxu0 %v2879
      %v3123 = vpop.f32.mrb[0].mxu0
      %v3124 = vadd.f32 0.0, %v3123
      %v3125 = vpop.f32.mrb[0].mxu0
      %v3126 = vpop.f32.mrb[0].mxu0
      %v3127 = vadd.f32 0.0, %v3126
      %v3128 = vpop.f32.mrb[0].mxu0
      %3129 = vmatprep.mubr.bf16.mxu0 0
      %3130 = vmatmul.mubr.bf16.gmra.mrb[0].mxu0 %v2880
      %v3131 = vpop.f32.mrb[0].mxu0
      %v3132 = vadd.f32 0.0, %v3131
      %v3133 = vpop.f32.mrb[0].mxu0
      %v3134 = vpop.f32.mrb[0].mxu0
      %v3135 = vadd.f32 0.0, %v3134
      %v3136 = vpop.f32.mrb[0].mxu0
      %3137 = vdwg.mxu0
      %v3138 = vadd.f32 %v2897, %v3012
      %v3139 = vadd.f32 %v2898, %v3015
      %v3140 = vadd.f32 %v2899, %v3020
      %v3141 = vadd.f32 %v2900, %v3023
      %v3142 = vadd.f32 %v2901, %v3028
      %v3143 = vadd.f32 %v2902, %v3031
      %v3144 = vadd.f32 %v2903, %v3036
      %v3145 = vadd.f32 %v2904, %v3039
      %v3146 = vadd.f32 %v2905, %v3044
      %v3147 = vadd.f32 %v2906, %v3047
      %v3148 = vadd.f32 %v2907, %v3052
      %v3149 = vadd.f32 %v2908, %v3055
      %v3150 = vadd.f32 %v2909, %v3060
      %v3151 = vadd.f32 %v2910, %v3063
      %v3152 = vadd.f32 %v2911, %v3068
      %v3153 = vadd.f32 %v2912, %v3071
      %v3154 = vadd.f32 %v2913, %v3076
      %v3155 = vadd.f32 %v2914, %v3079
      %v3156 = vadd.f32 %v2915, %v3084
      %v3157 = vadd.f32 %v2916, %v3087
      %v3158 = vadd.f32 %v2917, %v3092
      %v3159 = vadd.f32 %v2918, %v3095
      %v3160 = vadd.f32 %v2919, %v3100
      %v3161 = vadd.f32 %v2920, %v3103
      %v3162 = vadd.f32 %v2921, %v3108
      %v3163 = vadd.f32 %v2922, %v3111
      %v3164 = vadd.f32 %v2923, %v3116
      %v3165 = vadd.f32 %v2924, %v3119
      %v3166 = vadd.f32 %v2925, %v3124
      %v3167 = vadd.f32 %v2926, %v3127
      %v3168 = vadd.f32 %v2927, %v3132
      %v3169 = vadd.f32 %v2928, %v3135
      %3170 = vst [vmem:[%s208] sm:$0xff] %v3138
      %3171 = vst [vmem:[%s208 + $0x8] sm:$0xff] %v3139
      %3172 = vst [vmem:[%s208 + $0x10] sm:$0xff] %v3140
      %3173 = vst [vmem:[%s208 + $0x18] sm:$0xff] %v3141
      %3174 = vst [vmem:[%s208 + $0x20] sm:$0xff] %v3142
      %3175 = vst [vmem:[%s208 + $0x28] sm:$0xff] %v3143
      %3176 = vst [vmem:[%s208 + $0x30] sm:$0xff] %v3144
      %3177 = vst [vmem:[%s208 + $0x38] sm:$0xff] %v3145
      %3178 = vst [vmem:[%s208 + $0x40] sm:$0xff] %v3146
      %3179 = vst [vmem:[%s208 + $0x48] sm:$0xff] %v3147
      %3180 = vst [vmem:[%s208 + $0x50] sm:$0xff] %v3148
      %3181 = vst [vmem:[%s208 + $0x58] sm:$0xff] %v3149
      %3182 = vst [vmem:[%s208 + $0x60] sm:$0xff] %v3150
      %3183 = vst [vmem:[%s208 + $0x68] sm:$0xff] %v3151
      %3184 = vst [vmem:[%s208 + $0x70] sm:$0xff] %v3152
      %3185 = vst [vmem:[%s208 + $0x78] sm:$0xff] %v3153
      %3186 = vst [vmem:[%s208 + $0x80] sm:$0xff] %v3154
      %3187 = vst [vmem:[%s208 + $0x88] sm:$0xff] %v3155
      %3188 = vst [vmem:[%s208 + $0x90] sm:$0xff] %v3156
      %3189 = vst [vmem:[%s208 + $0x98] sm:$0xff] %v3157
      %3190 = vst [vmem:[%s208 + $0xa0] sm:$0xff] %v3158
      %3191 = vst [vmem:[%s208 + $0xa8] sm:$0xff] %v3159
      %3192 = vst [vmem:[%s208 + $0xb0] sm:$0xff] %v3160
      %3193 = vst [vmem:[%s208 + $0xb8] sm:$0xff] %v3161
      %3194 = vst [vmem:[%s208 + $0xc0] sm:$0xff] %v3162
      %3195 = vst [vmem:[%s208 + $0xc8] sm:$0xff] %v3163
      %3196 = vst [vmem:[%s208 + $0xd0] sm:$0xff] %v3164
      %3197 = vst [vmem:[%s208 + $0xd8] sm:$0xff] %v3165
      %3198 = vst [vmem:[%s208 + $0xe0] sm:$0xff] %v3166
      %3199 = vst [vmem:[%s208 + $0xe8] sm:$0xff] %v3167
      %3200 = vst [vmem:[%s208 + $0xf0] sm:$0xff] %v3168
      %3201 = vst [vmem:[%s208 + $0xf8] sm:$0xff] %v3169
      %v3202 = vld [vmem:[%s2463 + $0x2] sm:$0xff]
      %v3203 = vld [vmem:[%s2463 + $0xa] sm:$0xff]
      %v3204 = vld [vmem:[%s2463 + $0x1a] sm:$0xff]
      %v3205 = vld [vmem:[%s2463 + $0x22] sm:$0xff]
      %v3206 = vld [vmem:[%s2463 + $0x32] sm:$0xff]
      %v3207 = vld [vmem:[%s2463 + $0x3a] sm:$0xff]
      %v3208 = vld [vmem:[%s2463 + $0x4a] sm:$0xff]
      %v3209 = vld [vmem:[%s2463 + $0x52] sm:$0xff]
      %v3210 = vld [vmem:[%s2463 + $0x62] sm:$0xff]
      %v3211 = vld [vmem:[%s2463 + $0x6a] sm:$0xff]
      %v3212 = vld [vmem:[%s2463 + $0x7a] sm:$0xff]
      %v3213 = vld [vmem:[%s2463 + $0x82] sm:$0xff]
      %v3214 = vld [vmem:[%s2463 + $0x92] sm:$0xff]
      %v3215 = vld [vmem:[%s2463 + $0x9a] sm:$0xff]
      %v3216 = vld [vmem:[%s2463 + $0xaa] sm:$0xff]
      %v3217 = vld [vmem:[%s2463 + $0xb2] sm:$0xff]
      %v3218 = vld [vmem:[%s2463 + $0xc2] sm:$0xff]
      %v3219 = vld [vmem:[%s2463 + $0xca] sm:$0xff]
      %v3220 = vld [vmem:[%s2463 + $0xda] sm:$0xff]
      %v3221 = vld [vmem:[%s2463 + $0xe2] sm:$0xff]
      %v3222 = vld [vmem:[%s2463 + $0xf2] sm:$0xff]
      %v3223 = vld [vmem:[%s2463 + $0xfa] sm:$0xff]
      %v3224 = vld [vmem:[%s2463 + $0x10a] sm:$0xff]
      %v3225 = vld [vmem:[%s2463 + $0x112] sm:$0xff]
      %v3226 = vld [vmem:[%s2463 + $0x122] sm:$0xff]
      %v3227 = vld [vmem:[%s2463 + $0x12a] sm:$0xff]
      %v3228 = vld [vmem:[%s2463 + $0x13a] sm:$0xff]
      %v3229 = vld [vmem:[%s2463 + $0x142] sm:$0xff]
      %v3230 = vld [vmem:[%s2463 + $0x152] sm:$0xff]
      %v3231 = vld [vmem:[%s2463 + $0x15a] sm:$0xff]
      %v3232 = vld [vmem:[%s2463 + $0x16a] sm:$0xff]
      %v3233 = vld [vmem:[%s2463 + $0x172] sm:$0xff]
      %v3234 = vpack.c.bf16 %v3203, %v3202
      %v3235 = vpack.c.bf16 %v3205, %v3204
      %v3236 = vpack.c.bf16 %v3207, %v3206
      %v3237 = vpack.c.bf16 %v3209, %v3208
      %v3238 = vpack.c.bf16 %v3211, %v3210
      %v3239 = vpack.c.bf16 %v3213, %v3212
      %v3240 = vpack.c.bf16 %v3215, %v3214
      %v3241 = vpack.c.bf16 %v3217, %v3216
      %v3242 = vpack.c.bf16 %v3219, %v3218
      %v3243 = vpack.c.bf16 %v3221, %v3220
      %v3244 = vpack.c.bf16 %v3223, %v3222
      %v3245 = vpack.c.bf16 %v3225, %v3224
      %v3246 = vpack.c.bf16 %v3227, %v3226
      %v3247 = vpack.c.bf16 %v3229, %v3228
      %v3248 = vpack.c.bf16 %v3231, %v3230
      %v3249 = vpack.c.bf16 %v3233, %v3232
      %v3250 = vld [vmem:[%s1 + $0x200] sm:$0xf]
      %v3251 = vld [vmem:[%s1 + $0x204] sm:$0xf]
      %v3252 = vld [vmem:[%s1 + $0x208] sm:$0xf]
      %v3253 = vld [vmem:[%s1 + $0x20c] sm:$0xf]
      %v3254 = vld [vmem:[%s1 + $0x210] sm:$0xf]
      %v3255 = vld [vmem:[%s1 + $0x214] sm:$0xf]
      %v3256 = vld [vmem:[%s1 + $0x218] sm:$0xf]
      %v3257 = vld [vmem:[%s1 + $0x21c] sm:$0xf]
      %v3258 = vld [vmem:[%s1 + $0x220] sm:$0xf]
      %v3259 = vld [vmem:[%s1 + $0x224] sm:$0xf]
      %v3260 = vld [vmem:[%s1 + $0x228] sm:$0xf]
      %v3261 = vld [vmem:[%s1 + $0x22c] sm:$0xf]
      %v3262 = vld [vmem:[%s1 + $0x230] sm:$0xf]
      %v3263 = vld [vmem:[%s1 + $0x234] sm:$0xf]
      %v3264 = vld [vmem:[%s1 + $0x238] sm:$0xf]
      %v3265 = vld [vmem:[%s1 + $0x23c] sm:$0xf]
      %v3266 = vld [vmem:[%s208] sm:$0xff]
      %v3267 = vld [vmem:[%s208 + $0x8] sm:$0xff]
      %v3268 = vld [vmem:[%s208 + $0x10] sm:$0xff]
      %v3269 = vld [vmem:[%s208 + $0x18] sm:$0xff]
      %v3270 = vld [vmem:[%s208 + $0x20] sm:$0xff]
      %v3271 = vld [vmem:[%s208 + $0x28] sm:$0xff]
      %v3272 = vld [vmem:[%s208 + $0x30] sm:$0xff]
      %v3273 = vld [vmem:[%s208 + $0x38] sm:$0xff]
      %v3274 = vld [vmem:[%s208 + $0x40] sm:$0xff]
      %v3275 = vld [vmem:[%s208 + $0x48] sm:$0xff]
      %v3276 = vld [vmem:[%s208 + $0x50] sm:$0xff]
      %v3277 = vld [vmem:[%s208 + $0x58] sm:$0xff]
      %v3278 = vld [vmem:[%s208 + $0x60] sm:$0xff]
      %v3279 = vld [vmem:[%s208 + $0x68] sm:$0xff]
      %v3280 = vld [vmem:[%s208 + $0x70] sm:$0xff]
      %v3281 = vld [vmem:[%s208 + $0x78] sm:$0xff]
      %v3282 = vld [vmem:[%s208 + $0x80] sm:$0xff]
      %v3283 = vld [vmem:[%s208 + $0x88] sm:$0xff]
      %v3284 = vld [vmem:[%s208 + $0x90] sm:$0xff]
      %v3285 = vld [vmem:[%s208 + $0x98] sm:$0xff]
      %v3286 = vld [vmem:[%s208 + $0xa0] sm:$0xff]
      %v3287 = vld [vmem:[%s208 + $0xa8] sm:$0xff]
      %v3288 = vld [vmem:[%s208 + $0xb0] sm:$0xff]
      %v3289 = vld [vmem:[%s208 + $0xb8] sm:$0xff]
      %v3290 = vld [vmem:[%s208 + $0xc0] sm:$0xff]
      %v3291 = vld [vmem:[%s208 + $0xc8] sm:$0xff]
      %v3292 = vld [vmem:[%s208 + $0xd0] sm:$0xff]
      %v3293 = vld [vmem:[%s208 + $0xd8] sm:$0xff]
      %v3294 = vld [vmem:[%s208 + $0xe0] sm:$0xff]
      %v3295 = vld [vmem:[%s208 + $0xe8] sm:$0xff]
      %v3296 = vld [vmem:[%s208 + $0xf0] sm:$0xff]
      %v3297 = vld [vmem:[%s208 + $0xf8] sm:$0xff]
      %v3314 = vunpack.c.l.b16 %v3250
      %v3315 = vunpack.c.l.b16 %v3251
      %v3316 = vunpack.c.l.b16 %v3252
      %v3317 = vunpack.c.l.b16 %v3253
      %v3318 = vunpack.c.l.b16 %v3254
      %v3319 = vunpack.c.l.b16 %v3255
      %v3320 = vunpack.c.l.b16 %v3256
      %v3321 = vunpack.c.l.b16 %v3257
      %v3322 = vunpack.c.l.b16 %v3258
      %v3323 = vunpack.c.l.b16 %v3259
      %v3324 = vunpack.c.l.b16 %v3260
      %v3325 = vunpack.c.l.b16 %v3261
      %v3326 = vunpack.c.l.b16 %v3262
      %v3327 = vunpack.c.l.b16 %v3263
      %v3328 = vunpack.c.l.b16 %v3264
      %v3329 = vunpack.c.l.b16 %v3265
      %v3330 = vpack.c.b16 %v3315, %v3314
      %v3331 = vpack.c.b16 %v3317, %v3316
      %v3332 = vpack.c.b16 %v3319, %v3318
      %v3333 = vpack.c.b16 %v3321, %v3320
      %v3334 = vpack.c.b16 %v3323, %v3322
      %v3335 = vpack.c.b16 %v3325, %v3324
      %v3336 = vpack.c.b16 %v3327, %v3326
      %v3337 = vpack.c.b16 %v3329, %v3328
      %3346 = vmatprep.subr.bf16.mxu0 0
      %3347 = vmatpush1.bf16.msra.mxu0 %v3330
      %3348 = vmatprep.subr.bf16.mxu0 0
      %3349 = vmatpush1.bf16.msra.mxu0 %v3331
      %3350 = vmatprep.subr.bf16.mxu0 0
      %3351 = vmatpush1.bf16.msra.mxu0 %v3332
      %3352 = vmatprep.subr.bf16.mxu0 0
      %3353 = vmatpush1.bf16.msra.mxu0 %v3333
      %3354 = vmatprep.subr.bf16.mxu0 0
      %3355 = vmatpush1.bf16.msra.mxu0 %v3334
      %3356 = vmatprep.subr.bf16.mxu0 0
      %3357 = vmatpush1.bf16.msra.mxu0 %v3335
      %3358 = vmatprep.subr.bf16.mxu0 0
      %3359 = vmatpush1.bf16.msra.mxu0 %v3336
      %3360 = vmatprep.subr.bf16.mxu0 0
      %3361 = vmatpush1.bf16.msra.mxu0 %v3337
      %3362 = vmatprep.subr.bf16.mxu0 0
      %3363 = vmatpush1.bf16.msra.mxu0 0
      %3364 = vmatprep.subr.bf16.mxu0 0
      %3365 = vmatpush1.bf16.msra.mxu0 0
      %3366 = vmatprep.subr.bf16.mxu0 0
      %3367 = vmatpush1.bf16.msra.mxu0 0
      %3368 = vmatprep.subr.bf16.mxu0 0
      %3369 = vmatpush1.bf16.msra.mxu0 0
      %3370 = vmatprep.subr.bf16.mxu0 0
      %3371 = vmatpush1.bf16.msra.mxu0 0
      %3372 = vmatprep.subr.bf16.mxu0 0
      %3373 = vmatpush1.bf16.msra.mxu0 0
      %3374 = vmatprep.subr.bf16.mxu0 0
      %3375 = vmatpush1.bf16.msra.mxu0 0
      %3376 = vmatprep.subr.bf16.mxu0 0
      %3377 = vmatpush1.bf16.msra.mxu0 0
      %3378 = vmatprep.mubr.bf16.mxu0 0
      %3379 = vmatmul.mubr.bf16.gmra.mrb[0].mxu0 %v3234
      %v3380 = vpop.f32.mrb[0].mxu0
      %v3381 = vadd.f32 0.0, %v3380
      %v3382 = vpop.f32.mrb[0].mxu0
      %v3383 = vpop.f32.mrb[0].mxu0
      %v3384 = vadd.f32 0.0, %v3383
      %v3385 = vpop.f32.mrb[0].mxu0
      %3386 = vmatprep.mubr.bf16.mxu0 0
      %3387 = vmatmul.mubr.bf16.gmra.mrb[0].mxu0 %v3235
      %v3388 = vpop.f32.mrb[0].mxu0
      %v3389 = vadd.f32 0.0, %v3388
      %v3390 = vpop.f32.mrb[0].mxu0
      %v3391 = vpop.f32.mrb[0].mxu0
      %v3392 = vadd.f32 0.0, %v3391
      %v3393 = vpop.f32.mrb[0].mxu0
      %3394 = vmatprep.mubr.bf16.mxu0 0
      %3395 = vmatmul.mubr.bf16.gmra.mrb[0].mxu0 %v3236
      %v3396 = vpop.f32.mrb[0].mxu0
      %v3397 = vadd.f32 0.0, %v3396
      %v3398 = vpop.f32.mrb[0].mxu0
      %v3399 = vpop.f32.mrb[0].mxu0
      %v3400 = vadd.f32 0.0, %v3399
      %v3401 = vpop.f32.mrb[0].mxu0
      %3402 = vmatprep.mubr.bf16.mxu0 0
      %3403 = vmatmul.mubr.bf16.gmra.mrb[0].mxu0 %v3237
      %v3404 = vpop.f32.mrb[0].mxu0
      %v3405 = vadd.f32 0.0, %v3404
      %v3406 = vpop.f32.mrb[0].mxu0
      %v3407 = vpop.f32.mrb[0].mxu0
      %v3408 = vadd.f32 0.0, %v3407
      %v3409 = vpop.f32.mrb[0].mxu0
      %3410 = vmatprep.mubr.bf16.mxu0 0
      %3411 = vmatmul.mubr.bf16.gmra.mrb[0].mxu0 %v3238
      %v3412 = vpop.f32.mrb[0].mxu0
      %v3413 = vadd.f32 0.0, %v3412
      %v3414 = vpop.f32.mrb[0].mxu0
      %v3415 = vpop.f32.mrb[0].mxu0
      %v3416 = vadd.f32 0.0, %v3415
      %v3417 = vpop.f32.mrb[0].mxu0
      %3418 = vmatprep.mubr.bf16.mxu0 0
      %3419 = vmatmul.mubr.bf16.gmra.mrb[0].mxu0 %v3239
      %v3420 = vpop.f32.mrb[0].mxu0
      %v3421 = vadd.f32 0.0, %v3420
      %v3422 = vpop.f32.mrb[0].mxu0
      %v3423 = vpop.f32.mrb[0].mxu0
      %v3424 = vadd.f32 0.0, %v3423
      %v3425 = vpop.f32.mrb[0].mxu0
      %3426 = vmatprep.mubr.bf16.mxu0 0
      %3427 = vmatmul.mubr.bf16.gmra.mrb[0].mxu0 %v3240
      %v3428 = vpop.f32.mrb[0].mxu0
      %v3429 = vadd.f32 0.0, %v3428
      %v3430 = vpop.f32.mrb[0].mxu0
      %v3431 = vpop.f32.mrb[0].mxu0
      %v3432 = vadd.f32 0.0, %v3431
      %v3433 = vpop.f32.mrb[0].mxu0
      %3434 = vmatprep.mubr.bf16.mxu0 0
      %3435 = vmatmul.mubr.bf16.gmra.mrb[0].mxu0 %v3241
      %v3436 = vpop.f32.mrb[0].mxu0
      %v3437 = vadd.f32 0.0, %v3436
      %v3438 = vpop.f32.mrb[0].mxu0
      %v3439 = vpop.f32.mrb[0].mxu0
      %v3440 = vadd.f32 0.0, %v3439
      %v3441 = vpop.f32.mrb[0].mxu0
      %3442 = vmatprep.mubr.bf16.mxu0 0
      %3443 = vmatmul.mubr.bf16.gmra.mrb[0].mxu0 %v3242
      %v3444 = vpop.f32.mrb[0].mxu0
      %v3445 = vadd.f32 0.0, %v3444
      %v3446 = vpop.f32.mrb[0].mxu0
      %v3447 = vpop.f32.mrb[0].mxu0
      %v3448 = vadd.f32 0.0, %v3447
      %v3449 = vpop.f32.mrb[0].mxu0
      %3450 = vmatprep.mubr.bf16.mxu0 0
      %3451 = vmatmul.mubr.bf16.gmra.mrb[0].mxu0 %v3243
      %v3452 = vpop.f32.mrb[0].mxu0
      %v3453 = vadd.f32 0.0, %v3452
      %v3454 = vpop.f32.mrb[0].mxu0
      %v3455 = vpop.f32.mrb[0].mxu0
      %v3456 = vadd.f32 0.0, %v3455
      %v3457 = vpop.f32.mrb[0].mxu0
      %3458 = vmatprep.mubr.bf16.mxu0 0
      %3459 = vmatmul.mubr.bf16.gmra.mrb[0].mxu0 %v3244
      %v3460 = vpop.f32.mrb[0].mxu0
      %v3461 = vadd.f32 0.0, %v3460
      %v3462 = vpop.f32.mrb[0].mxu0
      %v3463 = vpop.f32.mrb[0].mxu0
      %v3464 = vadd.f32 0.0, %v3463
      %v3465 = vpop.f32.mrb[0].mxu0
      %3466 = vmatprep.mubr.bf16.mxu0 0
      %3467 = vmatmul.mubr.bf16.gmra.mrb[0].mxu0 %v3245
      %v3468 = vpop.f32.mrb[0].mxu0
      %v3469 = vadd.f32 0.0, %v3468
      %v3470 = vpop.f32.mrb[0].mxu0
      %v3471 = vpop.f32.mrb[0].mxu0
      %v3472 = vadd.f32 0.0, %v3471
      %v3473 = vpop.f32.mrb[0].mxu0
      %3474 = vmatprep.mubr.bf16.mxu0 0
      %3475 = vmatmul.mubr.bf16.gmra.mrb[0].mxu0 %v3246
      %v3476 = vpop.f32.mrb[0].mxu0
      %v3477 = vadd.f32 0.0, %v3476
      %v3478 = vpop.f32.mrb[0].mxu0
      %v3479 = vpop.f32.mrb[0].mxu0
      %v3480 = vadd.f32 0.0, %v3479
      %v3481 = vpop.f32.mrb[0].mxu0
      %3482 = vmatprep.mubr.bf16.mxu0 0
      %3483 = vmatmul.mubr.bf16.gmra.mrb[0].mxu0 %v3247
      %v3484 = vpop.f32.mrb[0].mxu0
      %v3485 = vadd.f32 0.0, %v3484
      %v3486 = vpop.f32.mrb[0].mxu0
      %v3487 = vpop.f32.mrb[0].mxu0
      %v3488 = vadd.f32 0.0, %v3487
      %v3489 = vpop.f32.mrb[0].mxu0
      %3490 = vmatprep.mubr.bf16.mxu0 0
      %3491 = vmatmul.mubr.bf16.gmra.mrb[0].mxu0 %v3248
      %v3492 = vpop.f32.mrb[0].mxu0
      %v3493 = vadd.f32 0.0, %v3492
      %v3494 = vpop.f32.mrb[0].mxu0
      %v3495 = vpop.f32.mrb[0].mxu0
      %v3496 = vadd.f32 0.0, %v3495
      %v3497 = vpop.f32.mrb[0].mxu0
      %3498 = vmatprep.mubr.bf16.mxu0 0
      %3499 = vmatmul.mubr.bf16.gmra.mrb[0].mxu0 %v3249
      %v3500 = vpop.f32.mrb[0].mxu0
      %v3501 = vadd.f32 0.0, %v3500
      %v3502 = vpop.f32.mrb[0].mxu0
      %v3503 = vpop.f32.mrb[0].mxu0
      %v3504 = vadd.f32 0.0, %v3503
      %v3505 = vpop.f32.mrb[0].mxu0
      %3506 = vdwg.mxu0
      %v3507 = vadd.f32 %v3266, %v3381
      %v3508 = vadd.f32 %v3267, %v3384
      %v3509 = vadd.f32 %v3268, %v3389
      %v3510 = vadd.f32 %v3269, %v3392
      %v3511 = vadd.f32 %v3270, %v3397
      %v3512 = vadd.f32 %v3271, %v3400
      %v3513 = vadd.f32 %v3272, %v3405
      %v3514 = vadd.f32 %v3273, %v3408
      %v3515 = vadd.f32 %v3274, %v3413
      %v3516 = vadd.f32 %v3275, %v3416
      %v3517 = vadd.f32 %v3276, %v3421
      %v3518 = vadd.f32 %v3277, %v3424
      %v3519 = vadd.f32 %v3278, %v3429
      %v3520 = vadd.f32 %v3279, %v3432
      %v3521 = vadd.f32 %v3280, %v3437
      %v3522 = vadd.f32 %v3281, %v3440
      %v3523 = vadd.f32 %v3282, %v3445
      %v3524 = vadd.f32 %v3283, %v3448
      %v3525 = vadd.f32 %v3284, %v3453
      %v3526 = vadd.f32 %v3285, %v3456
      %v3527 = vadd.f32 %v3286, %v3461
      %v3528 = vadd.f32 %v3287, %v3464
      %v3529 = vadd.f32 %v3288, %v3469
      %v3530 = vadd.f32 %v3289, %v3472
      %v3531 = vadd.f32 %v3290, %v3477
      %v3532 = vadd.f32 %v3291, %v3480
      %v3533 = vadd.f32 %v3292, %v3485
      %v3534 = vadd.f32 %v3293, %v3488
      %v3535 = vadd.f32 %v3294, %v3493
      %v3536 = vadd.f32 %v3295, %v3496
      %v3537 = vadd.f32 %v3296, %v3501
      %v3538 = vadd.f32 %v3297, %v3504
      %3539 = vst [vmem:[%s208] sm:$0xff] %v3507
      %3540 = vst [vmem:[%s208 + $0x8] sm:$0xff] %v3508
      %3541 = vst [vmem:[%s208 + $0x10] sm:$0xff] %v3509
      %3542 = vst [vmem:[%s208 + $0x18] sm:$0xff] %v3510
      %3543 = vst [vmem:[%s208 + $0x20] sm:$0xff] %v3511
      %3544 = vst [vmem:[%s208 + $0x28] sm:$0xff] %v3512
      %3545 = vst [vmem:[%s208 + $0x30] sm:$0xff] %v3513
      %3546 = vst [vmem:[%s208 + $0x38] sm:$0xff] %v3514
      %3547 = vst [vmem:[%s208 + $0x40] sm:$0xff] %v3515
      %3548 = vst [vmem:[%s208 + $0x48] sm:$0xff] %v3516
      %3549 = vst [vmem:[%s208 + $0x50] sm:$0xff] %v3517
      %3550 = vst [vmem:[%s208 + $0x58] sm:$0xff] %v3518
      %3551 = vst [vmem:[%s208 + $0x60] sm:$0xff] %v3519
      %3552 = vst [vmem:[%s208 + $0x68] sm:$0xff] %v3520
      %3553 = vst [vmem:[%s208 + $0x70] sm:$0xff] %v3521
      %3554 = vst [vmem:[%s208 + $0x78] sm:$0xff] %v3522
      %3555 = vst [vmem:[%s208 + $0x80] sm:$0xff] %v3523
      %3556 = vst [vmem:[%s208 + $0x88] sm:$0xff] %v3524
      %3557 = vst [vmem:[%s208 + $0x90] sm:$0xff] %v3525
      %3558 = vst [vmem:[%s208 + $0x98] sm:$0xff] %v3526
      %3559 = vst [vmem:[%s208 + $0xa0] sm:$0xff] %v3527
      %3560 = vst [vmem:[%s208 + $0xa8] sm:$0xff] %v3528
      %3561 = vst [vmem:[%s208 + $0xb0] sm:$0xff] %v3529
      %3562 = vst [vmem:[%s208 + $0xb8] sm:$0xff] %v3530
      %3563 = vst [vmem:[%s208 + $0xc0] sm:$0xff] %v3531
      %3564 = vst [vmem:[%s208 + $0xc8] sm:$0xff] %v3532
      %3565 = vst [vmem:[%s208 + $0xd0] sm:$0xff] %v3533
      %3566 = vst [vmem:[%s208 + $0xd8] sm:$0xff] %v3534
      %3567 = vst [vmem:[%s208 + $0xe0] sm:$0xff] %v3535
      %3568 = vst [vmem:[%s208 + $0xe8] sm:$0xff] %v3536
      %3569 = vst [vmem:[%s208 + $0xf0] sm:$0xff] %v3537
      %3570 = vst [vmem:[%s208 + $0xf8] sm:$0xff] %v3538
      %v3571 = vld [vmem:[%s208] sm:$0xff]
      %v3572 = vld [vmem:[%s208 + $0x8] sm:$0xff]
      %v3573 = vld [vmem:[%s208 + $0x10] sm:$0xff]
      %v3574 = vld [vmem:[%s208 + $0x18] sm:$0xff]
      %v3575 = vld [vmem:[%s208 + $0x20] sm:$0xff]
      %v3576 = vld [vmem:[%s208 + $0x28] sm:$0xff]
      %v3577 = vld [vmem:[%s208 + $0x30] sm:$0xff]
      %v3578 = vld [vmem:[%s208 + $0x38] sm:$0xff]
      %v3579 = vld [vmem:[%s208 + $0x40] sm:$0xff]
      %v3580 = vld [vmem:[%s208 + $0x48] sm:$0xff]
      %v3581 = vld [vmem:[%s208 + $0x50] sm:$0xff]
      %v3582 = vld [vmem:[%s208 + $0x58] sm:$0xff]
      %v3583 = vld [vmem:[%s208 + $0x60] sm:$0xff]
      %v3584 = vld [vmem:[%s208 + $0x68] sm:$0xff]
      %v3585 = vld [vmem:[%s208 + $0x70] sm:$0xff]
      %v3586 = vld [vmem:[%s208 + $0x78] sm:$0xff]
      %v3587 = vld [vmem:[%s208 + $0x80] sm:$0xff]
      %v3588 = vld [vmem:[%s208 + $0x88] sm:$0xff]
      %v3589 = vld [vmem:[%s208 + $0x90] sm:$0xff]
      %v3590 = vld [vmem:[%s208 + $0x98] sm:$0xff]
      %v3591 = vld [vmem:[%s208 + $0xa0] sm:$0xff]
      %v3592 = vld [vmem:[%s208 + $0xa8] sm:$0xff]
      %v3593 = vld [vmem:[%s208 + $0xb0] sm:$0xff]
      %v3594 = vld [vmem:[%s208 + $0xb8] sm:$0xff]
      %v3595 = vld [vmem:[%s208 + $0xc0] sm:$0xff]
      %v3596 = vld [vmem:[%s208 + $0xc8] sm:$0xff]
      %v3597 = vld [vmem:[%s208 + $0xd0] sm:$0xff]
      %v3598 = vld [vmem:[%s208 + $0xd8] sm:$0xff]
      %v3599 = vld [vmem:[%s208 + $0xe0] sm:$0xff]
      %v3600 = vld [vmem:[%s208 + $0xe8] sm:$0xff]
      %v3601 = vld [vmem:[%s208 + $0xf0] sm:$0xff]
      %v3602 = vld [vmem:[%s208 + $0xf8] sm:$0xff]
      %v3603 = vadd.f32 %v3571, %v3572
      %v3604 = vadd.f32 %v3603, %v3573
      %v3605 = vadd.f32 %v3604, %v3574
      %v3606 = vadd.f32 %v3605, %v3575
      %v3607 = vadd.f32 %v3606, %v3576
      %v3608 = vadd.f32 %v3607, %v3577
      %v3609 = vadd.f32 %v3608, %v3578
      %v3610 = vadd.f32 %v3609, %v3579
      %v3611 = vadd.f32 %v3610, %v3580
      %v3612 = vadd.f32 %v3611, %v3581
      %v3613 = vadd.f32 %v3612, %v3582
      %v3614 = vadd.f32 %v3613, %v3583
      %v3615 = vadd.f32 %v3614, %v3584
      %v3616 = vadd.f32 %v3615, %v3585
      %v3617 = vadd.f32 %v3616, %v3586
      %v3618 = vadd.f32 %v3617, %v3587
      %v3619 = vadd.f32 %v3618, %v3588
      %v3620 = vadd.f32 %v3619, %v3589
      %v3621 = vadd.f32 %v3620, %v3590
      %v3622 = vadd.f32 %v3621, %v3591
      %v3623 = vadd.f32 %v3622, %v3592
      %v3624 = vadd.f32 %v3623, %v3593
      %v3625 = vadd.f32 %v3624, %v3594
      %v3626 = vadd.f32 %v3625, %v3595
      %v3627 = vadd.f32 %v3626, %v3596
      %v3628 = vadd.f32 %v3627, %v3597
      %v3629 = vadd.f32 %v3628, %v3598
      %v3630 = vadd.f32 %v3629, %v3599
      %v3631 = vadd.f32 %v3630, %v3600
      %v3632 = vadd.f32 %v3631, %v3601
      %v3633 = vadd.f32 %v3632, %v3602
      %v3634 = vrot.slane %v3633, 4
      %v3635 = vadd.f32 %v3633, %v3634
      %v3636 = vrot.slane %v3635, 2
      %v3637 = vadd.f32 %v3635, %v3636
      %v3638 = vrot.slane %v3637, 1
      %v3639 = vadd.f32 %v3637, %v3638
      %3640 = vst [vmem:[%s211] sm:$0x1] %v3639
      %v3641 = vmul.f32 %v3571, %v3571
      %v3642 = vmul.f32 %v3572, %v3572
      %v3643 = vmul.f32 %v3573, %v3573
      %v3644 = vmul.f32 %v3574, %v3574
      %v3645 = vmul.f32 %v3575, %v3575
      %v3646 = vmul.f32 %v3576, %v3576
      %v3647 = vmul.f32 %v3577, %v3577
      %v3648 = vmul.f32 %v3578, %v3578
      %v3649 = vmul.f32 %v3579, %v3579
      %v3650 = vmul.f32 %v3580, %v3580
      %v3651 = vmul.f32 %v3581, %v3581
      %v3652 = vmul.f32 %v3582, %v3582
      %v3653 = vmul.f32 %v3583, %v3583
      %v3654 = vmul.f32 %v3584, %v3584
      %v3655 = vmul.f32 %v3585, %v3585
      %v3656 = vmul.f32 %v3586, %v3586
      %v3657 = vmul.f32 %v3587, %v3587
      %v3658 = vmul.f32 %v3588, %v3588
      %v3659 = vmul.f32 %v3589, %v3589
      %v3660 = vmul.f32 %v3590, %v3590
      %v3661 = vmul.f32 %v3591, %v3591
      %v3662 = vmul.f32 %v3592, %v3592
      %v3663 = vmul.f32 %v3593, %v3593
      %v3664 = vmul.f32 %v3594, %v3594
      %v3665 = vmul.f32 %v3595, %v3595
      %v3666 = vmul.f32 %v3596, %v3596
      %v3667 = vmul.f32 %v3597, %v3597
      %v3668 = vmul.f32 %v3598, %v3598
      %v3669 = vmul.f32 %v3599, %v3599
      %v3670 = vmul.f32 %v3600, %v3600
      %v3671 = vmul.f32 %v3601, %v3601
      %v3672 = vmul.f32 %v3602, %v3602
      %v3673 = vadd.f32 %v3641, %v3642
      %v3674 = vadd.f32 %v3673, %v3643
      %v3675 = vadd.f32 %v3674, %v3644
      %v3676 = vadd.f32 %v3675, %v3645
      %v3677 = vadd.f32 %v3676, %v3646
      %v3678 = vadd.f32 %v3677, %v3647
      %v3679 = vadd.f32 %v3678, %v3648
      %v3680 = vadd.f32 %v3679, %v3649
      %v3681 = vadd.f32 %v3680, %v3650
      %v3682 = vadd.f32 %v3681, %v3651
      %v3683 = vadd.f32 %v3682, %v3652
      %v3684 = vadd.f32 %v3683, %v3653
      %v3685 = vadd.f32 %v3684, %v3654
      %v3686 = vadd.f32 %v3685, %v3655
      %v3687 = vadd.f32 %v3686, %v3656
      %v3688 = vadd.f32 %v3687, %v3657
      %v3689 = vadd.f32 %v3688, %v3658
      %v3690 = vadd.f32 %v3689, %v3659
      %v3691 = vadd.f32 %v3690, %v3660
      %v3692 = vadd.f32 %v3691, %v3661
      %v3693 = vadd.f32 %v3692, %v3662
      %v3694 = vadd.f32 %v3693, %v3663
      %v3695 = vadd.f32 %v3694, %v3664
      %v3696 = vadd.f32 %v3695, %v3665
      %v3697 = vadd.f32 %v3696, %v3666
      %v3698 = vadd.f32 %v3697, %v3667
      %v3699 = vadd.f32 %v3698, %v3668
      %v3700 = vadd.f32 %v3699, %v3669
      %v3701 = vadd.f32 %v3700, %v3670
      %v3702 = vadd.f32 %v3701, %v3671
      %v3703 = vadd.f32 %v3702, %v3672
      %v3704 = vrot.slane %v3703, 4
      %v3705 = vadd.f32 %v3703, %v3704
      %v3706 = vrot.slane %v3705, 2
      %v3707 = vadd.f32 %v3705, %v3706
      %v3708 = vrot.slane %v3707, 1
      %v3709 = vadd.f32 %v3707, %v3708
      %3710 = vst [vmem:[%s214] sm:$0x1] %v3709
      %p3711 = scmp.lt.s32.totalorder %s16, 1
      %s3712 = scalar_select %p3711, %s16, 1
      %s3713 = smul.addr %s3712, 32
      %s3714 = smul.addr %s3713, 8
      %s3715 = scalar_lea.vmem %s2, %s3714
      %p3716 = scmp.lt.s32.totalorder %s16, 1
      %s3717 = scalar_select %p3716, %s16, 1
      %s3718 = scalar_lea.vmem %s3, %s3717
      %p3719 = scmp.lt.s32.totalorder %s16, 1
      %s3720 = scalar_select %p3719, %s16, 1
      %s3721 = scalar_lea.vmem %s4, %s3720
      // Predicated region
      $region29: #{basic_block_forward.5} parent=27 // pred_check
        %p3722 = pneg %p81
      $region30: #{basic_block_forward.5} parent=27 // pred_check_branch
        %3724 = sbr.rel (%p3722) target = $region32
      $region31: #{basic_block_forward.5} parent=27 // pred_region
        _
      $region32: #{basic_block_forward.5} parent=27 // pred_fallthru
        _
      // Predicated region
      $region33: #{basic_block_forward.5} parent=27 // pred_check
        %p3725 = pneg %p107
      $region34: #{basic_block_forward.5} parent=27 // pred_check_branch
        %3727 = sbr.rel (%p3725) target = $region36
      $region35: #{basic_block_forward.5} parent=27 // pred_region
        _
      $region36: #{basic_block_forward.5} parent=27 // pred_fallthru
        _
      // Predicated region
      $region37: #{basic_block_forward.5} parent=27 // pred_check
        %p3728 = pneg %p133
      $region38: #{basic_block_forward.5} parent=27 // pred_check_branch
        %3730 = sbr.rel (%p3728) target = $region40
      $region39: #{basic_block_forward.5} parent=27 // pred_region
        _
      $region40: #{basic_block_forward.5} parent=27 // pred_fallthru
        _
    $region28: #{basic_block_forward.5} parent=5 // pred_fallthru
      _
    %p3731 = scmp.le.s32.totalorder 2, %s11
    // Predicated region
    $region41: #{basic_block_forward.5} parent=5 // pred_check
      %p3732 = pneg %p3731
    $region42: #{basic_block_forward.5} parent=5 // pred_check_branch
      %3734 = sbr.rel (%p3732) target = $region44
    $region43: #{basic_block_forward.5} parent=5 // pred_region
      %s3735 = ssub.s32 %s11, 2
      // Predicated region
      $region45: #{basic_block_forward.5} parent=43 // pred_check
        %p3736 = pneg %p87
      $region46: #{basic_block_forward.5} parent=43 // pred_check_branch
        %3738 = sbr.rel (%p3736) target = $region48
      $region47: #{basic_block_forward.5} parent=43 // pred_region
        %p3739 = scmp.lt.s32.totalorder %s17, 1
        %s3740 = scalar_select %p3739, %s17, 1
        %s3741 = smul.addr %s3740, 32
        %s3742 = smul.addr %s3741, 8
        %s3743 = scalar_lea.vmem %s2, %s3742
      $region48: #{basic_block_forward.5} parent=43 // pred_fallthru
        _
      // Predicated region
      $region49: #{basic_block_forward.5} parent=43 // pred_check
        %p3744 = pneg %p113
      $region50: #{basic_block_forward.5} parent=43 // pred_check_branch
        %3746 = sbr.rel (%p3744) target = $region52
      $region51: #{basic_block_forward.5} parent=43 // pred_region
        %p3747 = scmp.lt.s32.totalorder %s17, 1
        %s3748 = scalar_select %p3747, %s17, 1
        %s3749 = scalar_lea.vmem %s3, %s3748
      $region52: #{basic_block_forward.5} parent=43 // pred_fallthru
        _
      // Predicated region
      $region53: #{basic_block_forward.5} parent=43 // pred_check
        %p3750 = pneg %p139
      $region54: #{basic_block_forward.5} parent=43 // pred_check_branch
        %3752 = sbr.rel (%p3750) target = $region56
      $region55: #{basic_block_forward.5} parent=43 // pred_region
        %p3753 = scmp.lt.s32.totalorder %s17, 1
        %s3754 = scalar_select %p3753, %s17, 1
        %s3755 = scalar_lea.vmem %s4, %s3754
      $region56: #{basic_block_forward.5} parent=43 // pred_fallthru
        _
    $region44: #{basic_block_forward.5} parent=5 // pred_fallthru
      _
  $region6: #{basic_block_forward.5} parent=0 // loop_footer
    %s15 = sadd.s32 1, %s11
  $region7: #{basic_block_forward.5} parent=0 // loop_footer_branch
    %10 = sbr.rel target = $region3
  $region8: #{basic_block_forward.5} parent=0 // loop_exit
    _

</llo_original>
